<compile_context>
chip_gen: v7x
topology: tpu7x:2x2x1
jax: 0.10.0
libtpu: 0.0.40
codegen_flags: <defaults>
</compile_context>

<pallas_src>
import random

import jax
import jax.numpy as jnp
from jax.experimental import pallas as pl
from jax.experimental.pallas import tpu as pltpu


# ----------------------------------------------------------------------------
# Fused Seq2Seq kernel: encoder GRU over src, then the whole decode loop.
# ----------------------------------------------------------------------------
def seq2seq_kernel(tf_ref, src_ref, trg_ref,
                   enc_wfold_ref, enc_whh_ref, enc_bih_ref, enc_bhh_ref,
                   dec_fold_ref, dec_whh_ref, dec_bhh_ref,
                   dec_ctxw_ref, dec_ctxb_ref, fch_ref,
                   out_ref, gi_scr):
    LB = src_ref.shape[0]
    SRC_V = enc_wfold_ref.shape[0]
    H = enc_whh_ref.shape[0]
    H3 = 3 * H
    T, B, V = out_ref.shape
    L = LB // B

    # ---------------- encoder ----------------
    # Folded-embedding input-gate matmul for ALL timesteps in one MXU call:
    #   onehot(src) @ (emb_tbl @ W_ih^T)  ==  embed(src) @ W_ih^T
    src_iota = jax.lax.broadcasted_iota(jnp.int32, (LB, SRC_V), 1)
    src_oh = (src_ref[...] == src_iota).astype(jnp.bfloat16)          # [L*B, SRC_V]
    gi_scr[...] = (jnp.dot(src_oh, enc_wfold_ref[...],
                           preferred_element_type=jnp.float32)
                   + enc_bih_ref[...])                                # [L*B, 3H] f32

    def enc_step(t, h):
        start = pl.multiple_of(t * B, B)
        gi = gi_scr[pl.ds(start, B), :]                               # [B, 3H] f32
        gh = (jnp.dot(h.astype(jnp.bfloat16), enc_whh_ref[...],
                      preferred_element_type=jnp.float32)
              + enc_bhh_ref[...])
        rz = jax.nn.sigmoid(gi[:, :2 * H] + gh[:, :2 * H])            # fused r|z
        r, z = rz[:, :H], rz[:, H:]
        n = jnp.tanh(gi[:, 2 * H:] + r * gh[:, 2 * H:])
        return (1.0 - z) * n + z * h

    ctx = jax.lax.fori_loop(0, L, enc_step,
                            jnp.zeros((B, H), jnp.float32),
                            unroll=True)                              # context [B, H]

    # ---------------- decoder ----------------
    # Hoisted context terms: ONE matmul for ctx @ [W_ic | fc_c] (+ [b_ih | fc_b]).
    ctx_terms = (jnp.dot(ctx.astype(jnp.bfloat16), dec_ctxw_ref[...],
                         preferred_element_type=jnp.float32)
                 + dec_ctxb_ref[...])                                 # [B, 3H+V]
    gi_ctx = ctx_terms[:, :H3]
    pred_ctx = ctx_terms[:, H3:]

    lane_iota = jax.lax.broadcasted_iota(jnp.int32, (B, V), 1)

    out_ref[0] = jnp.zeros((B, V), jnp.float32)       # outputs[0] stays zero (ref)

    def dec_step(t, carry):
        h, inp = carry                                # h: [B,H] f32, inp: [B,1] i32

        # One MXU pass gives both the gate-input term and the fc_out embedding term:
        #   onehot @ [emb@W_ie | emb@fc_e]  -> [B, 3H+V]
        onehot = (inp == lane_iota).astype(jnp.bfloat16)
        xw = jnp.dot(onehot, dec_fold_ref[...],
                     preferred_element_type=jnp.float32)

        gi = xw[:, :H3] + gi_ctx
        gh = (jnp.dot(h.astype(jnp.bfloat16), dec_whh_ref[...],
                      preferred_element_type=jnp.float32)
              + dec_bhh_ref[...])
        rz = jax.nn.sigmoid(gi[:, :2 * H] + gh[:, :2 * H])
        r, z = rz[:, :H], rz[:, H:]
        n = jnp.tanh(gi[:, 2 * H:] + r * gh[:, 2 * H:])
        h_new = (1.0 - z) * n + z * h

        pred = (xw[:, H3:]
                + jnp.dot(h_new.astype(jnp.bfloat16), fch_ref[...],
                          preferred_element_type=jnp.float32)
                + pred_ctx)                                           # [B, V] f32
        out_ref[t] = pred

        # Teacher forcing: only run the two cross-lane XLU reductions when the
        # argmax result is actually used.  First-occurrence argmax (int32 lanes)
        # matches torch.argmax tie-breaking.
        def greedy():
            m = jnp.max(pred, axis=-1, keepdims=True)
            return jnp.min(jnp.where(pred == m, lane_iota, V),
                           axis=-1, keepdims=True)                    # [B, 1] i32

        inp_next = jax.lax.cond(tf_ref[t] != 0, lambda: trg_ref[t], greedy)
        return h_new, inp_next

    # hidden starts as the context; first input token is trg[0]
    jax.lax.fori_loop(1, T, dec_step, (ctx, trg_ref[0]), unroll=True)


def run_seq2seq(tf_flags, src_tok, trg_tok, kp):
    T, B, _ = trg_tok.shape
    V = kp["fch"].shape[1]
    H = kp["enc_whh"].shape[0]
    LB = src_tok.shape[0]
    return pl.pallas_call(
        seq2seq_kernel,
        out_shape=jax.ShapeDtypeStruct((T, B, V), jnp.float32),
        in_specs=([pl.BlockSpec(memory_space=pltpu.MemorySpace.SMEM)]
                  + [pl.BlockSpec(memory_space=pltpu.MemorySpace.VMEM)] * 12),
        out_specs=pl.BlockSpec(memory_space=pltpu.MemorySpace.VMEM),
        scratch_shapes=[pltpu.VMEM((LB, 3 * H), jnp.float32)],
    )(tf_flags, src_tok, trg_tok,
      kp["enc_wfold"], kp["enc_whh"], kp["enc_bih"], kp["enc_bhh"],
      kp["dec_fold"], kp["dec_whh"], kp["dec_bhh"],
      kp["dec_ctxw"], kp["dec_ctxb"], kp["fch"])


# ----------------------------------------------------------------------------
# Parameter construction (PyTorch-layout) + embedding/weight folding for the kernel.
# ----------------------------------------------------------------------------
def init_params(key, input_dim, output_dim, emb_dim, hid_dim):
    def u(k, shape, scale=0.1):
        return jax.random.uniform(k, shape, jnp.float32, -scale, scale)

    ks = jax.random.split(key, 12)
    p = {}
    # encoder
    p["enc_emb"] = u(ks[0], (input_dim, emb_dim))
    p["enc_w_ih_t"] = u(ks[1], (emb_dim, 3 * hid_dim))        # (W_ih [3H,E]).T
    p["enc_w_hh_t"] = u(ks[2], (hid_dim, 3 * hid_dim))        # (W_hh [3H,H]).T
    p["enc_b_ih"] = u(ks[3], (1, 3 * hid_dim))
    p["enc_b_hh"] = u(ks[4], (1, 3 * hid_dim))
    # decoder (GRU input is concat(emb, context) -> W_ih.T split into emb/ctx rows)
    p["dec_emb"] = u(ks[5], (output_dim, emb_dim))
    p["dec_w_ie_t"] = u(ks[6], (emb_dim, 3 * hid_dim))
    p["dec_w_ic_t"] = u(ks[7], (hid_dim, 3 * hid_dim))
    p["dec_w_hh_t"] = u(ks[8], (hid_dim, 3 * hid_dim))
    p["dec_b_ih"] = u(ks[9], (1, 3 * hid_dim))
    p["dec_b_hh"] = u(ks[10], (1, 3 * hid_dim))
    # fc_out on concat(emb, hidden, context) -> weight split into three row blocks
    kf = jax.random.split(ks[11], 4)
    p["fc_e_t"] = u(kf[0], (emb_dim, output_dim))
    p["fc_h_t"] = u(kf[1], (hid_dim, output_dim))
    p["fc_c_t"] = u(kf[2], (hid_dim, output_dim))
    p["fc_b"] = u(kf[3], (1, output_dim))
    return p


def fold_params(p):
    """Fold embedding tables into gate/fc weights and cast matmul operands to bf16."""
    bf16 = jnp.bfloat16
    return {
        # encoder: emb_tbl @ W_ih^T  -> onehot(src) @ enc_wfold
        "enc_wfold": jnp.dot(p["enc_emb"], p["enc_w_ih_t"]).astype(bf16),
        "enc_whh": p["enc_w_hh_t"].astype(bf16),
        "enc_bih": p["enc_b_ih"],
        "enc_bhh": p["enc_b_hh"],
        # decoder: [emb@W_ie | emb@fc_e]  -> one onehot matmul per step
        "dec_fold": jnp.concatenate(
            [jnp.dot(p["dec_emb"], p["dec_w_ie_t"]),
             jnp.dot(p["dec_emb"], p["fc_e_t"])], axis=1).astype(bf16),
        "dec_whh": p["dec_w_hh_t"].astype(bf16),
        "dec_bhh": p["dec_b_hh"],
        # merged context weights/biases: ctx @ [W_ic | fc_c] + [b_ih | fc_b]
        "dec_ctxw": jnp.concatenate([p["dec_w_ic_t"], p["fc_c_t"]],
                                    axis=1).astype(bf16),
        "dec_ctxb": jnp.concatenate([p["dec_b_ih"], p["fc_b"]], axis=1),
        "fch": p["fc_h_t"].astype(bf16),
    }


# ----------------------------------------------------------------------------
# Seq2Seq forward (mirrors the PyTorch module's forward), fully jitted:
# a single pallas_call per forward (no host round-trips, no XLA gather).
# ----------------------------------------------------------------------------
@jax.jit
def seq2seq_forward(src, trg, tf_flags, kparams):
    L, B = src.shape
    src_tok = src.reshape(L * B, 1).astype(jnp.int32)       # [L*B, 1]
    trg_tok = trg[:, :, None].astype(jnp.int32)             # [trg_len, B, 1]
    return run_seq2seq(tf_flags, src_tok, trg_tok, kparams)  # [trg_len, B, V]


def make_teacher_forcing_flags(trg_len, ratio, seed=0):
    # TODO(synk): host-side Python RNG (random.random per step) mirrors the
    # reference's data-independent coin flips; passed to the kernel as data.
    random.seed(seed)
    flags = [0]                                              # index 0 unused
    for _ in range(1, trg_len):
        flags.append(1 if random.random() < ratio else 0)
    return jnp.array(flags, dtype=jnp.int32)


if __name__ == "__main__":
    INPUT_DIM = 128    # src vocab
    OUTPUT_DIM = 128   # trg vocab
    EMB_DIM = 128
    HID_DIM = 128
    SRC_LEN = 8
    TRG_LEN = 8
    BATCH = 8

    key = jax.random.PRNGKey(0)
    kp, ks, kt = jax.random.split(key, 3)
    params = init_params(kp, INPUT_DIM, OUTPUT_DIM, EMB_DIM, HID_DIM)
    kernel_params = fold_params(params)

    src = jax.random.randint(ks, (SRC_LEN, BATCH), 0, INPUT_DIM, dtype=jnp.int32)
    trg = jax.random.randint(kt, (TRG_LEN, BATCH), 0, OUTPUT_DIM, dtype=jnp.int32)
    tf_flags = make_teacher_forcing_flags(TRG_LEN, ratio=0.5, seed=0)

    outputs = seq2seq_forward(src, trg, tf_flags, kernel_params)
    outputs = jax.block_until_ready(outputs)
    assert outputs.shape == (TRG_LEN, BATCH, OUTPUT_DIM)
    assert bool(jnp.all(jnp.isfinite(outputs)))
    # outputs[0] must stay zero exactly as in the reference module
    assert bool(jnp.all(outputs[0] == 0.0))
    print("KERNEL_OK")
</pallas_src>

<mosaic_0001>
module attributes {stable_mosaic.version = 11 : i64} {
  func.func @seq2seq_kernel(%arg0: memref<8xi32, #tpu.memory_space<smem>>, %arg1: memref<64x1xi32, #tpu.memory_space<vmem>>, %arg2: memref<8x8x1xi32, #tpu.memory_space<vmem>>, %arg3: memref<128x384xbf16, #tpu.memory_space<vmem>>, %arg4: memref<128x384xbf16, #tpu.memory_space<vmem>>, %arg5: memref<1x384xf32, #tpu.memory_space<vmem>>, %arg6: memref<1x384xf32, #tpu.memory_space<vmem>>, %arg7: memref<128x512xbf16, #tpu.memory_space<vmem>>, %arg8: memref<128x384xbf16, #tpu.memory_space<vmem>>, %arg9: memref<1x384xf32, #tpu.memory_space<vmem>>, %arg10: memref<128x512xbf16, #tpu.memory_space<vmem>>, %arg11: memref<1x512xf32, #tpu.memory_space<vmem>>, %arg12: memref<128x128xbf16, #tpu.memory_space<vmem>>, %arg13: memref<8x8x128xf32, #tpu.memory_space<vmem>>, %arg14: memref<64x384xf32, #tpu.memory_space<vmem>>) attributes {dimension_semantics = [], scalar_prefetch = 0 : i64, scratch_operands = 1 : i64, tpu.core_type = #tpu.core_type<tc>} {
    %0 = tpu.iota {dimensions = array<i32: 1>} : vector<64x128xi32>
    %c0 = arith.constant 0 : index
    %c0_0 = arith.constant 0 : index
    %1 = vector.load %arg1[%c0, %c0_0] : memref<64x1xi32, #tpu.memory_space<vmem>>, vector<64x1xi32>
    %2 = vector.broadcast %1 : vector<64x1xi32> to vector<64x128xi32>
    %3 = arith.cmpi eq, %2, %0 : vector<64x128xi32>
    %4 = arith.extui %3 : vector<64x128xi1> to vector<64x128xi32>
    %5 = arith.sitofp %4 : vector<64x128xi32> to vector<64x128xf32>
    %6 = arith.truncf %5 : vector<64x128xf32> to vector<64x128xbf16>
    %c0_1 = arith.constant 0 : index
    %c0_2 = arith.constant 0 : index
    %7 = vector.load %arg3[%c0_1, %c0_2] : memref<128x384xbf16, #tpu.memory_space<vmem>>, vector<128x384xbf16>
    %cst = arith.constant dense<0.000000e+00> : vector<64x384xf32>
    %8 = tpu.matmul %6, %7, %cst {dimension_numbers = #tpu.dot_dimension_numbers<[1], [0], [0], [1], [0, 0, 1, 1], [], []>} : vector<64x128xbf16>, vector<128x384xbf16>, vector<64x384xf32> -> vector<64x384xf32>
    %c0_3 = arith.constant 0 : index
    %c0_4 = arith.constant 0 : index
    %9 = vector.load %arg5[%c0_3, %c0_4] : memref<1x384xf32, #tpu.memory_space<vmem>>, vector<1x384xf32>
    %10 = vector.broadcast %9 : vector<1x384xf32> to vector<64x384xf32>
    %11 = arith.addf %8, %10 : vector<64x384xf32>
    %c0_5 = arith.constant 0 : index
    %c0_6 = arith.constant 0 : index
    %12 = vector.load %arg14[%c0_5, %c0_6] : memref<64x384xf32, #tpu.memory_space<vmem>>, vector<64x384xf32>
    tpu.vector_store %arg14[%c0_5, %c0_6], %11 {strides = array<i32>} : memref<64x384xf32, #tpu.memory_space<vmem>>, vector<64x384xf32>,
    %cst_7 = arith.constant 0.000000e+00 : f32
    %13 = vector.broadcast %cst_7 : f32 to vector<8x128xf32>
    %c0_i32 = arith.constant 0 : i32
    %c8_i32 = arith.constant 8 : i32
    %14 = arith.muli %c0_i32, %c8_i32 : i32
    %15 = tpu.assume_multiple %14, 8 : i32
    %16 = arith.index_cast %15 : i32 to index
    %c0_8 = arith.constant 0 : index
    %17 = vector.load %arg14[%16, %c0_8] : memref<64x384xf32, #tpu.memory_space<vmem>>, vector<8x384xf32>
    %18 = arith.truncf %13 : vector<8x128xf32> to vector<8x128xbf16>
    %c0_9 = arith.constant 0 : index
    %c0_10 = arith.constant 0 : index
    %19 = vector.load %arg4[%c0_9, %c0_10] : memref<128x384xbf16, #tpu.memory_space<vmem>>, vector<128x384xbf16>
    %cst_11 = arith.constant dense<0.000000e+00> : vector<8x384xf32>
    %20 = tpu.matmul %18, %19, %cst_11 {dimension_numbers = #tpu.dot_dimension_numbers<[1], [0], [0], [1], [0, 0, 1, 1], [], []>} : vector<8x128xbf16>, vector<128x384xbf16>, vector<8x384xf32> -> vector<8x384xf32>
    %c0_12 = arith.constant 0 : index
    %c0_13 = arith.constant 0 : index
    %21 = vector.load %arg6[%c0_12, %c0_13] : memref<1x384xf32, #tpu.memory_space<vmem>>, vector<1x384xf32>
    %22 = vector.broadcast %21 : vector<1x384xf32> to vector<8x384xf32>
    %23 = arith.addf %20, %22 : vector<8x384xf32>
    %24 = vector.extract_strided_slice %17 {offsets = [0, 0], sizes = [8, 256], strides = [1, 1]} : vector<8x384xf32> to vector<8x256xf32>
    %25 = vector.extract_strided_slice %23 {offsets = [0, 0], sizes = [8, 256], strides = [1, 1]} : vector<8x384xf32> to vector<8x256xf32>
    %26 = arith.addf %24, %25 : vector<8x256xf32>
    %27 = arith.negf %26 : vector<8x256xf32>
    %28 = math.exp %27 : vector<8x256xf32>
    %cst_14 = arith.constant 1.000000e+00 : f32
    %29 = vector.broadcast %cst_14 : f32 to vector<8x256xf32>
    %30 = arith.addf %29, %28 : vector<8x256xf32>
    %31 = arith.divf %29, %30 : vector<8x256xf32>
    %32 = vector.extract_strided_slice %31 {offsets = [0, 0], sizes = [8, 128], strides = [1, 1]} : vector<8x256xf32> to vector<8x128xf32>
    %33 = vector.extract_strided_slice %31 {offsets = [0, 128], sizes = [8, 128], strides = [1, 1]} : vector<8x256xf32> to vector<8x128xf32>
    %34 = vector.extract_strided_slice %17 {offsets = [0, 256], sizes = [8, 128], strides = [1, 1]} : vector<8x384xf32> to vector<8x128xf32>
    %35 = vector.extract_strided_slice %23 {offsets = [0, 256], sizes = [8, 128], strides = [1, 1]} : vector<8x384xf32> to vector<8x128xf32>
    %36 = arith.mulf %32, %35 : vector<8x128xf32>
    %37 = arith.addf %34, %36 : vector<8x128xf32>
    %38 = math.tanh %37 : vector<8x128xf32>
    %cst_15 = arith.constant 1.000000e+00 : f32
    %39 = vector.broadcast %cst_15 : f32 to vector<8x128xf32>
    %40 = arith.subf %39, %33 : vector<8x128xf32>
    %41 = arith.mulf %40, %38 : vector<8x128xf32>
    %42 = arith.mulf %33, %13 : vector<8x128xf32>
    %43 = arith.addf %41, %42 : vector<8x128xf32>
    %c1_i32 = arith.constant 1 : i32
    %c8_i32_16 = arith.constant 8 : i32
    %44 = arith.muli %c1_i32, %c8_i32_16 : i32
    %45 = tpu.assume_multiple %44, 8 : i32
    %46 = arith.index_cast %45 : i32 to index
    %c0_17 = arith.constant 0 : index
    %47 = vector.load %arg14[%46, %c0_17] : memref<64x384xf32, #tpu.memory_space<vmem>>, vector<8x384xf32>
    %48 = arith.truncf %43 : vector<8x128xf32> to vector<8x128xbf16>
    %c0_18 = arith.constant 0 : index
    %c0_19 = arith.constant 0 : index
    %49 = vector.load %arg4[%c0_18, %c0_19] : memref<128x384xbf16, #tpu.memory_space<vmem>>, vector<128x384xbf16>
    %cst_20 = arith.constant dense<0.000000e+00> : vector<8x384xf32>
    %50 = tpu.matmul %48, %49, %cst_20 {dimension_numbers = #tpu.dot_dimension_numbers<[1], [0], [0], [1], [0, 0, 1, 1], [], []>} : vector<8x128xbf16>, vector<128x384xbf16>, vector<8x384xf32> -> vector<8x384xf32>
    %c0_21 = arith.constant 0 : index
    %c0_22 = arith.constant 0 : index
    %51 = vector.load %arg6[%c0_21, %c0_22] : memref<1x384xf32, #tpu.memory_space<vmem>>, vector<1x384xf32>
    %52 = vector.broadcast %51 : vector<1x384xf32> to vector<8x384xf32>
    %53 = arith.addf %50, %52 : vector<8x384xf32>
    %54 = vector.extract_strided_slice %47 {offsets = [0, 0], sizes = [8, 256], strides = [1, 1]} : vector<8x384xf32> to vector<8x256xf32>
    %55 = vector.extract_strided_slice %53 {offsets = [0, 0], sizes = [8, 256], strides = [1, 1]} : vector<8x384xf32> to vector<8x256xf32>
    %56 = arith.addf %54, %55 : vector<8x256xf32>
    %57 = arith.negf %56 : vector<8x256xf32>
    %58 = math.exp %57 : vector<8x256xf32>
    %cst_23 = arith.constant 1.000000e+00 : f32
    %59 = vector.broadcast %cst_23 : f32 to vector<8x256xf32>
    %60 = arith.addf %59, %58 : vector<8x256xf32>
    %61 = arith.divf %59, %60 : vector<8x256xf32>
    %62 = vector.extract_strided_slice %61 {offsets = [0, 0], sizes = [8, 128], strides = [1, 1]} : vector<8x256xf32> to vector<8x128xf32>
    %63 = vector.extract_strided_slice %61 {offsets = [0, 128], sizes = [8, 128], strides = [1, 1]} : vector<8x256xf32> to vector<8x128xf32>
    %64 = vector.extract_strided_slice %47 {offsets = [0, 256], sizes = [8, 128], strides = [1, 1]} : vector<8x384xf32> to vector<8x128xf32>
    %65 = vector.extract_strided_slice %53 {offsets = [0, 256], sizes = [8, 128], strides = [1, 1]} : vector<8x384xf32> to vector<8x128xf32>
    %66 = arith.mulf %62, %65 : vector<8x128xf32>
    %67 = arith.addf %64, %66 : vector<8x128xf32>
    %68 = math.tanh %67 : vector<8x128xf32>
    %cst_24 = arith.constant 1.000000e+00 : f32
    %69 = vector.broadcast %cst_24 : f32 to vector<8x128xf32>
    %70 = arith.subf %69, %63 : vector<8x128xf32>
    %71 = arith.mulf %70, %68 : vector<8x128xf32>
    %72 = arith.mulf %63, %43 : vector<8x128xf32>
    %73 = arith.addf %71, %72 : vector<8x128xf32>
    %c2_i32 = arith.constant 2 : i32
    %c8_i32_25 = arith.constant 8 : i32
    %74 = arith.muli %c2_i32, %c8_i32_25 : i32
    %75 = tpu.assume_multiple %74, 8 : i32
    %76 = arith.index_cast %75 : i32 to index
    %c0_26 = arith.constant 0 : index
    %77 = vector.load %arg14[%76, %c0_26] : memref<64x384xf32, #tpu.memory_space<vmem>>, vector<8x384xf32>
    %78 = arith.truncf %73 : vector<8x128xf32> to vector<8x128xbf16>
    %c0_27 = arith.constant 0 : index
    %c0_28 = arith.constant 0 : index
    %79 = vector.load %arg4[%c0_27, %c0_28] : memref<128x384xbf16, #tpu.memory_space<vmem>>, vector<128x384xbf16>
    %cst_29 = arith.constant dense<0.000000e+00> : vector<8x384xf32>
    %80 = tpu.matmul %78, %79, %cst_29 {dimension_numbers = #tpu.dot_dimension_numbers<[1], [0], [0], [1], [0, 0, 1, 1], [], []>} : vector<8x128xbf16>, vector<128x384xbf16>, vector<8x384xf32> -> vector<8x384xf32>
    %c0_30 = arith.constant 0 : index
    %c0_31 = arith.constant 0 : index
    %81 = vector.load %arg6[%c0_30, %c0_31] : memref<1x384xf32, #tpu.memory_space<vmem>>, vector<1x384xf32>
    %82 = vector.broadcast %81 : vector<1x384xf32> to vector<8x384xf32>
    %83 = arith.addf %80, %82 : vector<8x384xf32>
    %84 = vector.extract_strided_slice %77 {offsets = [0, 0], sizes = [8, 256], strides = [1, 1]} : vector<8x384xf32> to vector<8x256xf32>
    %85 = vector.extract_strided_slice %83 {offsets = [0, 0], sizes = [8, 256], strides = [1, 1]} : vector<8x384xf32> to vector<8x256xf32>
    %86 = arith.addf %84, %85 : vector<8x256xf32>
    %87 = arith.negf %86 : vector<8x256xf32>
    %88 = math.exp %87 : vector<8x256xf32>
    %cst_32 = arith.constant 1.000000e+00 : f32
    %89 = vector.broadcast %cst_32 : f32 to vector<8x256xf32>
    %90 = arith.addf %89, %88 : vector<8x256xf32>
    %91 = arith.divf %89, %90 : vector<8x256xf32>
    %92 = vector.extract_strided_slice %91 {offsets = [0, 0], sizes = [8, 128], strides = [1, 1]} : vector<8x256xf32> to vector<8x128xf32>
    %93 = vector.extract_strided_slice %91 {offsets = [0, 128], sizes = [8, 128], strides = [1, 1]} : vector<8x256xf32> to vector<8x128xf32>
    %94 = vector.extract_strided_slice %77 {offsets = [0, 256], sizes = [8, 128], strides = [1, 1]} : vector<8x384xf32> to vector<8x128xf32>
    %95 = vector.extract_strided_slice %83 {offsets = [0, 256], sizes = [8, 128], strides = [1, 1]} : vector<8x384xf32> to vector<8x128xf32>
    %96 = arith.mulf %92, %95 : vector<8x128xf32>
    %97 = arith.addf %94, %96 : vector<8x128xf32>
    %98 = math.tanh %97 : vector<8x128xf32>
    %cst_33 = arith.constant 1.000000e+00 : f32
    %99 = vector.broadcast %cst_33 : f32 to vector<8x128xf32>
    %100 = arith.subf %99, %93 : vector<8x128xf32>
    %101 = arith.mulf %100, %98 : vector<8x128xf32>
    %102 = arith.mulf %93, %73 : vector<8x128xf32>
    %103 = arith.addf %101, %102 : vector<8x128xf32>
    %c3_i32 = arith.constant 3 : i32
    %c8_i32_34 = arith.constant 8 : i32
    %104 = arith.muli %c3_i32, %c8_i32_34 : i32
    %105 = tpu.assume_multiple %104, 8 : i32
    %106 = arith.index_cast %105 : i32 to index
    %c0_35 = arith.constant 0 : index
    %107 = vector.load %arg14[%106, %c0_35] : memref<64x384xf32, #tpu.memory_space<vmem>>, vector<8x384xf32>
    %108 = arith.truncf %103 : vector<8x128xf32> to vector<8x128xbf16>
    %c0_36 = arith.constant 0 : index
    %c0_37 = arith.constant 0 : index
    %109 = vector.load %arg4[%c0_36, %c0_37] : memref<128x384xbf16, #tpu.memory_space<vmem>>, vector<128x384xbf16>
    %cst_38 = arith.constant dense<0.000000e+00> : vector<8x384xf32>
    %110 = tpu.matmul %108, %109, %cst_38 {dimension_numbers = #tpu.dot_dimension_numbers<[1], [0], [0], [1], [0, 0, 1, 1], [], []>} : vector<8x128xbf16>, vector<128x384xbf16>, vector<8x384xf32> -> vector<8x384xf32>
    %c0_39 = arith.constant 0 : index
    %c0_40 = arith.constant 0 : index
    %111 = vector.load %arg6[%c0_39, %c0_40] : memref<1x384xf32, #tpu.memory_space<vmem>>, vector<1x384xf32>
    %112 = vector.broadcast %111 : vector<1x384xf32> to vector<8x384xf32>
    %113 = arith.addf %110, %112 : vector<8x384xf32>
    %114 = vector.extract_strided_slice %107 {offsets = [0, 0], sizes = [8, 256], strides = [1, 1]} : vector<8x384xf32> to vector<8x256xf32>
    %115 = vector.extract_strided_slice %113 {offsets = [0, 0], sizes = [8, 256], strides = [1, 1]} : vector<8x384xf32> to vector<8x256xf32>
    %116 = arith.addf %114, %115 : vector<8x256xf32>
    %117 = arith.negf %116 : vector<8x256xf32>
    %118 = math.exp %117 : vector<8x256xf32>
    %cst_41 = arith.constant 1.000000e+00 : f32
    %119 = vector.broadcast %cst_41 : f32 to vector<8x256xf32>
    %120 = arith.addf %119, %118 : vector<8x256xf32>
    %121 = arith.divf %119, %120 : vector<8x256xf32>
    %122 = vector.extract_strided_slice %121 {offsets = [0, 0], sizes = [8, 128], strides = [1, 1]} : vector<8x256xf32> to vector<8x128xf32>
    %123 = vector.extract_strided_slice %121 {offsets = [0, 128], sizes = [8, 128], strides = [1, 1]} : vector<8x256xf32> to vector<8x128xf32>
    %124 = vector.extract_strided_slice %107 {offsets = [0, 256], sizes = [8, 128], strides = [1, 1]} : vector<8x384xf32> to vector<8x128xf32>
    %125 = vector.extract_strided_slice %113 {offsets = [0, 256], sizes = [8, 128], strides = [1, 1]} : vector<8x384xf32> to vector<8x128xf32>
    %126 = arith.mulf %122, %125 : vector<8x128xf32>
    %127 = arith.addf %124, %126 : vector<8x128xf32>
    %128 = math.tanh %127 : vector<8x128xf32>
    %cst_42 = arith.constant 1.000000e+00 : f32
    %129 = vector.broadcast %cst_42 : f32 to vector<8x128xf32>
    %130 = arith.subf %129, %123 : vector<8x128xf32>
    %131 = arith.mulf %130, %128 : vector<8x128xf32>
    %132 = arith.mulf %123, %103 : vector<8x128xf32>
    %133 = arith.addf %131, %132 : vector<8x128xf32>
    %c4_i32 = arith.constant 4 : i32
    %c8_i32_43 = arith.constant 8 : i32
    %134 = arith.muli %c4_i32, %c8_i32_43 : i32
    %135 = tpu.assume_multiple %134, 8 : i32
    %136 = arith.index_cast %135 : i32 to index
    %c0_44 = arith.constant 0 : index
    %137 = vector.load %arg14[%136, %c0_44] : memref<64x384xf32, #tpu.memory_space<vmem>>, vector<8x384xf32>
    %138 = arith.truncf %133 : vector<8x128xf32> to vector<8x128xbf16>
    %c0_45 = arith.constant 0 : index
    %c0_46 = arith.constant 0 : index
    %139 = vector.load %arg4[%c0_45, %c0_46] : memref<128x384xbf16, #tpu.memory_space<vmem>>, vector<128x384xbf16>
    %cst_47 = arith.constant dense<0.000000e+00> : vector<8x384xf32>
    %140 = tpu.matmul %138, %139, %cst_47 {dimension_numbers = #tpu.dot_dimension_numbers<[1], [0], [0], [1], [0, 0, 1, 1], [], []>} : vector<8x128xbf16>, vector<128x384xbf16>, vector<8x384xf32> -> vector<8x384xf32>
    %c0_48 = arith.constant 0 : index
    %c0_49 = arith.constant 0 : index
    %141 = vector.load %arg6[%c0_48, %c0_49] : memref<1x384xf32, #tpu.memory_space<vmem>>, vector<1x384xf32>
    %142 = vector.broadcast %141 : vector<1x384xf32> to vector<8x384xf32>
    %143 = arith.addf %140, %142 : vector<8x384xf32>
    %144 = vector.extract_strided_slice %137 {offsets = [0, 0], sizes = [8, 256], strides = [1, 1]} : vector<8x384xf32> to vector<8x256xf32>
    %145 = vector.extract_strided_slice %143 {offsets = [0, 0], sizes = [8, 256], strides = [1, 1]} : vector<8x384xf32> to vector<8x256xf32>
    %146 = arith.addf %144, %145 : vector<8x256xf32>
    %147 = arith.negf %146 : vector<8x256xf32>
    %148 = math.exp %147 : vector<8x256xf32>
    %cst_50 = arith.constant 1.000000e+00 : f32
    %149 = vector.broadcast %cst_50 : f32 to vector<8x256xf32>
    %150 = arith.addf %149, %148 : vector<8x256xf32>
    %151 = arith.divf %149, %150 : vector<8x256xf32>
    %152 = vector.extract_strided_slice %151 {offsets = [0, 0], sizes = [8, 128], strides = [1, 1]} : vector<8x256xf32> to vector<8x128xf32>
    %153 = vector.extract_strided_slice %151 {offsets = [0, 128], sizes = [8, 128], strides = [1, 1]} : vector<8x256xf32> to vector<8x128xf32>
    %154 = vector.extract_strided_slice %137 {offsets = [0, 256], sizes = [8, 128], strides = [1, 1]} : vector<8x384xf32> to vector<8x128xf32>
    %155 = vector.extract_strided_slice %143 {offsets = [0, 256], sizes = [8, 128], strides = [1, 1]} : vector<8x384xf32> to vector<8x128xf32>
    %156 = arith.mulf %152, %155 : vector<8x128xf32>
    %157 = arith.addf %154, %156 : vector<8x128xf32>
    %158 = math.tanh %157 : vector<8x128xf32>
    %cst_51 = arith.constant 1.000000e+00 : f32
    %159 = vector.broadcast %cst_51 : f32 to vector<8x128xf32>
    %160 = arith.subf %159, %153 : vector<8x128xf32>
    %161 = arith.mulf %160, %158 : vector<8x128xf32>
    %162 = arith.mulf %153, %133 : vector<8x128xf32>
    %163 = arith.addf %161, %162 : vector<8x128xf32>
    %c5_i32 = arith.constant 5 : i32
    %c8_i32_52 = arith.constant 8 : i32
    %164 = arith.muli %c5_i32, %c8_i32_52 : i32
    %165 = tpu.assume_multiple %164, 8 : i32
    %166 = arith.index_cast %165 : i32 to index
    %c0_53 = arith.constant 0 : index
    %167 = vector.load %arg14[%166, %c0_53] : memref<64x384xf32, #tpu.memory_space<vmem>>, vector<8x384xf32>
    %168 = arith.truncf %163 : vector<8x128xf32> to vector<8x128xbf16>
    %c0_54 = arith.constant 0 : index
    %c0_55 = arith.constant 0 : index
    %169 = vector.load %arg4[%c0_54, %c0_55] : memref<128x384xbf16, #tpu.memory_space<vmem>>, vector<128x384xbf16>
    %cst_56 = arith.constant dense<0.000000e+00> : vector<8x384xf32>
    %170 = tpu.matmul %168, %169, %cst_56 {dimension_numbers = #tpu.dot_dimension_numbers<[1], [0], [0], [1], [0, 0, 1, 1], [], []>} : vector<8x128xbf16>, vector<128x384xbf16>, vector<8x384xf32> -> vector<8x384xf32>
    %c0_57 = arith.constant 0 : index
    %c0_58 = arith.constant 0 : index
    %171 = vector.load %arg6[%c0_57, %c0_58] : memref<1x384xf32, #tpu.memory_space<vmem>>, vector<1x384xf32>
    %172 = vector.broadcast %171 : vector<1x384xf32> to vector<8x384xf32>
    %173 = arith.addf %170, %172 : vector<8x384xf32>
    %174 = vector.extract_strided_slice %167 {offsets = [0, 0], sizes = [8, 256], strides = [1, 1]} : vector<8x384xf32> to vector<8x256xf32>
    %175 = vector.extract_strided_slice %173 {offsets = [0, 0], sizes = [8, 256], strides = [1, 1]} : vector<8x384xf32> to vector<8x256xf32>
    %176 = arith.addf %174, %175 : vector<8x256xf32>
    %177 = arith.negf %176 : vector<8x256xf32>
    %178 = math.exp %177 : vector<8x256xf32>
    %cst_59 = arith.constant 1.000000e+00 : f32
    %179 = vector.broadcast %cst_59 : f32 to vector<8x256xf32>
    %180 = arith.addf %179, %178 : vector<8x256xf32>
    %181 = arith.divf %179, %180 : vector<8x256xf32>
    %182 = vector.extract_strided_slice %181 {offsets = [0, 0], sizes = [8, 128], strides = [1, 1]} : vector<8x256xf32> to vector<8x128xf32>
    %183 = vector.extract_strided_slice %181 {offsets = [0, 128], sizes = [8, 128], strides = [1, 1]} : vector<8x256xf32> to vector<8x128xf32>
    %184 = vector.extract_strided_slice %167 {offsets = [0, 256], sizes = [8, 128], strides = [1, 1]} : vector<8x384xf32> to vector<8x128xf32>
    %185 = vector.extract_strided_slice %173 {offsets = [0, 256], sizes = [8, 128], strides = [1, 1]} : vector<8x384xf32> to vector<8x128xf32>
    %186 = arith.mulf %182, %185 : vector<8x128xf32>
    %187 = arith.addf %184, %186 : vector<8x128xf32>
    %188 = math.tanh %187 : vector<8x128xf32>
    %cst_60 = arith.constant 1.000000e+00 : f32
    %189 = vector.broadcast %cst_60 : f32 to vector<8x128xf32>
    %190 = arith.subf %189, %183 : vector<8x128xf32>
    %191 = arith.mulf %190, %188 : vector<8x128xf32>
    %192 = arith.mulf %183, %163 : vector<8x128xf32>
    %193 = arith.addf %191, %192 : vector<8x128xf32>
    %c6_i32 = arith.constant 6 : i32
    %c8_i32_61 = arith.constant 8 : i32
    %194 = arith.muli %c6_i32, %c8_i32_61 : i32
    %195 = tpu.assume_multiple %194, 8 : i32
    %196 = arith.index_cast %195 : i32 to index
    %c0_62 = arith.constant 0 : index
    %197 = vector.load %arg14[%196, %c0_62] : memref<64x384xf32, #tpu.memory_space<vmem>>, vector<8x384xf32>
    %198 = arith.truncf %193 : vector<8x128xf32> to vector<8x128xbf16>
    %c0_63 = arith.constant 0 : index
    %c0_64 = arith.constant 0 : index
    %199 = vector.load %arg4[%c0_63, %c0_64] : memref<128x384xbf16, #tpu.memory_space<vmem>>, vector<128x384xbf16>
    %cst_65 = arith.constant dense<0.000000e+00> : vector<8x384xf32>
    %200 = tpu.matmul %198, %199, %cst_65 {dimension_numbers = #tpu.dot_dimension_numbers<[1], [0], [0], [1], [0, 0, 1, 1], [], []>} : vector<8x128xbf16>, vector<128x384xbf16>, vector<8x384xf32> -> vector<8x384xf32>
    %c0_66 = arith.constant 0 : index
    %c0_67 = arith.constant 0 : index
    %201 = vector.load %arg6[%c0_66, %c0_67] : memref<1x384xf32, #tpu.memory_space<vmem>>, vector<1x384xf32>
    %202 = vector.broadcast %201 : vector<1x384xf32> to vector<8x384xf32>
    %203 = arith.addf %200, %202 : vector<8x384xf32>
    %204 = vector.extract_strided_slice %197 {offsets = [0, 0], sizes = [8, 256], strides = [1, 1]} : vector<8x384xf32> to vector<8x256xf32>
    %205 = vector.extract_strided_slice %203 {offsets = [0, 0], sizes = [8, 256], strides = [1, 1]} : vector<8x384xf32> to vector<8x256xf32>
    %206 = arith.addf %204, %205 : vector<8x256xf32>
    %207 = arith.negf %206 : vector<8x256xf32>
    %208 = math.exp %207 : vector<8x256xf32>
    %cst_68 = arith.constant 1.000000e+00 : f32
    %209 = vector.broadcast %cst_68 : f32 to vector<8x256xf32>
    %210 = arith.addf %209, %208 : vector<8x256xf32>
    %211 = arith.divf %209, %210 : vector<8x256xf32>
    %212 = vector.extract_strided_slice %211 {offsets = [0, 0], sizes = [8, 128], strides = [1, 1]} : vector<8x256xf32> to vector<8x128xf32>
    %213 = vector.extract_strided_slice %211 {offsets = [0, 128], sizes = [8, 128], strides = [1, 1]} : vector<8x256xf32> to vector<8x128xf32>
    %214 = vector.extract_strided_slice %197 {offsets = [0, 256], sizes = [8, 128], strides = [1, 1]} : vector<8x384xf32> to vector<8x128xf32>
    %215 = vector.extract_strided_slice %203 {offsets = [0, 256], sizes = [8, 128], strides = [1, 1]} : vector<8x384xf32> to vector<8x128xf32>
    %216 = arith.mulf %212, %215 : vector<8x128xf32>
    %217 = arith.addf %214, %216 : vector<8x128xf32>
    %218 = math.tanh %217 : vector<8x128xf32>
    %cst_69 = arith.constant 1.000000e+00 : f32
    %219 = vector.broadcast %cst_69 : f32 to vector<8x128xf32>
    %220 = arith.subf %219, %213 : vector<8x128xf32>
    %221 = arith.mulf %220, %218 : vector<8x128xf32>
    %222 = arith.mulf %213, %193 : vector<8x128xf32>
    %223 = arith.addf %221, %222 : vector<8x128xf32>
    %c7_i32 = arith.constant 7 : i32
    %c8_i32_70 = arith.constant 8 : i32
    %224 = arith.muli %c7_i32, %c8_i32_70 : i32
    %225 = tpu.assume_multiple %224, 8 : i32
    %226 = arith.index_cast %225 : i32 to index
    %c0_71 = arith.constant 0 : index
    %227 = vector.load %arg14[%226, %c0_71] : memref<64x384xf32, #tpu.memory_space<vmem>>, vector<8x384xf32>
    %228 = arith.truncf %223 : vector<8x128xf32> to vector<8x128xbf16>
    %c0_72 = arith.constant 0 : index
    %c0_73 = arith.constant 0 : index
    %229 = vector.load %arg4[%c0_72, %c0_73] : memref<128x384xbf16, #tpu.memory_space<vmem>>, vector<128x384xbf16>
    %cst_74 = arith.constant dense<0.000000e+00> : vector<8x384xf32>
    %230 = tpu.matmul %228, %229, %cst_74 {dimension_numbers = #tpu.dot_dimension_numbers<[1], [0], [0], [1], [0, 0, 1, 1], [], []>} : vector<8x128xbf16>, vector<128x384xbf16>, vector<8x384xf32> -> vector<8x384xf32>
    %c0_75 = arith.constant 0 : index
    %c0_76 = arith.constant 0 : index
    %231 = vector.load %arg6[%c0_75, %c0_76] : memref<1x384xf32, #tpu.memory_space<vmem>>, vector<1x384xf32>
    %232 = vector.broadcast %231 : vector<1x384xf32> to vector<8x384xf32>
    %233 = arith.addf %230, %232 : vector<8x384xf32>
    %234 = vector.extract_strided_slice %227 {offsets = [0, 0], sizes = [8, 256], strides = [1, 1]} : vector<8x384xf32> to vector<8x256xf32>
    %235 = vector.extract_strided_slice %233 {offsets = [0, 0], sizes = [8, 256], strides = [1, 1]} : vector<8x384xf32> to vector<8x256xf32>
    %236 = arith.addf %234, %235 : vector<8x256xf32>
    %237 = arith.negf %236 : vector<8x256xf32>
    %238 = math.exp %237 : vector<8x256xf32>
    %cst_77 = arith.constant 1.000000e+00 : f32
    %239 = vector.broadcast %cst_77 : f32 to vector<8x256xf32>
    %240 = arith.addf %239, %238 : vector<8x256xf32>
    %241 = arith.divf %239, %240 : vector<8x256xf32>
    %242 = vector.extract_strided_slice %241 {offsets = [0, 0], sizes = [8, 128], strides = [1, 1]} : vector<8x256xf32> to vector<8x128xf32>
    %243 = vector.extract_strided_slice %241 {offsets = [0, 128], sizes = [8, 128], strides = [1, 1]} : vector<8x256xf32> to vector<8x128xf32>
    %244 = vector.extract_strided_slice %227 {offsets = [0, 256], sizes = [8, 128], strides = [1, 1]} : vector<8x384xf32> to vector<8x128xf32>
    %245 = vector.extract_strided_slice %233 {offsets = [0, 256], sizes = [8, 128], strides = [1, 1]} : vector<8x384xf32> to vector<8x128xf32>
    %246 = arith.mulf %242, %245 : vector<8x128xf32>
    %247 = arith.addf %244, %246 : vector<8x128xf32>
    %248 = math.tanh %247 : vector<8x128xf32>
    %cst_78 = arith.constant 1.000000e+00 : f32
    %249 = vector.broadcast %cst_78 : f32 to vector<8x128xf32>
    %250 = arith.subf %249, %243 : vector<8x128xf32>
    %251 = arith.mulf %250, %248 : vector<8x128xf32>
    %252 = arith.mulf %243, %223 : vector<8x128xf32>
    %253 = arith.addf %251, %252 : vector<8x128xf32>
    %c8_i32_79 = arith.constant 8 : i32
    %254 = arith.truncf %253 : vector<8x128xf32> to vector<8x128xbf16>
    %c0_80 = arith.constant 0 : index
    %c0_81 = arith.constant 0 : index
    %255 = vector.load %arg10[%c0_80, %c0_81] : memref<128x512xbf16, #tpu.memory_space<vmem>>, vector<128x512xbf16>
    %cst_82 = arith.constant dense<0.000000e+00> : vector<8x512xf32>
    %256 = tpu.matmul %254, %255, %cst_82 {dimension_numbers = #tpu.dot_dimension_numbers<[1], [0], [0], [1], [0, 0, 1, 1], [], []>} : vector<8x128xbf16>, vector<128x512xbf16>, vector<8x512xf32> -> vector<8x512xf32>
    %c0_83 = arith.constant 0 : index
    %c0_84 = arith.constant 0 : index
    %257 = vector.load %arg11[%c0_83, %c0_84] : memref<1x512xf32, #tpu.memory_space<vmem>>, vector<1x512xf32>
    %258 = vector.broadcast %257 : vector<1x512xf32> to vector<8x512xf32>
    %259 = arith.addf %256, %258 : vector<8x512xf32>
    %260 = vector.extract_strided_slice %259 {offsets = [0, 0], sizes = [8, 384], strides = [1, 1]} : vector<8x512xf32> to vector<8x384xf32>
    %261 = vector.extract_strided_slice %259 {offsets = [0, 384], sizes = [8, 128], strides = [1, 1]} : vector<8x512xf32> to vector<8x128xf32>
    %262 = tpu.iota {dimensions = array<i32: 1>} : vector<8x128xi32>
    %cst_85 = arith.constant 0.000000e+00 : f32
    %263 = vector.broadcast %cst_85 : f32 to vector<8x128xf32>
    %c0_86 = arith.constant 0 : index
    %c0_87 = arith.constant 0 : index
    %c0_88 = arith.constant 0 : index
    %264 = vector.load %arg13[%c0_86, %c0_87, %c0_88] : memref<8x8x128xf32, #tpu.memory_space<vmem>>, vector<1x8x128xf32>
    %265 = vector.shape_cast %264 : vector<1x8x128xf32> to vector<8x128xf32>
    %266 = vector.shape_cast %263 : vector<8x128xf32> to vector<1x8x128xf32>
    tpu.vector_store %arg13[%c0_86, %c0_87, %c0_88], %266 {strides = array<i32>} : memref<8x8x128xf32, #tpu.memory_space<vmem>>, vector<1x8x128xf32>,
    %c0_89 = arith.constant 0 : index
    %c0_90 = arith.constant 0 : index
    %c0_91 = arith.constant 0 : index
    %267 = vector.load %arg2[%c0_89, %c0_90, %c0_91] : memref<8x8x1xi32, #tpu.memory_space<vmem>>, vector<1x8x1xi32>
    %268 = vector.shape_cast %267 : vector<1x8x1xi32> to vector<8x1xi32>
    %c1_i32_92 = arith.constant 1 : i32
    %269 = vector.broadcast %268 : vector<8x1xi32> to vector<8x128xi32>
    %270 = arith.cmpi eq, %269, %262 : vector<8x128xi32>
    %271 = arith.extui %270 : vector<8x128xi1> to vector<8x128xi32>
    %272 = arith.sitofp %271 : vector<8x128xi32> to vector<8x128xf32>
    %273 = arith.truncf %272 : vector<8x128xf32> to vector<8x128xbf16>
    %c0_93 = arith.constant 0 : index
    %c0_94 = arith.constant 0 : index
    %274 = vector.load %arg7[%c0_93, %c0_94] : memref<128x512xbf16, #tpu.memory_space<vmem>>, vector<128x512xbf16>
    %cst_95 = arith.constant dense<0.000000e+00> : vector<8x512xf32>
    %275 = tpu.matmul %273, %274, %cst_95 {dimension_numbers = #tpu.dot_dimension_numbers<[1], [0], [0], [1], [0, 0, 1, 1], [], []>} : vector<8x128xbf16>, vector<128x512xbf16>, vector<8x512xf32> -> vector<8x512xf32>
    %276 = vector.extract_strided_slice %275 {offsets = [0, 0], sizes = [8, 384], strides = [1, 1]} : vector<8x512xf32> to vector<8x384xf32>
    %277 = arith.addf %276, %260 : vector<8x384xf32>
    %278 = arith.truncf %253 : vector<8x128xf32> to vector<8x128xbf16>
    %c0_96 = arith.constant 0 : index
    %c0_97 = arith.constant 0 : index
    %279 = vector.load %arg8[%c0_96, %c0_97] : memref<128x384xbf16, #tpu.memory_space<vmem>>, vector<128x384xbf16>
    %cst_98 = arith.constant dense<0.000000e+00> : vector<8x384xf32>
    %280 = tpu.matmul %278, %279, %cst_98 {dimension_numbers = #tpu.dot_dimension_numbers<[1], [0], [0], [1], [0, 0, 1, 1], [], []>} : vector<8x128xbf16>, vector<128x384xbf16>, vector<8x384xf32> -> vector<8x384xf32>
    %c0_99 = arith.constant 0 : index
    %c0_100 = arith.constant 0 : index
    %281 = vector.load %arg9[%c0_99, %c0_100] : memref<1x384xf32, #tpu.memory_space<vmem>>, vector<1x384xf32>
    %282 = vector.broadcast %281 : vector<1x384xf32> to vector<8x384xf32>
    %283 = arith.addf %280, %282 : vector<8x384xf32>
    %284 = vector.extract_strided_slice %277 {offsets = [0, 0], sizes = [8, 256], strides = [1, 1]} : vector<8x384xf32> to vector<8x256xf32>
    %285 = vector.extract_strided_slice %283 {offsets = [0, 0], sizes = [8, 256], strides = [1, 1]} : vector<8x384xf32> to vector<8x256xf32>
    %286 = arith.addf %284, %285 : vector<8x256xf32>
    %287 = arith.negf %286 : vector<8x256xf32>
    %288 = math.exp %287 : vector<8x256xf32>
    %cst_101 = arith.constant 1.000000e+00 : f32
    %289 = vector.broadcast %cst_101 : f32 to vector<8x256xf32>
    %290 = arith.addf %289, %288 : vector<8x256xf32>
    %291 = arith.divf %289, %290 : vector<8x256xf32>
    %292 = vector.extract_strided_slice %291 {offsets = [0, 0], sizes = [8, 128], strides = [1, 1]} : vector<8x256xf32> to vector<8x128xf32>
    %293 = vector.extract_strided_slice %291 {offsets = [0, 128], sizes = [8, 128], strides = [1, 1]} : vector<8x256xf32> to vector<8x128xf32>
    %294 = vector.extract_strided_slice %277 {offsets = [0, 256], sizes = [8, 128], strides = [1, 1]} : vector<8x384xf32> to vector<8x128xf32>
    %295 = vector.extract_strided_slice %283 {offsets = [0, 256], sizes = [8, 128], strides = [1, 1]} : vector<8x384xf32> to vector<8x128xf32>
    %296 = arith.mulf %292, %295 : vector<8x128xf32>
    %297 = arith.addf %294, %296 : vector<8x128xf32>
    %298 = math.tanh %297 : vector<8x128xf32>
    %cst_102 = arith.constant 1.000000e+00 : f32
    %299 = vector.broadcast %cst_102 : f32 to vector<8x128xf32>
    %300 = arith.subf %299, %293 : vector<8x128xf32>
    %301 = arith.mulf %300, %298 : vector<8x128xf32>
    %302 = arith.mulf %293, %253 : vector<8x128xf32>
    %303 = arith.addf %301, %302 : vector<8x128xf32>
    %304 = vector.extract_strided_slice %275 {offsets = [0, 384], sizes = [8, 128], strides = [1, 1]} : vector<8x512xf32> to vector<8x128xf32>
    %305 = arith.truncf %303 : vector<8x128xf32> to vector<8x128xbf16>
    %c0_103 = arith.constant 0 : index
    %c0_104 = arith.constant 0 : index
    %306 = vector.load %arg12[%c0_103, %c0_104] : memref<128x128xbf16, #tpu.memory_space<vmem>>, vector<128x128xbf16>
    %cst_105 = arith.constant dense<0.000000e+00> : vector<8x128xf32>
    %307 = tpu.matmul %305, %306, %cst_105 {dimension_numbers = #tpu.dot_dimension_numbers<[1], [0], [0], [1], [0, 0, 1, 1], [], []>} : vector<8x128xbf16>, vector<128x128xbf16>, vector<8x128xf32> -> vector<8x128xf32>
    %308 = arith.addf %304, %307 : vector<8x128xf32>
    %309 = arith.addf %308, %261 : vector<8x128xf32>
    %310 = arith.index_cast %c1_i32_92 : i32 to index
    %c0_106 = arith.constant 0 : index
    %c0_107 = arith.constant 0 : index
    %311 = vector.load %arg13[%310, %c0_106, %c0_107] : memref<8x8x128xf32, #tpu.memory_space<vmem>>, vector<1x8x128xf32>
    %312 = vector.shape_cast %311 : vector<1x8x128xf32> to vector<8x128xf32>
    %313 = vector.shape_cast %309 : vector<8x128xf32> to vector<1x8x128xf32>
    tpu.vector_store %arg13[%310, %c0_106, %c0_107], %313 {strides = array<i32>} : memref<8x8x128xf32, #tpu.memory_space<vmem>>, vector<1x8x128xf32>,
    %314 = arith.index_cast %c1_i32_92 : i32 to index
    %315 = memref.load %arg0[%314] : memref<8xi32, #tpu.memory_space<smem>>
    %c0_i32_108 = arith.constant 0 : i32
    %316 = arith.cmpi ne, %315, %c0_i32_108 : i32
    %317 = arith.extui %316 : i1 to i32
    %c0_i32_109 = arith.constant 0 : i32
    %318 = arith.cmpi ne, %317, %c0_i32_109 : i32
    %319 = scf.if %318 -> (vector<8x1xi32>) {
      %626 = arith.index_cast %c1_i32_92 : i32 to index
      %c0_219 = arith.constant 0 : index
      %c0_220 = arith.constant 0 : index
      %627 = vector.load %arg2[%626, %c0_219, %c0_220] : memref<8x8x1xi32, #tpu.memory_space<vmem>>, vector<1x8x1xi32>
      %628 = vector.shape_cast %627 : vector<1x8x1xi32> to vector<8x1xi32>
      scf.yield %628 : vector<8x1xi32>
    } else {
      %cst_219 = arith.constant dense<0xFF800000> : vector<8xf32>
      %626 = vector.multi_reduction <maximumf>, %309, %cst_219 [1] : vector<8x128xf32> to vector<8xf32>
      %627 = vector.shape_cast %626 : vector<8xf32> to vector<8x1xf32>
      %628 = vector.broadcast %627 : vector<8x1xf32> to vector<8x128xf32>
      %629 = arith.cmpf oeq, %309, %628 : vector<8x128xf32>
      %c128_i32 = arith.constant 128 : i32
      %630 = vector.broadcast %c128_i32 : i32 to vector<8x128xi32>
      %631 = arith.select %629, %262, %630 : vector<8x128xi1>, vector<8x128xi32>
      %cst_220 = arith.constant dense<2147483647> : vector<8xi32>
      %632 = vector.multi_reduction <minsi>, %631, %cst_220 [1] : vector<8x128xi32> to vector<8xi32>
      %633 = vector.shape_cast %632 : vector<8xi32> to vector<8x1xi32>
      scf.yield %633 : vector<8x1xi32>
    }
    %c2_i32_110 = arith.constant 2 : i32
    %320 = vector.broadcast %319 : vector<8x1xi32> to vector<8x128xi32>
    %321 = arith.cmpi eq, %320, %262 : vector<8x128xi32>
    %322 = arith.extui %321 : vector<8x128xi1> to vector<8x128xi32>
    %323 = arith.sitofp %322 : vector<8x128xi32> to vector<8x128xf32>
    %324 = arith.truncf %323 : vector<8x128xf32> to vector<8x128xbf16>
    %c0_111 = arith.constant 0 : index
    %c0_112 = arith.constant 0 : index
    %325 = vector.load %arg7[%c0_111, %c0_112] : memref<128x512xbf16, #tpu.memory_space<vmem>>, vector<128x512xbf16>
    %cst_113 = arith.constant dense<0.000000e+00> : vector<8x512xf32>
    %326 = tpu.matmul %324, %325, %cst_113 {dimension_numbers = #tpu.dot_dimension_numbers<[1], [0], [0], [1], [0, 0, 1, 1], [], []>} : vector<8x128xbf16>, vector<128x512xbf16>, vector<8x512xf32> -> vector<8x512xf32>
    %327 = vector.extract_strided_slice %326 {offsets = [0, 0], sizes = [8, 384], strides = [1, 1]} : vector<8x512xf32> to vector<8x384xf32>
    %328 = arith.addf %327, %260 : vector<8x384xf32>
    %329 = arith.truncf %303 : vector<8x128xf32> to vector<8x128xbf16>
    %c0_114 = arith.constant 0 : index
    %c0_115 = arith.constant 0 : index
    %330 = vector.load %arg8[%c0_114, %c0_115] : memref<128x384xbf16, #tpu.memory_space<vmem>>, vector<128x384xbf16>
    %cst_116 = arith.constant dense<0.000000e+00> : vector<8x384xf32>
    %331 = tpu.matmul %329, %330, %cst_116 {dimension_numbers = #tpu.dot_dimension_numbers<[1], [0], [0], [1], [0, 0, 1, 1], [], []>} : vector<8x128xbf16>, vector<128x384xbf16>, vector<8x384xf32> -> vector<8x384xf32>
    %c0_117 = arith.constant 0 : index
    %c0_118 = arith.constant 0 : index
    %332 = vector.load %arg9[%c0_117, %c0_118] : memref<1x384xf32, #tpu.memory_space<vmem>>, vector<1x384xf32>
    %333 = vector.broadcast %332 : vector<1x384xf32> to vector<8x384xf32>
    %334 = arith.addf %331, %333 : vector<8x384xf32>
    %335 = vector.extract_strided_slice %328 {offsets = [0, 0], sizes = [8, 256], strides = [1, 1]} : vector<8x384xf32> to vector<8x256xf32>
    %336 = vector.extract_strided_slice %334 {offsets = [0, 0], sizes = [8, 256], strides = [1, 1]} : vector<8x384xf32> to vector<8x256xf32>
    %337 = arith.addf %335, %336 : vector<8x256xf32>
    %338 = arith.negf %337 : vector<8x256xf32>
    %339 = math.exp %338 : vector<8x256xf32>
    %cst_119 = arith.constant 1.000000e+00 : f32
    %340 = vector.broadcast %cst_119 : f32 to vector<8x256xf32>
    %341 = arith.addf %340, %339 : vector<8x256xf32>
    %342 = arith.divf %340, %341 : vector<8x256xf32>
    %343 = vector.extract_strided_slice %342 {offsets = [0, 0], sizes = [8, 128], strides = [1, 1]} : vector<8x256xf32> to vector<8x128xf32>
    %344 = vector.extract_strided_slice %342 {offsets = [0, 128], sizes = [8, 128], strides = [1, 1]} : vector<8x256xf32> to vector<8x128xf32>
    %345 = vector.extract_strided_slice %328 {offsets = [0, 256], sizes = [8, 128], strides = [1, 1]} : vector<8x384xf32> to vector<8x128xf32>
    %346 = vector.extract_strided_slice %334 {offsets = [0, 256], sizes = [8, 128], strides = [1, 1]} : vector<8x384xf32> to vector<8x128xf32>
    %347 = arith.mulf %343, %346 : vector<8x128xf32>
    %348 = arith.addf %345, %347 : vector<8x128xf32>
    %349 = math.tanh %348 : vector<8x128xf32>
    %cst_120 = arith.constant 1.000000e+00 : f32
    %350 = vector.broadcast %cst_120 : f32 to vector<8x128xf32>
    %351 = arith.subf %350, %344 : vector<8x128xf32>
    %352 = arith.mulf %351, %349 : vector<8x128xf32>
    %353 = arith.mulf %344, %303 : vector<8x128xf32>
    %354 = arith.addf %352, %353 : vector<8x128xf32>
    %355 = vector.extract_strided_slice %326 {offsets = [0, 384], sizes = [8, 128], strides = [1, 1]} : vector<8x512xf32> to vector<8x128xf32>
    %356 = arith.truncf %354 : vector<8x128xf32> to vector<8x128xbf16>
    %c0_121 = arith.constant 0 : index
    %c0_122 = arith.constant 0 : index
    %357 = vector.load %arg12[%c0_121, %c0_122] : memref<128x128xbf16, #tpu.memory_space<vmem>>, vector<128x128xbf16>
    %cst_123 = arith.constant dense<0.000000e+00> : vector<8x128xf32>
    %358 = tpu.matmul %356, %357, %cst_123 {dimension_numbers = #tpu.dot_dimension_numbers<[1], [0], [0], [1], [0, 0, 1, 1], [], []>} : vector<8x128xbf16>, vector<128x128xbf16>, vector<8x128xf32> -> vector<8x128xf32>
    %359 = arith.addf %355, %358 : vector<8x128xf32>
    %360 = arith.addf %359, %261 : vector<8x128xf32>
    %361 = arith.index_cast %c2_i32_110 : i32 to index
    %c0_124 = arith.constant 0 : index
    %c0_125 = arith.constant 0 : index
    %362 = vector.load %arg13[%361, %c0_124, %c0_125] : memref<8x8x128xf32, #tpu.memory_space<vmem>>, vector<1x8x128xf32>
    %363 = vector.shape_cast %362 : vector<1x8x128xf32> to vector<8x128xf32>
    %364 = vector.shape_cast %360 : vector<8x128xf32> to vector<1x8x128xf32>
    tpu.vector_store %arg13[%361, %c0_124, %c0_125], %364 {strides = array<i32>} : memref<8x8x128xf32, #tpu.memory_space<vmem>>, vector<1x8x128xf32>,
    %365 = arith.index_cast %c2_i32_110 : i32 to index
    %366 = memref.load %arg0[%365] : memref<8xi32, #tpu.memory_space<smem>>
    %c0_i32_126 = arith.constant 0 : i32
    %367 = arith.cmpi ne, %366, %c0_i32_126 : i32
    %368 = arith.extui %367 : i1 to i32
    %c0_i32_127 = arith.constant 0 : i32
    %369 = arith.cmpi ne, %368, %c0_i32_127 : i32
    %370 = scf.if %369 -> (vector<8x1xi32>) {
      %626 = arith.index_cast %c2_i32_110 : i32 to index
      %c0_219 = arith.constant 0 : index
      %c0_220 = arith.constant 0 : index
      %627 = vector.load %arg2[%626, %c0_219, %c0_220] : memref<8x8x1xi32, #tpu.memory_space<vmem>>, vector<1x8x1xi32>
      %628 = vector.shape_cast %627 : vector<1x8x1xi32> to vector<8x1xi32>
      scf.yield %628 : vector<8x1xi32>
    } else {
      %cst_219 = arith.constant dense<0xFF800000> : vector<8xf32>
      %626 = vector.multi_reduction <maximumf>, %360, %cst_219 [1] : vector<8x128xf32> to vector<8xf32>
      %627 = vector.shape_cast %626 : vector<8xf32> to vector<8x1xf32>
      %628 = vector.broadcast %627 : vector<8x1xf32> to vector<8x128xf32>
      %629 = arith.cmpf oeq, %360, %628 : vector<8x128xf32>
      %c128_i32 = arith.constant 128 : i32
      %630 = vector.broadcast %c128_i32 : i32 to vector<8x128xi32>
      %631 = arith.select %629, %262, %630 : vector<8x128xi1>, vector<8x128xi32>
      %cst_220 = arith.constant dense<2147483647> : vector<8xi32>
      %632 = vector.multi_reduction <minsi>, %631, %cst_220 [1] : vector<8x128xi32> to vector<8xi32>
      %633 = vector.shape_cast %632 : vector<8xi32> to vector<8x1xi32>
      scf.yield %633 : vector<8x1xi32>
    }
    %c3_i32_128 = arith.constant 3 : i32
    %371 = vector.broadcast %370 : vector<8x1xi32> to vector<8x128xi32>
    %372 = arith.cmpi eq, %371, %262 : vector<8x128xi32>
    %373 = arith.extui %372 : vector<8x128xi1> to vector<8x128xi32>
    %374 = arith.sitofp %373 : vector<8x128xi32> to vector<8x128xf32>
    %375 = arith.truncf %374 : vector<8x128xf32> to vector<8x128xbf16>
    %c0_129 = arith.constant 0 : index
    %c0_130 = arith.constant 0 : index
    %376 = vector.load %arg7[%c0_129, %c0_130] : memref<128x512xbf16, #tpu.memory_space<vmem>>, vector<128x512xbf16>
    %cst_131 = arith.constant dense<0.000000e+00> : vector<8x512xf32>
    %377 = tpu.matmul %375, %376, %cst_131 {dimension_numbers = #tpu.dot_dimension_numbers<[1], [0], [0], [1], [0, 0, 1, 1], [], []>} : vector<8x128xbf16>, vector<128x512xbf16>, vector<8x512xf32> -> vector<8x512xf32>
    %378 = vector.extract_strided_slice %377 {offsets = [0, 0], sizes = [8, 384], strides = [1, 1]} : vector<8x512xf32> to vector<8x384xf32>
    %379 = arith.addf %378, %260 : vector<8x384xf32>
    %380 = arith.truncf %354 : vector<8x128xf32> to vector<8x128xbf16>
    %c0_132 = arith.constant 0 : index
    %c0_133 = arith.constant 0 : index
    %381 = vector.load %arg8[%c0_132, %c0_133] : memref<128x384xbf16, #tpu.memory_space<vmem>>, vector<128x384xbf16>
    %cst_134 = arith.constant dense<0.000000e+00> : vector<8x384xf32>
    %382 = tpu.matmul %380, %381, %cst_134 {dimension_numbers = #tpu.dot_dimension_numbers<[1], [0], [0], [1], [0, 0, 1, 1], [], []>} : vector<8x128xbf16>, vector<128x384xbf16>, vector<8x384xf32> -> vector<8x384xf32>
    %c0_135 = arith.constant 0 : index
    %c0_136 = arith.constant 0 : index
    %383 = vector.load %arg9[%c0_135, %c0_136] : memref<1x384xf32, #tpu.memory_space<vmem>>, vector<1x384xf32>
    %384 = vector.broadcast %383 : vector<1x384xf32> to vector<8x384xf32>
    %385 = arith.addf %382, %384 : vector<8x384xf32>
    %386 = vector.extract_strided_slice %379 {offsets = [0, 0], sizes = [8, 256], strides = [1, 1]} : vector<8x384xf32> to vector<8x256xf32>
    %387 = vector.extract_strided_slice %385 {offsets = [0, 0], sizes = [8, 256], strides = [1, 1]} : vector<8x384xf32> to vector<8x256xf32>
    %388 = arith.addf %386, %387 : vector<8x256xf32>
    %389 = arith.negf %388 : vector<8x256xf32>
    %390 = math.exp %389 : vector<8x256xf32>
    %cst_137 = arith.constant 1.000000e+00 : f32
    %391 = vector.broadcast %cst_137 : f32 to vector<8x256xf32>
    %392 = arith.addf %391, %390 : vector<8x256xf32>
    %393 = arith.divf %391, %392 : vector<8x256xf32>
    %394 = vector.extract_strided_slice %393 {offsets = [0, 0], sizes = [8, 128], strides = [1, 1]} : vector<8x256xf32> to vector<8x128xf32>
    %395 = vector.extract_strided_slice %393 {offsets = [0, 128], sizes = [8, 128], strides = [1, 1]} : vector<8x256xf32> to vector<8x128xf32>
    %396 = vector.extract_strided_slice %379 {offsets = [0, 256], sizes = [8, 128], strides = [1, 1]} : vector<8x384xf32> to vector<8x128xf32>
    %397 = vector.extract_strided_slice %385 {offsets = [0, 256], sizes = [8, 128], strides = [1, 1]} : vector<8x384xf32> to vector<8x128xf32>
    %398 = arith.mulf %394, %397 : vector<8x128xf32>
    %399 = arith.addf %396, %398 : vector<8x128xf32>
    %400 = math.tanh %399 : vector<8x128xf32>
    %cst_138 = arith.constant 1.000000e+00 : f32
    %401 = vector.broadcast %cst_138 : f32 to vector<8x128xf32>
    %402 = arith.subf %401, %395 : vector<8x128xf32>
    %403 = arith.mulf %402, %400 : vector<8x128xf32>
    %404 = arith.mulf %395, %354 : vector<8x128xf32>
    %405 = arith.addf %403, %404 : vector<8x128xf32>
    %406 = vector.extract_strided_slice %377 {offsets = [0, 384], sizes = [8, 128], strides = [1, 1]} : vector<8x512xf32> to vector<8x128xf32>
    %407 = arith.truncf %405 : vector<8x128xf32> to vector<8x128xbf16>
    %c0_139 = arith.constant 0 : index
    %c0_140 = arith.constant 0 : index
    %408 = vector.load %arg12[%c0_139, %c0_140] : memref<128x128xbf16, #tpu.memory_space<vmem>>, vector<128x128xbf16>
    %cst_141 = arith.constant dense<0.000000e+00> : vector<8x128xf32>
    %409 = tpu.matmul %407, %408, %cst_141 {dimension_numbers = #tpu.dot_dimension_numbers<[1], [0], [0], [1], [0, 0, 1, 1], [], []>} : vector<8x128xbf16>, vector<128x128xbf16>, vector<8x128xf32> -> vector<8x128xf32>
    %410 = arith.addf %406, %409 : vector<8x128xf32>
    %411 = arith.addf %410, %261 : vector<8x128xf32>
    %412 = arith.index_cast %c3_i32_128 : i32 to index
    %c0_142 = arith.constant 0 : index
    %c0_143 = arith.constant 0 : index
    %413 = vector.load %arg13[%412, %c0_142, %c0_143] : memref<8x8x128xf32, #tpu.memory_space<vmem>>, vector<1x8x128xf32>
    %414 = vector.shape_cast %413 : vector<1x8x128xf32> to vector<8x128xf32>
    %415 = vector.shape_cast %411 : vector<8x128xf32> to vector<1x8x128xf32>
    tpu.vector_store %arg13[%412, %c0_142, %c0_143], %415 {strides = array<i32>} : memref<8x8x128xf32, #tpu.memory_space<vmem>>, vector<1x8x128xf32>,
    %416 = arith.index_cast %c3_i32_128 : i32 to index
    %417 = memref.load %arg0[%416] : memref<8xi32, #tpu.memory_space<smem>>
    %c0_i32_144 = arith.constant 0 : i32
    %418 = arith.cmpi ne, %417, %c0_i32_144 : i32
    %419 = arith.extui %418 : i1 to i32
    %c0_i32_145 = arith.constant 0 : i32
    %420 = arith.cmpi ne, %419, %c0_i32_145 : i32
    %421 = scf.if %420 -> (vector<8x1xi32>) {
      %626 = arith.index_cast %c3_i32_128 : i32 to index
      %c0_219 = arith.constant 0 : index
      %c0_220 = arith.constant 0 : index
      %627 = vector.load %arg2[%626, %c0_219, %c0_220] : memref<8x8x1xi32, #tpu.memory_space<vmem>>, vector<1x8x1xi32>
      %628 = vector.shape_cast %627 : vector<1x8x1xi32> to vector<8x1xi32>
      scf.yield %628 : vector<8x1xi32>
    } else {
      %cst_219 = arith.constant dense<0xFF800000> : vector<8xf32>
      %626 = vector.multi_reduction <maximumf>, %411, %cst_219 [1] : vector<8x128xf32> to vector<8xf32>
      %627 = vector.shape_cast %626 : vector<8xf32> to vector<8x1xf32>
      %628 = vector.broadcast %627 : vector<8x1xf32> to vector<8x128xf32>
      %629 = arith.cmpf oeq, %411, %628 : vector<8x128xf32>
      %c128_i32 = arith.constant 128 : i32
      %630 = vector.broadcast %c128_i32 : i32 to vector<8x128xi32>
      %631 = arith.select %629, %262, %630 : vector<8x128xi1>, vector<8x128xi32>
      %cst_220 = arith.constant dense<2147483647> : vector<8xi32>
      %632 = vector.multi_reduction <minsi>, %631, %cst_220 [1] : vector<8x128xi32> to vector<8xi32>
      %633 = vector.shape_cast %632 : vector<8xi32> to vector<8x1xi32>
      scf.yield %633 : vector<8x1xi32>
    }
    %c4_i32_146 = arith.constant 4 : i32
    %422 = vector.broadcast %421 : vector<8x1xi32> to vector<8x128xi32>
    %423 = arith.cmpi eq, %422, %262 : vector<8x128xi32>
    %424 = arith.extui %423 : vector<8x128xi1> to vector<8x128xi32>
    %425 = arith.sitofp %424 : vector<8x128xi32> to vector<8x128xf32>
    %426 = arith.truncf %425 : vector<8x128xf32> to vector<8x128xbf16>
    %c0_147 = arith.constant 0 : index
    %c0_148 = arith.constant 0 : index
    %427 = vector.load %arg7[%c0_147, %c0_148] : memref<128x512xbf16, #tpu.memory_space<vmem>>, vector<128x512xbf16>
    %cst_149 = arith.constant dense<0.000000e+00> : vector<8x512xf32>
    %428 = tpu.matmul %426, %427, %cst_149 {dimension_numbers = #tpu.dot_dimension_numbers<[1], [0], [0], [1], [0, 0, 1, 1], [], []>} : vector<8x128xbf16>, vector<128x512xbf16>, vector<8x512xf32> -> vector<8x512xf32>
    %429 = vector.extract_strided_slice %428 {offsets = [0, 0], sizes = [8, 384], strides = [1, 1]} : vector<8x512xf32> to vector<8x384xf32>
    %430 = arith.addf %429, %260 : vector<8x384xf32>
    %431 = arith.truncf %405 : vector<8x128xf32> to vector<8x128xbf16>
    %c0_150 = arith.constant 0 : index
    %c0_151 = arith.constant 0 : index
    %432 = vector.load %arg8[%c0_150, %c0_151] : memref<128x384xbf16, #tpu.memory_space<vmem>>, vector<128x384xbf16>
    %cst_152 = arith.constant dense<0.000000e+00> : vector<8x384xf32>
    %433 = tpu.matmul %431, %432, %cst_152 {dimension_numbers = #tpu.dot_dimension_numbers<[1], [0], [0], [1], [0, 0, 1, 1], [], []>} : vector<8x128xbf16>, vector<128x384xbf16>, vector<8x384xf32> -> vector<8x384xf32>
    %c0_153 = arith.constant 0 : index
    %c0_154 = arith.constant 0 : index
    %434 = vector.load %arg9[%c0_153, %c0_154] : memref<1x384xf32, #tpu.memory_space<vmem>>, vector<1x384xf32>
    %435 = vector.broadcast %434 : vector<1x384xf32> to vector<8x384xf32>
    %436 = arith.addf %433, %435 : vector<8x384xf32>
    %437 = vector.extract_strided_slice %430 {offsets = [0, 0], sizes = [8, 256], strides = [1, 1]} : vector<8x384xf32> to vector<8x256xf32>
    %438 = vector.extract_strided_slice %436 {offsets = [0, 0], sizes = [8, 256], strides = [1, 1]} : vector<8x384xf32> to vector<8x256xf32>
    %439 = arith.addf %437, %438 : vector<8x256xf32>
    %440 = arith.negf %439 : vector<8x256xf32>
    %441 = math.exp %440 : vector<8x256xf32>
    %cst_155 = arith.constant 1.000000e+00 : f32
    %442 = vector.broadcast %cst_155 : f32 to vector<8x256xf32>
    %443 = arith.addf %442, %441 : vector<8x256xf32>
    %444 = arith.divf %442, %443 : vector<8x256xf32>
    %445 = vector.extract_strided_slice %444 {offsets = [0, 0], sizes = [8, 128], strides = [1, 1]} : vector<8x256xf32> to vector<8x128xf32>
    %446 = vector.extract_strided_slice %444 {offsets = [0, 128], sizes = [8, 128], strides = [1, 1]} : vector<8x256xf32> to vector<8x128xf32>
    %447 = vector.extract_strided_slice %430 {offsets = [0, 256], sizes = [8, 128], strides = [1, 1]} : vector<8x384xf32> to vector<8x128xf32>
    %448 = vector.extract_strided_slice %436 {offsets = [0, 256], sizes = [8, 128], strides = [1, 1]} : vector<8x384xf32> to vector<8x128xf32>
    %449 = arith.mulf %445, %448 : vector<8x128xf32>
    %450 = arith.addf %447, %449 : vector<8x128xf32>
    %451 = math.tanh %450 : vector<8x128xf32>
    %cst_156 = arith.constant 1.000000e+00 : f32
    %452 = vector.broadcast %cst_156 : f32 to vector<8x128xf32>
    %453 = arith.subf %452, %446 : vector<8x128xf32>
    %454 = arith.mulf %453, %451 : vector<8x128xf32>
    %455 = arith.mulf %446, %405 : vector<8x128xf32>
    %456 = arith.addf %454, %455 : vector<8x128xf32>
    %457 = vector.extract_strided_slice %428 {offsets = [0, 384], sizes = [8, 128], strides = [1, 1]} : vector<8x512xf32> to vector<8x128xf32>
    %458 = arith.truncf %456 : vector<8x128xf32> to vector<8x128xbf16>
    %c0_157 = arith.constant 0 : index
    %c0_158 = arith.constant 0 : index
    %459 = vector.load %arg12[%c0_157, %c0_158] : memref<128x128xbf16, #tpu.memory_space<vmem>>, vector<128x128xbf16>
    %cst_159 = arith.constant dense<0.000000e+00> : vector<8x128xf32>
    %460 = tpu.matmul %458, %459, %cst_159 {dimension_numbers = #tpu.dot_dimension_numbers<[1], [0], [0], [1], [0, 0, 1, 1], [], []>} : vector<8x128xbf16>, vector<128x128xbf16>, vector<8x128xf32> -> vector<8x128xf32>
    %461 = arith.addf %457, %460 : vector<8x128xf32>
    %462 = arith.addf %461, %261 : vector<8x128xf32>
    %463 = arith.index_cast %c4_i32_146 : i32 to index
    %c0_160 = arith.constant 0 : index
    %c0_161 = arith.constant 0 : index
    %464 = vector.load %arg13[%463, %c0_160, %c0_161] : memref<8x8x128xf32, #tpu.memory_space<vmem>>, vector<1x8x128xf32>
    %465 = vector.shape_cast %464 : vector<1x8x128xf32> to vector<8x128xf32>
    %466 = vector.shape_cast %462 : vector<8x128xf32> to vector<1x8x128xf32>
    tpu.vector_store %arg13[%463, %c0_160, %c0_161], %466 {strides = array<i32>} : memref<8x8x128xf32, #tpu.memory_space<vmem>>, vector<1x8x128xf32>,
    %467 = arith.index_cast %c4_i32_146 : i32 to index
    %468 = memref.load %arg0[%467] : memref<8xi32, #tpu.memory_space<smem>>
    %c0_i32_162 = arith.constant 0 : i32
    %469 = arith.cmpi ne, %468, %c0_i32_162 : i32
    %470 = arith.extui %469 : i1 to i32
    %c0_i32_163 = arith.constant 0 : i32
    %471 = arith.cmpi ne, %470, %c0_i32_163 : i32
    %472 = scf.if %471 -> (vector<8x1xi32>) {
      %626 = arith.index_cast %c4_i32_146 : i32 to index
      %c0_219 = arith.constant 0 : index
      %c0_220 = arith.constant 0 : index
      %627 = vector.load %arg2[%626, %c0_219, %c0_220] : memref<8x8x1xi32, #tpu.memory_space<vmem>>, vector<1x8x1xi32>
      %628 = vector.shape_cast %627 : vector<1x8x1xi32> to vector<8x1xi32>
      scf.yield %628 : vector<8x1xi32>
    } else {
      %cst_219 = arith.constant dense<0xFF800000> : vector<8xf32>
      %626 = vector.multi_reduction <maximumf>, %462, %cst_219 [1] : vector<8x128xf32> to vector<8xf32>
      %627 = vector.shape_cast %626 : vector<8xf32> to vector<8x1xf32>
      %628 = vector.broadcast %627 : vector<8x1xf32> to vector<8x128xf32>
      %629 = arith.cmpf oeq, %462, %628 : vector<8x128xf32>
      %c128_i32 = arith.constant 128 : i32
      %630 = vector.broadcast %c128_i32 : i32 to vector<8x128xi32>
      %631 = arith.select %629, %262, %630 : vector<8x128xi1>, vector<8x128xi32>
      %cst_220 = arith.constant dense<2147483647> : vector<8xi32>
      %632 = vector.multi_reduction <minsi>, %631, %cst_220 [1] : vector<8x128xi32> to vector<8xi32>
      %633 = vector.shape_cast %632 : vector<8xi32> to vector<8x1xi32>
      scf.yield %633 : vector<8x1xi32>
    }
    %c5_i32_164 = arith.constant 5 : i32
    %473 = vector.broadcast %472 : vector<8x1xi32> to vector<8x128xi32>
    %474 = arith.cmpi eq, %473, %262 : vector<8x128xi32>
    %475 = arith.extui %474 : vector<8x128xi1> to vector<8x128xi32>
    %476 = arith.sitofp %475 : vector<8x128xi32> to vector<8x128xf32>
    %477 = arith.truncf %476 : vector<8x128xf32> to vector<8x128xbf16>
    %c0_165 = arith.constant 0 : index
    %c0_166 = arith.constant 0 : index
    %478 = vector.load %arg7[%c0_165, %c0_166] : memref<128x512xbf16, #tpu.memory_space<vmem>>, vector<128x512xbf16>
    %cst_167 = arith.constant dense<0.000000e+00> : vector<8x512xf32>
    %479 = tpu.matmul %477, %478, %cst_167 {dimension_numbers = #tpu.dot_dimension_numbers<[1], [0], [0], [1], [0, 0, 1, 1], [], []>} : vector<8x128xbf16>, vector<128x512xbf16>, vector<8x512xf32> -> vector<8x512xf32>
    %480 = vector.extract_strided_slice %479 {offsets = [0, 0], sizes = [8, 384], strides = [1, 1]} : vector<8x512xf32> to vector<8x384xf32>
    %481 = arith.addf %480, %260 : vector<8x384xf32>
    %482 = arith.truncf %456 : vector<8x128xf32> to vector<8x128xbf16>
    %c0_168 = arith.constant 0 : index
    %c0_169 = arith.constant 0 : index
    %483 = vector.load %arg8[%c0_168, %c0_169] : memref<128x384xbf16, #tpu.memory_space<vmem>>, vector<128x384xbf16>
    %cst_170 = arith.constant dense<0.000000e+00> : vector<8x384xf32>
    %484 = tpu.matmul %482, %483, %cst_170 {dimension_numbers = #tpu.dot_dimension_numbers<[1], [0], [0], [1], [0, 0, 1, 1], [], []>} : vector<8x128xbf16>, vector<128x384xbf16>, vector<8x384xf32> -> vector<8x384xf32>
    %c0_171 = arith.constant 0 : index
    %c0_172 = arith.constant 0 : index
    %485 = vector.load %arg9[%c0_171, %c0_172] : memref<1x384xf32, #tpu.memory_space<vmem>>, vector<1x384xf32>
    %486 = vector.broadcast %485 : vector<1x384xf32> to vector<8x384xf32>
    %487 = arith.addf %484, %486 : vector<8x384xf32>
    %488 = vector.extract_strided_slice %481 {offsets = [0, 0], sizes = [8, 256], strides = [1, 1]} : vector<8x384xf32> to vector<8x256xf32>
    %489 = vector.extract_strided_slice %487 {offsets = [0, 0], sizes = [8, 256], strides = [1, 1]} : vector<8x384xf32> to vector<8x256xf32>
    %490 = arith.addf %488, %489 : vector<8x256xf32>
    %491 = arith.negf %490 : vector<8x256xf32>
    %492 = math.exp %491 : vector<8x256xf32>
    %cst_173 = arith.constant 1.000000e+00 : f32
    %493 = vector.broadcast %cst_173 : f32 to vector<8x256xf32>
    %494 = arith.addf %493, %492 : vector<8x256xf32>
    %495 = arith.divf %493, %494 : vector<8x256xf32>
    %496 = vector.extract_strided_slice %495 {offsets = [0, 0], sizes = [8, 128], strides = [1, 1]} : vector<8x256xf32> to vector<8x128xf32>
    %497 = vector.extract_strided_slice %495 {offsets = [0, 128], sizes = [8, 128], strides = [1, 1]} : vector<8x256xf32> to vector<8x128xf32>
    %498 = vector.extract_strided_slice %481 {offsets = [0, 256], sizes = [8, 128], strides = [1, 1]} : vector<8x384xf32> to vector<8x128xf32>
    %499 = vector.extract_strided_slice %487 {offsets = [0, 256], sizes = [8, 128], strides = [1, 1]} : vector<8x384xf32> to vector<8x128xf32>
    %500 = arith.mulf %496, %499 : vector<8x128xf32>
    %501 = arith.addf %498, %500 : vector<8x128xf32>
    %502 = math.tanh %501 : vector<8x128xf32>
    %cst_174 = arith.constant 1.000000e+00 : f32
    %503 = vector.broadcast %cst_174 : f32 to vector<8x128xf32>
    %504 = arith.subf %503, %497 : vector<8x128xf32>
    %505 = arith.mulf %504, %502 : vector<8x128xf32>
    %506 = arith.mulf %497, %456 : vector<8x128xf32>
    %507 = arith.addf %505, %506 : vector<8x128xf32>
    %508 = vector.extract_strided_slice %479 {offsets = [0, 384], sizes = [8, 128], strides = [1, 1]} : vector<8x512xf32> to vector<8x128xf32>
    %509 = arith.truncf %507 : vector<8x128xf32> to vector<8x128xbf16>
    %c0_175 = arith.constant 0 : index
    %c0_176 = arith.constant 0 : index
    %510 = vector.load %arg12[%c0_175, %c0_176] : memref<128x128xbf16, #tpu.memory_space<vmem>>, vector<128x128xbf16>
    %cst_177 = arith.constant dense<0.000000e+00> : vector<8x128xf32>
    %511 = tpu.matmul %509, %510, %cst_177 {dimension_numbers = #tpu.dot_dimension_numbers<[1], [0], [0], [1], [0, 0, 1, 1], [], []>} : vector<8x128xbf16>, vector<128x128xbf16>, vector<8x128xf32> -> vector<8x128xf32>
    %512 = arith.addf %508, %511 : vector<8x128xf32>
    %513 = arith.addf %512, %261 : vector<8x128xf32>
    %514 = arith.index_cast %c5_i32_164 : i32 to index
    %c0_178 = arith.constant 0 : index
    %c0_179 = arith.constant 0 : index
    %515 = vector.load %arg13[%514, %c0_178, %c0_179] : memref<8x8x128xf32, #tpu.memory_space<vmem>>, vector<1x8x128xf32>
    %516 = vector.shape_cast %515 : vector<1x8x128xf32> to vector<8x128xf32>
    %517 = vector.shape_cast %513 : vector<8x128xf32> to vector<1x8x128xf32>
    tpu.vector_store %arg13[%514, %c0_178, %c0_179], %517 {strides = array<i32>} : memref<8x8x128xf32, #tpu.memory_space<vmem>>, vector<1x8x128xf32>,
    %518 = arith.index_cast %c5_i32_164 : i32 to index
    %519 = memref.load %arg0[%518] : memref<8xi32, #tpu.memory_space<smem>>
    %c0_i32_180 = arith.constant 0 : i32
    %520 = arith.cmpi ne, %519, %c0_i32_180 : i32
    %521 = arith.extui %520 : i1 to i32
    %c0_i32_181 = arith.constant 0 : i32
    %522 = arith.cmpi ne, %521, %c0_i32_181 : i32
    %523 = scf.if %522 -> (vector<8x1xi32>) {
      %626 = arith.index_cast %c5_i32_164 : i32 to index
      %c0_219 = arith.constant 0 : index
      %c0_220 = arith.constant 0 : index
      %627 = vector.load %arg2[%626, %c0_219, %c0_220] : memref<8x8x1xi32, #tpu.memory_space<vmem>>, vector<1x8x1xi32>
      %628 = vector.shape_cast %627 : vector<1x8x1xi32> to vector<8x1xi32>
      scf.yield %628 : vector<8x1xi32>
    } else {
      %cst_219 = arith.constant dense<0xFF800000> : vector<8xf32>
      %626 = vector.multi_reduction <maximumf>, %513, %cst_219 [1] : vector<8x128xf32> to vector<8xf32>
      %627 = vector.shape_cast %626 : vector<8xf32> to vector<8x1xf32>
      %628 = vector.broadcast %627 : vector<8x1xf32> to vector<8x128xf32>
      %629 = arith.cmpf oeq, %513, %628 : vector<8x128xf32>
      %c128_i32 = arith.constant 128 : i32
      %630 = vector.broadcast %c128_i32 : i32 to vector<8x128xi32>
      %631 = arith.select %629, %262, %630 : vector<8x128xi1>, vector<8x128xi32>
      %cst_220 = arith.constant dense<2147483647> : vector<8xi32>
      %632 = vector.multi_reduction <minsi>, %631, %cst_220 [1] : vector<8x128xi32> to vector<8xi32>
      %633 = vector.shape_cast %632 : vector<8xi32> to vector<8x1xi32>
      scf.yield %633 : vector<8x1xi32>
    }
    %c6_i32_182 = arith.constant 6 : i32
    %524 = vector.broadcast %523 : vector<8x1xi32> to vector<8x128xi32>
    %525 = arith.cmpi eq, %524, %262 : vector<8x128xi32>
    %526 = arith.extui %525 : vector<8x128xi1> to vector<8x128xi32>
    %527 = arith.sitofp %526 : vector<8x128xi32> to vector<8x128xf32>
    %528 = arith.truncf %527 : vector<8x128xf32> to vector<8x128xbf16>
    %c0_183 = arith.constant 0 : index
    %c0_184 = arith.constant 0 : index
    %529 = vector.load %arg7[%c0_183, %c0_184] : memref<128x512xbf16, #tpu.memory_space<vmem>>, vector<128x512xbf16>
    %cst_185 = arith.constant dense<0.000000e+00> : vector<8x512xf32>
    %530 = tpu.matmul %528, %529, %cst_185 {dimension_numbers = #tpu.dot_dimension_numbers<[1], [0], [0], [1], [0, 0, 1, 1], [], []>} : vector<8x128xbf16>, vector<128x512xbf16>, vector<8x512xf32> -> vector<8x512xf32>
    %531 = vector.extract_strided_slice %530 {offsets = [0, 0], sizes = [8, 384], strides = [1, 1]} : vector<8x512xf32> to vector<8x384xf32>
    %532 = arith.addf %531, %260 : vector<8x384xf32>
    %533 = arith.truncf %507 : vector<8x128xf32> to vector<8x128xbf16>
    %c0_186 = arith.constant 0 : index
    %c0_187 = arith.constant 0 : index
    %534 = vector.load %arg8[%c0_186, %c0_187] : memref<128x384xbf16, #tpu.memory_space<vmem>>, vector<128x384xbf16>
    %cst_188 = arith.constant dense<0.000000e+00> : vector<8x384xf32>
    %535 = tpu.matmul %533, %534, %cst_188 {dimension_numbers = #tpu.dot_dimension_numbers<[1], [0], [0], [1], [0, 0, 1, 1], [], []>} : vector<8x128xbf16>, vector<128x384xbf16>, vector<8x384xf32> -> vector<8x384xf32>
    %c0_189 = arith.constant 0 : index
    %c0_190 = arith.constant 0 : index
    %536 = vector.load %arg9[%c0_189, %c0_190] : memref<1x384xf32, #tpu.memory_space<vmem>>, vector<1x384xf32>
    %537 = vector.broadcast %536 : vector<1x384xf32> to vector<8x384xf32>
    %538 = arith.addf %535, %537 : vector<8x384xf32>
    %539 = vector.extract_strided_slice %532 {offsets = [0, 0], sizes = [8, 256], strides = [1, 1]} : vector<8x384xf32> to vector<8x256xf32>
    %540 = vector.extract_strided_slice %538 {offsets = [0, 0], sizes = [8, 256], strides = [1, 1]} : vector<8x384xf32> to vector<8x256xf32>
    %541 = arith.addf %539, %540 : vector<8x256xf32>
    %542 = arith.negf %541 : vector<8x256xf32>
    %543 = math.exp %542 : vector<8x256xf32>
    %cst_191 = arith.constant 1.000000e+00 : f32
    %544 = vector.broadcast %cst_191 : f32 to vector<8x256xf32>
    %545 = arith.addf %544, %543 : vector<8x256xf32>
    %546 = arith.divf %544, %545 : vector<8x256xf32>
    %547 = vector.extract_strided_slice %546 {offsets = [0, 0], sizes = [8, 128], strides = [1, 1]} : vector<8x256xf32> to vector<8x128xf32>
    %548 = vector.extract_strided_slice %546 {offsets = [0, 128], sizes = [8, 128], strides = [1, 1]} : vector<8x256xf32> to vector<8x128xf32>
    %549 = vector.extract_strided_slice %532 {offsets = [0, 256], sizes = [8, 128], strides = [1, 1]} : vector<8x384xf32> to vector<8x128xf32>
    %550 = vector.extract_strided_slice %538 {offsets = [0, 256], sizes = [8, 128], strides = [1, 1]} : vector<8x384xf32> to vector<8x128xf32>
    %551 = arith.mulf %547, %550 : vector<8x128xf32>
    %552 = arith.addf %549, %551 : vector<8x128xf32>
    %553 = math.tanh %552 : vector<8x128xf32>
    %cst_192 = arith.constant 1.000000e+00 : f32
    %554 = vector.broadcast %cst_192 : f32 to vector<8x128xf32>
    %555 = arith.subf %554, %548 : vector<8x128xf32>
    %556 = arith.mulf %555, %553 : vector<8x128xf32>
    %557 = arith.mulf %548, %507 : vector<8x128xf32>
    %558 = arith.addf %556, %557 : vector<8x128xf32>
    %559 = vector.extract_strided_slice %530 {offsets = [0, 384], sizes = [8, 128], strides = [1, 1]} : vector<8x512xf32> to vector<8x128xf32>
    %560 = arith.truncf %558 : vector<8x128xf32> to vector<8x128xbf16>
    %c0_193 = arith.constant 0 : index
    %c0_194 = arith.constant 0 : index
    %561 = vector.load %arg12[%c0_193, %c0_194] : memref<128x128xbf16, #tpu.memory_space<vmem>>, vector<128x128xbf16>
    %cst_195 = arith.constant dense<0.000000e+00> : vector<8x128xf32>
    %562 = tpu.matmul %560, %561, %cst_195 {dimension_numbers = #tpu.dot_dimension_numbers<[1], [0], [0], [1], [0, 0, 1, 1], [], []>} : vector<8x128xbf16>, vector<128x128xbf16>, vector<8x128xf32> -> vector<8x128xf32>
    %563 = arith.addf %559, %562 : vector<8x128xf32>
    %564 = arith.addf %563, %261 : vector<8x128xf32>
    %565 = arith.index_cast %c6_i32_182 : i32 to index
    %c0_196 = arith.constant 0 : index
    %c0_197 = arith.constant 0 : index
    %566 = vector.load %arg13[%565, %c0_196, %c0_197] : memref<8x8x128xf32, #tpu.memory_space<vmem>>, vector<1x8x128xf32>
    %567 = vector.shape_cast %566 : vector<1x8x128xf32> to vector<8x128xf32>
    %568 = vector.shape_cast %564 : vector<8x128xf32> to vector<1x8x128xf32>
    tpu.vector_store %arg13[%565, %c0_196, %c0_197], %568 {strides = array<i32>} : memref<8x8x128xf32, #tpu.memory_space<vmem>>, vector<1x8x128xf32>,
    %569 = arith.index_cast %c6_i32_182 : i32 to index
    %570 = memref.load %arg0[%569] : memref<8xi32, #tpu.memory_space<smem>>
    %c0_i32_198 = arith.constant 0 : i32
    %571 = arith.cmpi ne, %570, %c0_i32_198 : i32
    %572 = arith.extui %571 : i1 to i32
    %c0_i32_199 = arith.constant 0 : i32
    %573 = arith.cmpi ne, %572, %c0_i32_199 : i32
    %574 = scf.if %573 -> (vector<8x1xi32>) {
      %626 = arith.index_cast %c6_i32_182 : i32 to index
      %c0_219 = arith.constant 0 : index
      %c0_220 = arith.constant 0 : index
      %627 = vector.load %arg2[%626, %c0_219, %c0_220] : memref<8x8x1xi32, #tpu.memory_space<vmem>>, vector<1x8x1xi32>
      %628 = vector.shape_cast %627 : vector<1x8x1xi32> to vector<8x1xi32>
      scf.yield %628 : vector<8x1xi32>
    } else {
      %cst_219 = arith.constant dense<0xFF800000> : vector<8xf32>
      %626 = vector.multi_reduction <maximumf>, %564, %cst_219 [1] : vector<8x128xf32> to vector<8xf32>
      %627 = vector.shape_cast %626 : vector<8xf32> to vector<8x1xf32>
      %628 = vector.broadcast %627 : vector<8x1xf32> to vector<8x128xf32>
      %629 = arith.cmpf oeq, %564, %628 : vector<8x128xf32>
      %c128_i32 = arith.constant 128 : i32
      %630 = vector.broadcast %c128_i32 : i32 to vector<8x128xi32>
      %631 = arith.select %629, %262, %630 : vector<8x128xi1>, vector<8x128xi32>
      %cst_220 = arith.constant dense<2147483647> : vector<8xi32>
      %632 = vector.multi_reduction <minsi>, %631, %cst_220 [1] : vector<8x128xi32> to vector<8xi32>
      %633 = vector.shape_cast %632 : vector<8xi32> to vector<8x1xi32>
      scf.yield %633 : vector<8x1xi32>
    }
    %c7_i32_200 = arith.constant 7 : i32
    %575 = vector.broadcast %574 : vector<8x1xi32> to vector<8x128xi32>
    %576 = arith.cmpi eq, %575, %262 : vector<8x128xi32>
    %577 = arith.extui %576 : vector<8x128xi1> to vector<8x128xi32>
    %578 = arith.sitofp %577 : vector<8x128xi32> to vector<8x128xf32>
    %579 = arith.truncf %578 : vector<8x128xf32> to vector<8x128xbf16>
    %c0_201 = arith.constant 0 : index
    %c0_202 = arith.constant 0 : index
    %580 = vector.load %arg7[%c0_201, %c0_202] : memref<128x512xbf16, #tpu.memory_space<vmem>>, vector<128x512xbf16>
    %cst_203 = arith.constant dense<0.000000e+00> : vector<8x512xf32>
    %581 = tpu.matmul %579, %580, %cst_203 {dimension_numbers = #tpu.dot_dimension_numbers<[1], [0], [0], [1], [0, 0, 1, 1], [], []>} : vector<8x128xbf16>, vector<128x512xbf16>, vector<8x512xf32> -> vector<8x512xf32>
    %582 = vector.extract_strided_slice %581 {offsets = [0, 0], sizes = [8, 384], strides = [1, 1]} : vector<8x512xf32> to vector<8x384xf32>
    %583 = arith.addf %582, %260 : vector<8x384xf32>
    %584 = arith.truncf %558 : vector<8x128xf32> to vector<8x128xbf16>
    %c0_204 = arith.constant 0 : index
    %c0_205 = arith.constant 0 : index
    %585 = vector.load %arg8[%c0_204, %c0_205] : memref<128x384xbf16, #tpu.memory_space<vmem>>, vector<128x384xbf16>
    %cst_206 = arith.constant dense<0.000000e+00> : vector<8x384xf32>
    %586 = tpu.matmul %584, %585, %cst_206 {dimension_numbers = #tpu.dot_dimension_numbers<[1], [0], [0], [1], [0, 0, 1, 1], [], []>} : vector<8x128xbf16>, vector<128x384xbf16>, vector<8x384xf32> -> vector<8x384xf32>
    %c0_207 = arith.constant 0 : index
    %c0_208 = arith.constant 0 : index
    %587 = vector.load %arg9[%c0_207, %c0_208] : memref<1x384xf32, #tpu.memory_space<vmem>>, vector<1x384xf32>
    %588 = vector.broadcast %587 : vector<1x384xf32> to vector<8x384xf32>
    %589 = arith.addf %586, %588 : vector<8x384xf32>
    %590 = vector.extract_strided_slice %583 {offsets = [0, 0], sizes = [8, 256], strides = [1, 1]} : vector<8x384xf32> to vector<8x256xf32>
    %591 = vector.extract_strided_slice %589 {offsets = [0, 0], sizes = [8, 256], strides = [1, 1]} : vector<8x384xf32> to vector<8x256xf32>
    %592 = arith.addf %590, %591 : vector<8x256xf32>
    %593 = arith.negf %592 : vector<8x256xf32>
    %594 = math.exp %593 : vector<8x256xf32>
    %cst_209 = arith.constant 1.000000e+00 : f32
    %595 = vector.broadcast %cst_209 : f32 to vector<8x256xf32>
    %596 = arith.addf %595, %594 : vector<8x256xf32>
    %597 = arith.divf %595, %596 : vector<8x256xf32>
    %598 = vector.extract_strided_slice %597 {offsets = [0, 0], sizes = [8, 128], strides = [1, 1]} : vector<8x256xf32> to vector<8x128xf32>
    %599 = vector.extract_strided_slice %597 {offsets = [0, 128], sizes = [8, 128], strides = [1, 1]} : vector<8x256xf32> to vector<8x128xf32>
    %600 = vector.extract_strided_slice %583 {offsets = [0, 256], sizes = [8, 128], strides = [1, 1]} : vector<8x384xf32> to vector<8x128xf32>
    %601 = vector.extract_strided_slice %589 {offsets = [0, 256], sizes = [8, 128], strides = [1, 1]} : vector<8x384xf32> to vector<8x128xf32>
    %602 = arith.mulf %598, %601 : vector<8x128xf32>
    %603 = arith.addf %600, %602 : vector<8x128xf32>
    %604 = math.tanh %603 : vector<8x128xf32>
    %cst_210 = arith.constant 1.000000e+00 : f32
    %605 = vector.broadcast %cst_210 : f32 to vector<8x128xf32>
    %606 = arith.subf %605, %599 : vector<8x128xf32>
    %607 = arith.mulf %606, %604 : vector<8x128xf32>
    %608 = arith.mulf %599, %558 : vector<8x128xf32>
    %609 = arith.addf %607, %608 : vector<8x128xf32>
    %610 = vector.extract_strided_slice %581 {offsets = [0, 384], sizes = [8, 128], strides = [1, 1]} : vector<8x512xf32> to vector<8x128xf32>
    %611 = arith.truncf %609 : vector<8x128xf32> to vector<8x128xbf16>
    %c0_211 = arith.constant 0 : index
    %c0_212 = arith.constant 0 : index
    %612 = vector.load %arg12[%c0_211, %c0_212] : memref<128x128xbf16, #tpu.memory_space<vmem>>, vector<128x128xbf16>
    %cst_213 = arith.constant dense<0.000000e+00> : vector<8x128xf32>
    %613 = tpu.matmul %611, %612, %cst_213 {dimension_numbers = #tpu.dot_dimension_numbers<[1], [0], [0], [1], [0, 0, 1, 1], [], []>} : vector<8x128xbf16>, vector<128x128xbf16>, vector<8x128xf32> -> vector<8x128xf32>
    %614 = arith.addf %610, %613 : vector<8x128xf32>
    %615 = arith.addf %614, %261 : vector<8x128xf32>
    %616 = arith.index_cast %c7_i32_200 : i32 to index
    %c0_214 = arith.constant 0 : index
    %c0_215 = arith.constant 0 : index
    %617 = vector.load %arg13[%616, %c0_214, %c0_215] : memref<8x8x128xf32, #tpu.memory_space<vmem>>, vector<1x8x128xf32>
    %618 = vector.shape_cast %617 : vector<1x8x128xf32> to vector<8x128xf32>
    %619 = vector.shape_cast %615 : vector<8x128xf32> to vector<1x8x128xf32>
    tpu.vector_store %arg13[%616, %c0_214, %c0_215], %619 {strides = array<i32>} : memref<8x8x128xf32, #tpu.memory_space<vmem>>, vector<1x8x128xf32>,
    %620 = arith.index_cast %c7_i32_200 : i32 to index
    %621 = memref.load %arg0[%620] : memref<8xi32, #tpu.memory_space<smem>>
    %c0_i32_216 = arith.constant 0 : i32
    %622 = arith.cmpi ne, %621, %c0_i32_216 : i32
    %623 = arith.extui %622 : i1 to i32
    %c0_i32_217 = arith.constant 0 : i32
    %624 = arith.cmpi ne, %623, %c0_i32_217 : i32
    %625 = scf.if %624 -> (vector<8x1xi32>) {
      %626 = arith.index_cast %c7_i32_200 : i32 to index
      %c0_219 = arith.constant 0 : index
      %c0_220 = arith.constant 0 : index
      %627 = vector.load %arg2[%626, %c0_219, %c0_220] : memref<8x8x1xi32, #tpu.memory_space<vmem>>, vector<1x8x1xi32>
      %628 = vector.shape_cast %627 : vector<1x8x1xi32> to vector<8x1xi32>
      scf.yield %628 : vector<8x1xi32>
    } else {
      %cst_219 = arith.constant dense<0xFF800000> : vector<8xf32>
      %626 = vector.multi_reduction <maximumf>, %615, %cst_219 [1] : vector<8x128xf32> to vector<8xf32>
      %627 = vector.shape_cast %626 : vector<8xf32> to vector<8x1xf32>
      %628 = vector.broadcast %627 : vector<8x1xf32> to vector<8x128xf32>
      %629 = arith.cmpf oeq, %615, %628 : vector<8x128xf32>
      %c128_i32 = arith.constant 128 : i32
      %630 = vector.broadcast %c128_i32 : i32 to vector<8x128xi32>
      %631 = arith.select %629, %262, %630 : vector<8x128xi1>, vector<8x128xi32>
      %cst_220 = arith.constant dense<2147483647> : vector<8xi32>
      %632 = vector.multi_reduction <minsi>, %631, %cst_220 [1] : vector<8x128xi32> to vector<8xi32>
      %633 = vector.shape_cast %632 : vector<8xi32> to vector<8x1xi32>
      scf.yield %633 : vector<8x1xi32>
    }
    %c7_i32_218 = arith.constant 7 : i32
    return
  }
}

</mosaic_0001>

<llo_original>
// kernel: seq2seq_forward.1
$region0: #{seq2seq_forward.1}
  #allocation0 [shape = 'u32[]', space=smem, size = 0x4, offset = 0x4, fixed_abs, tag = 'smem constant byte address 0x4 - core index']
  #allocation1 [shape = 'u32[144,128]{1,0:T(1,128)}', space=vmem, size = 0x12000, scoped, tag = 'internal scratch']
  #allocation2 [shape = 'f32[64,384]{1,0:T(8,128)}', space=vmem, size = 0x18000, scoped, tag = 'scratch operand']
  %s0 = inlined_call_operand.vmem [shape: s32[8], index: 0, kind: input, shape index: {}]
  %s1 = inlined_call_operand.vmem [shape: s32[64,1], index: 1, kind: input, shape index: {}]
  %s2 = inlined_call_operand.vmem [shape: s32[8,8,1], index: 2, kind: input, shape index: {}]
  %s3 = inlined_call_operand.hbm [shape: bf16[128,384], index: 3, kind: input, shape index: {}]
  %s4 = inlined_call_operand.hbm [shape: bf16[128,384], index: 4, kind: input, shape index: {}]
  %s5 = inlined_call_operand.vmem [shape: f32[1,384], index: 5, kind: input, shape index: {}]
  %s6 = inlined_call_operand.vmem [shape: f32[1,384], index: 6, kind: input, shape index: {}]
  %s7 = inlined_call_operand.hbm [shape: bf16[128,512], index: 7, kind: input, shape index: {}]
  %s8 = inlined_call_operand.hbm [shape: bf16[128,384], index: 8, kind: input, shape index: {}]
  %s9 = inlined_call_operand.vmem [shape: f32[1,384], index: 9, kind: input, shape index: {}]
  %s10 = inlined_call_operand.hbm [shape: bf16[128,512], index: 10, kind: input, shape index: {}]
  %s11 = inlined_call_operand.vmem [shape: f32[1,512], index: 11, kind: input, shape index: {}]
  %s12 = inlined_call_operand.vmem [shape: bf16[128,128], index: 12, kind: input, shape index: {}]
  %s13 = inlined_call_operand.hbm [shape: f32[8,8,128], index: 13, kind: output, shape index: {}]
  %s14 = sld [smem:[#allocation0]]
  $region134: #{seq2seq_forward.1} parent=0
    _
  %s16 = ssub.s32 1, %s14
  %s17 = scalar_select 0, %s16, %s14
  $region1: #{seq2seq_forward.1} parent=0
    #allocation3 [shape = 'u8[512]{0}', space=smem, size = 0x200, scoped, tag = 'input window, operand 0, single buffered']
    #allocation4 [shape = 's32[1]{0}', space=sflag, size = 0x4, scoped, tag = 'scoped memory for seq2seq_forward.1']
    #allocation5 [shape = 's32[1]{0}', space=sflag, size = 0x4, scoped, tag = 'scoped memory for seq2seq_forward.1']
    #allocation6 [shape = 's32[1]{0}', space=sflag, size = 0x4, scoped, tag = 'scoped memory for seq2seq_forward.1']
    #allocation7 [shape = 'u8[98304]{0}', space=vmem, size = 0x18000, scoped, tag = 'input window, operand 3, single buffered']
    #allocation8 [shape = 'u8[98304]{0}', space=vmem, size = 0x18000, scoped, tag = 'input window, operand 4, single buffered']
    #allocation9 [shape = 's32[1]{0}', space=sflag, size = 0x4, scoped, tag = 'scoped memory for seq2seq_forward.1']
    #allocation10 [shape = 'u8[131072]{0}', space=vmem, size = 0x20000, scoped, tag = 'input window, operand 7, single buffered']
    #allocation11 [shape = 'u8[98304]{0}', space=vmem, size = 0x18000, scoped, tag = 'input window, operand 8, single buffered']
    #allocation12 [shape = 's32[1]{0}', space=sflag, size = 0x4, scoped, tag = 'scoped memory for seq2seq_forward.1']
    #allocation13 [shape = 'u8[131072]{0}', space=vmem, size = 0x20000, scoped, tag = 'input window, operand 10, single buffered']
    #allocation14 [shape = 'u8[32768]{0}', space=vmem, size = 0x8000, scoped, tag = 'output window, operand 0, single buffered']
    %18 = vsyncpa [#allocation6], 0
    %19 = vsyncpa [#allocation4], 0
    %20 = vsyncpa [#allocation9], 0
    %21 = vsyncpa [#allocation12], 0
    %22 = vsyncpa [#allocation5], 0
    // Predicated region
    $region2: #{seq2seq_forward.1} parent=1 // pred_check
      _
    $region3: #{seq2seq_forward.1} parent=1 // pred_check_branch
      %24 = sbr.rel (0) target = $region5
    $region4: #{seq2seq_forward.1} parent=1 // pred_region
      %s26 = ssub.s32 16, 16
      %27 = vsyncadd [#allocation6], %s26
      %s29 = sshll.u32 %s0, 4
      %s30 = int_to_ptr.vmem [resolvable:$true] %s29
      %32 = dma.vmem_to_smem %s30, 16, [#allocation3], [#allocation6]
    $region5: #{seq2seq_forward.1} parent=1 // pred_fallthru
      _
    // Predicated region
    $region6: #{seq2seq_forward.1} parent=1 // pred_check
      _
    $region7: #{seq2seq_forward.1} parent=1 // pred_check_branch
      %34 = sbr.rel (0) target = $region9
    $region8: #{seq2seq_forward.1} parent=1 // pred_region
      _
    $region9: #{seq2seq_forward.1} parent=1 // pred_fallthru
      _
    // Predicated region
    $region10: #{seq2seq_forward.1} parent=1 // pred_check
      _
    $region11: #{seq2seq_forward.1} parent=1 // pred_check_branch
      %36 = sbr.rel (0) target = $region13
    $region12: #{seq2seq_forward.1} parent=1 // pred_region
      _
    $region13: #{seq2seq_forward.1} parent=1 // pred_fallthru
      _
    // Predicated region
    $region14: #{seq2seq_forward.1} parent=1 // pred_check
      _
    $region15: #{seq2seq_forward.1} parent=1 // pred_check_branch
      %38 = sbr.rel (0) target = $region17
    $region16: #{seq2seq_forward.1} parent=1 // pred_region
      %s40 = ssub.s32 3072, 3072
      %41 = vsyncadd [#allocation4], %s40
      %s42 = sshll.u32 [#allocation7], 4
      %s43 = int_to_ptr.vmem [resolvable:$true] %s42
      %48 = dma.hbm_to_vmem [thread:$0]  %s3, 3072, %s43, [#allocation4], 192, 192, 12
    $region17: #{seq2seq_forward.1} parent=1 // pred_fallthru
      _
    // Predicated region
    $region18: #{seq2seq_forward.1} parent=1 // pred_check
      _
    $region19: #{seq2seq_forward.1} parent=1 // pred_check_branch
      %50 = sbr.rel (0) target = $region21
    $region20: #{seq2seq_forward.1} parent=1 // pred_region
      %s52 = ssub.s32 3072, 3072
      %53 = vsyncadd [#allocation9], %s52
      %s54 = sshll.u32 [#allocation8], 4
      %s55 = int_to_ptr.vmem [resolvable:$true] %s54
      %60 = dma.hbm_to_vmem [thread:$0]  %s4, 3072, %s55, [#allocation9], 192, 192, 12
    $region21: #{seq2seq_forward.1} parent=1 // pred_fallthru
      _
    // Predicated region
    $region22: #{seq2seq_forward.1} parent=1 // pred_check
      _
    $region23: #{seq2seq_forward.1} parent=1 // pred_check_branch
      %62 = sbr.rel (0) target = $region25
    $region24: #{seq2seq_forward.1} parent=1 // pred_region
      _
    $region25: #{seq2seq_forward.1} parent=1 // pred_fallthru
      _
    // Predicated region
    $region26: #{seq2seq_forward.1} parent=1 // pred_check
      _
    $region27: #{seq2seq_forward.1} parent=1 // pred_check_branch
      %64 = sbr.rel (0) target = $region29
    $region28: #{seq2seq_forward.1} parent=1 // pred_region
      _
    $region29: #{seq2seq_forward.1} parent=1 // pred_fallthru
      _
    // Predicated region
    $region30: #{seq2seq_forward.1} parent=1 // pred_check
      _
    $region31: #{seq2seq_forward.1} parent=1 // pred_check_branch
      %66 = sbr.rel (0) target = $region33
    $region32: #{seq2seq_forward.1} parent=1 // pred_region
      %s68 = ssub.s32 4096, 4096
      %69 = vsyncadd [#allocation9], %s68
      %s70 = sshll.u32 [#allocation10], 4
      %s71 = int_to_ptr.vmem [resolvable:$true] %s70
      %76 = dma.hbm_to_vmem [thread:$0]  %s7, 4096, %s71, [#allocation9], 256, 256, 16
    $region33: #{seq2seq_forward.1} parent=1 // pred_fallthru
      _
    // Predicated region
    $region34: #{seq2seq_forward.1} parent=1 // pred_check
      _
    $region35: #{seq2seq_forward.1} parent=1 // pred_check_branch
      %78 = sbr.rel (0) target = $region37
    $region36: #{seq2seq_forward.1} parent=1 // pred_region
      %s80 = ssub.s32 3072, 3072
      %81 = vsyncadd [#allocation12], %s80
      %s82 = sshll.u32 [#allocation11], 4
      %s83 = int_to_ptr.vmem [resolvable:$true] %s82
      %88 = dma.hbm_to_vmem [thread:$0]  %s8, 3072, %s83, [#allocation12], 192, 192, 12
    $region37: #{seq2seq_forward.1} parent=1 // pred_fallthru
      _
    // Predicated region
    $region38: #{seq2seq_forward.1} parent=1 // pred_check
      _
    $region39: #{seq2seq_forward.1} parent=1 // pred_check_branch
      %90 = sbr.rel (0) target = $region41
    $region40: #{seq2seq_forward.1} parent=1 // pred_region
      _
    $region41: #{seq2seq_forward.1} parent=1 // pred_fallthru
      _
    // Predicated region
    $region42: #{seq2seq_forward.1} parent=1 // pred_check
      _
    $region43: #{seq2seq_forward.1} parent=1 // pred_check_branch
      %92 = sbr.rel (0) target = $region45
    $region44: #{seq2seq_forward.1} parent=1 // pred_region
      %s94 = ssub.s32 4096, 4096
      %95 = vsyncadd [#allocation12], %s94
      %s96 = sshll.u32 [#allocation13], 4
      %s97 = int_to_ptr.vmem [resolvable:$true] %s96
      %102 = dma.hbm_to_vmem [thread:$0]  %s10, 4096, %s97, [#allocation12], 256, 256, 16
    $region45: #{seq2seq_forward.1} parent=1 // pred_fallthru
      _
    // Predicated region
    $region46: #{seq2seq_forward.1} parent=1 // pred_check
      _
    $region47: #{seq2seq_forward.1} parent=1 // pred_check_branch
      %104 = sbr.rel (0) target = $region49
    $region48: #{seq2seq_forward.1} parent=1 // pred_region
      _
    $region49: #{seq2seq_forward.1} parent=1 // pred_fallthru
      _
    // Predicated region
    $region50: #{seq2seq_forward.1} parent=1 // pred_check
      _
    $region51: #{seq2seq_forward.1} parent=1 // pred_check_branch
      %106 = sbr.rel (0) target = $region53
    $region52: #{seq2seq_forward.1} parent=1 // pred_region
      _
    $region53: #{seq2seq_forward.1} parent=1 // pred_fallthru
      _
    // Predicated region
    $region54: #{seq2seq_forward.1} parent=1 // pred_check
      _
    $region55: #{seq2seq_forward.1} parent=1 // pred_check_branch
      %108 = sbr.rel (0) target = $region57
    $region56: #{seq2seq_forward.1} parent=1 // pred_region
      %109 = dma.done [#allocation6], 16
    $region57: #{seq2seq_forward.1} parent=1 // pred_fallthru
      _
    // Predicated region
    $region58: #{seq2seq_forward.1} parent=1 // pred_check
      _
    $region59: #{seq2seq_forward.1} parent=1 // pred_check_branch
      %111 = sbr.rel (0) target = $region61
    $region60: #{seq2seq_forward.1} parent=1 // pred_region
      %112 = dma.done [#allocation4], 3072
    $region61: #{seq2seq_forward.1} parent=1 // pred_fallthru
      _
    // Predicated region
    $region62: #{seq2seq_forward.1} parent=1 // pred_check
      _
    $region63: #{seq2seq_forward.1} parent=1 // pred_check_branch
      %114 = sbr.rel (0) target = $region65
    $region64: #{seq2seq_forward.1} parent=1 // pred_region
      %115 = dma.done [#allocation9], 3072
    $region65: #{seq2seq_forward.1} parent=1 // pred_fallthru
      _
    // Predicated region
    $region66: #{seq2seq_forward.1} parent=1 // pred_check
      _
    $region67: #{seq2seq_forward.1} parent=1 // pred_check_branch
      %117 = sbr.rel (0) target = $region69
    $region68: #{seq2seq_forward.1} parent=1 // pred_region
      %118 = dma.done [#allocation9], 4096
    $region69: #{seq2seq_forward.1} parent=1 // pred_fallthru
      _
    // Predicated region
    $region70: #{seq2seq_forward.1} parent=1 // pred_check
      _
    $region71: #{seq2seq_forward.1} parent=1 // pred_check_branch
      %120 = sbr.rel (0) target = $region73
    $region72: #{seq2seq_forward.1} parent=1 // pred_region
      %121 = dma.done [#allocation12], 3072
    $region73: #{seq2seq_forward.1} parent=1 // pred_fallthru
      _
    // Predicated region
    $region74: #{seq2seq_forward.1} parent=1 // pred_check
      _
    $region75: #{seq2seq_forward.1} parent=1 // pred_check_branch
      %123 = sbr.rel (0) target = $region77
    $region76: #{seq2seq_forward.1} parent=1 // pred_region
      %124 = dma.done [#allocation12], 4096
    $region77: #{seq2seq_forward.1} parent=1 // pred_fallthru
      _
    %125 = sfence
    %v127 = vlaneseq
    %v128 = vand.u32 %v127, 127
    %v129 = vld [vmem:[%s1] sm:$0xff]
    %v130 = vld [vmem:[%s1 + $0x8] sm:$0xff]
    %v131 = vld [vmem:[%s1 + $0x10] sm:$0xff]
    %v132 = vld [vmem:[%s1 + $0x18] sm:$0xff]
    %v133 = vld [vmem:[%s1 + $0x20] sm:$0xff]
    %v134 = vld [vmem:[%s1 + $0x28] sm:$0xff]
    %v135 = vld [vmem:[%s1 + $0x30] sm:$0xff]
    %v136 = vld [vmem:[%s1 + $0x38] sm:$0xff]
    %137 = vset.pattern.permute.xlu0 0
    %138 = vperm.xlu0 %137, %v129
    %v139 = vpop.permute.xlu0 %138
    %140 = vset.pattern.permute.xlu0 0
    %141 = vperm.xlu0 %140, %v130
    %v142 = vpop.permute.xlu0 %141
    %143 = vset.pattern.permute.xlu0 0
    %144 = vperm.xlu0 %143, %v131
    %v145 = vpop.permute.xlu0 %144
    %146 = vset.pattern.permute.xlu0 0
    %147 = vperm.xlu0 %146, %v132
    %v148 = vpop.permute.xlu0 %147
    %149 = vset.pattern.permute.xlu0 0
    %150 = vperm.xlu0 %149, %v133
    %v151 = vpop.permute.xlu0 %150
    %152 = vset.pattern.permute.xlu0 0
    %153 = vperm.xlu0 %152, %v134
    %v154 = vpop.permute.xlu0 %153
    %155 = vset.pattern.permute.xlu0 0
    %156 = vperm.xlu0 %155, %v135
    %v157 = vpop.permute.xlu0 %156
    %158 = vset.pattern.permute.xlu0 0
    %159 = vperm.xlu0 %158, %v136
    %v160 = vpop.permute.xlu0 %159
    %vm161 = vcmp.eq.s32.totalorder %v139, %v128
    %vm162 = vcmp.eq.s32.totalorder %v142, %v128
    %vm163 = vcmp.eq.s32.totalorder %v145, %v128
    %vm164 = vcmp.eq.s32.totalorder %v148, %v128
    %vm165 = vcmp.eq.s32.totalorder %v151, %v128
    %vm166 = vcmp.eq.s32.totalorder %v154, %v128
    %vm167 = vcmp.eq.s32.totalorder %v157, %v128
    %vm168 = vcmp.eq.s32.totalorder %v160, %v128
    %v169 = vsel %vm161, 1, 0
    %v170 = vsel %vm162, 1, 0
    %v171 = vsel %vm163, 1, 0
    %v172 = vsel %vm164, 1, 0
    %v173 = vsel %vm165, 1, 0
    %v174 = vsel %vm166, 1, 0
    %v175 = vsel %vm167, 1, 0
    %v176 = vsel %vm168, 1, 0
    %v177 = vcvt.s32.f32 %v169
    %v178 = vcvt.s32.f32 %v170
    %v179 = vcvt.s32.f32 %v171
    %v180 = vcvt.s32.f32 %v172
    %v181 = vcvt.s32.f32 %v173
    %v182 = vcvt.s32.f32 %v174
    %v183 = vcvt.s32.f32 %v175
    %v184 = vcvt.s32.f32 %v176
    %v185 = vpack.c.bf16 %v178, %v177
    %v186 = vpack.c.bf16 %v180, %v179
    %v187 = vpack.c.bf16 %v182, %v181
    %v188 = vpack.c.bf16 %v184, %v183
    %v189 = vld [vmem:[#allocation7] sm:$0xff]
    %v190 = vld [vmem:[#allocation7 + $0x8] sm:$0xf]
    %v191 = vld [vmem:[#allocation7 + $0xc] sm:$0xff]
    %v192 = vld [vmem:[#allocation7 + $0x14] sm:$0xf]
    %v193 = vld [vmem:[#allocation7 + $0x18] sm:$0xff]
    %v194 = vld [vmem:[#allocation7 + $0x20] sm:$0xf]
    %v195 = vld [vmem:[#allocation7 + $0x24] sm:$0xff]
    %v196 = vld [vmem:[#allocation7 + $0x2c] sm:$0xf]
    %v197 = vld [vmem:[#allocation7 + $0x30] sm:$0xff]
    %v198 = vld [vmem:[#allocation7 + $0x38] sm:$0xf]
    %v199 = vld [vmem:[#allocation7 + $0x3c] sm:$0xff]
    %v200 = vld [vmem:[#allocation7 + $0x44] sm:$0xf]
    %v201 = vld [vmem:[#allocation7 + $0x48] sm:$0xff]
    %v202 = vld [vmem:[#allocation7 + $0x50] sm:$0xf]
    %v203 = vld [vmem:[#allocation7 + $0x54] sm:$0xff]
    %v204 = vld [vmem:[#allocation7 + $0x5c] sm:$0xf]
    %v205 = vld [vmem:[#allocation7 + $0x60] sm:$0xff]
    %v206 = vld [vmem:[#allocation7 + $0x68] sm:$0xf]
    %v207 = vld [vmem:[#allocation7 + $0x6c] sm:$0xff]
    %v208 = vld [vmem:[#allocation7 + $0x74] sm:$0xf]
    %v209 = vld [vmem:[#allocation7 + $0x78] sm:$0xff]
    %v210 = vld [vmem:[#allocation7 + $0x80] sm:$0xf]
    %v211 = vld [vmem:[#allocation7 + $0x84] sm:$0xff]
    %v212 = vld [vmem:[#allocation7 + $0x8c] sm:$0xf]
    %v213 = vld [vmem:[#allocation7 + $0x90] sm:$0xff]
    %v214 = vld [vmem:[#allocation7 + $0x98] sm:$0xf]
    %v215 = vld [vmem:[#allocation7 + $0x9c] sm:$0xff]
    %v216 = vld [vmem:[#allocation7 + $0xa4] sm:$0xf]
    %v217 = vld [vmem:[#allocation7 + $0xa8] sm:$0xff]
    %v218 = vld [vmem:[#allocation7 + $0xb0] sm:$0xf]
    %v219 = vld [vmem:[#allocation7 + $0xb4] sm:$0xff]
    %v220 = vld [vmem:[#allocation7 + $0xbc] sm:$0xf]
    %v221 = vld [vmem:[%s5] sm:$0x7]
    %v223 = vlaneseq
    %v224 = vshrl.u32 %v223, 7
    %v225 = vsub.s32 0, %v224
    %v226 = vrot.slane %v221, %v225
    %v227 = vlaneseq
    %v228 = vshrl.u32 %v227, 7
    %v229 = vsub.s32 1, %v228
    %v230 = vrot.slane %v221, %v229
    %v231 = vlaneseq
    %v232 = vshrl.u32 %v231, 7
    %v233 = vsub.s32 2, %v232
    %v234 = vrot.slane %v221, %v233
    %v270 = vunpack.c.l.b16 %v189
    %v271 = vunpack.c.h.b16 %v189
    %v272 = vunpack.c.l.b16 %v190
    %v273 = vunpack.c.l.b16 %v191
    %v274 = vunpack.c.h.b16 %v191
    %v275 = vunpack.c.l.b16 %v192
    %v276 = vunpack.c.l.b16 %v193
    %v277 = vunpack.c.h.b16 %v193
    %v278 = vunpack.c.l.b16 %v194
    %v279 = vunpack.c.l.b16 %v195
    %v280 = vunpack.c.h.b16 %v195
    %v281 = vunpack.c.l.b16 %v196
    %v282 = vunpack.c.l.b16 %v197
    %v283 = vunpack.c.h.b16 %v197
    %v284 = vunpack.c.l.b16 %v198
    %v285 = vunpack.c.l.b16 %v199
    %v286 = vunpack.c.h.b16 %v199
    %v287 = vunpack.c.l.b16 %v200
    %v288 = vunpack.c.l.b16 %v201
    %v289 = vunpack.c.h.b16 %v201
    %v290 = vunpack.c.l.b16 %v202
    %v291 = vunpack.c.l.b16 %v203
    %v292 = vunpack.c.h.b16 %v203
    %v293 = vunpack.c.l.b16 %v204
    %v294 = vunpack.c.l.b16 %v205
    %v295 = vunpack.c.h.b16 %v205
    %v296 = vunpack.c.l.b16 %v206
    %v297 = vunpack.c.l.b16 %v207
    %v298 = vunpack.c.h.b16 %v207
    %v299 = vunpack.c.l.b16 %v208
    %v300 = vunpack.c.l.b16 %v209
    %v301 = vunpack.c.h.b16 %v209
    %v302 = vunpack.c.l.b16 %v210
    %v303 = vunpack.c.l.b16 %v211
    %v304 = vunpack.c.h.b16 %v211
    %v305 = vunpack.c.l.b16 %v212
    %v306 = vunpack.c.l.b16 %v213
    %v307 = vunpack.c.h.b16 %v213
    %v308 = vunpack.c.l.b16 %v214
    %v309 = vunpack.c.l.b16 %v215
    %v310 = vunpack.c.h.b16 %v215
    %v311 = vunpack.c.l.b16 %v216
    %v312 = vunpack.c.l.b16 %v217
    %v313 = vunpack.c.h.b16 %v217
    %v314 = vunpack.c.l.b16 %v218
    %v315 = vunpack.c.l.b16 %v219
    %v316 = vunpack.c.h.b16 %v219
    %v317 = vunpack.c.l.b16 %v220
    %v318 = vpack.c.b16 %v273, %v270
    %v319 = vpack.c.b16 %v274, %v271
    %v320 = vpack.c.b16 %v275, %v272
    %v321 = vpack.c.b16 %v279, %v276
    %v322 = vpack.c.b16 %v280, %v277
    %v323 = vpack.c.b16 %v281, %v278
    %v324 = vpack.c.b16 %v285, %v282
    %v325 = vpack.c.b16 %v286, %v283
    %v326 = vpack.c.b16 %v287, %v284
    %v327 = vpack.c.b16 %v291, %v288
    %v328 = vpack.c.b16 %v292, %v289
    %v329 = vpack.c.b16 %v293, %v290
    %v330 = vpack.c.b16 %v297, %v294
    %v331 = vpack.c.b16 %v298, %v295
    %v332 = vpack.c.b16 %v299, %v296
    %v333 = vpack.c.b16 %v303, %v300
    %v334 = vpack.c.b16 %v304, %v301
    %v335 = vpack.c.b16 %v305, %v302
    %v336 = vpack.c.b16 %v309, %v306
    %v337 = vpack.c.b16 %v310, %v307
    %v338 = vpack.c.b16 %v311, %v308
    %v339 = vpack.c.b16 %v315, %v312
    %v340 = vpack.c.b16 %v316, %v313
    %v341 = vpack.c.b16 %v317, %v314
    %366 = vmatprep.subr.bf16.mxu0 %v319
    %367 = vmatpush1.bf16.msra.mxu0 %v318
    %368 = vmatprep.subr.bf16.mxu0 %v322
    %369 = vmatpush1.bf16.msra.mxu0 %v321
    %370 = vmatprep.subr.bf16.mxu0 %v325
    %371 = vmatpush1.bf16.msra.mxu0 %v324
    %372 = vmatprep.subr.bf16.mxu0 %v328
    %373 = vmatpush1.bf16.msra.mxu0 %v327
    %374 = vmatprep.subr.bf16.mxu0 %v331
    %375 = vmatpush1.bf16.msra.mxu0 %v330
    %376 = vmatprep.subr.bf16.mxu0 %v334
    %377 = vmatpush1.bf16.msra.mxu0 %v333
    %378 = vmatprep.subr.bf16.mxu0 %v337
    %379 = vmatpush1.bf16.msra.mxu0 %v336
    %380 = vmatprep.subr.bf16.mxu0 %v340
    %381 = vmatpush1.bf16.msra.mxu0 %v339
    %382 = vmatprep.subr.bf16.mxu0 0
    %383 = vmatpush1.bf16.msra.mxu0 0
    %384 = vmatprep.subr.bf16.mxu0 0
    %385 = vmatpush1.bf16.msra.mxu0 0
    %386 = vmatprep.subr.bf16.mxu0 0
    %387 = vmatpush1.bf16.msra.mxu0 0
    %388 = vmatprep.subr.bf16.mxu0 0
    %389 = vmatpush1.bf16.msra.mxu0 0
    %390 = vmatprep.subr.bf16.mxu0 0
    %391 = vmatpush1.bf16.msra.mxu0 0
    %392 = vmatprep.subr.bf16.mxu0 0
    %393 = vmatpush1.bf16.msra.mxu0 0
    %394 = vmatprep.subr.bf16.mxu0 0
    %395 = vmatpush1.bf16.msra.mxu0 0
    %396 = vmatprep.subr.bf16.mxu0 0
    %397 = vmatpush1.bf16.msra.mxu0 0
    %398 = vmatprep.mubr.bf16.mxu0 0
    %399 = vmatmul.mubr.bf16.gmra.mrb[0].mxu0 %v185
    %v400 = vpop.f32.mrb[0].mxu0
    %v401 = vadd.f32 %v226, %v400
    %v402 = vpop.f32.mrb[0].mxu0
    %v403 = vadd.f32 %v230, %v402
    %v404 = vpop.f32.mrb[0].mxu0
    %v405 = vadd.f32 %v226, %v404
    %v406 = vpop.f32.mrb[0].mxu0
    %v407 = vadd.f32 %v230, %v406
    %408 = vmatprep.mubr.bf16.mxu0 0
    %409 = vmatmul.mubr.bf16.gmra.mrb[0].mxu0 %v186
    %v410 = vpop.f32.mrb[0].mxu0
    %v411 = vadd.f32 %v226, %v410
    %v412 = vpop.f32.mrb[0].mxu0
    %v413 = vadd.f32 %v230, %v412
    %v414 = vpop.f32.mrb[0].mxu0
    %v415 = vadd.f32 %v226, %v414
    %v416 = vpop.f32.mrb[0].mxu0
    %v417 = vadd.f32 %v230, %v416
    %418 = vmatprep.mubr.bf16.mxu0 0
    %419 = vmatmul.mubr.bf16.gmra.mrb[0].mxu0 %v187
    %v420 = vpop.f32.mrb[0].mxu0
    %v421 = vadd.f32 %v226, %v420
    %v422 = vpop.f32.mrb[0].mxu0
    %v423 = vadd.f32 %v230, %v422
    %v424 = vpop.f32.mrb[0].mxu0
    %v425 = vadd.f32 %v226, %v424
    %v426 = vpop.f32.mrb[0].mxu0
    %v427 = vadd.f32 %v230, %v426
    %428 = vmatprep.mubr.bf16.mxu0 0
    %429 = vmatmul.mubr.bf16.gmra.mrb[0].mxu0 %v188
    %v430 = vpop.f32.mrb[0].mxu0
    %v431 = vadd.f32 %v226, %v430
    %v432 = vpop.f32.mrb[0].mxu0
    %v433 = vadd.f32 %v230, %v432
    %v434 = vpop.f32.mrb[0].mxu0
    %v435 = vadd.f32 %v226, %v434
    %v436 = vpop.f32.mrb[0].mxu0
    %v437 = vadd.f32 %v230, %v436
    %438 = vdwg.mxu0
    %439 = vmatprep.subr.bf16.mxu0 0
    %440 = vmatpush1.bf16.msra.mxu0 %v320
    %441 = vmatprep.subr.bf16.mxu0 0
    %442 = vmatpush1.bf16.msra.mxu0 %v323
    %443 = vmatprep.subr.bf16.mxu0 0
    %444 = vmatpush1.bf16.msra.mxu0 %v326
    %445 = vmatprep.subr.bf16.mxu0 0
    %446 = vmatpush1.bf16.msra.mxu0 %v329
    %447 = vmatprep.subr.bf16.mxu0 0
    %448 = vmatpush1.bf16.msra.mxu0 %v332
    %449 = vmatprep.subr.bf16.mxu0 0
    %450 = vmatpush1.bf16.msra.mxu0 %v335
    %451 = vmatprep.subr.bf16.mxu0 0
    %452 = vmatpush1.bf16.msra.mxu0 %v338
    %453 = vmatprep.subr.bf16.mxu0 0
    %454 = vmatpush1.bf16.msra.mxu0 %v341
    %455 = vmatprep.subr.bf16.mxu0 0
    %456 = vmatpush1.bf16.msra.mxu0 0
    %457 = vmatprep.subr.bf16.mxu0 0
    %458 = vmatpush1.bf16.msra.mxu0 0
    %459 = vmatprep.subr.bf16.mxu0 0
    %460 = vmatpush1.bf16.msra.mxu0 0
    %461 = vmatprep.subr.bf16.mxu0 0
    %462 = vmatpush1.bf16.msra.mxu0 0
    %463 = vmatprep.subr.bf16.mxu0 0
    %464 = vmatpush1.bf16.msra.mxu0 0
    %465 = vmatprep.subr.bf16.mxu0 0
    %466 = vmatpush1.bf16.msra.mxu0 0
    %467 = vmatprep.subr.bf16.mxu0 0
    %468 = vmatpush1.bf16.msra.mxu0 0
    %469 = vmatprep.subr.bf16.mxu0 0
    %470 = vmatpush1.bf16.msra.mxu0 0
    %471 = vmatprep.mubr.bf16.mxu0 0
    %472 = vmatmul.mubr.bf16.gmra.mrb[0].mxu0 %v185
    %v473 = vpop.f32.mrb[0].mxu0
    %v474 = vadd.f32 %v234, %v473
    %v475 = vpop.f32.mrb[0].mxu0
    %v476 = vpop.f32.mrb[0].mxu0
    %v477 = vadd.f32 %v234, %v476
    %v478 = vpop.f32.mrb[0].mxu0
    %479 = vmatprep.mubr.bf16.mxu0 0
    %480 = vmatmul.mubr.bf16.gmra.mrb[0].mxu0 %v186
    %v481 = vpop.f32.mrb[0].mxu0
    %v482 = vadd.f32 %v234, %v481
    %v483 = vpop.f32.mrb[0].mxu0
    %v484 = vpop.f32.mrb[0].mxu0
    %v485 = vadd.f32 %v234, %v484
    %v486 = vpop.f32.mrb[0].mxu0
    %487 = vmatprep.mubr.bf16.mxu0 0
    %488 = vmatmul.mubr.bf16.gmra.mrb[0].mxu0 %v187
    %v489 = vpop.f32.mrb[0].mxu0
    %v490 = vadd.f32 %v234, %v489
    %v491 = vpop.f32.mrb[0].mxu0
    %v492 = vpop.f32.mrb[0].mxu0
    %v493 = vadd.f32 %v234, %v492
    %v494 = vpop.f32.mrb[0].mxu0
    %495 = vmatprep.mubr.bf16.mxu0 0
    %496 = vmatmul.mubr.bf16.gmra.mrb[0].mxu0 %v188
    %v497 = vpop.f32.mrb[0].mxu0
    %v498 = vadd.f32 %v234, %v497
    %v499 = vpop.f32.mrb[0].mxu0
    %v500 = vpop.f32.mrb[0].mxu0
    %v501 = vadd.f32 %v234, %v500
    %v502 = vpop.f32.mrb[0].mxu0
    %503 = vdwg.mxu0
    %504 = vst [vmem:[#allocation2] sm:$0xff] %v401
    %505 = vst [vmem:[#allocation2 + $0x8] sm:$0xff] %v403
    %506 = vst [vmem:[#allocation2 + $0x10] sm:$0xff] %v474
    %507 = vst [vmem:[#allocation2 + $0x18] sm:$0xff] %v405
    %508 = vst [vmem:[#allocation2 + $0x20] sm:$0xff] %v407
    %509 = vst [vmem:[#allocation2 + $0x28] sm:$0xff] %v477
    %510 = vst [vmem:[#allocation2 + $0x30] sm:$0xff] %v411
    %511 = vst [vmem:[#allocation2 + $0x38] sm:$0xff] %v413
    %512 = vst [vmem:[#allocation2 + $0x40] sm:$0xff] %v482
    %513 = vst [vmem:[#allocation2 + $0x48] sm:$0xff] %v415
    %514 = vst [vmem:[#allocation2 + $0x50] sm:$0xff] %v417
    %515 = vst [vmem:[#allocation2 + $0x58] sm:$0xff] %v485
    %516 = vst [vmem:[#allocation2 + $0x60] sm:$0xff] %v421
    %517 = vst [vmem:[#allocation2 + $0x68] sm:$0xff] %v423
    %518 = vst [vmem:[#allocation2 + $0x70] sm:$0xff] %v490
    %519 = vst [vmem:[#allocation2 + $0x78] sm:$0xff] %v425
    %520 = vst [vmem:[#allocation2 + $0x80] sm:$0xff] %v427
    %521 = vst [vmem:[#allocation2 + $0x88] sm:$0xff] %v493
    %522 = vst [vmem:[#allocation2 + $0x90] sm:$0xff] %v431
    %523 = vst [vmem:[#allocation2 + $0x98] sm:$0xff] %v433
    %524 = vst [vmem:[#allocation2 + $0xa0] sm:$0xff] %v498
    %525 = vst [vmem:[#allocation2 + $0xa8] sm:$0xff] %v435
    %526 = vst [vmem:[#allocation2 + $0xb0] sm:$0xff] %v437
    %527 = vst [vmem:[#allocation2 + $0xb8] sm:$0xff] %v501
    %s528 = smul.u32 0, 3
    %s529 = smul.addr %s528, 8
    %s530 = scalar_lea.vmem [#allocation2], %s529
    %v531 = vld [vmem:[%s530] sm:$0xff]
    %v532 = vld [vmem:[%s530 + $0x8] sm:$0xff]
    %v533 = vld [vmem:[%s530 + $0x10] sm:$0xff]
    %v534 = vld [vmem:[#allocation8] sm:$0xff]
    %v535 = vld [vmem:[#allocation8 + $0x8] sm:$0xf]
    %v536 = vld [vmem:[#allocation8 + $0xc] sm:$0xff]
    %v537 = vld [vmem:[#allocation8 + $0x14] sm:$0xf]
    %v538 = vld [vmem:[#allocation8 + $0x18] sm:$0xff]
    %v539 = vld [vmem:[#allocation8 + $0x20] sm:$0xf]
    %v540 = vld [vmem:[#allocation8 + $0x24] sm:$0xff]
    %v541 = vld [vmem:[#allocation8 + $0x2c] sm:$0xf]
    %v542 = vld [vmem:[#allocation8 + $0x30] sm:$0xff]
    %v543 = vld [vmem:[#allocation8 + $0x38] sm:$0xf]
    %v544 = vld [vmem:[#allocation8 + $0x3c] sm:$0xff]
    %v545 = vld [vmem:[#allocation8 + $0x44] sm:$0xf]
    %v546 = vld [vmem:[#allocation8 + $0x48] sm:$0xff]
    %v547 = vld [vmem:[#allocation8 + $0x50] sm:$0xf]
    %v548 = vld [vmem:[#allocation8 + $0x54] sm:$0xff]
    %v549 = vld [vmem:[#allocation8 + $0x5c] sm:$0xf]
    %v550 = vld [vmem:[#allocation8 + $0x60] sm:$0xff]
    %v551 = vld [vmem:[#allocation8 + $0x68] sm:$0xf]
    %v552 = vld [vmem:[#allocation8 + $0x6c] sm:$0xff]
    %v553 = vld [vmem:[#allocation8 + $0x74] sm:$0xf]
    %v554 = vld [vmem:[#allocation8 + $0x78] sm:$0xff]
    %v555 = vld [vmem:[#allocation8 + $0x80] sm:$0xf]
    %v556 = vld [vmem:[#allocation8 + $0x84] sm:$0xff]
    %v557 = vld [vmem:[#allocation8 + $0x8c] sm:$0xf]
    %v558 = vld [vmem:[#allocation8 + $0x90] sm:$0xff]
    %v559 = vld [vmem:[#allocation8 + $0x98] sm:$0xf]
    %v560 = vld [vmem:[#allocation8 + $0x9c] sm:$0xff]
    %v561 = vld [vmem:[#allocation8 + $0xa4] sm:$0xf]
    %v562 = vld [vmem:[#allocation8 + $0xa8] sm:$0xff]
    %v563 = vld [vmem:[#allocation8 + $0xb0] sm:$0xf]
    %v564 = vld [vmem:[#allocation8 + $0xb4] sm:$0xff]
    %v565 = vld [vmem:[#allocation8 + $0xbc] sm:$0xf]
    %v566 = vld [vmem:[%s6] sm:$0x7]
    %v568 = vlaneseq
    %v569 = vshrl.u32 %v568, 7
    %v570 = vsub.s32 0, %v569
    %v571 = vrot.slane %v566, %v570
    %v572 = vlaneseq
    %v573 = vshrl.u32 %v572, 7
    %v574 = vsub.s32 1, %v573
    %v575 = vrot.slane %v566, %v574
    %v576 = vlaneseq
    %v577 = vshrl.u32 %v576, 7
    %v578 = vsub.s32 2, %v577
    %v579 = vrot.slane %v566, %v578
    %v615 = vunpack.c.l.b16 %v534
    %v616 = vunpack.c.h.b16 %v534
    %v617 = vunpack.c.l.b16 %v535
    %v618 = vunpack.c.l.b16 %v536
    %v619 = vunpack.c.h.b16 %v536
    %v620 = vunpack.c.l.b16 %v537
    %v621 = vunpack.c.l.b16 %v538
    %v622 = vunpack.c.h.b16 %v538
    %v623 = vunpack.c.l.b16 %v539
    %v624 = vunpack.c.l.b16 %v540
    %v625 = vunpack.c.h.b16 %v540
    %v626 = vunpack.c.l.b16 %v541
    %v627 = vunpack.c.l.b16 %v542
    %v628 = vunpack.c.h.b16 %v542
    %v629 = vunpack.c.l.b16 %v543
    %v630 = vunpack.c.l.b16 %v544
    %v631 = vunpack.c.h.b16 %v544
    %v632 = vunpack.c.l.b16 %v545
    %v633 = vunpack.c.l.b16 %v546
    %v634 = vunpack.c.h.b16 %v546
    %v635 = vunpack.c.l.b16 %v547
    %v636 = vunpack.c.l.b16 %v548
    %v637 = vunpack.c.h.b16 %v548
    %v638 = vunpack.c.l.b16 %v549
    %v639 = vunpack.c.l.b16 %v550
    %v640 = vunpack.c.h.b16 %v550
    %v641 = vunpack.c.l.b16 %v551
    %v642 = vunpack.c.l.b16 %v552
    %v643 = vunpack.c.h.b16 %v552
    %v644 = vunpack.c.l.b16 %v553
    %v645 = vunpack.c.l.b16 %v554
    %v646 = vunpack.c.h.b16 %v554
    %v647 = vunpack.c.l.b16 %v555
    %v648 = vunpack.c.l.b16 %v556
    %v649 = vunpack.c.h.b16 %v556
    %v650 = vunpack.c.l.b16 %v557
    %v651 = vunpack.c.l.b16 %v558
    %v652 = vunpack.c.h.b16 %v558
    %v653 = vunpack.c.l.b16 %v559
    %v654 = vunpack.c.l.b16 %v560
    %v655 = vunpack.c.h.b16 %v560
    %v656 = vunpack.c.l.b16 %v561
    %v657 = vunpack.c.l.b16 %v562
    %v658 = vunpack.c.h.b16 %v562
    %v659 = vunpack.c.l.b16 %v563
    %v660 = vunpack.c.l.b16 %v564
    %v661 = vunpack.c.h.b16 %v564
    %v662 = vunpack.c.l.b16 %v565
    %v663 = vpack.c.b16 %v618, %v615
    %v664 = vpack.c.b16 %v619, %v616
    %v665 = vpack.c.b16 %v620, %v617
    %v666 = vpack.c.b16 %v624, %v621
    %v667 = vpack.c.b16 %v625, %v622
    %v668 = vpack.c.b16 %v626, %v623
    %v669 = vpack.c.b16 %v630, %v627
    %v670 = vpack.c.b16 %v631, %v628
    %v671 = vpack.c.b16 %v632, %v629
    %v672 = vpack.c.b16 %v636, %v633
    %v673 = vpack.c.b16 %v637, %v634
    %v674 = vpack.c.b16 %v638, %v635
    %v675 = vpack.c.b16 %v642, %v639
    %v676 = vpack.c.b16 %v643, %v640
    %v677 = vpack.c.b16 %v644, %v641
    %v678 = vpack.c.b16 %v648, %v645
    %v679 = vpack.c.b16 %v649, %v646
    %v680 = vpack.c.b16 %v650, %v647
    %v681 = vpack.c.b16 %v654, %v651
    %v682 = vpack.c.b16 %v655, %v652
    %v683 = vpack.c.b16 %v656, %v653
    %v684 = vpack.c.b16 %v660, %v657
    %v685 = vpack.c.b16 %v661, %v658
    %v686 = vpack.c.b16 %v662, %v659
    %711 = vmatprep.subr.bf16.mxu0 %v664
    %712 = vmatpush1.bf16.msra.mxu0 %v663
    %713 = vmatprep.subr.bf16.mxu0 %v667
    %714 = vmatpush1.bf16.msra.mxu0 %v666
    %715 = vmatprep.subr.bf16.mxu0 %v670
    %716 = vmatpush1.bf16.msra.mxu0 %v669
    %717 = vmatprep.subr.bf16.mxu0 %v673
    %718 = vmatpush1.bf16.msra.mxu0 %v672
    %719 = vmatprep.subr.bf16.mxu0 %v676
    %720 = vmatpush1.bf16.msra.mxu0 %v675
    %721 = vmatprep.subr.bf16.mxu0 %v679
    %722 = vmatpush1.bf16.msra.mxu0 %v678
    %723 = vmatprep.subr.bf16.mxu0 %v682
    %724 = vmatpush1.bf16.msra.mxu0 %v681
    %725 = vmatprep.subr.bf16.mxu0 %v685
    %726 = vmatpush1.bf16.msra.mxu0 %v684
    %727 = vmatprep.subr.bf16.mxu0 0
    %728 = vmatpush1.bf16.msra.mxu0 0
    %729 = vmatprep.subr.bf16.mxu0 0
    %730 = vmatpush1.bf16.msra.mxu0 0
    %731 = vmatprep.subr.bf16.mxu0 0
    %732 = vmatpush1.bf16.msra.mxu0 0
    %733 = vmatprep.subr.bf16.mxu0 0
    %734 = vmatpush1.bf16.msra.mxu0 0
    %735 = vmatprep.subr.bf16.mxu0 0
    %736 = vmatpush1.bf16.msra.mxu0 0
    %737 = vmatprep.subr.bf16.mxu0 0
    %738 = vmatpush1.bf16.msra.mxu0 0
    %739 = vmatprep.subr.bf16.mxu0 0
    %740 = vmatpush1.bf16.msra.mxu0 0
    %741 = vmatprep.subr.bf16.mxu0 0
    %742 = vmatpush1.bf16.msra.mxu0 0
    %743 = vmatprep.mubr.bf16.mxu0 0
    %744 = vmatmul.mubr.bf16.gmra.mrb[0].mxu0 0
    %v745 = vpop.f32.mrb[0].mxu0
    %v746 = vadd.f32 %v571, %v745
    %v747 = vpop.f32.mrb[0].mxu0
    %v748 = vadd.f32 %v575, %v747
    %v749 = vpop.f32.mrb[0].mxu0
    %v750 = vpop.f32.mrb[0].mxu0
    %751 = vdwg.mxu0
    %752 = vmatprep.subr.bf16.mxu0 0
    %753 = vmatpush1.bf16.msra.mxu0 %v665
    %754 = vmatprep.subr.bf16.mxu0 0
    %755 = vmatpush1.bf16.msra.mxu0 %v668
    %756 = vmatprep.subr.bf16.mxu0 0
    %757 = vmatpush1.bf16.msra.mxu0 %v671
    %758 = vmatprep.subr.bf16.mxu0 0
    %759 = vmatpush1.bf16.msra.mxu0 %v674
    %760 = vmatprep.subr.bf16.mxu0 0
    %761 = vmatpush1.bf16.msra.mxu0 %v677
    %762 = vmatprep.subr.bf16.mxu0 0
    %763 = vmatpush1.bf16.msra.mxu0 %v680
    %764 = vmatprep.subr.bf16.mxu0 0
    %765 = vmatpush1.bf16.msra.mxu0 %v683
    %766 = vmatprep.subr.bf16.mxu0 0
    %767 = vmatpush1.bf16.msra.mxu0 %v686
    %768 = vmatprep.subr.bf16.mxu0 0
    %769 = vmatpush1.bf16.msra.mxu0 0
    %770 = vmatprep.subr.bf16.mxu0 0
    %771 = vmatpush1.bf16.msra.mxu0 0
    %772 = vmatprep.subr.bf16.mxu0 0
    %773 = vmatpush1.bf16.msra.mxu0 0
    %774 = vmatprep.subr.bf16.mxu0 0
    %775 = vmatpush1.bf16.msra.mxu0 0
    %776 = vmatprep.subr.bf16.mxu0 0
    %777 = vmatpush1.bf16.msra.mxu0 0
    %778 = vmatprep.subr.bf16.mxu0 0
    %779 = vmatpush1.bf16.msra.mxu0 0
    %780 = vmatprep.subr.bf16.mxu0 0
    %781 = vmatpush1.bf16.msra.mxu0 0
    %782 = vmatprep.subr.bf16.mxu0 0
    %783 = vmatpush1.bf16.msra.mxu0 0
    %784 = vmatprep.mubr.bf16.mxu0 0
    %785 = vmatmul.mubr.bf16.gmra.mrb[0].mxu0 0
    %v786 = vpop.f32.mrb[0].mxu0
    %v787 = vadd.f32 %v579, %v786
    %v788 = vpop.f32.mrb[0].mxu0
    %v789 = vpop.f32.mrb[0].mxu0
    %v790 = vpop.f32.mrb[0].mxu0
    %791 = vdwg.mxu0
    %v792 = vadd.f32 %v531, %v746
    %v793 = vadd.f32 %v532, %v748
    %v794 = vxor.u32 %v792, 2147483648
    %v795 = vxor.u32 %v793, 2147483648
    %v796 = vmul.f32 %v794, 1.442695
    %v797 = vpow.pop %v796
    %v798 = vmul.f32 %v795, 1.442695
    %v799 = vpow.pop %v798
    %v800 = vadd.f32 %v797, 1.0
    %v801 = vadd.f32 %v799, 1.0
    %v802 = vrcp.pop %v800
    %v803 = vmul.f32 1.0, %v802
    %v804 = vrcp.pop %v801
    %v805 = vmul.f32 1.0, %v804
    %v806 = vmul.f32 %v803, %v787
    %v807 = vadd.f32 %v533, %v806
    %v808 = vtanh.pop %v807
    %v809 = vsub.f32 1.0, %v805
    %v810 = vmul.f32 %v809, %v808
    %v811 = vmul.f32 %v805, 0.0
    %v812 = vadd.f32 %v810, %v811
    %s813 = smul.u32 1, 3
    %s814 = smul.addr %s813, 8
    %s815 = scalar_lea.vmem [#allocation2], %s814
    %v816 = vld [vmem:[%s815] sm:$0xff]
    %v817 = vld [vmem:[%s815 + $0x8] sm:$0xff]
    %v818 = vld [vmem:[%s815 + $0x10] sm:$0xff]
    %v819 = vpack.c.bf16 %v812, %v812
    %820 = vmatprep.subr.bf16.mxu0 %v664
    %821 = vmatpush1.bf16.msra.mxu0 %v663
    %822 = vmatprep.subr.bf16.mxu0 %v667
    %823 = vmatpush1.bf16.msra.mxu0 %v666
    %824 = vmatprep.subr.bf16.mxu0 %v670
    %825 = vmatpush1.bf16.msra.mxu0 %v669
    %826 = vmatprep.subr.bf16.mxu0 %v673
    %827 = vmatpush1.bf16.msra.mxu0 %v672
    %828 = vmatprep.subr.bf16.mxu0 %v676
    %829 = vmatpush1.bf16.msra.mxu0 %v675
    %830 = vmatprep.subr.bf16.mxu0 %v679
    %831 = vmatpush1.bf16.msra.mxu0 %v678
    %832 = vmatprep.subr.bf16.mxu0 %v682
    %833 = vmatpush1.bf16.msra.mxu0 %v681
    %834 = vmatprep.subr.bf16.mxu0 %v685
    %835 = vmatpush1.bf16.msra.mxu0 %v684
    %836 = vmatprep.subr.bf16.mxu0 0
    %837 = vmatpush1.bf16.msra.mxu0 0
    %838 = vmatprep.subr.bf16.mxu0 0
    %839 = vmatpush1.bf16.msra.mxu0 0
    %840 = vmatprep.subr.bf16.mxu0 0
    %841 = vmatpush1.bf16.msra.mxu0 0
    %842 = vmatprep.subr.bf16.mxu0 0
    %843 = vmatpush1.bf16.msra.mxu0 0
    %844 = vmatprep.subr.bf16.mxu0 0
    %845 = vmatpush1.bf16.msra.mxu0 0
    %846 = vmatprep.subr.bf16.mxu0 0
    %847 = vmatpush1.bf16.msra.mxu0 0
    %848 = vmatprep.subr.bf16.mxu0 0
    %849 = vmatpush1.bf16.msra.mxu0 0
    %850 = vmatprep.subr.bf16.mxu0 0
    %851 = vmatpush1.bf16.msra.mxu0 0
    %852 = vmatprep.mubr.bf16.mxu0 0
    %853 = vmatmul.mubr.bf16.gmra.mrb[0].mxu0 %v819
    %v854 = vpop.f32.mrb[0].mxu0
    %v855 = vadd.f32 %v571, %v854
    %v856 = vpop.f32.mrb[0].mxu0
    %v857 = vadd.f32 %v575, %v856
    %v858 = vpop.f32.mrb[0].mxu0
    %v859 = vpop.f32.mrb[0].mxu0
    %860 = vdwg.mxu0
    %861 = vmatprep.subr.bf16.mxu0 0
    %862 = vmatpush1.bf16.msra.mxu0 %v665
    %863 = vmatprep.subr.bf16.mxu0 0
    %864 = vmatpush1.bf16.msra.mxu0 %v668
    %865 = vmatprep.subr.bf16.mxu0 0
    %866 = vmatpush1.bf16.msra.mxu0 %v671
    %867 = vmatprep.subr.bf16.mxu0 0
    %868 = vmatpush1.bf16.msra.mxu0 %v674
    %869 = vmatprep.subr.bf16.mxu0 0
    %870 = vmatpush1.bf16.msra.mxu0 %v677
    %871 = vmatprep.subr.bf16.mxu0 0
    %872 = vmatpush1.bf16.msra.mxu0 %v680
    %873 = vmatprep.subr.bf16.mxu0 0
    %874 = vmatpush1.bf16.msra.mxu0 %v683
    %875 = vmatprep.subr.bf16.mxu0 0
    %876 = vmatpush1.bf16.msra.mxu0 %v686
    %877 = vmatprep.subr.bf16.mxu0 0
    %878 = vmatpush1.bf16.msra.mxu0 0
    %879 = vmatprep.subr.bf16.mxu0 0
    %880 = vmatpush1.bf16.msra.mxu0 0
    %881 = vmatprep.subr.bf16.mxu0 0
    %882 = vmatpush1.bf16.msra.mxu0 0
    %883 = vmatprep.subr.bf16.mxu0 0
    %884 = vmatpush1.bf16.msra.mxu0 0
    %885 = vmatprep.subr.bf16.mxu0 0
    %886 = vmatpush1.bf16.msra.mxu0 0
    %887 = vmatprep.subr.bf16.mxu0 0
    %888 = vmatpush1.bf16.msra.mxu0 0
    %889 = vmatprep.subr.bf16.mxu0 0
    %890 = vmatpush1.bf16.msra.mxu0 0
    %891 = vmatprep.subr.bf16.mxu0 0
    %892 = vmatpush1.bf16.msra.mxu0 0
    %893 = vmatprep.mubr.bf16.mxu0 0
    %894 = vmatmul.mubr.bf16.gmra.mrb[0].mxu0 %v819
    %v895 = vpop.f32.mrb[0].mxu0
    %v896 = vadd.f32 %v579, %v895
    %v897 = vpop.f32.mrb[0].mxu0
    %v898 = vpop.f32.mrb[0].mxu0
    %v899 = vpop.f32.mrb[0].mxu0
    %900 = vdwg.mxu0
    %v901 = vadd.f32 %v816, %v855
    %v902 = vadd.f32 %v817, %v857
    %v903 = vxor.u32 %v901, 2147483648
    %v904 = vxor.u32 %v902, 2147483648
    %v905 = vmul.f32 %v903, 1.442695
    %v906 = vpow.pop %v905
    %v907 = vmul.f32 %v904, 1.442695
    %v908 = vpow.pop %v907
    %v909 = vadd.f32 %v906, 1.0
    %v910 = vadd.f32 %v908, 1.0
    %v911 = vrcp.pop %v909
    %v912 = vmul.f32 1.0, %v911
    %v913 = vrcp.pop %v910
    %v914 = vmul.f32 1.0, %v913
    %v915 = vmul.f32 %v912, %v896
    %v916 = vadd.f32 %v818, %v915
    %v917 = vtanh.pop %v916
    %v918 = vsub.f32 1.0, %v914
    %v919 = vmul.f32 %v918, %v917
    %v920 = vmul.f32 %v914, %v812
    %v921 = vadd.f32 %v919, %v920
    %s922 = smul.u32 2, 3
    %s923 = smul.addr %s922, 8
    %s924 = scalar_lea.vmem [#allocation2], %s923
    %v925 = vld [vmem:[%s924] sm:$0xff]
    %v926 = vld [vmem:[%s924 + $0x8] sm:$0xff]
    %v927 = vld [vmem:[%s924 + $0x10] sm:$0xff]
    %v928 = vpack.c.bf16 %v921, %v921
    %929 = vmatprep.subr.bf16.mxu0 %v664
    %930 = vmatpush1.bf16.msra.mxu0 %v663
    %931 = vmatprep.subr.bf16.mxu0 %v667
    %932 = vmatpush1.bf16.msra.mxu0 %v666
    %933 = vmatprep.subr.bf16.mxu0 %v670
    %934 = vmatpush1.bf16.msra.mxu0 %v669
    %935 = vmatprep.subr.bf16.mxu0 %v673
    %936 = vmatpush1.bf16.msra.mxu0 %v672
    %937 = vmatprep.subr.bf16.mxu0 %v676
    %938 = vmatpush1.bf16.msra.mxu0 %v675
    %939 = vmatprep.subr.bf16.mxu0 %v679
    %940 = vmatpush1.bf16.msra.mxu0 %v678
    %941 = vmatprep.subr.bf16.mxu0 %v682
    %942 = vmatpush1.bf16.msra.mxu0 %v681
    %943 = vmatprep.subr.bf16.mxu0 %v685
    %944 = vmatpush1.bf16.msra.mxu0 %v684
    %945 = vmatprep.subr.bf16.mxu0 0
    %946 = vmatpush1.bf16.msra.mxu0 0
    %947 = vmatprep.subr.bf16.mxu0 0
    %948 = vmatpush1.bf16.msra.mxu0 0
    %949 = vmatprep.subr.bf16.mxu0 0
    %950 = vmatpush1.bf16.msra.mxu0 0
    %951 = vmatprep.subr.bf16.mxu0 0
    %952 = vmatpush1.bf16.msra.mxu0 0
    %953 = vmatprep.subr.bf16.mxu0 0
    %954 = vmatpush1.bf16.msra.mxu0 0
    %955 = vmatprep.subr.bf16.mxu0 0
    %956 = vmatpush1.bf16.msra.mxu0 0
    %957 = vmatprep.subr.bf16.mxu0 0
    %958 = vmatpush1.bf16.msra.mxu0 0
    %959 = vmatprep.subr.bf16.mxu0 0
    %960 = vmatpush1.bf16.msra.mxu0 0
    %961 = vmatprep.mubr.bf16.mxu0 0
    %962 = vmatmul.mubr.bf16.gmra.mrb[0].mxu0 %v928
    %v963 = vpop.f32.mrb[0].mxu0
    %v964 = vadd.f32 %v571, %v963
    %v965 = vpop.f32.mrb[0].mxu0
    %v966 = vadd.f32 %v575, %v965
    %v967 = vpop.f32.mrb[0].mxu0
    %v968 = vpop.f32.mrb[0].mxu0
    %969 = vdwg.mxu0
    %970 = vmatprep.subr.bf16.mxu0 0
    %971 = vmatpush1.bf16.msra.mxu0 %v665
    %972 = vmatprep.subr.bf16.mxu0 0
    %973 = vmatpush1.bf16.msra.mxu0 %v668
    %974 = vmatprep.subr.bf16.mxu0 0
    %975 = vmatpush1.bf16.msra.mxu0 %v671
    %976 = vmatprep.subr.bf16.mxu0 0
    %977 = vmatpush1.bf16.msra.mxu0 %v674
    %978 = vmatprep.subr.bf16.mxu0 0
    %979 = vmatpush1.bf16.msra.mxu0 %v677
    %980 = vmatprep.subr.bf16.mxu0 0
    %981 = vmatpush1.bf16.msra.mxu0 %v680
    %982 = vmatprep.subr.bf16.mxu0 0
    %983 = vmatpush1.bf16.msra.mxu0 %v683
    %984 = vmatprep.subr.bf16.mxu0 0
    %985 = vmatpush1.bf16.msra.mxu0 %v686
    %986 = vmatprep.subr.bf16.mxu0 0
    %987 = vmatpush1.bf16.msra.mxu0 0
    %988 = vmatprep.subr.bf16.mxu0 0
    %989 = vmatpush1.bf16.msra.mxu0 0
    %990 = vmatprep.subr.bf16.mxu0 0
    %991 = vmatpush1.bf16.msra.mxu0 0
    %992 = vmatprep.subr.bf16.mxu0 0
    %993 = vmatpush1.bf16.msra.mxu0 0
    %994 = vmatprep.subr.bf16.mxu0 0
    %995 = vmatpush1.bf16.msra.mxu0 0
    %996 = vmatprep.subr.bf16.mxu0 0
    %997 = vmatpush1.bf16.msra.mxu0 0
    %998 = vmatprep.subr.bf16.mxu0 0
    %999 = vmatpush1.bf16.msra.mxu0 0
    %1000 = vmatprep.subr.bf16.mxu0 0
    %1001 = vmatpush1.bf16.msra.mxu0 0
    %1002 = vmatprep.mubr.bf16.mxu0 0
    %1003 = vmatmul.mubr.bf16.gmra.mrb[0].mxu0 %v928
    %v1004 = vpop.f32.mrb[0].mxu0
    %v1005 = vadd.f32 %v579, %v1004
    %v1006 = vpop.f32.mrb[0].mxu0
    %v1007 = vpop.f32.mrb[0].mxu0
    %v1008 = vpop.f32.mrb[0].mxu0
    %1009 = vdwg.mxu0
    %v1010 = vadd.f32 %v925, %v964
    %v1011 = vadd.f32 %v926, %v966
    %v1012 = vxor.u32 %v1010, 2147483648
    %v1013 = vxor.u32 %v1011, 2147483648
    %v1014 = vmul.f32 %v1012, 1.442695
    %v1015 = vpow.pop %v1014
    %v1016 = vmul.f32 %v1013, 1.442695
    %v1017 = vpow.pop %v1016
    %v1018 = vadd.f32 %v1015, 1.0
    %v1019 = vadd.f32 %v1017, 1.0
    %v1020 = vrcp.pop %v1018
    %v1021 = vmul.f32 1.0, %v1020
    %v1022 = vrcp.pop %v1019
    %v1023 = vmul.f32 1.0, %v1022
    %v1024 = vmul.f32 %v1021, %v1005
    %v1025 = vadd.f32 %v927, %v1024
    %v1026 = vtanh.pop %v1025
    %v1027 = vsub.f32 1.0, %v1023
    %v1028 = vmul.f32 %v1027, %v1026
    %v1029 = vmul.f32 %v1023, %v921
    %v1030 = vadd.f32 %v1028, %v1029
    %s1031 = smul.u32 3, 3
    %s1032 = smul.addr %s1031, 8
    %s1033 = scalar_lea.vmem [#allocation2], %s1032
    %v1034 = vld [vmem:[%s1033] sm:$0xff]
    %v1035 = vld [vmem:[%s1033 + $0x8] sm:$0xff]
    %v1036 = vld [vmem:[%s1033 + $0x10] sm:$0xff]
    %v1037 = vpack.c.bf16 %v1030, %v1030
    %1038 = vmatprep.subr.bf16.mxu0 %v664
    %1039 = vmatpush1.bf16.msra.mxu0 %v663
    %1040 = vmatprep.subr.bf16.mxu0 %v667
    %1041 = vmatpush1.bf16.msra.mxu0 %v666
    %1042 = vmatprep.subr.bf16.mxu0 %v670
    %1043 = vmatpush1.bf16.msra.mxu0 %v669
    %1044 = vmatprep.subr.bf16.mxu0 %v673
    %1045 = vmatpush1.bf16.msra.mxu0 %v672
    %1046 = vmatprep.subr.bf16.mxu0 %v676
    %1047 = vmatpush1.bf16.msra.mxu0 %v675
    %1048 = vmatprep.subr.bf16.mxu0 %v679
    %1049 = vmatpush1.bf16.msra.mxu0 %v678
    %1050 = vmatprep.subr.bf16.mxu0 %v682
    %1051 = vmatpush1.bf16.msra.mxu0 %v681
    %1052 = vmatprep.subr.bf16.mxu0 %v685
    %1053 = vmatpush1.bf16.msra.mxu0 %v684
    %1054 = vmatprep.subr.bf16.mxu0 0
    %1055 = vmatpush1.bf16.msra.mxu0 0
    %1056 = vmatprep.subr.bf16.mxu0 0
    %1057 = vmatpush1.bf16.msra.mxu0 0
    %1058 = vmatprep.subr.bf16.mxu0 0
    %1059 = vmatpush1.bf16.msra.mxu0 0
    %1060 = vmatprep.subr.bf16.mxu0 0
    %1061 = vmatpush1.bf16.msra.mxu0 0
    %1062 = vmatprep.subr.bf16.mxu0 0
    %1063 = vmatpush1.bf16.msra.mxu0 0
    %1064 = vmatprep.subr.bf16.mxu0 0
    %1065 = vmatpush1.bf16.msra.mxu0 0
    %1066 = vmatprep.subr.bf16.mxu0 0
    %1067 = vmatpush1.bf16.msra.mxu0 0
    %1068 = vmatprep.subr.bf16.mxu0 0
    %1069 = vmatpush1.bf16.msra.mxu0 0
    %1070 = vmatprep.mubr.bf16.mxu0 0
    %1071 = vmatmul.mubr.bf16.gmra.mrb[0].mxu0 %v1037
    %v1072 = vpop.f32.mrb[0].mxu0
    %v1073 = vadd.f32 %v571, %v1072
    %v1074 = vpop.f32.mrb[0].mxu0
    %v1075 = vadd.f32 %v575, %v1074
    %v1076 = vpop.f32.mrb[0].mxu0
    %v1077 = vpop.f32.mrb[0].mxu0
    %1078 = vdwg.mxu0
    %1079 = vmatprep.subr.bf16.mxu0 0
    %1080 = vmatpush1.bf16.msra.mxu0 %v665
    %1081 = vmatprep.subr.bf16.mxu0 0
    %1082 = vmatpush1.bf16.msra.mxu0 %v668
    %1083 = vmatprep.subr.bf16.mxu0 0
    %1084 = vmatpush1.bf16.msra.mxu0 %v671
    %1085 = vmatprep.subr.bf16.mxu0 0
    %1086 = vmatpush1.bf16.msra.mxu0 %v674
    %1087 = vmatprep.subr.bf16.mxu0 0
    %1088 = vmatpush1.bf16.msra.mxu0 %v677
    %1089 = vmatprep.subr.bf16.mxu0 0
    %1090 = vmatpush1.bf16.msra.mxu0 %v680
    %1091 = vmatprep.subr.bf16.mxu0 0
    %1092 = vmatpush1.bf16.msra.mxu0 %v683
    %1093 = vmatprep.subr.bf16.mxu0 0
    %1094 = vmatpush1.bf16.msra.mxu0 %v686
    %1095 = vmatprep.subr.bf16.mxu0 0
    %1096 = vmatpush1.bf16.msra.mxu0 0
    %1097 = vmatprep.subr.bf16.mxu0 0
    %1098 = vmatpush1.bf16.msra.mxu0 0
    %1099 = vmatprep.subr.bf16.mxu0 0
    %1100 = vmatpush1.bf16.msra.mxu0 0
    %1101 = vmatprep.subr.bf16.mxu0 0
    %1102 = vmatpush1.bf16.msra.mxu0 0
    %1103 = vmatprep.subr.bf16.mxu0 0
    %1104 = vmatpush1.bf16.msra.mxu0 0
    %1105 = vmatprep.subr.bf16.mxu0 0
    %1106 = vmatpush1.bf16.msra.mxu0 0
    %1107 = vmatprep.subr.bf16.mxu0 0
    %1108 = vmatpush1.bf16.msra.mxu0 0
    %1109 = vmatprep.subr.bf16.mxu0 0
    %1110 = vmatpush1.bf16.msra.mxu0 0
    %1111 = vmatprep.mubr.bf16.mxu0 0
    %1112 = vmatmul.mubr.bf16.gmra.mrb[0].mxu0 %v1037
    %v1113 = vpop.f32.mrb[0].mxu0
    %v1114 = vadd.f32 %v579, %v1113
    %v1115 = vpop.f32.mrb[0].mxu0
    %v1116 = vpop.f32.mrb[0].mxu0
    %v1117 = vpop.f32.mrb[0].mxu0
    %1118 = vdwg.mxu0
    %v1119 = vadd.f32 %v1034, %v1073
    %v1120 = vadd.f32 %v1035, %v1075
    %v1121 = vxor.u32 %v1119, 2147483648
    %v1122 = vxor.u32 %v1120, 2147483648
    %v1123 = vmul.f32 %v1121, 1.442695
    %v1124 = vpow.pop %v1123
    %v1125 = vmul.f32 %v1122, 1.442695
    %v1126 = vpow.pop %v1125
    %v1127 = vadd.f32 %v1124, 1.0
    %v1128 = vadd.f32 %v1126, 1.0
    %v1129 = vrcp.pop %v1127
    %v1130 = vmul.f32 1.0, %v1129
    %v1131 = vrcp.pop %v1128
    %v1132 = vmul.f32 1.0, %v1131
    %v1133 = vmul.f32 %v1130, %v1114
    %v1134 = vadd.f32 %v1036, %v1133
    %v1135 = vtanh.pop %v1134
    %v1136 = vsub.f32 1.0, %v1132
    %v1137 = vmul.f32 %v1136, %v1135
    %v1138 = vmul.f32 %v1132, %v1030
    %v1139 = vadd.f32 %v1137, %v1138
    %s1140 = smul.u32 4, 3
    %s1141 = smul.addr %s1140, 8
    %s1142 = scalar_lea.vmem [#allocation2], %s1141
    %v1143 = vld [vmem:[%s1142] sm:$0xff]
    %v1144 = vld [vmem:[%s1142 + $0x8] sm:$0xff]
    %v1145 = vld [vmem:[%s1142 + $0x10] sm:$0xff]
    %v1146 = vpack.c.bf16 %v1139, %v1139
    %1147 = vmatprep.subr.bf16.mxu0 %v664
    %1148 = vmatpush1.bf16.msra.mxu0 %v663
    %1149 = vmatprep.subr.bf16.mxu0 %v667
    %1150 = vmatpush1.bf16.msra.mxu0 %v666
    %1151 = vmatprep.subr.bf16.mxu0 %v670
    %1152 = vmatpush1.bf16.msra.mxu0 %v669
    %1153 = vmatprep.subr.bf16.mxu0 %v673
    %1154 = vmatpush1.bf16.msra.mxu0 %v672
    %1155 = vmatprep.subr.bf16.mxu0 %v676
    %1156 = vmatpush1.bf16.msra.mxu0 %v675
    %1157 = vmatprep.subr.bf16.mxu0 %v679
    %1158 = vmatpush1.bf16.msra.mxu0 %v678
    %1159 = vmatprep.subr.bf16.mxu0 %v682
    %1160 = vmatpush1.bf16.msra.mxu0 %v681
    %1161 = vmatprep.subr.bf16.mxu0 %v685
    %1162 = vmatpush1.bf16.msra.mxu0 %v684
    %1163 = vmatprep.subr.bf16.mxu0 0
    %1164 = vmatpush1.bf16.msra.mxu0 0
    %1165 = vmatprep.subr.bf16.mxu0 0
    %1166 = vmatpush1.bf16.msra.mxu0 0
    %1167 = vmatprep.subr.bf16.mxu0 0
    %1168 = vmatpush1.bf16.msra.mxu0 0
    %1169 = vmatprep.subr.bf16.mxu0 0
    %1170 = vmatpush1.bf16.msra.mxu0 0
    %1171 = vmatprep.subr.bf16.mxu0 0
    %1172 = vmatpush1.bf16.msra.mxu0 0
    %1173 = vmatprep.subr.bf16.mxu0 0
    %1174 = vmatpush1.bf16.msra.mxu0 0
    %1175 = vmatprep.subr.bf16.mxu0 0
    %1176 = vmatpush1.bf16.msra.mxu0 0
    %1177 = vmatprep.subr.bf16.mxu0 0
    %1178 = vmatpush1.bf16.msra.mxu0 0
    %1179 = vmatprep.mubr.bf16.mxu0 0
    %1180 = vmatmul.mubr.bf16.gmra.mrb[0].mxu0 %v1146
    %v1181 = vpop.f32.mrb[0].mxu0
    %v1182 = vadd.f32 %v571, %v1181
    %v1183 = vpop.f32.mrb[0].mxu0
    %v1184 = vadd.f32 %v575, %v1183
    %v1185 = vpop.f32.mrb[0].mxu0
    %v1186 = vpop.f32.mrb[0].mxu0
    %1187 = vdwg.mxu0
    %1188 = vmatprep.subr.bf16.mxu0 0
    %1189 = vmatpush1.bf16.msra.mxu0 %v665
    %1190 = vmatprep.subr.bf16.mxu0 0
    %1191 = vmatpush1.bf16.msra.mxu0 %v668
    %1192 = vmatprep.subr.bf16.mxu0 0
    %1193 = vmatpush1.bf16.msra.mxu0 %v671
    %1194 = vmatprep.subr.bf16.mxu0 0
    %1195 = vmatpush1.bf16.msra.mxu0 %v674
    %1196 = vmatprep.subr.bf16.mxu0 0
    %1197 = vmatpush1.bf16.msra.mxu0 %v677
    %1198 = vmatprep.subr.bf16.mxu0 0
    %1199 = vmatpush1.bf16.msra.mxu0 %v680
    %1200 = vmatprep.subr.bf16.mxu0 0
    %1201 = vmatpush1.bf16.msra.mxu0 %v683
    %1202 = vmatprep.subr.bf16.mxu0 0
    %1203 = vmatpush1.bf16.msra.mxu0 %v686
    %1204 = vmatprep.subr.bf16.mxu0 0
    %1205 = vmatpush1.bf16.msra.mxu0 0
    %1206 = vmatprep.subr.bf16.mxu0 0
    %1207 = vmatpush1.bf16.msra.mxu0 0
    %1208 = vmatprep.subr.bf16.mxu0 0
    %1209 = vmatpush1.bf16.msra.mxu0 0
    %1210 = vmatprep.subr.bf16.mxu0 0
    %1211 = vmatpush1.bf16.msra.mxu0 0
    %1212 = vmatprep.subr.bf16.mxu0 0
    %1213 = vmatpush1.bf16.msra.mxu0 0
    %1214 = vmatprep.subr.bf16.mxu0 0
    %1215 = vmatpush1.bf16.msra.mxu0 0
    %1216 = vmatprep.subr.bf16.mxu0 0
    %1217 = vmatpush1.bf16.msra.mxu0 0
    %1218 = vmatprep.subr.bf16.mxu0 0
    %1219 = vmatpush1.bf16.msra.mxu0 0
    %1220 = vmatprep.mubr.bf16.mxu0 0
    %1221 = vmatmul.mubr.bf16.gmra.mrb[0].mxu0 %v1146
    %v1222 = vpop.f32.mrb[0].mxu0
    %v1223 = vadd.f32 %v579, %v1222
    %v1224 = vpop.f32.mrb[0].mxu0
    %v1225 = vpop.f32.mrb[0].mxu0
    %v1226 = vpop.f32.mrb[0].mxu0
    %1227 = vdwg.mxu0
    %v1228 = vadd.f32 %v1143, %v1182
    %v1229 = vadd.f32 %v1144, %v1184
    %v1230 = vxor.u32 %v1228, 2147483648
    %v1231 = vxor.u32 %v1229, 2147483648
    %v1232 = vmul.f32 %v1230, 1.442695
    %v1233 = vpow.pop %v1232
    %v1234 = vmul.f32 %v1231, 1.442695
    %v1235 = vpow.pop %v1234
    %v1236 = vadd.f32 %v1233, 1.0
    %v1237 = vadd.f32 %v1235, 1.0
    %v1238 = vrcp.pop %v1236
    %v1239 = vmul.f32 1.0, %v1238
    %v1240 = vrcp.pop %v1237
    %v1241 = vmul.f32 1.0, %v1240
    %v1242 = vmul.f32 %v1239, %v1223
    %v1243 = vadd.f32 %v1145, %v1242
    %v1244 = vtanh.pop %v1243
    %v1245 = vsub.f32 1.0, %v1241
    %v1246 = vmul.f32 %v1245, %v1244
    %v1247 = vmul.f32 %v1241, %v1139
    %v1248 = vadd.f32 %v1246, %v1247
    %s1249 = smul.u32 5, 3
    %s1250 = smul.addr %s1249, 8
    %s1251 = scalar_lea.vmem [#allocation2], %s1250
    %v1252 = vld [vmem:[%s1251] sm:$0xff]
    %v1253 = vld [vmem:[%s1251 + $0x8] sm:$0xff]
    %v1254 = vld [vmem:[%s1251 + $0x10] sm:$0xff]
    %v1255 = vpack.c.bf16 %v1248, %v1248
    %1256 = vmatprep.subr.bf16.mxu0 %v664
    %1257 = vmatpush1.bf16.msra.mxu0 %v663
    %1258 = vmatprep.subr.bf16.mxu0 %v667
    %1259 = vmatpush1.bf16.msra.mxu0 %v666
    %1260 = vmatprep.subr.bf16.mxu0 %v670
    %1261 = vmatpush1.bf16.msra.mxu0 %v669
    %1262 = vmatprep.subr.bf16.mxu0 %v673
    %1263 = vmatpush1.bf16.msra.mxu0 %v672
    %1264 = vmatprep.subr.bf16.mxu0 %v676
    %1265 = vmatpush1.bf16.msra.mxu0 %v675
    %1266 = vmatprep.subr.bf16.mxu0 %v679
    %1267 = vmatpush1.bf16.msra.mxu0 %v678
    %1268 = vmatprep.subr.bf16.mxu0 %v682
    %1269 = vmatpush1.bf16.msra.mxu0 %v681
    %1270 = vmatprep.subr.bf16.mxu0 %v685
    %1271 = vmatpush1.bf16.msra.mxu0 %v684
    %1272 = vmatprep.subr.bf16.mxu0 0
    %1273 = vmatpush1.bf16.msra.mxu0 0
    %1274 = vmatprep.subr.bf16.mxu0 0
    %1275 = vmatpush1.bf16.msra.mxu0 0
    %1276 = vmatprep.subr.bf16.mxu0 0
    %1277 = vmatpush1.bf16.msra.mxu0 0
    %1278 = vmatprep.subr.bf16.mxu0 0
    %1279 = vmatpush1.bf16.msra.mxu0 0
    %1280 = vmatprep.subr.bf16.mxu0 0
    %1281 = vmatpush1.bf16.msra.mxu0 0
    %1282 = vmatprep.subr.bf16.mxu0 0
    %1283 = vmatpush1.bf16.msra.mxu0 0
    %1284 = vmatprep.subr.bf16.mxu0 0
    %1285 = vmatpush1.bf16.msra.mxu0 0
    %1286 = vmatprep.subr.bf16.mxu0 0
    %1287 = vmatpush1.bf16.msra.mxu0 0
    %1288 = vmatprep.mubr.bf16.mxu0 0
    %1289 = vmatmul.mubr.bf16.gmra.mrb[0].mxu0 %v1255
    %v1290 = vpop.f32.mrb[0].mxu0
    %v1291 = vadd.f32 %v571, %v1290
    %v1292 = vpop.f32.mrb[0].mxu0
    %v1293 = vadd.f32 %v575, %v1292
    %v1294 = vpop.f32.mrb[0].mxu0
    %v1295 = vpop.f32.mrb[0].mxu0
    %1296 = vdwg.mxu0
    %1297 = vmatprep.subr.bf16.mxu0 0
    %1298 = vmatpush1.bf16.msra.mxu0 %v665
    %1299 = vmatprep.subr.bf16.mxu0 0
    %1300 = vmatpush1.bf16.msra.mxu0 %v668
    %1301 = vmatprep.subr.bf16.mxu0 0
    %1302 = vmatpush1.bf16.msra.mxu0 %v671
    %1303 = vmatprep.subr.bf16.mxu0 0
    %1304 = vmatpush1.bf16.msra.mxu0 %v674
    %1305 = vmatprep.subr.bf16.mxu0 0
    %1306 = vmatpush1.bf16.msra.mxu0 %v677
    %1307 = vmatprep.subr.bf16.mxu0 0
    %1308 = vmatpush1.bf16.msra.mxu0 %v680
    %1309 = vmatprep.subr.bf16.mxu0 0
    %1310 = vmatpush1.bf16.msra.mxu0 %v683
    %1311 = vmatprep.subr.bf16.mxu0 0
    %1312 = vmatpush1.bf16.msra.mxu0 %v686
    %1313 = vmatprep.subr.bf16.mxu0 0
    %1314 = vmatpush1.bf16.msra.mxu0 0
    %1315 = vmatprep.subr.bf16.mxu0 0
    %1316 = vmatpush1.bf16.msra.mxu0 0
    %1317 = vmatprep.subr.bf16.mxu0 0
    %1318 = vmatpush1.bf16.msra.mxu0 0
    %1319 = vmatprep.subr.bf16.mxu0 0
    %1320 = vmatpush1.bf16.msra.mxu0 0
    %1321 = vmatprep.subr.bf16.mxu0 0
    %1322 = vmatpush1.bf16.msra.mxu0 0
    %1323 = vmatprep.subr.bf16.mxu0 0
    %1324 = vmatpush1.bf16.msra.mxu0 0
    %1325 = vmatprep.subr.bf16.mxu0 0
    %1326 = vmatpush1.bf16.msra.mxu0 0
    %1327 = vmatprep.subr.bf16.mxu0 0
    %1328 = vmatpush1.bf16.msra.mxu0 0
    %1329 = vmatprep.mubr.bf16.mxu0 0
    %1330 = vmatmul.mubr.bf16.gmra.mrb[0].mxu0 %v1255
    %v1331 = vpop.f32.mrb[0].mxu0
    %v1332 = vadd.f32 %v579, %v1331
    %v1333 = vpop.f32.mrb[0].mxu0
    %v1334 = vpop.f32.mrb[0].mxu0
    %v1335 = vpop.f32.mrb[0].mxu0
    %1336 = vdwg.mxu0
    %v1337 = vadd.f32 %v1252, %v1291
    %v1338 = vadd.f32 %v1253, %v1293
    %v1339 = vxor.u32 %v1337, 2147483648
    %v1340 = vxor.u32 %v1338, 2147483648
    %v1341 = vmul.f32 %v1339, 1.442695
    %v1342 = vpow.pop %v1341
    %v1343 = vmul.f32 %v1340, 1.442695
    %v1344 = vpow.pop %v1343
    %v1345 = vadd.f32 %v1342, 1.0
    %v1346 = vadd.f32 %v1344, 1.0
    %v1347 = vrcp.pop %v1345
    %v1348 = vmul.f32 1.0, %v1347
    %v1349 = vrcp.pop %v1346
    %v1350 = vmul.f32 1.0, %v1349
    %v1351 = vmul.f32 %v1348, %v1332
    %v1352 = vadd.f32 %v1254, %v1351
    %v1353 = vtanh.pop %v1352
    %v1354 = vsub.f32 1.0, %v1350
    %v1355 = vmul.f32 %v1354, %v1353
    %v1356 = vmul.f32 %v1350, %v1248
    %v1357 = vadd.f32 %v1355, %v1356
    %s1358 = smul.u32 6, 3
    %s1359 = smul.addr %s1358, 8
    %s1360 = scalar_lea.vmem [#allocation2], %s1359
    %v1361 = vld [vmem:[%s1360] sm:$0xff]
    %v1362 = vld [vmem:[%s1360 + $0x8] sm:$0xff]
    %v1363 = vld [vmem:[%s1360 + $0x10] sm:$0xff]
    %v1364 = vpack.c.bf16 %v1357, %v1357
    %1365 = vmatprep.subr.bf16.mxu0 %v664
    %1366 = vmatpush1.bf16.msra.mxu0 %v663
    %1367 = vmatprep.subr.bf16.mxu0 %v667
    %1368 = vmatpush1.bf16.msra.mxu0 %v666
    %1369 = vmatprep.subr.bf16.mxu0 %v670
    %1370 = vmatpush1.bf16.msra.mxu0 %v669
    %1371 = vmatprep.subr.bf16.mxu0 %v673
    %1372 = vmatpush1.bf16.msra.mxu0 %v672
    %1373 = vmatprep.subr.bf16.mxu0 %v676
    %1374 = vmatpush1.bf16.msra.mxu0 %v675
    %1375 = vmatprep.subr.bf16.mxu0 %v679
    %1376 = vmatpush1.bf16.msra.mxu0 %v678
    %1377 = vmatprep.subr.bf16.mxu0 %v682
    %1378 = vmatpush1.bf16.msra.mxu0 %v681
    %1379 = vmatprep.subr.bf16.mxu0 %v685
    %1380 = vmatpush1.bf16.msra.mxu0 %v684
    %1381 = vmatprep.subr.bf16.mxu0 0
    %1382 = vmatpush1.bf16.msra.mxu0 0
    %1383 = vmatprep.subr.bf16.mxu0 0
    %1384 = vmatpush1.bf16.msra.mxu0 0
    %1385 = vmatprep.subr.bf16.mxu0 0
    %1386 = vmatpush1.bf16.msra.mxu0 0
    %1387 = vmatprep.subr.bf16.mxu0 0
    %1388 = vmatpush1.bf16.msra.mxu0 0
    %1389 = vmatprep.subr.bf16.mxu0 0
    %1390 = vmatpush1.bf16.msra.mxu0 0
    %1391 = vmatprep.subr.bf16.mxu0 0
    %1392 = vmatpush1.bf16.msra.mxu0 0
    %1393 = vmatprep.subr.bf16.mxu0 0
    %1394 = vmatpush1.bf16.msra.mxu0 0
    %1395 = vmatprep.subr.bf16.mxu0 0
    %1396 = vmatpush1.bf16.msra.mxu0 0
    %1397 = vmatprep.mubr.bf16.mxu0 0
    %1398 = vmatmul.mubr.bf16.gmra.mrb[0].mxu0 %v1364
    %v1399 = vpop.f32.mrb[0].mxu0
    %v1400 = vadd.f32 %v571, %v1399
    %v1401 = vpop.f32.mrb[0].mxu0
    %v1402 = vadd.f32 %v575, %v1401
    %v1403 = vpop.f32.mrb[0].mxu0
    %v1404 = vpop.f32.mrb[0].mxu0
    %1405 = vdwg.mxu0
    %1406 = vmatprep.subr.bf16.mxu0 0
    %1407 = vmatpush1.bf16.msra.mxu0 %v665
    %1408 = vmatprep.subr.bf16.mxu0 0
    %1409 = vmatpush1.bf16.msra.mxu0 %v668
    %1410 = vmatprep.subr.bf16.mxu0 0
    %1411 = vmatpush1.bf16.msra.mxu0 %v671
    %1412 = vmatprep.subr.bf16.mxu0 0
    %1413 = vmatpush1.bf16.msra.mxu0 %v674
    %1414 = vmatprep.subr.bf16.mxu0 0
    %1415 = vmatpush1.bf16.msra.mxu0 %v677
    %1416 = vmatprep.subr.bf16.mxu0 0
    %1417 = vmatpush1.bf16.msra.mxu0 %v680
    %1418 = vmatprep.subr.bf16.mxu0 0
    %1419 = vmatpush1.bf16.msra.mxu0 %v683
    %1420 = vmatprep.subr.bf16.mxu0 0
    %1421 = vmatpush1.bf16.msra.mxu0 %v686
    %1422 = vmatprep.subr.bf16.mxu0 0
    %1423 = vmatpush1.bf16.msra.mxu0 0
    %1424 = vmatprep.subr.bf16.mxu0 0
    %1425 = vmatpush1.bf16.msra.mxu0 0
    %1426 = vmatprep.subr.bf16.mxu0 0
    %1427 = vmatpush1.bf16.msra.mxu0 0
    %1428 = vmatprep.subr.bf16.mxu0 0
    %1429 = vmatpush1.bf16.msra.mxu0 0
    %1430 = vmatprep.subr.bf16.mxu0 0
    %1431 = vmatpush1.bf16.msra.mxu0 0
    %1432 = vmatprep.subr.bf16.mxu0 0
    %1433 = vmatpush1.bf16.msra.mxu0 0
    %1434 = vmatprep.subr.bf16.mxu0 0
    %1435 = vmatpush1.bf16.msra.mxu0 0
    %1436 = vmatprep.subr.bf16.mxu0 0
    %1437 = vmatpush1.bf16.msra.mxu0 0
    %1438 = vmatprep.mubr.bf16.mxu0 0
    %1439 = vmatmul.mubr.bf16.gmra.mrb[0].mxu0 %v1364
    %v1440 = vpop.f32.mrb[0].mxu0
    %v1441 = vadd.f32 %v579, %v1440
    %v1442 = vpop.f32.mrb[0].mxu0
    %v1443 = vpop.f32.mrb[0].mxu0
    %v1444 = vpop.f32.mrb[0].mxu0
    %1445 = vdwg.mxu0
    %v1446 = vadd.f32 %v1361, %v1400
    %v1447 = vadd.f32 %v1362, %v1402
    %v1448 = vxor.u32 %v1446, 2147483648
    %v1449 = vxor.u32 %v1447, 2147483648
    %v1450 = vmul.f32 %v1448, 1.442695
    %v1451 = vpow.pop %v1450
    %v1452 = vmul.f32 %v1449, 1.442695
    %v1453 = vpow.pop %v1452
    %v1454 = vadd.f32 %v1451, 1.0
    %v1455 = vadd.f32 %v1453, 1.0
    %v1456 = vrcp.pop %v1454
    %v1457 = vmul.f32 1.0, %v1456
    %v1458 = vrcp.pop %v1455
    %v1459 = vmul.f32 1.0, %v1458
    %v1460 = vmul.f32 %v1457, %v1441
    %v1461 = vadd.f32 %v1363, %v1460
    %v1462 = vtanh.pop %v1461
    %v1463 = vsub.f32 1.0, %v1459
    %v1464 = vmul.f32 %v1463, %v1462
    %v1465 = vmul.f32 %v1459, %v1357
    %v1466 = vadd.f32 %v1464, %v1465
    %s1467 = smul.u32 7, 3
    %s1468 = smul.addr %s1467, 8
    %s1469 = scalar_lea.vmem [#allocation2], %s1468
    %v1470 = vld [vmem:[%s1469] sm:$0xff]
    %v1471 = vld [vmem:[%s1469 + $0x8] sm:$0xff]
    %v1472 = vld [vmem:[%s1469 + $0x10] sm:$0xff]
    %v1473 = vpack.c.bf16 %v1466, %v1466
    %1474 = vmatprep.subr.bf16.mxu0 %v664
    %1475 = vmatpush1.bf16.msra.mxu0 %v663
    %1476 = vmatprep.subr.bf16.mxu0 %v667
    %1477 = vmatpush1.bf16.msra.mxu0 %v666
    %1478 = vmatprep.subr.bf16.mxu0 %v670
    %1479 = vmatpush1.bf16.msra.mxu0 %v669
    %1480 = vmatprep.subr.bf16.mxu0 %v673
    %1481 = vmatpush1.bf16.msra.mxu0 %v672
    %1482 = vmatprep.subr.bf16.mxu0 %v676
    %1483 = vmatpush1.bf16.msra.mxu0 %v675
    %1484 = vmatprep.subr.bf16.mxu0 %v679
    %1485 = vmatpush1.bf16.msra.mxu0 %v678
    %1486 = vmatprep.subr.bf16.mxu0 %v682
    %1487 = vmatpush1.bf16.msra.mxu0 %v681
    %1488 = vmatprep.subr.bf16.mxu0 %v685
    %1489 = vmatpush1.bf16.msra.mxu0 %v684
    %1490 = vmatprep.subr.bf16.mxu0 0
    %1491 = vmatpush1.bf16.msra.mxu0 0
    %1492 = vmatprep.subr.bf16.mxu0 0
    %1493 = vmatpush1.bf16.msra.mxu0 0
    %1494 = vmatprep.subr.bf16.mxu0 0
    %1495 = vmatpush1.bf16.msra.mxu0 0
    %1496 = vmatprep.subr.bf16.mxu0 0
    %1497 = vmatpush1.bf16.msra.mxu0 0
    %1498 = vmatprep.subr.bf16.mxu0 0
    %1499 = vmatpush1.bf16.msra.mxu0 0
    %1500 = vmatprep.subr.bf16.mxu0 0
    %1501 = vmatpush1.bf16.msra.mxu0 0
    %1502 = vmatprep.subr.bf16.mxu0 0
    %1503 = vmatpush1.bf16.msra.mxu0 0
    %1504 = vmatprep.subr.bf16.mxu0 0
    %1505 = vmatpush1.bf16.msra.mxu0 0
    %1506 = vmatprep.mubr.bf16.mxu0 0
    %1507 = vmatmul.mubr.bf16.gmra.mrb[0].mxu0 %v1473
    %v1508 = vpop.f32.mrb[0].mxu0
    %v1509 = vadd.f32 %v571, %v1508
    %v1510 = vpop.f32.mrb[0].mxu0
    %v1511 = vadd.f32 %v575, %v1510
    %v1512 = vpop.f32.mrb[0].mxu0
    %v1513 = vpop.f32.mrb[0].mxu0
    %1514 = vdwg.mxu0
    %1515 = vmatprep.subr.bf16.mxu0 0
    %1516 = vmatpush1.bf16.msra.mxu0 %v665
    %1517 = vmatprep.subr.bf16.mxu0 0
    %1518 = vmatpush1.bf16.msra.mxu0 %v668
    %1519 = vmatprep.subr.bf16.mxu0 0
    %1520 = vmatpush1.bf16.msra.mxu0 %v671
    %1521 = vmatprep.subr.bf16.mxu0 0
    %1522 = vmatpush1.bf16.msra.mxu0 %v674
    %1523 = vmatprep.subr.bf16.mxu0 0
    %1524 = vmatpush1.bf16.msra.mxu0 %v677
    %1525 = vmatprep.subr.bf16.mxu0 0
    %1526 = vmatpush1.bf16.msra.mxu0 %v680
    %1527 = vmatprep.subr.bf16.mxu0 0
    %1528 = vmatpush1.bf16.msra.mxu0 %v683
    %1529 = vmatprep.subr.bf16.mxu0 0
    %1530 = vmatpush1.bf16.msra.mxu0 %v686
    %1531 = vmatprep.subr.bf16.mxu0 0
    %1532 = vmatpush1.bf16.msra.mxu0 0
    %1533 = vmatprep.subr.bf16.mxu0 0
    %1534 = vmatpush1.bf16.msra.mxu0 0
    %1535 = vmatprep.subr.bf16.mxu0 0
    %1536 = vmatpush1.bf16.msra.mxu0 0
    %1537 = vmatprep.subr.bf16.mxu0 0
    %1538 = vmatpush1.bf16.msra.mxu0 0
    %1539 = vmatprep.subr.bf16.mxu0 0
    %1540 = vmatpush1.bf16.msra.mxu0 0
    %1541 = vmatprep.subr.bf16.mxu0 0
    %1542 = vmatpush1.bf16.msra.mxu0 0
    %1543 = vmatprep.subr.bf16.mxu0 0
    %1544 = vmatpush1.bf16.msra.mxu0 0
    %1545 = vmatprep.subr.bf16.mxu0 0
    %1546 = vmatpush1.bf16.msra.mxu0 0
    %1547 = vmatprep.mubr.bf16.mxu0 0
    %1548 = vmatmul.mubr.bf16.gmra.mrb[0].mxu0 %v1473
    %v1549 = vpop.f32.mrb[0].mxu0
    %v1550 = vadd.f32 %v579, %v1549
    %v1551 = vpop.f32.mrb[0].mxu0
    %v1552 = vpop.f32.mrb[0].mxu0
    %v1553 = vpop.f32.mrb[0].mxu0
    %1554 = vdwg.mxu0
    %v1555 = vadd.f32 %v1470, %v1509
    %v1556 = vadd.f32 %v1471, %v1511
    %v1557 = vxor.u32 %v1555, 2147483648
    %v1558 = vxor.u32 %v1556, 2147483648
    %v1559 = vmul.f32 %v1557, 1.442695
    %v1560 = vpow.pop %v1559
    %v1561 = vmul.f32 %v1558, 1.442695
    %v1562 = vpow.pop %v1561
    %v1563 = vadd.f32 %v1560, 1.0
    %v1564 = vadd.f32 %v1562, 1.0
    %v1565 = vrcp.pop %v1563
    %v1566 = vmul.f32 1.0, %v1565
    %v1567 = vrcp.pop %v1564
    %v1568 = vmul.f32 1.0, %v1567
    %v1569 = vmul.f32 %v1566, %v1550
    %v1570 = vadd.f32 %v1472, %v1569
    %v1571 = vtanh.pop %v1570
    %v1572 = vsub.f32 1.0, %v1568
    %v1573 = vmul.f32 %v1572, %v1571
    %v1574 = vmul.f32 %v1568, %v1466
    %v1575 = vadd.f32 %v1573, %v1574
    %v1576 = vpack.c.bf16 %v1575, %v1575
    %v1577 = vld [vmem:[#allocation13] sm:$0xff]
    %v1578 = vld [vmem:[#allocation13 + $0x8] sm:$0xff]
    %v1579 = vld [vmem:[#allocation13 + $0x10] sm:$0xff]
    %v1580 = vld [vmem:[#allocation13 + $0x18] sm:$0xff]
    %v1581 = vld [vmem:[#allocation13 + $0x20] sm:$0xff]
    %v1582 = vld [vmem:[#allocation13 + $0x28] sm:$0xff]
    %v1583 = vld [vmem:[#allocation13 + $0x30] sm:$0xff]
    %v1584 = vld [vmem:[#allocation13 + $0x38] sm:$0xff]
    %v1585 = vld [vmem:[#allocation13 + $0x40] sm:$0xff]
    %v1586 = vld [vmem:[#allocation13 + $0x48] sm:$0xff]
    %v1587 = vld [vmem:[#allocation13 + $0x50] sm:$0xff]
    %v1588 = vld [vmem:[#allocation13 + $0x58] sm:$0xff]
    %v1589 = vld [vmem:[#allocation13 + $0x60] sm:$0xff]
    %v1590 = vld [vmem:[#allocation13 + $0x68] sm:$0xff]
    %v1591 = vld [vmem:[#allocation13 + $0x70] sm:$0xff]
    %v1592 = vld [vmem:[#allocation13 + $0x78] sm:$0xff]
    %v1593 = vld [vmem:[#allocation13 + $0x80] sm:$0xff]
    %v1594 = vld [vmem:[#allocation13 + $0x88] sm:$0xff]
    %v1595 = vld [vmem:[#allocation13 + $0x90] sm:$0xff]
    %v1596 = vld [vmem:[#allocation13 + $0x98] sm:$0xff]
    %v1597 = vld [vmem:[#allocation13 + $0xa0] sm:$0xff]
    %v1598 = vld [vmem:[#allocation13 + $0xa8] sm:$0xff]
    %v1599 = vld [vmem:[#allocation13 + $0xb0] sm:$0xff]
    %v1600 = vld [vmem:[#allocation13 + $0xb8] sm:$0xff]
    %v1601 = vld [vmem:[#allocation13 + $0xc0] sm:$0xff]
    %v1602 = vld [vmem:[#allocation13 + $0xc8] sm:$0xff]
    %v1603 = vld [vmem:[#allocation13 + $0xd0] sm:$0xff]
    %v1604 = vld [vmem:[#allocation13 + $0xd8] sm:$0xff]
    %v1605 = vld [vmem:[#allocation13 + $0xe0] sm:$0xff]
    %v1606 = vld [vmem:[#allocation13 + $0xe8] sm:$0xff]
    %v1607 = vld [vmem:[#allocation13 + $0xf0] sm:$0xff]
    %v1608 = vld [vmem:[#allocation13 + $0xf8] sm:$0xff]
    %v1609 = vld [vmem:[%s11] sm:$0xf]
    %v1611 = vlaneseq
    %v1612 = vshrl.u32 %v1611, 7
    %v1613 = vsub.s32 0, %v1612
    %v1614 = vrot.slane %v1609, %v1613
    %v1615 = vlaneseq
    %v1616 = vshrl.u32 %v1615, 7
    %v1617 = vsub.s32 1, %v1616
    %v1618 = vrot.slane %v1609, %v1617
    %v1619 = vlaneseq
    %v1620 = vshrl.u32 %v1619, 7
    %v1621 = vsub.s32 2, %v1620
    %v1622 = vrot.slane %v1609, %v1621
    %v1623 = vlaneseq
    %v1624 = vshrl.u32 %v1623, 7
    %v1625 = vsub.s32 3, %v1624
    %v1626 = vrot.slane %v1609, %v1625
    %v1663 = vunpack.c.l.b16 %v1577
    %v1664 = vunpack.c.h.b16 %v1577
    %v1665 = vunpack.c.l.b16 %v1578
    %v1666 = vunpack.c.h.b16 %v1578
    %v1667 = vunpack.c.l.b16 %v1579
    %v1668 = vunpack.c.h.b16 %v1579
    %v1669 = vunpack.c.l.b16 %v1580
    %v1670 = vunpack.c.h.b16 %v1580
    %v1671 = vunpack.c.l.b16 %v1581
    %v1672 = vunpack.c.h.b16 %v1581
    %v1673 = vunpack.c.l.b16 %v1582
    %v1674 = vunpack.c.h.b16 %v1582
    %v1675 = vunpack.c.l.b16 %v1583
    %v1676 = vunpack.c.h.b16 %v1583
    %v1677 = vunpack.c.l.b16 %v1584
    %v1678 = vunpack.c.h.b16 %v1584
    %v1679 = vunpack.c.l.b16 %v1585
    %v1680 = vunpack.c.h.b16 %v1585
    %v1681 = vunpack.c.l.b16 %v1586
    %v1682 = vunpack.c.h.b16 %v1586
    %v1683 = vunpack.c.l.b16 %v1587
    %v1684 = vunpack.c.h.b16 %v1587
    %v1685 = vunpack.c.l.b16 %v1588
    %v1686 = vunpack.c.h.b16 %v1588
    %v1687 = vunpack.c.l.b16 %v1589
    %v1688 = vunpack.c.h.b16 %v1589
    %v1689 = vunpack.c.l.b16 %v1590
    %v1690 = vunpack.c.h.b16 %v1590
    %v1691 = vunpack.c.l.b16 %v1591
    %v1692 = vunpack.c.h.b16 %v1591
    %v1693 = vunpack.c.l.b16 %v1592
    %v1694 = vunpack.c.h.b16 %v1592
    %v1695 = vunpack.c.l.b16 %v1593
    %v1696 = vunpack.c.h.b16 %v1593
    %v1697 = vunpack.c.l.b16 %v1594
    %v1698 = vunpack.c.h.b16 %v1594
    %v1699 = vunpack.c.l.b16 %v1595
    %v1700 = vunpack.c.h.b16 %v1595
    %v1701 = vunpack.c.l.b16 %v1596
    %v1702 = vunpack.c.h.b16 %v1596
    %v1703 = vunpack.c.l.b16 %v1597
    %v1704 = vunpack.c.h.b16 %v1597
    %v1705 = vunpack.c.l.b16 %v1598
    %v1706 = vunpack.c.h.b16 %v1598
    %v1707 = vunpack.c.l.b16 %v1599
    %v1708 = vunpack.c.h.b16 %v1599
    %v1709 = vunpack.c.l.b16 %v1600
    %v1710 = vunpack.c.h.b16 %v1600
    %v1711 = vunpack.c.l.b16 %v1601
    %v1712 = vunpack.c.h.b16 %v1601
    %v1713 = vunpack.c.l.b16 %v1602
    %v1714 = vunpack.c.h.b16 %v1602
    %v1715 = vunpack.c.l.b16 %v1603
    %v1716 = vunpack.c.h.b16 %v1603
    %v1717 = vunpack.c.l.b16 %v1604
    %v1718 = vunpack.c.h.b16 %v1604
    %v1719 = vunpack.c.l.b16 %v1605
    %v1720 = vunpack.c.h.b16 %v1605
    %v1721 = vunpack.c.l.b16 %v1606
    %v1722 = vunpack.c.h.b16 %v1606
    %v1723 = vunpack.c.l.b16 %v1607
    %v1724 = vunpack.c.h.b16 %v1607
    %v1725 = vunpack.c.l.b16 %v1608
    %v1726 = vunpack.c.h.b16 %v1608
    %v1727 = vpack.c.b16 %v1667, %v1663
    %v1728 = vpack.c.b16 %v1668, %v1664
    %v1729 = vpack.c.b16 %v1669, %v1665
    %v1730 = vpack.c.b16 %v1670, %v1666
    %v1731 = vpack.c.b16 %v1675, %v1671
    %v1732 = vpack.c.b16 %v1676, %v1672
    %v1733 = vpack.c.b16 %v1677, %v1673
    %v1734 = vpack.c.b16 %v1678, %v1674
    %v1735 = vpack.c.b16 %v1683, %v1679
    %v1736 = vpack.c.b16 %v1684, %v1680
    %v1737 = vpack.c.b16 %v1685, %v1681
    %v1738 = vpack.c.b16 %v1686, %v1682
    %v1739 = vpack.c.b16 %v1691, %v1687
    %v1740 = vpack.c.b16 %v1692, %v1688
    %v1741 = vpack.c.b16 %v1693, %v1689
    %v1742 = vpack.c.b16 %v1694, %v1690
    %v1743 = vpack.c.b16 %v1699, %v1695
    %v1744 = vpack.c.b16 %v1700, %v1696
    %v1745 = vpack.c.b16 %v1701, %v1697
    %v1746 = vpack.c.b16 %v1702, %v1698
    %v1747 = vpack.c.b16 %v1707, %v1703
    %v1748 = vpack.c.b16 %v1708, %v1704
    %v1749 = vpack.c.b16 %v1709, %v1705
    %v1750 = vpack.c.b16 %v1710, %v1706
    %v1751 = vpack.c.b16 %v1715, %v1711
    %v1752 = vpack.c.b16 %v1716, %v1712
    %v1753 = vpack.c.b16 %v1717, %v1713
    %v1754 = vpack.c.b16 %v1718, %v1714
    %v1755 = vpack.c.b16 %v1723, %v1719
    %v1756 = vpack.c.b16 %v1724, %v1720
    %v1757 = vpack.c.b16 %v1725, %v1721
    %v1758 = vpack.c.b16 %v1726, %v1722
    %1791 = vmatprep.subr.bf16.mxu0 %v1728
    %1792 = vmatpush1.bf16.msra.mxu0 %v1727
    %1793 = vmatprep.subr.bf16.mxu0 %v1732
    %1794 = vmatpush1.bf16.msra.mxu0 %v1731
    %1795 = vmatprep.subr.bf16.mxu0 %v1736
    %1796 = vmatpush1.bf16.msra.mxu0 %v1735
    %1797 = vmatprep.subr.bf16.mxu0 %v1740
    %1798 = vmatpush1.bf16.msra.mxu0 %v1739
    %1799 = vmatprep.subr.bf16.mxu0 %v1744
    %1800 = vmatpush1.bf16.msra.mxu0 %v1743
    %1801 = vmatprep.subr.bf16.mxu0 %v1748
    %1802 = vmatpush1.bf16.msra.mxu0 %v1747
    %1803 = vmatprep.subr.bf16.mxu0 %v1752
    %1804 = vmatpush1.bf16.msra.mxu0 %v1751
    %1805 = vmatprep.subr.bf16.mxu0 %v1756
    %1806 = vmatpush1.bf16.msra.mxu0 %v1755
    %1807 = vmatprep.subr.bf16.mxu0 0
    %1808 = vmatpush1.bf16.msra.mxu0 0
    %1809 = vmatprep.subr.bf16.mxu0 0
    %1810 = vmatpush1.bf16.msra.mxu0 0
    %1811 = vmatprep.subr.bf16.mxu0 0
    %1812 = vmatpush1.bf16.msra.mxu0 0
    %1813 = vmatprep.subr.bf16.mxu0 0
    %1814 = vmatpush1.bf16.msra.mxu0 0
    %1815 = vmatprep.subr.bf16.mxu0 0
    %1816 = vmatpush1.bf16.msra.mxu0 0
    %1817 = vmatprep.subr.bf16.mxu0 0
    %1818 = vmatpush1.bf16.msra.mxu0 0
    %1819 = vmatprep.subr.bf16.mxu0 0
    %1820 = vmatpush1.bf16.msra.mxu0 0
    %1821 = vmatprep.subr.bf16.mxu0 0
    %1822 = vmatpush1.bf16.msra.mxu0 0
    %1823 = vmatprep.mubr.bf16.mxu0 0
    %1824 = vmatmul.mubr.bf16.gmra.mrb[0].mxu0 %v1576
    %v1825 = vpop.f32.mrb[0].mxu0
    %v1826 = vadd.f32 %v1614, %v1825
    %v1827 = vpop.f32.mrb[0].mxu0
    %v1828 = vadd.f32 %v1618, %v1827
    %v1829 = vpop.f32.mrb[0].mxu0
    %v1830 = vpop.f32.mrb[0].mxu0
    %1831 = vdwg.mxu0
    %1832 = vmatprep.subr.bf16.mxu0 %v1730
    %1833 = vmatpush1.bf16.msra.mxu0 %v1729
    %1834 = vmatprep.subr.bf16.mxu0 %v1734
    %1835 = vmatpush1.bf16.msra.mxu0 %v1733
    %1836 = vmatprep.subr.bf16.mxu0 %v1738
    %1837 = vmatpush1.bf16.msra.mxu0 %v1737
    %1838 = vmatprep.subr.bf16.mxu0 %v1742
    %1839 = vmatpush1.bf16.msra.mxu0 %v1741
    %1840 = vmatprep.subr.bf16.mxu0 %v1746
    %1841 = vmatpush1.bf16.msra.mxu0 %v1745
    %1842 = vmatprep.subr.bf16.mxu0 %v1750
    %1843 = vmatpush1.bf16.msra.mxu0 %v1749
    %1844 = vmatprep.subr.bf16.mxu0 %v1754
    %1845 = vmatpush1.bf16.msra.mxu0 %v1753
    %1846 = vmatprep.subr.bf16.mxu0 %v1758
    %1847 = vmatpush1.bf16.msra.mxu0 %v1757
    %1848 = vmatprep.subr.bf16.mxu0 0
    %1849 = vmatpush1.bf16.msra.mxu0 0
    %1850 = vmatprep.subr.bf16.mxu0 0
    %1851 = vmatpush1.bf16.msra.mxu0 0
    %1852 = vmatprep.subr.bf16.mxu0 0
    %1853 = vmatpush1.bf16.msra.mxu0 0
    %1854 = vmatprep.subr.bf16.mxu0 0
    %1855 = vmatpush1.bf16.msra.mxu0 0
    %1856 = vmatprep.subr.bf16.mxu0 0
    %1857 = vmatpush1.bf16.msra.mxu0 0
    %1858 = vmatprep.subr.bf16.mxu0 0
    %1859 = vmatpush1.bf16.msra.mxu0 0
    %1860 = vmatprep.subr.bf16.mxu0 0
    %1861 = vmatpush1.bf16.msra.mxu0 0
    %1862 = vmatprep.subr.bf16.mxu0 0
    %1863 = vmatpush1.bf16.msra.mxu0 0
    %1864 = vmatprep.mubr.bf16.mxu0 0
    %1865 = vmatmul.mubr.bf16.gmra.mrb[0].mxu0 %v1576
    %v1866 = vpop.f32.mrb[0].mxu0
    %v1867 = vadd.f32 %v1622, %v1866
    %v1868 = vpop.f32.mrb[0].mxu0
    %v1869 = vadd.f32 %v1626, %v1868
    %v1870 = vpop.f32.mrb[0].mxu0
    %v1871 = vpop.f32.mrb[0].mxu0
    %1872 = vdwg.mxu0
    %1873 = vst [vmem:[#allocation14] sm:$0xff] 0.0
    %v1874 = vld [vmem:[%s2] sm:$0xff]
    %1875 = vset.pattern.permute.xlu0 0
    %1876 = vperm.xlu0 %1875, %v1874
    %v1877 = vpop.permute.xlu0 %1876
    %vm1878 = vcmp.eq.s32.totalorder %v1877, %v128
    %v1879 = vsel %vm1878, 1, 0
    %v1880 = vcvt.s32.f32 %v1879
    %v1881 = vpack.c.bf16 %v1880, %v1880
    %v1882 = vld [vmem:[#allocation10] sm:$0xff]
    %v1883 = vld [vmem:[#allocation10 + $0x8] sm:$0xff]
    %v1884 = vld [vmem:[#allocation10 + $0x10] sm:$0xff]
    %v1885 = vld [vmem:[#allocation10 + $0x18] sm:$0xff]
    %v1886 = vld [vmem:[#allocation10 + $0x20] sm:$0xff]
    %v1887 = vld [vmem:[#allocation10 + $0x28] sm:$0xff]
    %v1888 = vld [vmem:[#allocation10 + $0x30] sm:$0xff]
    %v1889 = vld [vmem:[#allocation10 + $0x38] sm:$0xff]
    %v1890 = vld [vmem:[#allocation10 + $0x40] sm:$0xff]
    %v1891 = vld [vmem:[#allocation10 + $0x48] sm:$0xff]
    %v1892 = vld [vmem:[#allocation10 + $0x50] sm:$0xff]
    %v1893 = vld [vmem:[#allocation10 + $0x58] sm:$0xff]
    %v1894 = vld [vmem:[#allocation10 + $0x60] sm:$0xff]
    %v1895 = vld [vmem:[#allocation10 + $0x68] sm:$0xff]
    %v1896 = vld [vmem:[#allocation10 + $0x70] sm:$0xff]
    %v1897 = vld [vmem:[#allocation10 + $0x78] sm:$0xff]
    %v1898 = vld [vmem:[#allocation10 + $0x80] sm:$0xff]
    %v1899 = vld [vmem:[#allocation10 + $0x88] sm:$0xff]
    %v1900 = vld [vmem:[#allocation10 + $0x90] sm:$0xff]
    %v1901 = vld [vmem:[#allocation10 + $0x98] sm:$0xff]
    %v1902 = vld [vmem:[#allocation10 + $0xa0] sm:$0xff]
    %v1903 = vld [vmem:[#allocation10 + $0xa8] sm:$0xff]
    %v1904 = vld [vmem:[#allocation10 + $0xb0] sm:$0xff]
    %v1905 = vld [vmem:[#allocation10 + $0xb8] sm:$0xff]
    %v1906 = vld [vmem:[#allocation10 + $0xc0] sm:$0xff]
    %v1907 = vld [vmem:[#allocation10 + $0xc8] sm:$0xff]
    %v1908 = vld [vmem:[#allocation10 + $0xd0] sm:$0xff]
    %v1909 = vld [vmem:[#allocation10 + $0xd8] sm:$0xff]
    %v1910 = vld [vmem:[#allocation10 + $0xe0] sm:$0xff]
    %v1911 = vld [vmem:[#allocation10 + $0xe8] sm:$0xff]
    %v1912 = vld [vmem:[#allocation10 + $0xf0] sm:$0xff]
    %v1913 = vld [vmem:[#allocation10 + $0xf8] sm:$0xff]
    %v1946 = vunpack.c.l.b16 %v1882
    %v1947 = vunpack.c.h.b16 %v1882
    %v1948 = vunpack.c.l.b16 %v1883
    %v1949 = vunpack.c.h.b16 %v1883
    %v1950 = vunpack.c.l.b16 %v1884
    %v1951 = vunpack.c.h.b16 %v1884
    %v1952 = vunpack.c.l.b16 %v1885
    %v1953 = vunpack.c.h.b16 %v1885
    %v1954 = vunpack.c.l.b16 %v1886
    %v1955 = vunpack.c.h.b16 %v1886
    %v1956 = vunpack.c.l.b16 %v1887
    %v1957 = vunpack.c.h.b16 %v1887
    %v1958 = vunpack.c.l.b16 %v1888
    %v1959 = vunpack.c.h.b16 %v1888
    %v1960 = vunpack.c.l.b16 %v1889
    %v1961 = vunpack.c.h.b16 %v1889
    %v1962 = vunpack.c.l.b16 %v1890
    %v1963 = vunpack.c.h.b16 %v1890
    %v1964 = vunpack.c.l.b16 %v1891
    %v1965 = vunpack.c.h.b16 %v1891
    %v1966 = vunpack.c.l.b16 %v1892
    %v1967 = vunpack.c.h.b16 %v1892
    %v1968 = vunpack.c.l.b16 %v1893
    %v1969 = vunpack.c.h.b16 %v1893
    %v1970 = vunpack.c.l.b16 %v1894
    %v1971 = vunpack.c.h.b16 %v1894
    %v1972 = vunpack.c.l.b16 %v1895
    %v1973 = vunpack.c.h.b16 %v1895
    %v1974 = vunpack.c.l.b16 %v1896
    %v1975 = vunpack.c.h.b16 %v1896
    %v1976 = vunpack.c.l.b16 %v1897
    %v1977 = vunpack.c.h.b16 %v1897
    %v1978 = vunpack.c.l.b16 %v1898
    %v1979 = vunpack.c.h.b16 %v1898
    %v1980 = vunpack.c.l.b16 %v1899
    %v1981 = vunpack.c.h.b16 %v1899
    %v1982 = vunpack.c.l.b16 %v1900
    %v1983 = vunpack.c.h.b16 %v1900
    %v1984 = vunpack.c.l.b16 %v1901
    %v1985 = vunpack.c.h.b16 %v1901
    %v1986 = vunpack.c.l.b16 %v1902
    %v1987 = vunpack.c.h.b16 %v1902
    %v1988 = vunpack.c.l.b16 %v1903
    %v1989 = vunpack.c.h.b16 %v1903
    %v1990 = vunpack.c.l.b16 %v1904
    %v1991 = vunpack.c.h.b16 %v1904
    %v1992 = vunpack.c.l.b16 %v1905
    %v1993 = vunpack.c.h.b16 %v1905
    %v1994 = vunpack.c.l.b16 %v1906
    %v1995 = vunpack.c.h.b16 %v1906
    %v1996 = vunpack.c.l.b16 %v1907
    %v1997 = vunpack.c.h.b16 %v1907
    %v1998 = vunpack.c.l.b16 %v1908
    %v1999 = vunpack.c.h.b16 %v1908
    %v2000 = vunpack.c.l.b16 %v1909
    %v2001 = vunpack.c.h.b16 %v1909
    %v2002 = vunpack.c.l.b16 %v1910
    %v2003 = vunpack.c.h.b16 %v1910
    %v2004 = vunpack.c.l.b16 %v1911
    %v2005 = vunpack.c.h.b16 %v1911
    %v2006 = vunpack.c.l.b16 %v1912
    %v2007 = vunpack.c.h.b16 %v1912
    %v2008 = vunpack.c.l.b16 %v1913
    %v2009 = vunpack.c.h.b16 %v1913
    %v2010 = vpack.c.b16 %v1950, %v1946
    %v2011 = vpack.c.b16 %v1951, %v1947
    %v2012 = vpack.c.b16 %v1952, %v1948
    %v2013 = vpack.c.b16 %v1953, %v1949
    %v2014 = vpack.c.b16 %v1958, %v1954
    %v2015 = vpack.c.b16 %v1959, %v1955
    %v2016 = vpack.c.b16 %v1960, %v1956
    %v2017 = vpack.c.b16 %v1961, %v1957
    %v2018 = vpack.c.b16 %v1966, %v1962
    %v2019 = vpack.c.b16 %v1967, %v1963
    %v2020 = vpack.c.b16 %v1968, %v1964
    %v2021 = vpack.c.b16 %v1969, %v1965
    %v2022 = vpack.c.b16 %v1974, %v1970
    %v2023 = vpack.c.b16 %v1975, %v1971
    %v2024 = vpack.c.b16 %v1976, %v1972
    %v2025 = vpack.c.b16 %v1977, %v1973
    %v2026 = vpack.c.b16 %v1982, %v1978
    %v2027 = vpack.c.b16 %v1983, %v1979
    %v2028 = vpack.c.b16 %v1984, %v1980
    %v2029 = vpack.c.b16 %v1985, %v1981
    %v2030 = vpack.c.b16 %v1990, %v1986
    %v2031 = vpack.c.b16 %v1991, %v1987
    %v2032 = vpack.c.b16 %v1992, %v1988
    %v2033 = vpack.c.b16 %v1993, %v1989
    %v2034 = vpack.c.b16 %v1998, %v1994
    %v2035 = vpack.c.b16 %v1999, %v1995
    %v2036 = vpack.c.b16 %v2000, %v1996
    %v2037 = vpack.c.b16 %v2001, %v1997
    %v2038 = vpack.c.b16 %v2006, %v2002
    %v2039 = vpack.c.b16 %v2007, %v2003
    %v2040 = vpack.c.b16 %v2008, %v2004
    %v2041 = vpack.c.b16 %v2009, %v2005
    %2074 = vmatprep.subr.bf16.mxu0 %v2011
    %2075 = vmatpush1.bf16.msra.mxu0 %v2010
    %2076 = vmatprep.subr.bf16.mxu0 %v2015
    %2077 = vmatpush1.bf16.msra.mxu0 %v2014
    %2078 = vmatprep.subr.bf16.mxu0 %v2019
    %2079 = vmatpush1.bf16.msra.mxu0 %v2018
    %2080 = vmatprep.subr.bf16.mxu0 %v2023
    %2081 = vmatpush1.bf16.msra.mxu0 %v2022
    %2082 = vmatprep.subr.bf16.mxu0 %v2027
    %2083 = vmatpush1.bf16.msra.mxu0 %v2026
    %2084 = vmatprep.subr.bf16.mxu0 %v2031
    %2085 = vmatpush1.bf16.msra.mxu0 %v2030
    %2086 = vmatprep.subr.bf16.mxu0 %v2035
    %2087 = vmatpush1.bf16.msra.mxu0 %v2034
    %2088 = vmatprep.subr.bf16.mxu0 %v2039
    %2089 = vmatpush1.bf16.msra.mxu0 %v2038
    %2090 = vmatprep.subr.bf16.mxu0 0
    %2091 = vmatpush1.bf16.msra.mxu0 0
    %2092 = vmatprep.subr.bf16.mxu0 0
    %2093 = vmatpush1.bf16.msra.mxu0 0
    %2094 = vmatprep.subr.bf16.mxu0 0
    %2095 = vmatpush1.bf16.msra.mxu0 0
    %2096 = vmatprep.subr.bf16.mxu0 0
    %2097 = vmatpush1.bf16.msra.mxu0 0
    %2098 = vmatprep.subr.bf16.mxu0 0
    %2099 = vmatpush1.bf16.msra.mxu0 0
    %2100 = vmatprep.subr.bf16.mxu0 0
    %2101 = vmatpush1.bf16.msra.mxu0 0
    %2102 = vmatprep.subr.bf16.mxu0 0
    %2103 = vmatpush1.bf16.msra.mxu0 0
    %2104 = vmatprep.subr.bf16.mxu0 0
    %2105 = vmatpush1.bf16.msra.mxu0 0
    %2106 = vmatprep.mubr.bf16.mxu0 0
    %2107 = vmatmul.mubr.bf16.gmra.mrb[0].mxu0 %v1881
    %v2108 = vpop.f32.mrb[0].mxu0
    %v2109 = vadd.f32 0.0, %v2108
    %v2110 = vpop.f32.mrb[0].mxu0
    %v2111 = vadd.f32 0.0, %v2110
    %v2112 = vpop.f32.mrb[0].mxu0
    %v2113 = vpop.f32.mrb[0].mxu0
    %2114 = vdwg.mxu0
    %2115 = vmatprep.subr.bf16.mxu0 %v2013
    %2116 = vmatpush1.bf16.msra.mxu0 %v2012
    %2117 = vmatprep.subr.bf16.mxu0 %v2017
    %2118 = vmatpush1.bf16.msra.mxu0 %v2016
    %2119 = vmatprep.subr.bf16.mxu0 %v2021
    %2120 = vmatpush1.bf16.msra.mxu0 %v2020
    %2121 = vmatprep.subr.bf16.mxu0 %v2025
    %2122 = vmatpush1.bf16.msra.mxu0 %v2024
    %2123 = vmatprep.subr.bf16.mxu0 %v2029
    %2124 = vmatpush1.bf16.msra.mxu0 %v2028
    %2125 = vmatprep.subr.bf16.mxu0 %v2033
    %2126 = vmatpush1.bf16.msra.mxu0 %v2032
    %2127 = vmatprep.subr.bf16.mxu0 %v2037
    %2128 = vmatpush1.bf16.msra.mxu0 %v2036
    %2129 = vmatprep.subr.bf16.mxu0 %v2041
    %2130 = vmatpush1.bf16.msra.mxu0 %v2040
    %2131 = vmatprep.subr.bf16.mxu0 0
    %2132 = vmatpush1.bf16.msra.mxu0 0
    %2133 = vmatprep.subr.bf16.mxu0 0
    %2134 = vmatpush1.bf16.msra.mxu0 0
    %2135 = vmatprep.subr.bf16.mxu0 0
    %2136 = vmatpush1.bf16.msra.mxu0 0
    %2137 = vmatprep.subr.bf16.mxu0 0
    %2138 = vmatpush1.bf16.msra.mxu0 0
    %2139 = vmatprep.subr.bf16.mxu0 0
    %2140 = vmatpush1.bf16.msra.mxu0 0
    %2141 = vmatprep.subr.bf16.mxu0 0
    %2142 = vmatpush1.bf16.msra.mxu0 0
    %2143 = vmatprep.subr.bf16.mxu0 0
    %2144 = vmatpush1.bf16.msra.mxu0 0
    %2145 = vmatprep.subr.bf16.mxu0 0
    %2146 = vmatpush1.bf16.msra.mxu0 0
    %2147 = vmatprep.mubr.bf16.mxu0 0
    %2148 = vmatmul.mubr.bf16.gmra.mrb[0].mxu0 %v1881
    %v2149 = vpop.f32.mrb[0].mxu0
    %v2150 = vadd.f32 0.0, %v2149
    %v2151 = vpop.f32.mrb[0].mxu0
    %v2152 = vadd.f32 0.0, %v2151
    %v2153 = vpop.f32.mrb[0].mxu0
    %v2154 = vpop.f32.mrb[0].mxu0
    %2155 = vdwg.mxu0
    %v2156 = vadd.f32 %v2109, %v1826
    %v2157 = vadd.f32 %v2111, %v1828
    %v2158 = vadd.f32 %v2150, %v1867
    %v2159 = vld [vmem:[#allocation11] sm:$0xff]
    %v2160 = vld [vmem:[#allocation11 + $0x8] sm:$0xf]
    %v2161 = vld [vmem:[#allocation11 + $0xc] sm:$0xff]
    %v2162 = vld [vmem:[#allocation11 + $0x14] sm:$0xf]
    %v2163 = vld [vmem:[#allocation11 + $0x18] sm:$0xff]
    %v2164 = vld [vmem:[#allocation11 + $0x20] sm:$0xf]
    %v2165 = vld [vmem:[#allocation11 + $0x24] sm:$0xff]
    %v2166 = vld [vmem:[#allocation11 + $0x2c] sm:$0xf]
    %v2167 = vld [vmem:[#allocation11 + $0x30] sm:$0xff]
    %v2168 = vld [vmem:[#allocation11 + $0x38] sm:$0xf]
    %v2169 = vld [vmem:[#allocation11 + $0x3c] sm:$0xff]
    %v2170 = vld [vmem:[#allocation11 + $0x44] sm:$0xf]
    %v2171 = vld [vmem:[#allocation11 + $0x48] sm:$0xff]
    %v2172 = vld [vmem:[#allocation11 + $0x50] sm:$0xf]
    %v2173 = vld [vmem:[#allocation11 + $0x54] sm:$0xff]
    %v2174 = vld [vmem:[#allocation11 + $0x5c] sm:$0xf]
    %v2175 = vld [vmem:[#allocation11 + $0x60] sm:$0xff]
    %v2176 = vld [vmem:[#allocation11 + $0x68] sm:$0xf]
    %v2177 = vld [vmem:[#allocation11 + $0x6c] sm:$0xff]
    %v2178 = vld [vmem:[#allocation11 + $0x74] sm:$0xf]
    %v2179 = vld [vmem:[#allocation11 + $0x78] sm:$0xff]
    %v2180 = vld [vmem:[#allocation11 + $0x80] sm:$0xf]
    %v2181 = vld [vmem:[#allocation11 + $0x84] sm:$0xff]
    %v2182 = vld [vmem:[#allocation11 + $0x8c] sm:$0xf]
    %v2183 = vld [vmem:[#allocation11 + $0x90] sm:$0xff]
    %v2184 = vld [vmem:[#allocation11 + $0x98] sm:$0xf]
    %v2185 = vld [vmem:[#allocation11 + $0x9c] sm:$0xff]
    %v2186 = vld [vmem:[#allocation11 + $0xa4] sm:$0xf]
    %v2187 = vld [vmem:[#allocation11 + $0xa8] sm:$0xff]
    %v2188 = vld [vmem:[#allocation11 + $0xb0] sm:$0xf]
    %v2189 = vld [vmem:[#allocation11 + $0xb4] sm:$0xff]
    %v2190 = vld [vmem:[#allocation11 + $0xbc] sm:$0xf]
    %v2191 = vld [vmem:[%s9] sm:$0x7]
    %v2193 = vlaneseq
    %v2194 = vshrl.u32 %v2193, 7
    %v2195 = vsub.s32 0, %v2194
    %v2196 = vrot.slane %v2191, %v2195
    %v2197 = vlaneseq
    %v2198 = vshrl.u32 %v2197, 7
    %v2199 = vsub.s32 1, %v2198
    %v2200 = vrot.slane %v2191, %v2199
    %v2201 = vlaneseq
    %v2202 = vshrl.u32 %v2201, 7
    %v2203 = vsub.s32 2, %v2202
    %v2204 = vrot.slane %v2191, %v2203
    %v2240 = vunpack.c.l.b16 %v2159
    %v2241 = vunpack.c.h.b16 %v2159
    %v2242 = vunpack.c.l.b16 %v2160
    %v2243 = vunpack.c.l.b16 %v2161
    %v2244 = vunpack.c.h.b16 %v2161
    %v2245 = vunpack.c.l.b16 %v2162
    %v2246 = vunpack.c.l.b16 %v2163
    %v2247 = vunpack.c.h.b16 %v2163
    %v2248 = vunpack.c.l.b16 %v2164
    %v2249 = vunpack.c.l.b16 %v2165
    %v2250 = vunpack.c.h.b16 %v2165
    %v2251 = vunpack.c.l.b16 %v2166
    %v2252 = vunpack.c.l.b16 %v2167
    %v2253 = vunpack.c.h.b16 %v2167
    %v2254 = vunpack.c.l.b16 %v2168
    %v2255 = vunpack.c.l.b16 %v2169
    %v2256 = vunpack.c.h.b16 %v2169
    %v2257 = vunpack.c.l.b16 %v2170
    %v2258 = vunpack.c.l.b16 %v2171
    %v2259 = vunpack.c.h.b16 %v2171
    %v2260 = vunpack.c.l.b16 %v2172
    %v2261 = vunpack.c.l.b16 %v2173
    %v2262 = vunpack.c.h.b16 %v2173
    %v2263 = vunpack.c.l.b16 %v2174
    %v2264 = vunpack.c.l.b16 %v2175
    %v2265 = vunpack.c.h.b16 %v2175
    %v2266 = vunpack.c.l.b16 %v2176
    %v2267 = vunpack.c.l.b16 %v2177
    %v2268 = vunpack.c.h.b16 %v2177
    %v2269 = vunpack.c.l.b16 %v2178
    %v2270 = vunpack.c.l.b16 %v2179
    %v2271 = vunpack.c.h.b16 %v2179
    %v2272 = vunpack.c.l.b16 %v2180
    %v2273 = vunpack.c.l.b16 %v2181
    %v2274 = vunpack.c.h.b16 %v2181
    %v2275 = vunpack.c.l.b16 %v2182
    %v2276 = vunpack.c.l.b16 %v2183
    %v2277 = vunpack.c.h.b16 %v2183
    %v2278 = vunpack.c.l.b16 %v2184
    %v2279 = vunpack.c.l.b16 %v2185
    %v2280 = vunpack.c.h.b16 %v2185
    %v2281 = vunpack.c.l.b16 %v2186
    %v2282 = vunpack.c.l.b16 %v2187
    %v2283 = vunpack.c.h.b16 %v2187
    %v2284 = vunpack.c.l.b16 %v2188
    %v2285 = vunpack.c.l.b16 %v2189
    %v2286 = vunpack.c.h.b16 %v2189
    %v2287 = vunpack.c.l.b16 %v2190
    %v2288 = vpack.c.b16 %v2243, %v2240
    %v2289 = vpack.c.b16 %v2244, %v2241
    %v2290 = vpack.c.b16 %v2245, %v2242
    %v2291 = vpack.c.b16 %v2249, %v2246
    %v2292 = vpack.c.b16 %v2250, %v2247
    %v2293 = vpack.c.b16 %v2251, %v2248
    %v2294 = vpack.c.b16 %v2255, %v2252
    %v2295 = vpack.c.b16 %v2256, %v2253
    %v2296 = vpack.c.b16 %v2257, %v2254
    %v2297 = vpack.c.b16 %v2261, %v2258
    %v2298 = vpack.c.b16 %v2262, %v2259
    %v2299 = vpack.c.b16 %v2263, %v2260
    %v2300 = vpack.c.b16 %v2267, %v2264
    %v2301 = vpack.c.b16 %v2268, %v2265
    %v2302 = vpack.c.b16 %v2269, %v2266
    %v2303 = vpack.c.b16 %v2273, %v2270
    %v2304 = vpack.c.b16 %v2274, %v2271
    %v2305 = vpack.c.b16 %v2275, %v2272
    %v2306 = vpack.c.b16 %v2279, %v2276
    %v2307 = vpack.c.b16 %v2280, %v2277
    %v2308 = vpack.c.b16 %v2281, %v2278
    %v2309 = vpack.c.b16 %v2285, %v2282
    %v2310 = vpack.c.b16 %v2286, %v2283
    %v2311 = vpack.c.b16 %v2287, %v2284
    %2336 = vmatprep.subr.bf16.mxu0 %v2289
    %2337 = vmatpush1.bf16.msra.mxu0 %v2288
    %2338 = vmatprep.subr.bf16.mxu0 %v2292
    %2339 = vmatpush1.bf16.msra.mxu0 %v2291
    %2340 = vmatprep.subr.bf16.mxu0 %v2295
    %2341 = vmatpush1.bf16.msra.mxu0 %v2294
    %2342 = vmatprep.subr.bf16.mxu0 %v2298
    %2343 = vmatpush1.bf16.msra.mxu0 %v2297
    %2344 = vmatprep.subr.bf16.mxu0 %v2301
    %2345 = vmatpush1.bf16.msra.mxu0 %v2300
    %2346 = vmatprep.subr.bf16.mxu0 %v2304
    %2347 = vmatpush1.bf16.msra.mxu0 %v2303
    %2348 = vmatprep.subr.bf16.mxu0 %v2307
    %2349 = vmatpush1.bf16.msra.mxu0 %v2306
    %2350 = vmatprep.subr.bf16.mxu0 %v2310
    %2351 = vmatpush1.bf16.msra.mxu0 %v2309
    %2352 = vmatprep.subr.bf16.mxu0 0
    %2353 = vmatpush1.bf16.msra.mxu0 0
    %2354 = vmatprep.subr.bf16.mxu0 0
    %2355 = vmatpush1.bf16.msra.mxu0 0
    %2356 = vmatprep.subr.bf16.mxu0 0
    %2357 = vmatpush1.bf16.msra.mxu0 0
    %2358 = vmatprep.subr.bf16.mxu0 0
    %2359 = vmatpush1.bf16.msra.mxu0 0
    %2360 = vmatprep.subr.bf16.mxu0 0
    %2361 = vmatpush1.bf16.msra.mxu0 0
    %2362 = vmatprep.subr.bf16.mxu0 0
    %2363 = vmatpush1.bf16.msra.mxu0 0
    %2364 = vmatprep.subr.bf16.mxu0 0
    %2365 = vmatpush1.bf16.msra.mxu0 0
    %2366 = vmatprep.subr.bf16.mxu0 0
    %2367 = vmatpush1.bf16.msra.mxu0 0
    %2368 = vmatprep.mubr.bf16.mxu0 0
    %2369 = vmatmul.mubr.bf16.gmra.mrb[0].mxu0 %v1576
    %v2370 = vpop.f32.mrb[0].mxu0
    %v2371 = vadd.f32 %v2196, %v2370
    %v2372 = vpop.f32.mrb[0].mxu0
    %v2373 = vadd.f32 %v2200, %v2372
    %v2374 = vpop.f32.mrb[0].mxu0
    %v2375 = vpop.f32.mrb[0].mxu0
    %2376 = vdwg.mxu0
    %2377 = vmatprep.subr.bf16.mxu0 0
    %2378 = vmatpush1.bf16.msra.mxu0 %v2290
    %2379 = vmatprep.subr.bf16.mxu0 0
    %2380 = vmatpush1.bf16.msra.mxu0 %v2293
    %2381 = vmatprep.subr.bf16.mxu0 0
    %2382 = vmatpush1.bf16.msra.mxu0 %v2296
    %2383 = vmatprep.subr.bf16.mxu0 0
    %2384 = vmatpush1.bf16.msra.mxu0 %v2299
    %2385 = vmatprep.subr.bf16.mxu0 0
    %2386 = vmatpush1.bf16.msra.mxu0 %v2302
    %2387 = vmatprep.subr.bf16.mxu0 0
    %2388 = vmatpush1.bf16.msra.mxu0 %v2305
    %2389 = vmatprep.subr.bf16.mxu0 0
    %2390 = vmatpush1.bf16.msra.mxu0 %v2308
    %2391 = vmatprep.subr.bf16.mxu0 0
    %2392 = vmatpush1.bf16.msra.mxu0 %v2311
    %2393 = vmatprep.subr.bf16.mxu0 0
    %2394 = vmatpush1.bf16.msra.mxu0 0
    %2395 = vmatprep.subr.bf16.mxu0 0
    %2396 = vmatpush1.bf16.msra.mxu0 0
    %2397 = vmatprep.subr.bf16.mxu0 0
    %2398 = vmatpush1.bf16.msra.mxu0 0
    %2399 = vmatprep.subr.bf16.mxu0 0
    %2400 = vmatpush1.bf16.msra.mxu0 0
    %2401 = vmatprep.subr.bf16.mxu0 0
    %2402 = vmatpush1.bf16.msra.mxu0 0
    %2403 = vmatprep.subr.bf16.mxu0 0
    %2404 = vmatpush1.bf16.msra.mxu0 0
    %2405 = vmatprep.subr.bf16.mxu0 0
    %2406 = vmatpush1.bf16.msra.mxu0 0
    %2407 = vmatprep.subr.bf16.mxu0 0
    %2408 = vmatpush1.bf16.msra.mxu0 0
    %2409 = vmatprep.mubr.bf16.mxu0 0
    %2410 = vmatmul.mubr.bf16.gmra.mrb[0].mxu0 %v1576
    %v2411 = vpop.f32.mrb[0].mxu0
    %v2412 = vadd.f32 %v2204, %v2411
    %v2413 = vpop.f32.mrb[0].mxu0
    %v2414 = vpop.f32.mrb[0].mxu0
    %v2415 = vpop.f32.mrb[0].mxu0
    %2416 = vdwg.mxu0
    %v2417 = vadd.f32 %v2156, %v2371
    %v2418 = vadd.f32 %v2157, %v2373
    %v2419 = vxor.u32 %v2417, 2147483648
    %v2420 = vxor.u32 %v2418, 2147483648
    %v2421 = vmul.f32 %v2419, 1.442695
    %v2422 = vpow.pop %v2421
    %v2423 = vmul.f32 %v2420, 1.442695
    %v2424 = vpow.pop %v2423
    %v2425 = vadd.f32 %v2422, 1.0
    %v2426 = vadd.f32 %v2424, 1.0
    %v2427 = vrcp.pop %v2425
    %v2428 = vmul.f32 1.0, %v2427
    %v2429 = vrcp.pop %v2426
    %v2430 = vmul.f32 1.0, %v2429
    %v2431 = vmul.f32 %v2428, %v2412
    %v2432 = vadd.f32 %v2158, %v2431
    %v2433 = vtanh.pop %v2432
    %v2434 = vsub.f32 1.0, %v2430
    %v2435 = vmul.f32 %v2434, %v2433
    %v2436 = vmul.f32 %v2430, %v1575
    %v2437 = vadd.f32 %v2435, %v2436
    %v2438 = vpack.c.bf16 %v2437, %v2437
    %v2439 = vld [vmem:[%s12] sm:$0xf]
    %v2440 = vld [vmem:[%s12 + $0x4] sm:$0xf]
    %v2441 = vld [vmem:[%s12 + $0x8] sm:$0xf]
    %v2442 = vld [vmem:[%s12 + $0xc] sm:$0xf]
    %v2443 = vld [vmem:[%s12 + $0x10] sm:$0xf]
    %v2444 = vld [vmem:[%s12 + $0x14] sm:$0xf]
    %v2445 = vld [vmem:[%s12 + $0x18] sm:$0xf]
    %v2446 = vld [vmem:[%s12 + $0x1c] sm:$0xf]
    %v2447 = vld [vmem:[%s12 + $0x20] sm:$0xf]
    %v2448 = vld [vmem:[%s12 + $0x24] sm:$0xf]
    %v2449 = vld [vmem:[%s12 + $0x28] sm:$0xf]
    %v2450 = vld [vmem:[%s12 + $0x2c] sm:$0xf]
    %v2451 = vld [vmem:[%s12 + $0x30] sm:$0xf]
    %v2452 = vld [vmem:[%s12 + $0x34] sm:$0xf]
    %v2453 = vld [vmem:[%s12 + $0x38] sm:$0xf]
    %v2454 = vld [vmem:[%s12 + $0x3c] sm:$0xf]
    %v2471 = vunpack.c.l.b16 %v2439
    %v2472 = vunpack.c.l.b16 %v2440
    %v2473 = vunpack.c.l.b16 %v2441
    %v2474 = vunpack.c.l.b16 %v2442
    %v2475 = vunpack.c.l.b16 %v2443
    %v2476 = vunpack.c.l.b16 %v2444
    %v2477 = vunpack.c.l.b16 %v2445
    %v2478 = vunpack.c.l.b16 %v2446
    %v2479 = vunpack.c.l.b16 %v2447
    %v2480 = vunpack.c.l.b16 %v2448
    %v2481 = vunpack.c.l.b16 %v2449
    %v2482 = vunpack.c.l.b16 %v2450
    %v2483 = vunpack.c.l.b16 %v2451
    %v2484 = vunpack.c.l.b16 %v2452
    %v2485 = vunpack.c.l.b16 %v2453
    %v2486 = vunpack.c.l.b16 %v2454
    %v2487 = vpack.c.b16 %v2472, %v2471
    %v2488 = vpack.c.b16 %v2474, %v2473
    %v2489 = vpack.c.b16 %v2476, %v2475
    %v2490 = vpack.c.b16 %v2478, %v2477
    %v2491 = vpack.c.b16 %v2480, %v2479
    %v2492 = vpack.c.b16 %v2482, %v2481
    %v2493 = vpack.c.b16 %v2484, %v2483
    %v2494 = vpack.c.b16 %v2486, %v2485
    %2503 = vmatprep.subr.bf16.mxu0 0
    %2504 = vmatpush1.bf16.msra.mxu0 %v2487
    %2505 = vmatprep.subr.bf16.mxu0 0
    %2506 = vmatpush1.bf16.msra.mxu0 %v2488
    %2507 = vmatprep.subr.bf16.mxu0 0
    %2508 = vmatpush1.bf16.msra.mxu0 %v2489
    %2509 = vmatprep.subr.bf16.mxu0 0
    %2510 = vmatpush1.bf16.msra.mxu0 %v2490
    %2511 = vmatprep.subr.bf16.mxu0 0
    %2512 = vmatpush1.bf16.msra.mxu0 %v2491
    %2513 = vmatprep.subr.bf16.mxu0 0
    %2514 = vmatpush1.bf16.msra.mxu0 %v2492
    %2515 = vmatprep.subr.bf16.mxu0 0
    %2516 = vmatpush1.bf16.msra.mxu0 %v2493
    %2517 = vmatprep.subr.bf16.mxu0 0
    %2518 = vmatpush1.bf16.msra.mxu0 %v2494
    %2519 = vmatprep.subr.bf16.mxu0 0
    %2520 = vmatpush1.bf16.msra.mxu0 0
    %2521 = vmatprep.subr.bf16.mxu0 0
    %2522 = vmatpush1.bf16.msra.mxu0 0
    %2523 = vmatprep.subr.bf16.mxu0 0
    %2524 = vmatpush1.bf16.msra.mxu0 0
    %2525 = vmatprep.subr.bf16.mxu0 0
    %2526 = vmatpush1.bf16.msra.mxu0 0
    %2527 = vmatprep.subr.bf16.mxu0 0
    %2528 = vmatpush1.bf16.msra.mxu0 0
    %2529 = vmatprep.subr.bf16.mxu0 0
    %2530 = vmatpush1.bf16.msra.mxu0 0
    %2531 = vmatprep.subr.bf16.mxu0 0
    %2532 = vmatpush1.bf16.msra.mxu0 0
    %2533 = vmatprep.subr.bf16.mxu0 0
    %2534 = vmatpush1.bf16.msra.mxu0 0
    %2535 = vmatprep.mubr.bf16.mxu0 0
    %2536 = vmatmul.mubr.bf16.gmra.mrb[0].mxu0 %v2438
    %v2537 = vpop.f32.mrb[0].mxu0
    %v2538 = vadd.f32 0.0, %v2537
    %v2539 = vpop.f32.mrb[0].mxu0
    %v2540 = vpop.f32.mrb[0].mxu0
    %v2541 = vpop.f32.mrb[0].mxu0
    %2542 = vdwg.mxu0
    %v2543 = vadd.f32 %v2152, %v2538
    %v2544 = vadd.f32 %v2543, %v1869
    %s2545 = scalar_lea.vmem [#allocation14], 8
    %2546 = vst [vmem:[%s2545] sm:$0xff] %v2544
    %s2547 = sld [smem:[#allocation3 + $0x1]]
    %p2548 = scmp.ne.s32.totalorder %s2547, 0
    // Predicated region
    $region78: #{seq2seq_forward.1} parent=1 // pred_check
      %p2549 = pneg %p2548
    $region79: #{seq2seq_forward.1} parent=1 // pred_check_branch
      %2551 = sbr.rel (%p2549) target = $region81
    $region80: #{seq2seq_forward.1} parent=1 // pred_region
      %s2552 = scalar_lea.vmem %s2, 8
      %v2553 = vld [vmem:[%s2552] sm:$0xff]
    $region81: #{seq2seq_forward.1} parent=1 // pred_fallthru
      %v2554 = vphi 0, %v2553
    %p2555 = pneg %p2548
    // Predicated region
    $region82: #{seq2seq_forward.1} parent=1 // pred_check
      _
    $region83: #{seq2seq_forward.1} parent=1 // pred_check_branch
      %2557 = sbr.rel (%p2548) target = $region85
    $region84: #{seq2seq_forward.1} parent=1 // pred_region
      %2558 = vmax.xlane.f32.xlu0 %v2544
      %v2559 = vpop.xlane.xlu0 %2558
      %vm2560 = vcmp.eq.f32.partialorder %v2544, %v2559
      %v2561 = vsel %vm2560, %v128, 128
      %v2562 = vand.u32 %v2561, 65535
      %v2563 = vshra.s32 %v2561, 16
      %v2564 = vcvt.s32.f32 %v2562
      %v2565 = vcvt.s32.f32 %v2563
      %2566 = vmin.xlane.f32.xlu0 %v2565
      %v2567 = vpop.xlane.xlu0 %2566
      %vm2568 = vcmp.eq.f32.partialorder %v2565, %v2567
      %v2569 = vsel %vm2568, %v2564, inf
      %2570 = vmin.xlane.f32.xlu0 %v2569
      %v2571 = vpop.xlane.xlu0 %2570
      %v2572 = vcvt.f32.s32 %v2571
      %v2573 = vcvt.f32.s32 %v2567
      %v2574 = vshll.u32 %v2573, 16
      %v2575 = vadd.s32 %v2574, %v2572
    $region85: #{seq2seq_forward.1} parent=1 // pred_fallthru
      %v2576 = vphi %v2554, %v2575
    %2577 = vset.pattern.permute.xlu0 0
    %2578 = vperm.xlu0 %2577, %v2576
    %v2579 = vpop.permute.xlu0 %2578
    %vm2580 = vcmp.eq.s32.totalorder %v2579, %v128
    %v2581 = vsel %vm2580, 1, 0
    %v2582 = vcvt.s32.f32 %v2581
    %v2583 = vpack.c.bf16 %v2582, %v2582
    %v2584 = vld [vmem:[#allocation10] sm:$0xff]
    %v2585 = vld [vmem:[#allocation10 + $0x8] sm:$0xff]
    %v2586 = vld [vmem:[#allocation10 + $0x10] sm:$0xff]
    %v2587 = vld [vmem:[#allocation10 + $0x18] sm:$0xff]
    %v2588 = vld [vmem:[#allocation10 + $0x20] sm:$0xff]
    %v2589 = vld [vmem:[#allocation10 + $0x28] sm:$0xff]
    %v2590 = vld [vmem:[#allocation10 + $0x30] sm:$0xff]
    %v2591 = vld [vmem:[#allocation10 + $0x38] sm:$0xff]
    %v2592 = vld [vmem:[#allocation10 + $0x40] sm:$0xff]
    %v2593 = vld [vmem:[#allocation10 + $0x48] sm:$0xff]
    %v2594 = vld [vmem:[#allocation10 + $0x50] sm:$0xff]
    %v2595 = vld [vmem:[#allocation10 + $0x58] sm:$0xff]
    %v2596 = vld [vmem:[#allocation10 + $0x60] sm:$0xff]
    %v2597 = vld [vmem:[#allocation10 + $0x68] sm:$0xff]
    %v2598 = vld [vmem:[#allocation10 + $0x70] sm:$0xff]
    %v2599 = vld [vmem:[#allocation10 + $0x78] sm:$0xff]
    %v2600 = vld [vmem:[#allocation10 + $0x80] sm:$0xff]
    %v2601 = vld [vmem:[#allocation10 + $0x88] sm:$0xff]
    %v2602 = vld [vmem:[#allocation10 + $0x90] sm:$0xff]
    %v2603 = vld [vmem:[#allocation10 + $0x98] sm:$0xff]
    %v2604 = vld [vmem:[#allocation10 + $0xa0] sm:$0xff]
    %v2605 = vld [vmem:[#allocation10 + $0xa8] sm:$0xff]
    %v2606 = vld [vmem:[#allocation10 + $0xb0] sm:$0xff]
    %v2607 = vld [vmem:[#allocation10 + $0xb8] sm:$0xff]
    %v2608 = vld [vmem:[#allocation10 + $0xc0] sm:$0xff]
    %v2609 = vld [vmem:[#allocation10 + $0xc8] sm:$0xff]
    %v2610 = vld [vmem:[#allocation10 + $0xd0] sm:$0xff]
    %v2611 = vld [vmem:[#allocation10 + $0xd8] sm:$0xff]
    %v2612 = vld [vmem:[#allocation10 + $0xe0] sm:$0xff]
    %v2613 = vld [vmem:[#allocation10 + $0xe8] sm:$0xff]
    %v2614 = vld [vmem:[#allocation10 + $0xf0] sm:$0xff]
    %v2615 = vld [vmem:[#allocation10 + $0xf8] sm:$0xff]
    %v2648 = vunpack.c.l.b16 %v2584
    %v2649 = vunpack.c.h.b16 %v2584
    %v2650 = vunpack.c.l.b16 %v2585
    %v2651 = vunpack.c.h.b16 %v2585
    %v2652 = vunpack.c.l.b16 %v2586
    %v2653 = vunpack.c.h.b16 %v2586
    %v2654 = vunpack.c.l.b16 %v2587
    %v2655 = vunpack.c.h.b16 %v2587
    %v2656 = vunpack.c.l.b16 %v2588
    %v2657 = vunpack.c.h.b16 %v2588
    %v2658 = vunpack.c.l.b16 %v2589
    %v2659 = vunpack.c.h.b16 %v2589
    %v2660 = vunpack.c.l.b16 %v2590
    %v2661 = vunpack.c.h.b16 %v2590
    %v2662 = vunpack.c.l.b16 %v2591
    %v2663 = vunpack.c.h.b16 %v2591
    %v2664 = vunpack.c.l.b16 %v2592
    %v2665 = vunpack.c.h.b16 %v2592
    %v2666 = vunpack.c.l.b16 %v2593
    %v2667 = vunpack.c.h.b16 %v2593
    %v2668 = vunpack.c.l.b16 %v2594
    %v2669 = vunpack.c.h.b16 %v2594
    %v2670 = vunpack.c.l.b16 %v2595
    %v2671 = vunpack.c.h.b16 %v2595
    %v2672 = vunpack.c.l.b16 %v2596
    %v2673 = vunpack.c.h.b16 %v2596
    %v2674 = vunpack.c.l.b16 %v2597
    %v2675 = vunpack.c.h.b16 %v2597
    %v2676 = vunpack.c.l.b16 %v2598
    %v2677 = vunpack.c.h.b16 %v2598
    %v2678 = vunpack.c.l.b16 %v2599
    %v2679 = vunpack.c.h.b16 %v2599
    %v2680 = vunpack.c.l.b16 %v2600
    %v2681 = vunpack.c.h.b16 %v2600
    %v2682 = vunpack.c.l.b16 %v2601
    %v2683 = vunpack.c.h.b16 %v2601
    %v2684 = vunpack.c.l.b16 %v2602
    %v2685 = vunpack.c.h.b16 %v2602
    %v2686 = vunpack.c.l.b16 %v2603
    %v2687 = vunpack.c.h.b16 %v2603
    %v2688 = vunpack.c.l.b16 %v2604
    %v2689 = vunpack.c.h.b16 %v2604
    %v2690 = vunpack.c.l.b16 %v2605
    %v2691 = vunpack.c.h.b16 %v2605
    %v2692 = vunpack.c.l.b16 %v2606
    %v2693 = vunpack.c.h.b16 %v2606
    %v2694 = vunpack.c.l.b16 %v2607
    %v2695 = vunpack.c.h.b16 %v2607
    %v2696 = vunpack.c.l.b16 %v2608
    %v2697 = vunpack.c.h.b16 %v2608
    %v2698 = vunpack.c.l.b16 %v2609
    %v2699 = vunpack.c.h.b16 %v2609
    %v2700 = vunpack.c.l.b16 %v2610
    %v2701 = vunpack.c.h.b16 %v2610
    %v2702 = vunpack.c.l.b16 %v2611
    %v2703 = vunpack.c.h.b16 %v2611
    %v2704 = vunpack.c.l.b16 %v2612
    %v2705 = vunpack.c.h.b16 %v2612
    %v2706 = vunpack.c.l.b16 %v2613
    %v2707 = vunpack.c.h.b16 %v2613
    %v2708 = vunpack.c.l.b16 %v2614
    %v2709 = vunpack.c.h.b16 %v2614
    %v2710 = vunpack.c.l.b16 %v2615
    %v2711 = vunpack.c.h.b16 %v2615
    %v2712 = vpack.c.b16 %v2652, %v2648
    %v2713 = vpack.c.b16 %v2653, %v2649
    %v2714 = vpack.c.b16 %v2654, %v2650
    %v2715 = vpack.c.b16 %v2655, %v2651
    %v2716 = vpack.c.b16 %v2660, %v2656
    %v2717 = vpack.c.b16 %v2661, %v2657
    %v2718 = vpack.c.b16 %v2662, %v2658
    %v2719 = vpack.c.b16 %v2663, %v2659
    %v2720 = vpack.c.b16 %v2668, %v2664
    %v2721 = vpack.c.b16 %v2669, %v2665
    %v2722 = vpack.c.b16 %v2670, %v2666
    %v2723 = vpack.c.b16 %v2671, %v2667
    %v2724 = vpack.c.b16 %v2676, %v2672
    %v2725 = vpack.c.b16 %v2677, %v2673
    %v2726 = vpack.c.b16 %v2678, %v2674
    %v2727 = vpack.c.b16 %v2679, %v2675
    %v2728 = vpack.c.b16 %v2684, %v2680
    %v2729 = vpack.c.b16 %v2685, %v2681
    %v2730 = vpack.c.b16 %v2686, %v2682
    %v2731 = vpack.c.b16 %v2687, %v2683
    %v2732 = vpack.c.b16 %v2692, %v2688
    %v2733 = vpack.c.b16 %v2693, %v2689
    %v2734 = vpack.c.b16 %v2694, %v2690
    %v2735 = vpack.c.b16 %v2695, %v2691
    %v2736 = vpack.c.b16 %v2700, %v2696
    %v2737 = vpack.c.b16 %v2701, %v2697
    %v2738 = vpack.c.b16 %v2702, %v2698
    %v2739 = vpack.c.b16 %v2703, %v2699
    %v2740 = vpack.c.b16 %v2708, %v2704
    %v2741 = vpack.c.b16 %v2709, %v2705
    %v2742 = vpack.c.b16 %v2710, %v2706
    %v2743 = vpack.c.b16 %v2711, %v2707
    %2776 = vmatprep.subr.bf16.mxu0 %v2713
    %2777 = vmatpush1.bf16.msra.mxu0 %v2712
    %2778 = vmatprep.subr.bf16.mxu0 %v2717
    %2779 = vmatpush1.bf16.msra.mxu0 %v2716
    %2780 = vmatprep.subr.bf16.mxu0 %v2721
    %2781 = vmatpush1.bf16.msra.mxu0 %v2720
    %2782 = vmatprep.subr.bf16.mxu0 %v2725
    %2783 = vmatpush1.bf16.msra.mxu0 %v2724
    %2784 = vmatprep.subr.bf16.mxu0 %v2729
    %2785 = vmatpush1.bf16.msra.mxu0 %v2728
    %2786 = vmatprep.subr.bf16.mxu0 %v2733
    %2787 = vmatpush1.bf16.msra.mxu0 %v2732
    %2788 = vmatprep.subr.bf16.mxu0 %v2737
    %2789 = vmatpush1.bf16.msra.mxu0 %v2736
    %2790 = vmatprep.subr.bf16.mxu0 %v2741
    %2791 = vmatpush1.bf16.msra.mxu0 %v2740
    %2792 = vmatprep.subr.bf16.mxu0 0
    %2793 = vmatpush1.bf16.msra.mxu0 0
    %2794 = vmatprep.subr.bf16.mxu0 0
    %2795 = vmatpush1.bf16.msra.mxu0 0
    %2796 = vmatprep.subr.bf16.mxu0 0
    %2797 = vmatpush1.bf16.msra.mxu0 0
    %2798 = vmatprep.subr.bf16.mxu0 0
    %2799 = vmatpush1.bf16.msra.mxu0 0
    %2800 = vmatprep.subr.bf16.mxu0 0
    %2801 = vmatpush1.bf16.msra.mxu0 0
    %2802 = vmatprep.subr.bf16.mxu0 0
    %2803 = vmatpush1.bf16.msra.mxu0 0
    %2804 = vmatprep.subr.bf16.mxu0 0
    %2805 = vmatpush1.bf16.msra.mxu0 0
    %2806 = vmatprep.subr.bf16.mxu0 0
    %2807 = vmatpush1.bf16.msra.mxu0 0
    %2808 = vmatprep.mubr.bf16.mxu0 0
    %2809 = vmatmul.mubr.bf16.gmra.mrb[0].mxu0 %v2583
    %v2810 = vpop.f32.mrb[0].mxu0
    %v2811 = vadd.f32 0.0, %v2810
    %v2812 = vpop.f32.mrb[0].mxu0
    %v2813 = vadd.f32 0.0, %v2812
    %v2814 = vpop.f32.mrb[0].mxu0
    %v2815 = vpop.f32.mrb[0].mxu0
    %2816 = vdwg.mxu0
    %2817 = vmatprep.subr.bf16.mxu0 %v2715
    %2818 = vmatpush1.bf16.msra.mxu0 %v2714
    %2819 = vmatprep.subr.bf16.mxu0 %v2719
    %2820 = vmatpush1.bf16.msra.mxu0 %v2718
    %2821 = vmatprep.subr.bf16.mxu0 %v2723
    %2822 = vmatpush1.bf16.msra.mxu0 %v2722
    %2823 = vmatprep.subr.bf16.mxu0 %v2727
    %2824 = vmatpush1.bf16.msra.mxu0 %v2726
    %2825 = vmatprep.subr.bf16.mxu0 %v2731
    %2826 = vmatpush1.bf16.msra.mxu0 %v2730
    %2827 = vmatprep.subr.bf16.mxu0 %v2735
    %2828 = vmatpush1.bf16.msra.mxu0 %v2734
    %2829 = vmatprep.subr.bf16.mxu0 %v2739
    %2830 = vmatpush1.bf16.msra.mxu0 %v2738
    %2831 = vmatprep.subr.bf16.mxu0 %v2743
    %2832 = vmatpush1.bf16.msra.mxu0 %v2742
    %2833 = vmatprep.subr.bf16.mxu0 0
    %2834 = vmatpush1.bf16.msra.mxu0 0
    %2835 = vmatprep.subr.bf16.mxu0 0
    %2836 = vmatpush1.bf16.msra.mxu0 0
    %2837 = vmatprep.subr.bf16.mxu0 0
    %2838 = vmatpush1.bf16.msra.mxu0 0
    %2839 = vmatprep.subr.bf16.mxu0 0
    %2840 = vmatpush1.bf16.msra.mxu0 0
    %2841 = vmatprep.subr.bf16.mxu0 0
    %2842 = vmatpush1.bf16.msra.mxu0 0
    %2843 = vmatprep.subr.bf16.mxu0 0
    %2844 = vmatpush1.bf16.msra.mxu0 0
    %2845 = vmatprep.subr.bf16.mxu0 0
    %2846 = vmatpush1.bf16.msra.mxu0 0
    %2847 = vmatprep.subr.bf16.mxu0 0
    %2848 = vmatpush1.bf16.msra.mxu0 0
    %2849 = vmatprep.mubr.bf16.mxu0 0
    %2850 = vmatmul.mubr.bf16.gmra.mrb[0].mxu0 %v2583
    %v2851 = vpop.f32.mrb[0].mxu0
    %v2852 = vadd.f32 0.0, %v2851
    %v2853 = vpop.f32.mrb[0].mxu0
    %v2854 = vadd.f32 0.0, %v2853
    %v2855 = vpop.f32.mrb[0].mxu0
    %v2856 = vpop.f32.mrb[0].mxu0
    %2857 = vdwg.mxu0
    %v2858 = vadd.f32 %v2811, %v1826
    %v2859 = vadd.f32 %v2813, %v1828
    %v2860 = vadd.f32 %v2852, %v1867
    %v2861 = vld [vmem:[#allocation11] sm:$0xff]
    %v2862 = vld [vmem:[#allocation11 + $0x8] sm:$0xf]
    %v2863 = vld [vmem:[#allocation11 + $0xc] sm:$0xff]
    %v2864 = vld [vmem:[#allocation11 + $0x14] sm:$0xf]
    %v2865 = vld [vmem:[#allocation11 + $0x18] sm:$0xff]
    %v2866 = vld [vmem:[#allocation11 + $0x20] sm:$0xf]
    %v2867 = vld [vmem:[#allocation11 + $0x24] sm:$0xff]
    %v2868 = vld [vmem:[#allocation11 + $0x2c] sm:$0xf]
    %v2869 = vld [vmem:[#allocation11 + $0x30] sm:$0xff]
    %v2870 = vld [vmem:[#allocation11 + $0x38] sm:$0xf]
    %v2871 = vld [vmem:[#allocation11 + $0x3c] sm:$0xff]
    %v2872 = vld [vmem:[#allocation11 + $0x44] sm:$0xf]
    %v2873 = vld [vmem:[#allocation11 + $0x48] sm:$0xff]
    %v2874 = vld [vmem:[#allocation11 + $0x50] sm:$0xf]
    %v2875 = vld [vmem:[#allocation11 + $0x54] sm:$0xff]
    %v2876 = vld [vmem:[#allocation11 + $0x5c] sm:$0xf]
    %v2877 = vld [vmem:[#allocation11 + $0x60] sm:$0xff]
    %v2878 = vld [vmem:[#allocation11 + $0x68] sm:$0xf]
    %v2879 = vld [vmem:[#allocation11 + $0x6c] sm:$0xff]
    %v2880 = vld [vmem:[#allocation11 + $0x74] sm:$0xf]
    %v2881 = vld [vmem:[#allocation11 + $0x78] sm:$0xff]
    %v2882 = vld [vmem:[#allocation11 + $0x80] sm:$0xf]
    %v2883 = vld [vmem:[#allocation11 + $0x84] sm:$0xff]
    %v2884 = vld [vmem:[#allocation11 + $0x8c] sm:$0xf]
    %v2885 = vld [vmem:[#allocation11 + $0x90] sm:$0xff]
    %v2886 = vld [vmem:[#allocation11 + $0x98] sm:$0xf]
    %v2887 = vld [vmem:[#allocation11 + $0x9c] sm:$0xff]
    %v2888 = vld [vmem:[#allocation11 + $0xa4] sm:$0xf]
    %v2889 = vld [vmem:[#allocation11 + $0xa8] sm:$0xff]
    %v2890 = vld [vmem:[#allocation11 + $0xb0] sm:$0xf]
    %v2891 = vld [vmem:[#allocation11 + $0xb4] sm:$0xff]
    %v2892 = vld [vmem:[#allocation11 + $0xbc] sm:$0xf]
    %v2893 = vld [vmem:[%s9] sm:$0x7]
    %v2895 = vlaneseq
    %v2896 = vshrl.u32 %v2895, 7
    %v2897 = vsub.s32 0, %v2896
    %v2898 = vrot.slane %v2893, %v2897
    %v2899 = vlaneseq
    %v2900 = vshrl.u32 %v2899, 7
    %v2901 = vsub.s32 1, %v2900
    %v2902 = vrot.slane %v2893, %v2901
    %v2903 = vlaneseq
    %v2904 = vshrl.u32 %v2903, 7
    %v2905 = vsub.s32 2, %v2904
    %v2906 = vrot.slane %v2893, %v2905
    %v2942 = vunpack.c.l.b16 %v2861
    %v2943 = vunpack.c.h.b16 %v2861
    %v2944 = vunpack.c.l.b16 %v2862
    %v2945 = vunpack.c.l.b16 %v2863
    %v2946 = vunpack.c.h.b16 %v2863
    %v2947 = vunpack.c.l.b16 %v2864
    %v2948 = vunpack.c.l.b16 %v2865
    %v2949 = vunpack.c.h.b16 %v2865
    %v2950 = vunpack.c.l.b16 %v2866
    %v2951 = vunpack.c.l.b16 %v2867
    %v2952 = vunpack.c.h.b16 %v2867
    %v2953 = vunpack.c.l.b16 %v2868
    %v2954 = vunpack.c.l.b16 %v2869
    %v2955 = vunpack.c.h.b16 %v2869
    %v2956 = vunpack.c.l.b16 %v2870
    %v2957 = vunpack.c.l.b16 %v2871
    %v2958 = vunpack.c.h.b16 %v2871
    %v2959 = vunpack.c.l.b16 %v2872
    %v2960 = vunpack.c.l.b16 %v2873
    %v2961 = vunpack.c.h.b16 %v2873
    %v2962 = vunpack.c.l.b16 %v2874
    %v2963 = vunpack.c.l.b16 %v2875
    %v2964 = vunpack.c.h.b16 %v2875
    %v2965 = vunpack.c.l.b16 %v2876
    %v2966 = vunpack.c.l.b16 %v2877
    %v2967 = vunpack.c.h.b16 %v2877
    %v2968 = vunpack.c.l.b16 %v2878
    %v2969 = vunpack.c.l.b16 %v2879
    %v2970 = vunpack.c.h.b16 %v2879
    %v2971 = vunpack.c.l.b16 %v2880
    %v2972 = vunpack.c.l.b16 %v2881
    %v2973 = vunpack.c.h.b16 %v2881
    %v2974 = vunpack.c.l.b16 %v2882
    %v2975 = vunpack.c.l.b16 %v2883
    %v2976 = vunpack.c.h.b16 %v2883
    %v2977 = vunpack.c.l.b16 %v2884
    %v2978 = vunpack.c.l.b16 %v2885
    %v2979 = vunpack.c.h.b16 %v2885
    %v2980 = vunpack.c.l.b16 %v2886
    %v2981 = vunpack.c.l.b16 %v2887
    %v2982 = vunpack.c.h.b16 %v2887
    %v2983 = vunpack.c.l.b16 %v2888
    %v2984 = vunpack.c.l.b16 %v2889
    %v2985 = vunpack.c.h.b16 %v2889
    %v2986 = vunpack.c.l.b16 %v2890
    %v2987 = vunpack.c.l.b16 %v2891
    %v2988 = vunpack.c.h.b16 %v2891
    %v2989 = vunpack.c.l.b16 %v2892
    %v2990 = vpack.c.b16 %v2945, %v2942
    %v2991 = vpack.c.b16 %v2946, %v2943
    %v2992 = vpack.c.b16 %v2947, %v2944
    %v2993 = vpack.c.b16 %v2951, %v2948
    %v2994 = vpack.c.b16 %v2952, %v2949
    %v2995 = vpack.c.b16 %v2953, %v2950
    %v2996 = vpack.c.b16 %v2957, %v2954
    %v2997 = vpack.c.b16 %v2958, %v2955
    %v2998 = vpack.c.b16 %v2959, %v2956
    %v2999 = vpack.c.b16 %v2963, %v2960
    %v3000 = vpack.c.b16 %v2964, %v2961
    %v3001 = vpack.c.b16 %v2965, %v2962
    %v3002 = vpack.c.b16 %v2969, %v2966
    %v3003 = vpack.c.b16 %v2970, %v2967
    %v3004 = vpack.c.b16 %v2971, %v2968
    %v3005 = vpack.c.b16 %v2975, %v2972
    %v3006 = vpack.c.b16 %v2976, %v2973
    %v3007 = vpack.c.b16 %v2977, %v2974
    %v3008 = vpack.c.b16 %v2981, %v2978
    %v3009 = vpack.c.b16 %v2982, %v2979
    %v3010 = vpack.c.b16 %v2983, %v2980
    %v3011 = vpack.c.b16 %v2987, %v2984
    %v3012 = vpack.c.b16 %v2988, %v2985
    %v3013 = vpack.c.b16 %v2989, %v2986
    %3038 = vmatprep.subr.bf16.mxu0 %v2991
    %3039 = vmatpush1.bf16.msra.mxu0 %v2990
    %3040 = vmatprep.subr.bf16.mxu0 %v2994
    %3041 = vmatpush1.bf16.msra.mxu0 %v2993
    %3042 = vmatprep.subr.bf16.mxu0 %v2997
    %3043 = vmatpush1.bf16.msra.mxu0 %v2996
    %3044 = vmatprep.subr.bf16.mxu0 %v3000
    %3045 = vmatpush1.bf16.msra.mxu0 %v2999
    %3046 = vmatprep.subr.bf16.mxu0 %v3003
    %3047 = vmatpush1.bf16.msra.mxu0 %v3002
    %3048 = vmatprep.subr.bf16.mxu0 %v3006
    %3049 = vmatpush1.bf16.msra.mxu0 %v3005
    %3050 = vmatprep.subr.bf16.mxu0 %v3009
    %3051 = vmatpush1.bf16.msra.mxu0 %v3008
    %3052 = vmatprep.subr.bf16.mxu0 %v3012
    %3053 = vmatpush1.bf16.msra.mxu0 %v3011
    %3054 = vmatprep.subr.bf16.mxu0 0
    %3055 = vmatpush1.bf16.msra.mxu0 0
    %3056 = vmatprep.subr.bf16.mxu0 0
    %3057 = vmatpush1.bf16.msra.mxu0 0
    %3058 = vmatprep.subr.bf16.mxu0 0
    %3059 = vmatpush1.bf16.msra.mxu0 0
    %3060 = vmatprep.subr.bf16.mxu0 0
    %3061 = vmatpush1.bf16.msra.mxu0 0
    %3062 = vmatprep.subr.bf16.mxu0 0
    %3063 = vmatpush1.bf16.msra.mxu0 0
    %3064 = vmatprep.subr.bf16.mxu0 0
    %3065 = vmatpush1.bf16.msra.mxu0 0
    %3066 = vmatprep.subr.bf16.mxu0 0
    %3067 = vmatpush1.bf16.msra.mxu0 0
    %3068 = vmatprep.subr.bf16.mxu0 0
    %3069 = vmatpush1.bf16.msra.mxu0 0
    %3070 = vmatprep.mubr.bf16.mxu0 0
    %3071 = vmatmul.mubr.bf16.gmra.mrb[0].mxu0 %v2438
    %v3072 = vpop.f32.mrb[0].mxu0
    %v3073 = vadd.f32 %v2898, %v3072
    %v3074 = vpop.f32.mrb[0].mxu0
    %v3075 = vadd.f32 %v2902, %v3074
    %v3076 = vpop.f32.mrb[0].mxu0
    %v3077 = vpop.f32.mrb[0].mxu0
    %3078 = vdwg.mxu0
    %3079 = vmatprep.subr.bf16.mxu0 0
    %3080 = vmatpush1.bf16.msra.mxu0 %v2992
    %3081 = vmatprep.subr.bf16.mxu0 0
    %3082 = vmatpush1.bf16.msra.mxu0 %v2995
    %3083 = vmatprep.subr.bf16.mxu0 0
    %3084 = vmatpush1.bf16.msra.mxu0 %v2998
    %3085 = vmatprep.subr.bf16.mxu0 0
    %3086 = vmatpush1.bf16.msra.mxu0 %v3001
    %3087 = vmatprep.subr.bf16.mxu0 0
    %3088 = vmatpush1.bf16.msra.mxu0 %v3004
    %3089 = vmatprep.subr.bf16.mxu0 0
    %3090 = vmatpush1.bf16.msra.mxu0 %v3007
    %3091 = vmatprep.subr.bf16.mxu0 0
    %3092 = vmatpush1.bf16.msra.mxu0 %v3010
    %3093 = vmatprep.subr.bf16.mxu0 0
    %3094 = vmatpush1.bf16.msra.mxu0 %v3013
    %3095 = vmatprep.subr.bf16.mxu0 0
    %3096 = vmatpush1.bf16.msra.mxu0 0
    %3097 = vmatprep.subr.bf16.mxu0 0
    %3098 = vmatpush1.bf16.msra.mxu0 0
    %3099 = vmatprep.subr.bf16.mxu0 0
    %3100 = vmatpush1.bf16.msra.mxu0 0
    %3101 = vmatprep.subr.bf16.mxu0 0
    %3102 = vmatpush1.bf16.msra.mxu0 0
    %3103 = vmatprep.subr.bf16.mxu0 0
    %3104 = vmatpush1.bf16.msra.mxu0 0
    %3105 = vmatprep.subr.bf16.mxu0 0
    %3106 = vmatpush1.bf16.msra.mxu0 0
    %3107 = vmatprep.subr.bf16.mxu0 0
    %3108 = vmatpush1.bf16.msra.mxu0 0
    %3109 = vmatprep.subr.bf16.mxu0 0
    %3110 = vmatpush1.bf16.msra.mxu0 0
    %3111 = vmatprep.mubr.bf16.mxu0 0
    %3112 = vmatmul.mubr.bf16.gmra.mrb[0].mxu0 %v2438
    %v3113 = vpop.f32.mrb[0].mxu0
    %v3114 = vadd.f32 %v2906, %v3113
    %v3115 = vpop.f32.mrb[0].mxu0
    %v3116 = vpop.f32.mrb[0].mxu0
    %v3117 = vpop.f32.mrb[0].mxu0
    %3118 = vdwg.mxu0
    %v3119 = vadd.f32 %v2858, %v3073
    %v3120 = vadd.f32 %v2859, %v3075
    %v3121 = vxor.u32 %v3119, 2147483648
    %v3122 = vxor.u32 %v3120, 2147483648
    %v3123 = vmul.f32 %v3121, 1.442695
    %v3124 = vpow.pop %v3123
    %v3125 = vmul.f32 %v3122, 1.442695
    %v3126 = vpow.pop %v3125
    %v3127 = vadd.f32 %v3124, 1.0
    %v3128 = vadd.f32 %v3126, 1.0
    %v3129 = vrcp.pop %v3127
    %v3130 = vmul.f32 1.0, %v3129
    %v3131 = vrcp.pop %v3128
    %v3132 = vmul.f32 1.0, %v3131
    %v3133 = vmul.f32 %v3130, %v3114
    %v3134 = vadd.f32 %v2860, %v3133
    %v3135 = vtanh.pop %v3134
    %v3136 = vsub.f32 1.0, %v3132
    %v3137 = vmul.f32 %v3136, %v3135
    %v3138 = vmul.f32 %v3132, %v2437
    %v3139 = vadd.f32 %v3137, %v3138
    %v3140 = vpack.c.bf16 %v3139, %v3139
    %v3141 = vld [vmem:[%s12] sm:$0xf]
    %v3142 = vld [vmem:[%s12 + $0x4] sm:$0xf]
    %v3143 = vld [vmem:[%s12 + $0x8] sm:$0xf]
    %v3144 = vld [vmem:[%s12 + $0xc] sm:$0xf]
    %v3145 = vld [vmem:[%s12 + $0x10] sm:$0xf]
    %v3146 = vld [vmem:[%s12 + $0x14] sm:$0xf]
    %v3147 = vld [vmem:[%s12 + $0x18] sm:$0xf]
    %v3148 = vld [vmem:[%s12 + $0x1c] sm:$0xf]
    %v3149 = vld [vmem:[%s12 + $0x20] sm:$0xf]
    %v3150 = vld [vmem:[%s12 + $0x24] sm:$0xf]
    %v3151 = vld [vmem:[%s12 + $0x28] sm:$0xf]
    %v3152 = vld [vmem:[%s12 + $0x2c] sm:$0xf]
    %v3153 = vld [vmem:[%s12 + $0x30] sm:$0xf]
    %v3154 = vld [vmem:[%s12 + $0x34] sm:$0xf]
    %v3155 = vld [vmem:[%s12 + $0x38] sm:$0xf]
    %v3156 = vld [vmem:[%s12 + $0x3c] sm:$0xf]
    %v3173 = vunpack.c.l.b16 %v3141
    %v3174 = vunpack.c.l.b16 %v3142
    %v3175 = vunpack.c.l.b16 %v3143
    %v3176 = vunpack.c.l.b16 %v3144
    %v3177 = vunpack.c.l.b16 %v3145
    %v3178 = vunpack.c.l.b16 %v3146
    %v3179 = vunpack.c.l.b16 %v3147
    %v3180 = vunpack.c.l.b16 %v3148
    %v3181 = vunpack.c.l.b16 %v3149
    %v3182 = vunpack.c.l.b16 %v3150
    %v3183 = vunpack.c.l.b16 %v3151
    %v3184 = vunpack.c.l.b16 %v3152
    %v3185 = vunpack.c.l.b16 %v3153
    %v3186 = vunpack.c.l.b16 %v3154
    %v3187 = vunpack.c.l.b16 %v3155
    %v3188 = vunpack.c.l.b16 %v3156
    %v3189 = vpack.c.b16 %v3174, %v3173
    %v3190 = vpack.c.b16 %v3176, %v3175
    %v3191 = vpack.c.b16 %v3178, %v3177
    %v3192 = vpack.c.b16 %v3180, %v3179
    %v3193 = vpack.c.b16 %v3182, %v3181
    %v3194 = vpack.c.b16 %v3184, %v3183
    %v3195 = vpack.c.b16 %v3186, %v3185
    %v3196 = vpack.c.b16 %v3188, %v3187
    %3205 = vmatprep.subr.bf16.mxu0 0
    %3206 = vmatpush1.bf16.msra.mxu0 %v3189
    %3207 = vmatprep.subr.bf16.mxu0 0
    %3208 = vmatpush1.bf16.msra.mxu0 %v3190
    %3209 = vmatprep.subr.bf16.mxu0 0
    %3210 = vmatpush1.bf16.msra.mxu0 %v3191
    %3211 = vmatprep.subr.bf16.mxu0 0
    %3212 = vmatpush1.bf16.msra.mxu0 %v3192
    %3213 = vmatprep.subr.bf16.mxu0 0
    %3214 = vmatpush1.bf16.msra.mxu0 %v3193
    %3215 = vmatprep.subr.bf16.mxu0 0
    %3216 = vmatpush1.bf16.msra.mxu0 %v3194
    %3217 = vmatprep.subr.bf16.mxu0 0
    %3218 = vmatpush1.bf16.msra.mxu0 %v3195
    %3219 = vmatprep.subr.bf16.mxu0 0
    %3220 = vmatpush1.bf16.msra.mxu0 %v3196
    %3221 = vmatprep.subr.bf16.mxu0 0
    %3222 = vmatpush1.bf16.msra.mxu0 0
    %3223 = vmatprep.subr.bf16.mxu0 0
    %3224 = vmatpush1.bf16.msra.mxu0 0
    %3225 = vmatprep.subr.bf16.mxu0 0
    %3226 = vmatpush1.bf16.msra.mxu0 0
    %3227 = vmatprep.subr.bf16.mxu0 0
    %3228 = vmatpush1.bf16.msra.mxu0 0
    %3229 = vmatprep.subr.bf16.mxu0 0
    %3230 = vmatpush1.bf16.msra.mxu0 0
    %3231 = vmatprep.subr.bf16.mxu0 0
    %3232 = vmatpush1.bf16.msra.mxu0 0
    %3233 = vmatprep.subr.bf16.mxu0 0
    %3234 = vmatpush1.bf16.msra.mxu0 0
    %3235 = vmatprep.subr.bf16.mxu0 0
    %3236 = vmatpush1.bf16.msra.mxu0 0
    %3237 = vmatprep.mubr.bf16.mxu0 0
    %3238 = vmatmul.mubr.bf16.gmra.mrb[0].mxu0 %v3140
    %v3239 = vpop.f32.mrb[0].mxu0
    %v3240 = vadd.f32 0.0, %v3239
    %v3241 = vpop.f32.mrb[0].mxu0
    %v3242 = vpop.f32.mrb[0].mxu0
    %v3243 = vpop.f32.mrb[0].mxu0
    %3244 = vdwg.mxu0
    %v3245 = vadd.f32 %v2854, %v3240
    %v3246 = vadd.f32 %v3245, %v1869
    %s3247 = scalar_lea.vmem [#allocation14], 16
    %3248 = vst [vmem:[%s3247] sm:$0xff] %v3246
    %s3249 = sld [smem:[#allocation3 + $0x2]]
    %p3250 = scmp.ne.s32.totalorder %s3249, 0
    // Predicated region
    $region86: #{seq2seq_forward.1} parent=1 // pred_check
      %p3251 = pneg %p3250
    $region87: #{seq2seq_forward.1} parent=1 // pred_check_branch
      %3253 = sbr.rel (%p3251) target = $region89
    $region88: #{seq2seq_forward.1} parent=1 // pred_region
      %s3254 = scalar_lea.vmem %s2, 16
      %v3255 = vld [vmem:[%s3254] sm:$0xff]
    $region89: #{seq2seq_forward.1} parent=1 // pred_fallthru
      %v3256 = vphi 0, %v3255
    %p3257 = pneg %p3250
    // Predicated region
    $region90: #{seq2seq_forward.1} parent=1 // pred_check
      _
    $region91: #{seq2seq_forward.1} parent=1 // pred_check_branch
      %3259 = sbr.rel (%p3250) target = $region93
    $region92: #{seq2seq_forward.1} parent=1 // pred_region
      %3260 = vmax.xlane.f32.xlu0 %v3246
      %v3261 = vpop.xlane.xlu0 %3260
      %vm3262 = vcmp.eq.f32.partialorder %v3246, %v3261
      %v3263 = vsel %vm3262, %v128, 128
      %v3264 = vand.u32 %v3263, 65535
      %v3265 = vshra.s32 %v3263, 16
      %v3266 = vcvt.s32.f32 %v3264
      %v3267 = vcvt.s32.f32 %v3265
      %3268 = vmin.xlane.f32.xlu0 %v3267
      %v3269 = vpop.xlane.xlu0 %3268
      %vm3270 = vcmp.eq.f32.partialorder %v3267, %v3269
      %v3271 = vsel %vm3270, %v3266, inf
      %3272 = vmin.xlane.f32.xlu0 %v3271
      %v3273 = vpop.xlane.xlu0 %3272
      %v3274 = vcvt.f32.s32 %v3273
      %v3275 = vcvt.f32.s32 %v3269
      %v3276 = vshll.u32 %v3275, 16
      %v3277 = vadd.s32 %v3276, %v3274
    $region93: #{seq2seq_forward.1} parent=1 // pred_fallthru
      %v3278 = vphi %v3256, %v3277
    %3279 = vset.pattern.permute.xlu0 0
    %3280 = vperm.xlu0 %3279, %v3278
    %v3281 = vpop.permute.xlu0 %3280
    %vm3282 = vcmp.eq.s32.totalorder %v3281, %v128
    %v3283 = vsel %vm3282, 1, 0
    %v3284 = vcvt.s32.f32 %v3283
    %v3285 = vpack.c.bf16 %v3284, %v3284
    %v3286 = vld [vmem:[#allocation10] sm:$0xff]
    %v3287 = vld [vmem:[#allocation10 + $0x8] sm:$0xff]
    %v3288 = vld [vmem:[#allocation10 + $0x10] sm:$0xff]
    %v3289 = vld [vmem:[#allocation10 + $0x18] sm:$0xff]
    %v3290 = vld [vmem:[#allocation10 + $0x20] sm:$0xff]
    %v3291 = vld [vmem:[#allocation10 + $0x28] sm:$0xff]
    %v3292 = vld [vmem:[#allocation10 + $0x30] sm:$0xff]
    %v3293 = vld [vmem:[#allocation10 + $0x38] sm:$0xff]
    %v3294 = vld [vmem:[#allocation10 + $0x40] sm:$0xff]
    %v3295 = vld [vmem:[#allocation10 + $0x48] sm:$0xff]
    %v3296 = vld [vmem:[#allocation10 + $0x50] sm:$0xff]
    %v3297 = vld [vmem:[#allocation10 + $0x58] sm:$0xff]
    %v3298 = vld [vmem:[#allocation10 + $0x60] sm:$0xff]
    %v3299 = vld [vmem:[#allocation10 + $0x68] sm:$0xff]
    %v3300 = vld [vmem:[#allocation10 + $0x70] sm:$0xff]
    %v3301 = vld [vmem:[#allocation10 + $0x78] sm:$0xff]
    %v3302 = vld [vmem:[#allocation10 + $0x80] sm:$0xff]
    %v3303 = vld [vmem:[#allocation10 + $0x88] sm:$0xff]
    %v3304 = vld [vmem:[#allocation10 + $0x90] sm:$0xff]
    %v3305 = vld [vmem:[#allocation10 + $0x98] sm:$0xff]
    %v3306 = vld [vmem:[#allocation10 + $0xa0] sm:$0xff]
    %v3307 = vld [vmem:[#allocation10 + $0xa8] sm:$0xff]
    %v3308 = vld [vmem:[#allocation10 + $0xb0] sm:$0xff]
    %v3309 = vld [vmem:[#allocation10 + $0xb8] sm:$0xff]
    %v3310 = vld [vmem:[#allocation10 + $0xc0] sm:$0xff]
    %v3311 = vld [vmem:[#allocation10 + $0xc8] sm:$0xff]
    %v3312 = vld [vmem:[#allocation10 + $0xd0] sm:$0xff]
    %v3313 = vld [vmem:[#allocation10 + $0xd8] sm:$0xff]
    %v3314 = vld [vmem:[#allocation10 + $0xe0] sm:$0xff]
    %v3315 = vld [vmem:[#allocation10 + $0xe8] sm:$0xff]
    %v3316 = vld [vmem:[#allocation10 + $0xf0] sm:$0xff]
    %v3317 = vld [vmem:[#allocation10 + $0xf8] sm:$0xff]
    %v3350 = vunpack.c.l.b16 %v3286
    %v3351 = vunpack.c.h.b16 %v3286
    %v3352 = vunpack.c.l.b16 %v3287
    %v3353 = vunpack.c.h.b16 %v3287
    %v3354 = vunpack.c.l.b16 %v3288
    %v3355 = vunpack.c.h.b16 %v3288
    %v3356 = vunpack.c.l.b16 %v3289
    %v3357 = vunpack.c.h.b16 %v3289
    %v3358 = vunpack.c.l.b16 %v3290
    %v3359 = vunpack.c.h.b16 %v3290
    %v3360 = vunpack.c.l.b16 %v3291
    %v3361 = vunpack.c.h.b16 %v3291
    %v3362 = vunpack.c.l.b16 %v3292
    %v3363 = vunpack.c.h.b16 %v3292
    %v3364 = vunpack.c.l.b16 %v3293
    %v3365 = vunpack.c.h.b16 %v3293
    %v3366 = vunpack.c.l.b16 %v3294
    %v3367 = vunpack.c.h.b16 %v3294
    %v3368 = vunpack.c.l.b16 %v3295
    %v3369 = vunpack.c.h.b16 %v3295
    %v3370 = vunpack.c.l.b16 %v3296
    %v3371 = vunpack.c.h.b16 %v3296
    %v3372 = vunpack.c.l.b16 %v3297
    %v3373 = vunpack.c.h.b16 %v3297
    %v3374 = vunpack.c.l.b16 %v3298
    %v3375 = vunpack.c.h.b16 %v3298
    %v3376 = vunpack.c.l.b16 %v3299
    %v3377 = vunpack.c.h.b16 %v3299
    %v3378 = vunpack.c.l.b16 %v3300
    %v3379 = vunpack.c.h.b16 %v3300
    %v3380 = vunpack.c.l.b16 %v3301
    %v3381 = vunpack.c.h.b16 %v3301
    %v3382 = vunpack.c.l.b16 %v3302
    %v3383 = vunpack.c.h.b16 %v3302
    %v3384 = vunpack.c.l.b16 %v3303
    %v3385 = vunpack.c.h.b16 %v3303
    %v3386 = vunpack.c.l.b16 %v3304
    %v3387 = vunpack.c.h.b16 %v3304
    %v3388 = vunpack.c.l.b16 %v3305
    %v3389 = vunpack.c.h.b16 %v3305
    %v3390 = vunpack.c.l.b16 %v3306
    %v3391 = vunpack.c.h.b16 %v3306
    %v3392 = vunpack.c.l.b16 %v3307
    %v3393 = vunpack.c.h.b16 %v3307
    %v3394 = vunpack.c.l.b16 %v3308
    %v3395 = vunpack.c.h.b16 %v3308
    %v3396 = vunpack.c.l.b16 %v3309
    %v3397 = vunpack.c.h.b16 %v3309
    %v3398 = vunpack.c.l.b16 %v3310
    %v3399 = vunpack.c.h.b16 %v3310
    %v3400 = vunpack.c.l.b16 %v3311
    %v3401 = vunpack.c.h.b16 %v3311
    %v3402 = vunpack.c.l.b16 %v3312
    %v3403 = vunpack.c.h.b16 %v3312
    %v3404 = vunpack.c.l.b16 %v3313
    %v3405 = vunpack.c.h.b16 %v3313
    %v3406 = vunpack.c.l.b16 %v3314
    %v3407 = vunpack.c.h.b16 %v3314
    %v3408 = vunpack.c.l.b16 %v3315
    %v3409 = vunpack.c.h.b16 %v3315
    %v3410 = vunpack.c.l.b16 %v3316
    %v3411 = vunpack.c.h.b16 %v3316
    %v3412 = vunpack.c.l.b16 %v3317
    %v3413 = vunpack.c.h.b16 %v3317
    %v3414 = vpack.c.b16 %v3354, %v3350
    %v3415 = vpack.c.b16 %v3355, %v3351
    %v3416 = vpack.c.b16 %v3356, %v3352
    %v3417 = vpack.c.b16 %v3357, %v3353
    %v3418 = vpack.c.b16 %v3362, %v3358
    %v3419 = vpack.c.b16 %v3363, %v3359
    %v3420 = vpack.c.b16 %v3364, %v3360
    %v3421 = vpack.c.b16 %v3365, %v3361
    %v3422 = vpack.c.b16 %v3370, %v3366
    %v3423 = vpack.c.b16 %v3371, %v3367
    %v3424 = vpack.c.b16 %v3372, %v3368
    %v3425 = vpack.c.b16 %v3373, %v3369
    %v3426 = vpack.c.b16 %v3378, %v3374
    %v3427 = vpack.c.b16 %v3379, %v3375
    %v3428 = vpack.c.b16 %v3380, %v3376
    %v3429 = vpack.c.b16 %v3381, %v3377
    %v3430 = vpack.c.b16 %v3386, %v3382
    %v3431 = vpack.c.b16 %v3387, %v3383
    %v3432 = vpack.c.b16 %v3388, %v3384
    %v3433 = vpack.c.b16 %v3389, %v3385
    %v3434 = vpack.c.b16 %v3394, %v3390
    %v3435 = vpack.c.b16 %v3395, %v3391
    %v3436 = vpack.c.b16 %v3396, %v3392
    %v3437 = vpack.c.b16 %v3397, %v3393
    %v3438 = vpack.c.b16 %v3402, %v3398
    %v3439 = vpack.c.b16 %v3403, %v3399
    %v3440 = vpack.c.b16 %v3404, %v3400
    %v3441 = vpack.c.b16 %v3405, %v3401
    %v3442 = vpack.c.b16 %v3410, %v3406
    %v3443 = vpack.c.b16 %v3411, %v3407
    %v3444 = vpack.c.b16 %v3412, %v3408
    %v3445 = vpack.c.b16 %v3413, %v3409
    %3478 = vmatprep.subr.bf16.mxu0 %v3415
    %3479 = vmatpush1.bf16.msra.mxu0 %v3414
    %3480 = vmatprep.subr.bf16.mxu0 %v3419
    %3481 = vmatpush1.bf16.msra.mxu0 %v3418
    %3482 = vmatprep.subr.bf16.mxu0 %v3423
    %3483 = vmatpush1.bf16.msra.mxu0 %v3422
    %3484 = vmatprep.subr.bf16.mxu0 %v3427
    %3485 = vmatpush1.bf16.msra.mxu0 %v3426
    %3486 = vmatprep.subr.bf16.mxu0 %v3431
    %3487 = vmatpush1.bf16.msra.mxu0 %v3430
    %3488 = vmatprep.subr.bf16.mxu0 %v3435
    %3489 = vmatpush1.bf16.msra.mxu0 %v3434
    %3490 = vmatprep.subr.bf16.mxu0 %v3439
    %3491 = vmatpush1.bf16.msra.mxu0 %v3438
    %3492 = vmatprep.subr.bf16.mxu0 %v3443
    %3493 = vmatpush1.bf16.msra.mxu0 %v3442
    %3494 = vmatprep.subr.bf16.mxu0 0
    %3495 = vmatpush1.bf16.msra.mxu0 0
    %3496 = vmatprep.subr.bf16.mxu0 0
    %3497 = vmatpush1.bf16.msra.mxu0 0
    %3498 = vmatprep.subr.bf16.mxu0 0
    %3499 = vmatpush1.bf16.msra.mxu0 0
    %3500 = vmatprep.subr.bf16.mxu0 0
    %3501 = vmatpush1.bf16.msra.mxu0 0
    %3502 = vmatprep.subr.bf16.mxu0 0
    %3503 = vmatpush1.bf16.msra.mxu0 0
    %3504 = vmatprep.subr.bf16.mxu0 0
    %3505 = vmatpush1.bf16.msra.mxu0 0
    %3506 = vmatprep.subr.bf16.mxu0 0
    %3507 = vmatpush1.bf16.msra.mxu0 0
    %3508 = vmatprep.subr.bf16.mxu0 0
    %3509 = vmatpush1.bf16.msra.mxu0 0
    %3510 = vmatprep.mubr.bf16.mxu0 0
    %3511 = vmatmul.mubr.bf16.gmra.mrb[0].mxu0 %v3285
    %v3512 = vpop.f32.mrb[0].mxu0
    %v3513 = vadd.f32 0.0, %v3512
    %v3514 = vpop.f32.mrb[0].mxu0
    %v3515 = vadd.f32 0.0, %v3514
    %v3516 = vpop.f32.mrb[0].mxu0
    %v3517 = vpop.f32.mrb[0].mxu0
    %3518 = vdwg.mxu0
    %3519 = vmatprep.subr.bf16.mxu0 %v3417
    %3520 = vmatpush1.bf16.msra.mxu0 %v3416
    %3521 = vmatprep.subr.bf16.mxu0 %v3421
    %3522 = vmatpush1.bf16.msra.mxu0 %v3420
    %3523 = vmatprep.subr.bf16.mxu0 %v3425
    %3524 = vmatpush1.bf16.msra.mxu0 %v3424
    %3525 = vmatprep.subr.bf16.mxu0 %v3429
    %3526 = vmatpush1.bf16.msra.mxu0 %v3428
    %3527 = vmatprep.subr.bf16.mxu0 %v3433
    %3528 = vmatpush1.bf16.msra.mxu0 %v3432
    %3529 = vmatprep.subr.bf16.mxu0 %v3437
    %3530 = vmatpush1.bf16.msra.mxu0 %v3436
    %3531 = vmatprep.subr.bf16.mxu0 %v3441
    %3532 = vmatpush1.bf16.msra.mxu0 %v3440
    %3533 = vmatprep.subr.bf16.mxu0 %v3445
    %3534 = vmatpush1.bf16.msra.mxu0 %v3444
    %3535 = vmatprep.subr.bf16.mxu0 0
    %3536 = vmatpush1.bf16.msra.mxu0 0
    %3537 = vmatprep.subr.bf16.mxu0 0
    %3538 = vmatpush1.bf16.msra.mxu0 0
    %3539 = vmatprep.subr.bf16.mxu0 0
    %3540 = vmatpush1.bf16.msra.mxu0 0
    %3541 = vmatprep.subr.bf16.mxu0 0
    %3542 = vmatpush1.bf16.msra.mxu0 0
    %3543 = vmatprep.subr.bf16.mxu0 0
    %3544 = vmatpush1.bf16.msra.mxu0 0
    %3545 = vmatprep.subr.bf16.mxu0 0
    %3546 = vmatpush1.bf16.msra.mxu0 0
    %3547 = vmatprep.subr.bf16.mxu0 0
    %3548 = vmatpush1.bf16.msra.mxu0 0
    %3549 = vmatprep.subr.bf16.mxu0 0
    %3550 = vmatpush1.bf16.msra.mxu0 0
    %3551 = vmatprep.mubr.bf16.mxu0 0
    %3552 = vmatmul.mubr.bf16.gmra.mrb[0].mxu0 %v3285
    %v3553 = vpop.f32.mrb[0].mxu0
    %v3554 = vadd.f32 0.0, %v3553
    %v3555 = vpop.f32.mrb[0].mxu0
    %v3556 = vadd.f32 0.0, %v3555
    %v3557 = vpop.f32.mrb[0].mxu0
    %v3558 = vpop.f32.mrb[0].mxu0
    %3559 = vdwg.mxu0
    %v3560 = vadd.f32 %v3513, %v1826
    %v3561 = vadd.f32 %v3515, %v1828
    %v3562 = vadd.f32 %v3554, %v1867
    %v3563 = vld [vmem:[#allocation11] sm:$0xff]
    %v3564 = vld [vmem:[#allocation11 + $0x8] sm:$0xf]
    %v3565 = vld [vmem:[#allocation11 + $0xc] sm:$0xff]
    %v3566 = vld [vmem:[#allocation11 + $0x14] sm:$0xf]
    %v3567 = vld [vmem:[#allocation11 + $0x18] sm:$0xff]
    %v3568 = vld [vmem:[#allocation11 + $0x20] sm:$0xf]
    %v3569 = vld [vmem:[#allocation11 + $0x24] sm:$0xff]
    %v3570 = vld [vmem:[#allocation11 + $0x2c] sm:$0xf]
    %v3571 = vld [vmem:[#allocation11 + $0x30] sm:$0xff]
    %v3572 = vld [vmem:[#allocation11 + $0x38] sm:$0xf]
    %v3573 = vld [vmem:[#allocation11 + $0x3c] sm:$0xff]
    %v3574 = vld [vmem:[#allocation11 + $0x44] sm:$0xf]
    %v3575 = vld [vmem:[#allocation11 + $0x48] sm:$0xff]
    %v3576 = vld [vmem:[#allocation11 + $0x50] sm:$0xf]
    %v3577 = vld [vmem:[#allocation11 + $0x54] sm:$0xff]
    %v3578 = vld [vmem:[#allocation11 + $0x5c] sm:$0xf]
    %v3579 = vld [vmem:[#allocation11 + $0x60] sm:$0xff]
    %v3580 = vld [vmem:[#allocation11 + $0x68] sm:$0xf]
    %v3581 = vld [vmem:[#allocation11 + $0x6c] sm:$0xff]
    %v3582 = vld [vmem:[#allocation11 + $0x74] sm:$0xf]
    %v3583 = vld [vmem:[#allocation11 + $0x78] sm:$0xff]
    %v3584 = vld [vmem:[#allocation11 + $0x80] sm:$0xf]
    %v3585 = vld [vmem:[#allocation11 + $0x84] sm:$0xff]
    %v3586 = vld [vmem:[#allocation11 + $0x8c] sm:$0xf]
    %v3587 = vld [vmem:[#allocation11 + $0x90] sm:$0xff]
    %v3588 = vld [vmem:[#allocation11 + $0x98] sm:$0xf]
    %v3589 = vld [vmem:[#allocation11 + $0x9c] sm:$0xff]
    %v3590 = vld [vmem:[#allocation11 + $0xa4] sm:$0xf]
    %v3591 = vld [vmem:[#allocation11 + $0xa8] sm:$0xff]
    %v3592 = vld [vmem:[#allocation11 + $0xb0] sm:$0xf]
    %v3593 = vld [vmem:[#allocation11 + $0xb4] sm:$0xff]
    %v3594 = vld [vmem:[#allocation11 + $0xbc] sm:$0xf]
    %v3595 = vld [vmem:[%s9] sm:$0x7]
    %v3597 = vlaneseq
    %v3598 = vshrl.u32 %v3597, 7
    %v3599 = vsub.s32 0, %v3598
    %v3600 = vrot.slane %v3595, %v3599
    %v3601 = vlaneseq
    %v3602 = vshrl.u32 %v3601, 7
    %v3603 = vsub.s32 1, %v3602
    %v3604 = vrot.slane %v3595, %v3603
    %v3605 = vlaneseq
    %v3606 = vshrl.u32 %v3605, 7
    %v3607 = vsub.s32 2, %v3606
    %v3608 = vrot.slane %v3595, %v3607
    %v3644 = vunpack.c.l.b16 %v3563
    %v3645 = vunpack.c.h.b16 %v3563
    %v3646 = vunpack.c.l.b16 %v3564
    %v3647 = vunpack.c.l.b16 %v3565
    %v3648 = vunpack.c.h.b16 %v3565
    %v3649 = vunpack.c.l.b16 %v3566
    %v3650 = vunpack.c.l.b16 %v3567
    %v3651 = vunpack.c.h.b16 %v3567
    %v3652 = vunpack.c.l.b16 %v3568
    %v3653 = vunpack.c.l.b16 %v3569
    %v3654 = vunpack.c.h.b16 %v3569
    %v3655 = vunpack.c.l.b16 %v3570
    %v3656 = vunpack.c.l.b16 %v3571
    %v3657 = vunpack.c.h.b16 %v3571
    %v3658 = vunpack.c.l.b16 %v3572
    %v3659 = vunpack.c.l.b16 %v3573
    %v3660 = vunpack.c.h.b16 %v3573
    %v3661 = vunpack.c.l.b16 %v3574
    %v3662 = vunpack.c.l.b16 %v3575
    %v3663 = vunpack.c.h.b16 %v3575
    %v3664 = vunpack.c.l.b16 %v3576
    %v3665 = vunpack.c.l.b16 %v3577
    %v3666 = vunpack.c.h.b16 %v3577
    %v3667 = vunpack.c.l.b16 %v3578
    %v3668 = vunpack.c.l.b16 %v3579
    %v3669 = vunpack.c.h.b16 %v3579
    %v3670 = vunpack.c.l.b16 %v3580
    %v3671 = vunpack.c.l.b16 %v3581
    %v3672 = vunpack.c.h.b16 %v3581
    %v3673 = vunpack.c.l.b16 %v3582
    %v3674 = vunpack.c.l.b16 %v3583
    %v3675 = vunpack.c.h.b16 %v3583
    %v3676 = vunpack.c.l.b16 %v3584
    %v3677 = vunpack.c.l.b16 %v3585
    %v3678 = vunpack.c.h.b16 %v3585
    %v3679 = vunpack.c.l.b16 %v3586
    %v3680 = vunpack.c.l.b16 %v3587
    %v3681 = vunpack.c.h.b16 %v3587
    %v3682 = vunpack.c.l.b16 %v3588
    %v3683 = vunpack.c.l.b16 %v3589
    %v3684 = vunpack.c.h.b16 %v3589
    %v3685 = vunpack.c.l.b16 %v3590
    %v3686 = vunpack.c.l.b16 %v3591
    %v3687 = vunpack.c.h.b16 %v3591
    %v3688 = vunpack.c.l.b16 %v3592
    %v3689 = vunpack.c.l.b16 %v3593
    %v3690 = vunpack.c.h.b16 %v3593
    %v3691 = vunpack.c.l.b16 %v3594
    %v3692 = vpack.c.b16 %v3647, %v3644
    %v3693 = vpack.c.b16 %v3648, %v3645
    %v3694 = vpack.c.b16 %v3649, %v3646
    %v3695 = vpack.c.b16 %v3653, %v3650
    %v3696 = vpack.c.b16 %v3654, %v3651
    %v3697 = vpack.c.b16 %v3655, %v3652
    %v3698 = vpack.c.b16 %v3659, %v3656
    %v3699 = vpack.c.b16 %v3660, %v3657
    %v3700 = vpack.c.b16 %v3661, %v3658
    %v3701 = vpack.c.b16 %v3665, %v3662
    %v3702 = vpack.c.b16 %v3666, %v3663
    %v3703 = vpack.c.b16 %v3667, %v3664
    %v3704 = vpack.c.b16 %v3671, %v3668
    %v3705 = vpack.c.b16 %v3672, %v3669
    %v3706 = vpack.c.b16 %v3673, %v3670
    %v3707 = vpack.c.b16 %v3677, %v3674
    %v3708 = vpack.c.b16 %v3678, %v3675
    %v3709 = vpack.c.b16 %v3679, %v3676
    %v3710 = vpack.c.b16 %v3683, %v3680
    %v3711 = vpack.c.b16 %v3684, %v3681
    %v3712 = vpack.c.b16 %v3685, %v3682
    %v3713 = vpack.c.b16 %v3689, %v3686
    %v3714 = vpack.c.b16 %v3690, %v3687
    %v3715 = vpack.c.b16 %v3691, %v3688
    %3740 = vmatprep.subr.bf16.mxu0 %v3693
    %3741 = vmatpush1.bf16.msra.mxu0 %v3692
    %3742 = vmatprep.subr.bf16.mxu0 %v3696
    %3743 = vmatpush1.bf16.msra.mxu0 %v3695
    %3744 = vmatprep.subr.bf16.mxu0 %v3699
    %3745 = vmatpush1.bf16.msra.mxu0 %v3698
    %3746 = vmatprep.subr.bf16.mxu0 %v3702
    %3747 = vmatpush1.bf16.msra.mxu0 %v3701
    %3748 = vmatprep.subr.bf16.mxu0 %v3705
    %3749 = vmatpush1.bf16.msra.mxu0 %v3704
    %3750 = vmatprep.subr.bf16.mxu0 %v3708
    %3751 = vmatpush1.bf16.msra.mxu0 %v3707
    %3752 = vmatprep.subr.bf16.mxu0 %v3711
    %3753 = vmatpush1.bf16.msra.mxu0 %v3710
    %3754 = vmatprep.subr.bf16.mxu0 %v3714
    %3755 = vmatpush1.bf16.msra.mxu0 %v3713
    %3756 = vmatprep.subr.bf16.mxu0 0
    %3757 = vmatpush1.bf16.msra.mxu0 0
    %3758 = vmatprep.subr.bf16.mxu0 0
    %3759 = vmatpush1.bf16.msra.mxu0 0
    %3760 = vmatprep.subr.bf16.mxu0 0
    %3761 = vmatpush1.bf16.msra.mxu0 0
    %3762 = vmatprep.subr.bf16.mxu0 0
    %3763 = vmatpush1.bf16.msra.mxu0 0
    %3764 = vmatprep.subr.bf16.mxu0 0
    %3765 = vmatpush1.bf16.msra.mxu0 0
    %3766 = vmatprep.subr.bf16.mxu0 0
    %3767 = vmatpush1.bf16.msra.mxu0 0
    %3768 = vmatprep.subr.bf16.mxu0 0
    %3769 = vmatpush1.bf16.msra.mxu0 0
    %3770 = vmatprep.subr.bf16.mxu0 0
    %3771 = vmatpush1.bf16.msra.mxu0 0
    %3772 = vmatprep.mubr.bf16.mxu0 0
    %3773 = vmatmul.mubr.bf16.gmra.mrb[0].mxu0 %v3140
    %v3774 = vpop.f32.mrb[0].mxu0
    %v3775 = vadd.f32 %v3600, %v3774
    %v3776 = vpop.f32.mrb[0].mxu0
    %v3777 = vadd.f32 %v3604, %v3776
    %v3778 = vpop.f32.mrb[0].mxu0
    %v3779 = vpop.f32.mrb[0].mxu0
    %3780 = vdwg.mxu0
    %3781 = vmatprep.subr.bf16.mxu0 0
    %3782 = vmatpush1.bf16.msra.mxu0 %v3694
    %3783 = vmatprep.subr.bf16.mxu0 0
    %3784 = vmatpush1.bf16.msra.mxu0 %v3697
    %3785 = vmatprep.subr.bf16.mxu0 0
    %3786 = vmatpush1.bf16.msra.mxu0 %v3700
    %3787 = vmatprep.subr.bf16.mxu0 0
    %3788 = vmatpush1.bf16.msra.mxu0 %v3703
    %3789 = vmatprep.subr.bf16.mxu0 0
    %3790 = vmatpush1.bf16.msra.mxu0 %v3706
    %3791 = vmatprep.subr.bf16.mxu0 0
    %3792 = vmatpush1.bf16.msra.mxu0 %v3709
    %3793 = vmatprep.subr.bf16.mxu0 0
    %3794 = vmatpush1.bf16.msra.mxu0 %v3712
    %3795 = vmatprep.subr.bf16.mxu0 0
    %3796 = vmatpush1.bf16.msra.mxu0 %v3715
    %3797 = vmatprep.subr.bf16.mxu0 0
    %3798 = vmatpush1.bf16.msra.mxu0 0
    %3799 = vmatprep.subr.bf16.mxu0 0
    %3800 = vmatpush1.bf16.msra.mxu0 0
    %3801 = vmatprep.subr.bf16.mxu0 0
    %3802 = vmatpush1.bf16.msra.mxu0 0
    %3803 = vmatprep.subr.bf16.mxu0 0
    %3804 = vmatpush1.bf16.msra.mxu0 0
    %3805 = vmatprep.subr.bf16.mxu0 0
    %3806 = vmatpush1.bf16.msra.mxu0 0
    %3807 = vmatprep.subr.bf16.mxu0 0
    %3808 = vmatpush1.bf16.msra.mxu0 0
    %3809 = vmatprep.subr.bf16.mxu0 0
    %3810 = vmatpush1.bf16.msra.mxu0 0
    %3811 = vmatprep.subr.bf16.mxu0 0
    %3812 = vmatpush1.bf16.msra.mxu0 0
    %3813 = vmatprep.mubr.bf16.mxu0 0
    %3814 = vmatmul.mubr.bf16.gmra.mrb[0].mxu0 %v3140
    %v3815 = vpop.f32.mrb[0].mxu0
    %v3816 = vadd.f32 %v3608, %v3815
    %v3817 = vpop.f32.mrb[0].mxu0
    %v3818 = vpop.f32.mrb[0].mxu0
    %v3819 = vpop.f32.mrb[0].mxu0
    %3820 = vdwg.mxu0
    %v3821 = vadd.f32 %v3560, %v3775
    %v3822 = vadd.f32 %v3561, %v3777
    %v3823 = vxor.u32 %v3821, 2147483648
    %v3824 = vxor.u32 %v3822, 2147483648
    %v3825 = vmul.f32 %v3823, 1.442695
    %v3826 = vpow.pop %v3825
    %v3827 = vmul.f32 %v3824, 1.442695
    %v3828 = vpow.pop %v3827
    %v3829 = vadd.f32 %v3826, 1.0
    %v3830 = vadd.f32 %v3828, 1.0
    %v3831 = vrcp.pop %v3829
    %v3832 = vmul.f32 1.0, %v3831
    %v3833 = vrcp.pop %v3830
    %v3834 = vmul.f32 1.0, %v3833
    %v3835 = vmul.f32 %v3832, %v3816
    %v3836 = vadd.f32 %v3562, %v3835
    %v3837 = vtanh.pop %v3836
    %v3838 = vsub.f32 1.0, %v3834
    %v3839 = vmul.f32 %v3838, %v3837
    %v3840 = vmul.f32 %v3834, %v3139
    %v3841 = vadd.f32 %v3839, %v3840
    %v3842 = vpack.c.bf16 %v3841, %v3841
    %v3843 = vld [vmem:[%s12] sm:$0xf]
    %v3844 = vld [vmem:[%s12 + $0x4] sm:$0xf]
    %v3845 = vld [vmem:[%s12 + $0x8] sm:$0xf]
    %v3846 = vld [vmem:[%s12 + $0xc] sm:$0xf]
    %v3847 = vld [vmem:[%s12 + $0x10] sm:$0xf]
    %v3848 = vld [vmem:[%s12 + $0x14] sm:$0xf]
    %v3849 = vld [vmem:[%s12 + $0x18] sm:$0xf]
    %v3850 = vld [vmem:[%s12 + $0x1c] sm:$0xf]
    %v3851 = vld [vmem:[%s12 + $0x20] sm:$0xf]
    %v3852 = vld [vmem:[%s12 + $0x24] sm:$0xf]
    %v3853 = vld [vmem:[%s12 + $0x28] sm:$0xf]
    %v3854 = vld [vmem:[%s12 + $0x2c] sm:$0xf]
    %v3855 = vld [vmem:[%s12 + $0x30] sm:$0xf]
    %v3856 = vld [vmem:[%s12 + $0x34] sm:$0xf]
    %v3857 = vld [vmem:[%s12 + $0x38] sm:$0xf]
    %v3858 = vld [vmem:[%s12 + $0x3c] sm:$0xf]
    %v3875 = vunpack.c.l.b16 %v3843
    %v3876 = vunpack.c.l.b16 %v3844
    %v3877 = vunpack.c.l.b16 %v3845
    %v3878 = vunpack.c.l.b16 %v3846
    %v3879 = vunpack.c.l.b16 %v3847
    %v3880 = vunpack.c.l.b16 %v3848
    %v3881 = vunpack.c.l.b16 %v3849
    %v3882 = vunpack.c.l.b16 %v3850
    %v3883 = vunpack.c.l.b16 %v3851
    %v3884 = vunpack.c.l.b16 %v3852
    %v3885 = vunpack.c.l.b16 %v3853
    %v3886 = vunpack.c.l.b16 %v3854
    %v3887 = vunpack.c.l.b16 %v3855
    %v3888 = vunpack.c.l.b16 %v3856
    %v3889 = vunpack.c.l.b16 %v3857
    %v3890 = vunpack.c.l.b16 %v3858
    %v3891 = vpack.c.b16 %v3876, %v3875
    %v3892 = vpack.c.b16 %v3878, %v3877
    %v3893 = vpack.c.b16 %v3880, %v3879
    %v3894 = vpack.c.b16 %v3882, %v3881
    %v3895 = vpack.c.b16 %v3884, %v3883
    %v3896 = vpack.c.b16 %v3886, %v3885
    %v3897 = vpack.c.b16 %v3888, %v3887
    %v3898 = vpack.c.b16 %v3890, %v3889
    %3907 = vmatprep.subr.bf16.mxu0 0
    %3908 = vmatpush1.bf16.msra.mxu0 %v3891
    %3909 = vmatprep.subr.bf16.mxu0 0
    %3910 = vmatpush1.bf16.msra.mxu0 %v3892
    %3911 = vmatprep.subr.bf16.mxu0 0
    %3912 = vmatpush1.bf16.msra.mxu0 %v3893
    %3913 = vmatprep.subr.bf16.mxu0 0
    %3914 = vmatpush1.bf16.msra.mxu0 %v3894
    %3915 = vmatprep.subr.bf16.mxu0 0
    %3916 = vmatpush1.bf16.msra.mxu0 %v3895
    %3917 = vmatprep.subr.bf16.mxu0 0
    %3918 = vmatpush1.bf16.msra.mxu0 %v3896
    %3919 = vmatprep.subr.bf16.mxu0 0
    %3920 = vmatpush1.bf16.msra.mxu0 %v3897
    %3921 = vmatprep.subr.bf16.mxu0 0
    %3922 = vmatpush1.bf16.msra.mxu0 %v3898
    %3923 = vmatprep.subr.bf16.mxu0 0
    %3924 = vmatpush1.bf16.msra.mxu0 0
    %3925 = vmatprep.subr.bf16.mxu0 0
    %3926 = vmatpush1.bf16.msra.mxu0 0
    %3927 = vmatprep.subr.bf16.mxu0 0
    %3928 = vmatpush1.bf16.msra.mxu0 0
    %3929 = vmatprep.subr.bf16.mxu0 0
    %3930 = vmatpush1.bf16.msra.mxu0 0
    %3931 = vmatprep.subr.bf16.mxu0 0
    %3932 = vmatpush1.bf16.msra.mxu0 0
    %3933 = vmatprep.subr.bf16.mxu0 0
    %3934 = vmatpush1.bf16.msra.mxu0 0
    %3935 = vmatprep.subr.bf16.mxu0 0
    %3936 = vmatpush1.bf16.msra.mxu0 0
    %3937 = vmatprep.subr.bf16.mxu0 0
    %3938 = vmatpush1.bf16.msra.mxu0 0
    %3939 = vmatprep.mubr.bf16.mxu0 0
    %3940 = vmatmul.mubr.bf16.gmra.mrb[0].mxu0 %v3842
    %v3941 = vpop.f32.mrb[0].mxu0
    %v3942 = vadd.f32 0.0, %v3941
    %v3943 = vpop.f32.mrb[0].mxu0
    %v3944 = vpop.f32.mrb[0].mxu0
    %v3945 = vpop.f32.mrb[0].mxu0
    %3946 = vdwg.mxu0
    %v3947 = vadd.f32 %v3556, %v3942
    %v3948 = vadd.f32 %v3947, %v1869
    %s3949 = scalar_lea.vmem [#allocation14], 24
    %3950 = vst [vmem:[%s3949] sm:$0xff] %v3948
    %s3951 = sld [smem:[#allocation3 + $0x3]]
    %p3952 = scmp.ne.s32.totalorder %s3951, 0
    // Predicated region
    $region94: #{seq2seq_forward.1} parent=1 // pred_check
      %p3953 = pneg %p3952
    $region95: #{seq2seq_forward.1} parent=1 // pred_check_branch
      %3955 = sbr.rel (%p3953) target = $region97
    $region96: #{seq2seq_forward.1} parent=1 // pred_region
      %s3956 = scalar_lea.vmem %s2, 24
      %v3957 = vld [vmem:[%s3956] sm:$0xff]
    $region97: #{seq2seq_forward.1} parent=1 // pred_fallthru
      %v3958 = vphi 0, %v3957
    %p3959 = pneg %p3952
    // Predicated region
    $region98: #{seq2seq_forward.1} parent=1 // pred_check
      _
    $region99: #{seq2seq_forward.1} parent=1 // pred_check_branch
      %3961 = sbr.rel (%p3952) target = $region101
    $region100: #{seq2seq_forward.1} parent=1 // pred_region
      %3962 = vmax.xlane.f32.xlu0 %v3948
      %v3963 = vpop.xlane.xlu0 %3962
      %vm3964 = vcmp.eq.f32.partialorder %v3948, %v3963
      %v3965 = vsel %vm3964, %v128, 128
      %v3966 = vand.u32 %v3965, 65535
      %v3967 = vshra.s32 %v3965, 16
      %v3968 = vcvt.s32.f32 %v3966
      %v3969 = vcvt.s32.f32 %v3967
      %3970 = vmin.xlane.f32.xlu0 %v3969
      %v3971 = vpop.xlane.xlu0 %3970
      %vm3972 = vcmp.eq.f32.partialorder %v3969, %v3971
      %v3973 = vsel %vm3972, %v3968, inf
      %3974 = vmin.xlane.f32.xlu0 %v3973
      %v3975 = vpop.xlane.xlu0 %3974
      %v3976 = vcvt.f32.s32 %v3975
      %v3977 = vcvt.f32.s32 %v3971
      %v3978 = vshll.u32 %v3977, 16
      %v3979 = vadd.s32 %v3978, %v3976
    $region101: #{seq2seq_forward.1} parent=1 // pred_fallthru
      %v3980 = vphi %v3958, %v3979
    %3981 = vset.pattern.permute.xlu0 0
    %3982 = vperm.xlu0 %3981, %v3980
    %v3983 = vpop.permute.xlu0 %3982
    %vm3984 = vcmp.eq.s32.totalorder %v3983, %v128
    %v3985 = vsel %vm3984, 1, 0
    %v3986 = vcvt.s32.f32 %v3985
    %v3987 = vpack.c.bf16 %v3986, %v3986
    %v3988 = vld [vmem:[#allocation10] sm:$0xff]
    %v3989 = vld [vmem:[#allocation10 + $0x8] sm:$0xff]
    %v3990 = vld [vmem:[#allocation10 + $0x10] sm:$0xff]
    %v3991 = vld [vmem:[#allocation10 + $0x18] sm:$0xff]
    %v3992 = vld [vmem:[#allocation10 + $0x20] sm:$0xff]
    %v3993 = vld [vmem:[#allocation10 + $0x28] sm:$0xff]
    %v3994 = vld [vmem:[#allocation10 + $0x30] sm:$0xff]
    %v3995 = vld [vmem:[#allocation10 + $0x38] sm:$0xff]
    %v3996 = vld [vmem:[#allocation10 + $0x40] sm:$0xff]
    %v3997 = vld [vmem:[#allocation10 + $0x48] sm:$0xff]
    %v3998 = vld [vmem:[#allocation10 + $0x50] sm:$0xff]
    %v3999 = vld [vmem:[#allocation10 + $0x58] sm:$0xff]
    %v4000 = vld [vmem:[#allocation10 + $0x60] sm:$0xff]
    %v4001 = vld [vmem:[#allocation10 + $0x68] sm:$0xff]
    %v4002 = vld [vmem:[#allocation10 + $0x70] sm:$0xff]
    %v4003 = vld [vmem:[#allocation10 + $0x78] sm:$0xff]
    %v4004 = vld [vmem:[#allocation10 + $0x80] sm:$0xff]
    %v4005 = vld [vmem:[#allocation10 + $0x88] sm:$0xff]
    %v4006 = vld [vmem:[#allocation10 + $0x90] sm:$0xff]
    %v4007 = vld [vmem:[#allocation10 + $0x98] sm:$0xff]
    %v4008 = vld [vmem:[#allocation10 + $0xa0] sm:$0xff]
    %v4009 = vld [vmem:[#allocation10 + $0xa8] sm:$0xff]
    %v4010 = vld [vmem:[#allocation10 + $0xb0] sm:$0xff]
    %v4011 = vld [vmem:[#allocation10 + $0xb8] sm:$0xff]
    %v4012 = vld [vmem:[#allocation10 + $0xc0] sm:$0xff]
    %v4013 = vld [vmem:[#allocation10 + $0xc8] sm:$0xff]
    %v4014 = vld [vmem:[#allocation10 + $0xd0] sm:$0xff]
    %v4015 = vld [vmem:[#allocation10 + $0xd8] sm:$0xff]
    %v4016 = vld [vmem:[#allocation10 + $0xe0] sm:$0xff]
    %v4017 = vld [vmem:[#allocation10 + $0xe8] sm:$0xff]
    %v4018 = vld [vmem:[#allocation10 + $0xf0] sm:$0xff]
    %v4019 = vld [vmem:[#allocation10 + $0xf8] sm:$0xff]
    %v4052 = vunpack.c.l.b16 %v3988
    %v4053 = vunpack.c.h.b16 %v3988
    %v4054 = vunpack.c.l.b16 %v3989
    %v4055 = vunpack.c.h.b16 %v3989
    %v4056 = vunpack.c.l.b16 %v3990
    %v4057 = vunpack.c.h.b16 %v3990
    %v4058 = vunpack.c.l.b16 %v3991
    %v4059 = vunpack.c.h.b16 %v3991
    %v4060 = vunpack.c.l.b16 %v3992
    %v4061 = vunpack.c.h.b16 %v3992
    %v4062 = vunpack.c.l.b16 %v3993
    %v4063 = vunpack.c.h.b16 %v3993
    %v4064 = vunpack.c.l.b16 %v3994
    %v4065 = vunpack.c.h.b16 %v3994
    %v4066 = vunpack.c.l.b16 %v3995
    %v4067 = vunpack.c.h.b16 %v3995
    %v4068 = vunpack.c.l.b16 %v3996
    %v4069 = vunpack.c.h.b16 %v3996
    %v4070 = vunpack.c.l.b16 %v3997
    %v4071 = vunpack.c.h.b16 %v3997
    %v4072 = vunpack.c.l.b16 %v3998
    %v4073 = vunpack.c.h.b16 %v3998
    %v4074 = vunpack.c.l.b16 %v3999
    %v4075 = vunpack.c.h.b16 %v3999
    %v4076 = vunpack.c.l.b16 %v4000
    %v4077 = vunpack.c.h.b16 %v4000
    %v4078 = vunpack.c.l.b16 %v4001
    %v4079 = vunpack.c.h.b16 %v4001
    %v4080 = vunpack.c.l.b16 %v4002
    %v4081 = vunpack.c.h.b16 %v4002
    %v4082 = vunpack.c.l.b16 %v4003
    %v4083 = vunpack.c.h.b16 %v4003
    %v4084 = vunpack.c.l.b16 %v4004
    %v4085 = vunpack.c.h.b16 %v4004
    %v4086 = vunpack.c.l.b16 %v4005
    %v4087 = vunpack.c.h.b16 %v4005
    %v4088 = vunpack.c.l.b16 %v4006
    %v4089 = vunpack.c.h.b16 %v4006
    %v4090 = vunpack.c.l.b16 %v4007
    %v4091 = vunpack.c.h.b16 %v4007
    %v4092 = vunpack.c.l.b16 %v4008
    %v4093 = vunpack.c.h.b16 %v4008
    %v4094 = vunpack.c.l.b16 %v4009
    %v4095 = vunpack.c.h.b16 %v4009
    %v4096 = vunpack.c.l.b16 %v4010
    %v4097 = vunpack.c.h.b16 %v4010
    %v4098 = vunpack.c.l.b16 %v4011
    %v4099 = vunpack.c.h.b16 %v4011
    %v4100 = vunpack.c.l.b16 %v4012
    %v4101 = vunpack.c.h.b16 %v4012
    %v4102 = vunpack.c.l.b16 %v4013
    %v4103 = vunpack.c.h.b16 %v4013
    %v4104 = vunpack.c.l.b16 %v4014
    %v4105 = vunpack.c.h.b16 %v4014
    %v4106 = vunpack.c.l.b16 %v4015
    %v4107 = vunpack.c.h.b16 %v4015
    %v4108 = vunpack.c.l.b16 %v4016
    %v4109 = vunpack.c.h.b16 %v4016
    %v4110 = vunpack.c.l.b16 %v4017
    %v4111 = vunpack.c.h.b16 %v4017
    %v4112 = vunpack.c.l.b16 %v4018
    %v4113 = vunpack.c.h.b16 %v4018
    %v4114 = vunpack.c.l.b16 %v4019
    %v4115 = vunpack.c.h.b16 %v4019
    %v4116 = vpack.c.b16 %v4056, %v4052
    %v4117 = vpack.c.b16 %v4057, %v4053
    %v4118 = vpack.c.b16 %v4058, %v4054
    %v4119 = vpack.c.b16 %v4059, %v4055
    %v4120 = vpack.c.b16 %v4064, %v4060
    %v4121 = vpack.c.b16 %v4065, %v4061
    %v4122 = vpack.c.b16 %v4066, %v4062
    %v4123 = vpack.c.b16 %v4067, %v4063
    %v4124 = vpack.c.b16 %v4072, %v4068
    %v4125 = vpack.c.b16 %v4073, %v4069
    %v4126 = vpack.c.b16 %v4074, %v4070
    %v4127 = vpack.c.b16 %v4075, %v4071
    %v4128 = vpack.c.b16 %v4080, %v4076
    %v4129 = vpack.c.b16 %v4081, %v4077
    %v4130 = vpack.c.b16 %v4082, %v4078
    %v4131 = vpack.c.b16 %v4083, %v4079
    %v4132 = vpack.c.b16 %v4088, %v4084
    %v4133 = vpack.c.b16 %v4089, %v4085
    %v4134 = vpack.c.b16 %v4090, %v4086
    %v4135 = vpack.c.b16 %v4091, %v4087
    %v4136 = vpack.c.b16 %v4096, %v4092
    %v4137 = vpack.c.b16 %v4097, %v4093
    %v4138 = vpack.c.b16 %v4098, %v4094
    %v4139 = vpack.c.b16 %v4099, %v4095
    %v4140 = vpack.c.b16 %v4104, %v4100
    %v4141 = vpack.c.b16 %v4105, %v4101
    %v4142 = vpack.c.b16 %v4106, %v4102
    %v4143 = vpack.c.b16 %v4107, %v4103
    %v4144 = vpack.c.b16 %v4112, %v4108
    %v4145 = vpack.c.b16 %v4113, %v4109
    %v4146 = vpack.c.b16 %v4114, %v4110
    %v4147 = vpack.c.b16 %v4115, %v4111
    %4180 = vmatprep.subr.bf16.mxu0 %v4117
    %4181 = vmatpush1.bf16.msra.mxu0 %v4116
    %4182 = vmatprep.subr.bf16.mxu0 %v4121
    %4183 = vmatpush1.bf16.msra.mxu0 %v4120
    %4184 = vmatprep.subr.bf16.mxu0 %v4125
    %4185 = vmatpush1.bf16.msra.mxu0 %v4124
    %4186 = vmatprep.subr.bf16.mxu0 %v4129
    %4187 = vmatpush1.bf16.msra.mxu0 %v4128
    %4188 = vmatprep.subr.bf16.mxu0 %v4133
    %4189 = vmatpush1.bf16.msra.mxu0 %v4132
    %4190 = vmatprep.subr.bf16.mxu0 %v4137
    %4191 = vmatpush1.bf16.msra.mxu0 %v4136
    %4192 = vmatprep.subr.bf16.mxu0 %v4141
    %4193 = vmatpush1.bf16.msra.mxu0 %v4140
    %4194 = vmatprep.subr.bf16.mxu0 %v4145
    %4195 = vmatpush1.bf16.msra.mxu0 %v4144
    %4196 = vmatprep.subr.bf16.mxu0 0
    %4197 = vmatpush1.bf16.msra.mxu0 0
    %4198 = vmatprep.subr.bf16.mxu0 0
    %4199 = vmatpush1.bf16.msra.mxu0 0
    %4200 = vmatprep.subr.bf16.mxu0 0
    %4201 = vmatpush1.bf16.msra.mxu0 0
    %4202 = vmatprep.subr.bf16.mxu0 0
    %4203 = vmatpush1.bf16.msra.mxu0 0
    %4204 = vmatprep.subr.bf16.mxu0 0
    %4205 = vmatpush1.bf16.msra.mxu0 0
    %4206 = vmatprep.subr.bf16.mxu0 0
    %4207 = vmatpush1.bf16.msra.mxu0 0
    %4208 = vmatprep.subr.bf16.mxu0 0
    %4209 = vmatpush1.bf16.msra.mxu0 0
    %4210 = vmatprep.subr.bf16.mxu0 0
    %4211 = vmatpush1.bf16.msra.mxu0 0
    %4212 = vmatprep.mubr.bf16.mxu0 0
    %4213 = vmatmul.mubr.bf16.gmra.mrb[0].mxu0 %v3987
    %v4214 = vpop.f32.mrb[0].mxu0
    %v4215 = vadd.f32 0.0, %v4214
    %v4216 = vpop.f32.mrb[0].mxu0
    %v4217 = vadd.f32 0.0, %v4216
    %v4218 = vpop.f32.mrb[0].mxu0
    %v4219 = vpop.f32.mrb[0].mxu0
    %4220 = vdwg.mxu0
    %4221 = vmatprep.subr.bf16.mxu0 %v4119
    %4222 = vmatpush1.bf16.msra.mxu0 %v4118
    %4223 = vmatprep.subr.bf16.mxu0 %v4123
    %4224 = vmatpush1.bf16.msra.mxu0 %v4122
    %4225 = vmatprep.subr.bf16.mxu0 %v4127
    %4226 = vmatpush1.bf16.msra.mxu0 %v4126
    %4227 = vmatprep.subr.bf16.mxu0 %v4131
    %4228 = vmatpush1.bf16.msra.mxu0 %v4130
    %4229 = vmatprep.subr.bf16.mxu0 %v4135
    %4230 = vmatpush1.bf16.msra.mxu0 %v4134
    %4231 = vmatprep.subr.bf16.mxu0 %v4139
    %4232 = vmatpush1.bf16.msra.mxu0 %v4138
    %4233 = vmatprep.subr.bf16.mxu0 %v4143
    %4234 = vmatpush1.bf16.msra.mxu0 %v4142
    %4235 = vmatprep.subr.bf16.mxu0 %v4147
    %4236 = vmatpush1.bf16.msra.mxu0 %v4146
    %4237 = vmatprep.subr.bf16.mxu0 0
    %4238 = vmatpush1.bf16.msra.mxu0 0
    %4239 = vmatprep.subr.bf16.mxu0 0
    %4240 = vmatpush1.bf16.msra.mxu0 0
    %4241 = vmatprep.subr.bf16.mxu0 0
    %4242 = vmatpush1.bf16.msra.mxu0 0
    %4243 = vmatprep.subr.bf16.mxu0 0
    %4244 = vmatpush1.bf16.msra.mxu0 0
    %4245 = vmatprep.subr.bf16.mxu0 0
    %4246 = vmatpush1.bf16.msra.mxu0 0
    %4247 = vmatprep.subr.bf16.mxu0 0
    %4248 = vmatpush1.bf16.msra.mxu0 0
    %4249 = vmatprep.subr.bf16.mxu0 0
    %4250 = vmatpush1.bf16.msra.mxu0 0
    %4251 = vmatprep.subr.bf16.mxu0 0
    %4252 = vmatpush1.bf16.msra.mxu0 0
    %4253 = vmatprep.mubr.bf16.mxu0 0
    %4254 = vmatmul.mubr.bf16.gmra.mrb[0].mxu0 %v3987
    %v4255 = vpop.f32.mrb[0].mxu0
    %v4256 = vadd.f32 0.0, %v4255
    %v4257 = vpop.f32.mrb[0].mxu0
    %v4258 = vadd.f32 0.0, %v4257
    %v4259 = vpop.f32.mrb[0].mxu0
    %v4260 = vpop.f32.mrb[0].mxu0
    %4261 = vdwg.mxu0
    %v4262 = vadd.f32 %v4215, %v1826
    %v4263 = vadd.f32 %v4217, %v1828
    %v4264 = vadd.f32 %v4256, %v1867
    %v4265 = vld [vmem:[#allocation11] sm:$0xff]
    %v4266 = vld [vmem:[#allocation11 + $0x8] sm:$0xf]
    %v4267 = vld [vmem:[#allocation11 + $0xc] sm:$0xff]
    %v4268 = vld [vmem:[#allocation11 + $0x14] sm:$0xf]
    %v4269 = vld [vmem:[#allocation11 + $0x18] sm:$0xff]
    %v4270 = vld [vmem:[#allocation11 + $0x20] sm:$0xf]
    %v4271 = vld [vmem:[#allocation11 + $0x24] sm:$0xff]
    %v4272 = vld [vmem:[#allocation11 + $0x2c] sm:$0xf]
    %v4273 = vld [vmem:[#allocation11 + $0x30] sm:$0xff]
    %v4274 = vld [vmem:[#allocation11 + $0x38] sm:$0xf]
    %v4275 = vld [vmem:[#allocation11 + $0x3c] sm:$0xff]
    %v4276 = vld [vmem:[#allocation11 + $0x44] sm:$0xf]
    %v4277 = vld [vmem:[#allocation11 + $0x48] sm:$0xff]
    %v4278 = vld [vmem:[#allocation11 + $0x50] sm:$0xf]
    %v4279 = vld [vmem:[#allocation11 + $0x54] sm:$0xff]
    %v4280 = vld [vmem:[#allocation11 + $0x5c] sm:$0xf]
    %v4281 = vld [vmem:[#allocation11 + $0x60] sm:$0xff]
    %v4282 = vld [vmem:[#allocation11 + $0x68] sm:$0xf]
    %v4283 = vld [vmem:[#allocation11 + $0x6c] sm:$0xff]
    %v4284 = vld [vmem:[#allocation11 + $0x74] sm:$0xf]
    %v4285 = vld [vmem:[#allocation11 + $0x78] sm:$0xff]
    %v4286 = vld [vmem:[#allocation11 + $0x80] sm:$0xf]
    %v4287 = vld [vmem:[#allocation11 + $0x84] sm:$0xff]
    %v4288 = vld [vmem:[#allocation11 + $0x8c] sm:$0xf]
    %v4289 = vld [vmem:[#allocation11 + $0x90] sm:$0xff]
    %v4290 = vld [vmem:[#allocation11 + $0x98] sm:$0xf]
    %v4291 = vld [vmem:[#allocation11 + $0x9c] sm:$0xff]
    %v4292 = vld [vmem:[#allocation11 + $0xa4] sm:$0xf]
    %v4293 = vld [vmem:[#allocation11 + $0xa8] sm:$0xff]
    %v4294 = vld [vmem:[#allocation11 + $0xb0] sm:$0xf]
    %v4295 = vld [vmem:[#allocation11 + $0xb4] sm:$0xff]
    %v4296 = vld [vmem:[#allocation11 + $0xbc] sm:$0xf]
    %v4297 = vld [vmem:[%s9] sm:$0x7]
    %v4299 = vlaneseq
    %v4300 = vshrl.u32 %v4299, 7
    %v4301 = vsub.s32 0, %v4300
    %v4302 = vrot.slane %v4297, %v4301
    %v4303 = vlaneseq
    %v4304 = vshrl.u32 %v4303, 7
    %v4305 = vsub.s32 1, %v4304
    %v4306 = vrot.slane %v4297, %v4305
    %v4307 = vlaneseq
    %v4308 = vshrl.u32 %v4307, 7
    %v4309 = vsub.s32 2, %v4308
    %v4310 = vrot.slane %v4297, %v4309
    %v4346 = vunpack.c.l.b16 %v4265
    %v4347 = vunpack.c.h.b16 %v4265
    %v4348 = vunpack.c.l.b16 %v4266
    %v4349 = vunpack.c.l.b16 %v4267
    %v4350 = vunpack.c.h.b16 %v4267
    %v4351 = vunpack.c.l.b16 %v4268
    %v4352 = vunpack.c.l.b16 %v4269
    %v4353 = vunpack.c.h.b16 %v4269
    %v4354 = vunpack.c.l.b16 %v4270
    %v4355 = vunpack.c.l.b16 %v4271
    %v4356 = vunpack.c.h.b16 %v4271
    %v4357 = vunpack.c.l.b16 %v4272
    %v4358 = vunpack.c.l.b16 %v4273
    %v4359 = vunpack.c.h.b16 %v4273
    %v4360 = vunpack.c.l.b16 %v4274
    %v4361 = vunpack.c.l.b16 %v4275
    %v4362 = vunpack.c.h.b16 %v4275
    %v4363 = vunpack.c.l.b16 %v4276
    %v4364 = vunpack.c.l.b16 %v4277
    %v4365 = vunpack.c.h.b16 %v4277
    %v4366 = vunpack.c.l.b16 %v4278
    %v4367 = vunpack.c.l.b16 %v4279
    %v4368 = vunpack.c.h.b16 %v4279
    %v4369 = vunpack.c.l.b16 %v4280
    %v4370 = vunpack.c.l.b16 %v4281
    %v4371 = vunpack.c.h.b16 %v4281
    %v4372 = vunpack.c.l.b16 %v4282
    %v4373 = vunpack.c.l.b16 %v4283
    %v4374 = vunpack.c.h.b16 %v4283
    %v4375 = vunpack.c.l.b16 %v4284
    %v4376 = vunpack.c.l.b16 %v4285
    %v4377 = vunpack.c.h.b16 %v4285
    %v4378 = vunpack.c.l.b16 %v4286
    %v4379 = vunpack.c.l.b16 %v4287
    %v4380 = vunpack.c.h.b16 %v4287
    %v4381 = vunpack.c.l.b16 %v4288
    %v4382 = vunpack.c.l.b16 %v4289
    %v4383 = vunpack.c.h.b16 %v4289
    %v4384 = vunpack.c.l.b16 %v4290
    %v4385 = vunpack.c.l.b16 %v4291
    %v4386 = vunpack.c.h.b16 %v4291
    %v4387 = vunpack.c.l.b16 %v4292
    %v4388 = vunpack.c.l.b16 %v4293
    %v4389 = vunpack.c.h.b16 %v4293
    %v4390 = vunpack.c.l.b16 %v4294
    %v4391 = vunpack.c.l.b16 %v4295
    %v4392 = vunpack.c.h.b16 %v4295
    %v4393 = vunpack.c.l.b16 %v4296
    %v4394 = vpack.c.b16 %v4349, %v4346
    %v4395 = vpack.c.b16 %v4350, %v4347
    %v4396 = vpack.c.b16 %v4351, %v4348
    %v4397 = vpack.c.b16 %v4355, %v4352
    %v4398 = vpack.c.b16 %v4356, %v4353
    %v4399 = vpack.c.b16 %v4357, %v4354
    %v4400 = vpack.c.b16 %v4361, %v4358
    %v4401 = vpack.c.b16 %v4362, %v4359
    %v4402 = vpack.c.b16 %v4363, %v4360
    %v4403 = vpack.c.b16 %v4367, %v4364
    %v4404 = vpack.c.b16 %v4368, %v4365
    %v4405 = vpack.c.b16 %v4369, %v4366
    %v4406 = vpack.c.b16 %v4373, %v4370
    %v4407 = vpack.c.b16 %v4374, %v4371
    %v4408 = vpack.c.b16 %v4375, %v4372
    %v4409 = vpack.c.b16 %v4379, %v4376
    %v4410 = vpack.c.b16 %v4380, %v4377
    %v4411 = vpack.c.b16 %v4381, %v4378
    %v4412 = vpack.c.b16 %v4385, %v4382
    %v4413 = vpack.c.b16 %v4386, %v4383
    %v4414 = vpack.c.b16 %v4387, %v4384
    %v4415 = vpack.c.b16 %v4391, %v4388
    %v4416 = vpack.c.b16 %v4392, %v4389
    %v4417 = vpack.c.b16 %v4393, %v4390
    %4442 = vmatprep.subr.bf16.mxu0 %v4395
    %4443 = vmatpush1.bf16.msra.mxu0 %v4394
    %4444 = vmatprep.subr.bf16.mxu0 %v4398
    %4445 = vmatpush1.bf16.msra.mxu0 %v4397
    %4446 = vmatprep.subr.bf16.mxu0 %v4401
    %4447 = vmatpush1.bf16.msra.mxu0 %v4400
    %4448 = vmatprep.subr.bf16.mxu0 %v4404
    %4449 = vmatpush1.bf16.msra.mxu0 %v4403
    %4450 = vmatprep.subr.bf16.mxu0 %v4407
    %4451 = vmatpush1.bf16.msra.mxu0 %v4406
    %4452 = vmatprep.subr.bf16.mxu0 %v4410
    %4453 = vmatpush1.bf16.msra.mxu0 %v4409
    %4454 = vmatprep.subr.bf16.mxu0 %v4413
    %4455 = vmatpush1.bf16.msra.mxu0 %v4412
    %4456 = vmatprep.subr.bf16.mxu0 %v4416
    %4457 = vmatpush1.bf16.msra.mxu0 %v4415
    %4458 = vmatprep.subr.bf16.mxu0 0
    %4459 = vmatpush1.bf16.msra.mxu0 0
    %4460 = vmatprep.subr.bf16.mxu0 0
    %4461 = vmatpush1.bf16.msra.mxu0 0
    %4462 = vmatprep.subr.bf16.mxu0 0
    %4463 = vmatpush1.bf16.msra.mxu0 0
    %4464 = vmatprep.subr.bf16.mxu0 0
    %4465 = vmatpush1.bf16.msra.mxu0 0
    %4466 = vmatprep.subr.bf16.mxu0 0
    %4467 = vmatpush1.bf16.msra.mxu0 0
    %4468 = vmatprep.subr.bf16.mxu0 0
    %4469 = vmatpush1.bf16.msra.mxu0 0
    %4470 = vmatprep.subr.bf16.mxu0 0
    %4471 = vmatpush1.bf16.msra.mxu0 0
    %4472 = vmatprep.subr.bf16.mxu0 0
    %4473 = vmatpush1.bf16.msra.mxu0 0
    %4474 = vmatprep.mubr.bf16.mxu0 0
    %4475 = vmatmul.mubr.bf16.gmra.mrb[0].mxu0 %v3842
    %v4476 = vpop.f32.mrb[0].mxu0
    %v4477 = vadd.f32 %v4302, %v4476
    %v4478 = vpop.f32.mrb[0].mxu0
    %v4479 = vadd.f32 %v4306, %v4478
    %v4480 = vpop.f32.mrb[0].mxu0
    %v4481 = vpop.f32.mrb[0].mxu0
    %4482 = vdwg.mxu0
    %4483 = vmatprep.subr.bf16.mxu0 0
    %4484 = vmatpush1.bf16.msra.mxu0 %v4396
    %4485 = vmatprep.subr.bf16.mxu0 0
    %4486 = vmatpush1.bf16.msra.mxu0 %v4399
    %4487 = vmatprep.subr.bf16.mxu0 0
    %4488 = vmatpush1.bf16.msra.mxu0 %v4402
    %4489 = vmatprep.subr.bf16.mxu0 0
    %4490 = vmatpush1.bf16.msra.mxu0 %v4405
    %4491 = vmatprep.subr.bf16.mxu0 0
    %4492 = vmatpush1.bf16.msra.mxu0 %v4408
    %4493 = vmatprep.subr.bf16.mxu0 0
    %4494 = vmatpush1.bf16.msra.mxu0 %v4411
    %4495 = vmatprep.subr.bf16.mxu0 0
    %4496 = vmatpush1.bf16.msra.mxu0 %v4414
    %4497 = vmatprep.subr.bf16.mxu0 0
    %4498 = vmatpush1.bf16.msra.mxu0 %v4417
    %4499 = vmatprep.subr.bf16.mxu0 0
    %4500 = vmatpush1.bf16.msra.mxu0 0
    %4501 = vmatprep.subr.bf16.mxu0 0
    %4502 = vmatpush1.bf16.msra.mxu0 0
    %4503 = vmatprep.subr.bf16.mxu0 0
    %4504 = vmatpush1.bf16.msra.mxu0 0
    %4505 = vmatprep.subr.bf16.mxu0 0
    %4506 = vmatpush1.bf16.msra.mxu0 0
    %4507 = vmatprep.subr.bf16.mxu0 0
    %4508 = vmatpush1.bf16.msra.mxu0 0
    %4509 = vmatprep.subr.bf16.mxu0 0
    %4510 = vmatpush1.bf16.msra.mxu0 0
    %4511 = vmatprep.subr.bf16.mxu0 0
    %4512 = vmatpush1.bf16.msra.mxu0 0
    %4513 = vmatprep.subr.bf16.mxu0 0
    %4514 = vmatpush1.bf16.msra.mxu0 0
    %4515 = vmatprep.mubr.bf16.mxu0 0
    %4516 = vmatmul.mubr.bf16.gmra.mrb[0].mxu0 %v3842
    %v4517 = vpop.f32.mrb[0].mxu0
    %v4518 = vadd.f32 %v4310, %v4517
    %v4519 = vpop.f32.mrb[0].mxu0
    %v4520 = vpop.f32.mrb[0].mxu0
    %v4521 = vpop.f32.mrb[0].mxu0
    %4522 = vdwg.mxu0
    %v4523 = vadd.f32 %v4262, %v4477
    %v4524 = vadd.f32 %v4263, %v4479
    %v4525 = vxor.u32 %v4523, 2147483648
    %v4526 = vxor.u32 %v4524, 2147483648
    %v4527 = vmul.f32 %v4525, 1.442695
    %v4528 = vpow.pop %v4527
    %v4529 = vmul.f32 %v4526, 1.442695
    %v4530 = vpow.pop %v4529
    %v4531 = vadd.f32 %v4528, 1.0
    %v4532 = vadd.f32 %v4530, 1.0
    %v4533 = vrcp.pop %v4531
    %v4534 = vmul.f32 1.0, %v4533
    %v4535 = vrcp.pop %v4532
    %v4536 = vmul.f32 1.0, %v4535
    %v4537 = vmul.f32 %v4534, %v4518
    %v4538 = vadd.f32 %v4264, %v4537
    %v4539 = vtanh.pop %v4538
    %v4540 = vsub.f32 1.0, %v4536
    %v4541 = vmul.f32 %v4540, %v4539
    %v4542 = vmul.f32 %v4536, %v3841
    %v4543 = vadd.f32 %v4541, %v4542
    %v4544 = vpack.c.bf16 %v4543, %v4543
    %v4545 = vld [vmem:[%s12] sm:$0xf]
    %v4546 = vld [vmem:[%s12 + $0x4] sm:$0xf]
    %v4547 = vld [vmem:[%s12 + $0x8] sm:$0xf]
    %v4548 = vld [vmem:[%s12 + $0xc] sm:$0xf]
    %v4549 = vld [vmem:[%s12 + $0x10] sm:$0xf]
    %v4550 = vld [vmem:[%s12 + $0x14] sm:$0xf]
    %v4551 = vld [vmem:[%s12 + $0x18] sm:$0xf]
    %v4552 = vld [vmem:[%s12 + $0x1c] sm:$0xf]
    %v4553 = vld [vmem:[%s12 + $0x20] sm:$0xf]
    %v4554 = vld [vmem:[%s12 + $0x24] sm:$0xf]
    %v4555 = vld [vmem:[%s12 + $0x28] sm:$0xf]
    %v4556 = vld [vmem:[%s12 + $0x2c] sm:$0xf]
    %v4557 = vld [vmem:[%s12 + $0x30] sm:$0xf]
    %v4558 = vld [vmem:[%s12 + $0x34] sm:$0xf]
    %v4559 = vld [vmem:[%s12 + $0x38] sm:$0xf]
    %v4560 = vld [vmem:[%s12 + $0x3c] sm:$0xf]
    %v4577 = vunpack.c.l.b16 %v4545
    %v4578 = vunpack.c.l.b16 %v4546
    %v4579 = vunpack.c.l.b16 %v4547
    %v4580 = vunpack.c.l.b16 %v4548
    %v4581 = vunpack.c.l.b16 %v4549
    %v4582 = vunpack.c.l.b16 %v4550
    %v4583 = vunpack.c.l.b16 %v4551
    %v4584 = vunpack.c.l.b16 %v4552
    %v4585 = vunpack.c.l.b16 %v4553
    %v4586 = vunpack.c.l.b16 %v4554
    %v4587 = vunpack.c.l.b16 %v4555
    %v4588 = vunpack.c.l.b16 %v4556
    %v4589 = vunpack.c.l.b16 %v4557
    %v4590 = vunpack.c.l.b16 %v4558
    %v4591 = vunpack.c.l.b16 %v4559
    %v4592 = vunpack.c.l.b16 %v4560
    %v4593 = vpack.c.b16 %v4578, %v4577
    %v4594 = vpack.c.b16 %v4580, %v4579
    %v4595 = vpack.c.b16 %v4582, %v4581
    %v4596 = vpack.c.b16 %v4584, %v4583
    %v4597 = vpack.c.b16 %v4586, %v4585
    %v4598 = vpack.c.b16 %v4588, %v4587
    %v4599 = vpack.c.b16 %v4590, %v4589
    %v4600 = vpack.c.b16 %v4592, %v4591
    %4609 = vmatprep.subr.bf16.mxu0 0
    %4610 = vmatpush1.bf16.msra.mxu0 %v4593
    %4611 = vmatprep.subr.bf16.mxu0 0
    %4612 = vmatpush1.bf16.msra.mxu0 %v4594
    %4613 = vmatprep.subr.bf16.mxu0 0
    %4614 = vmatpush1.bf16.msra.mxu0 %v4595
    %4615 = vmatprep.subr.bf16.mxu0 0
    %4616 = vmatpush1.bf16.msra.mxu0 %v4596
    %4617 = vmatprep.subr.bf16.mxu0 0
    %4618 = vmatpush1.bf16.msra.mxu0 %v4597
    %4619 = vmatprep.subr.bf16.mxu0 0
    %4620 = vmatpush1.bf16.msra.mxu0 %v4598
    %4621 = vmatprep.subr.bf16.mxu0 0
    %4622 = vmatpush1.bf16.msra.mxu0 %v4599
    %4623 = vmatprep.subr.bf16.mxu0 0
    %4624 = vmatpush1.bf16.msra.mxu0 %v4600
    %4625 = vmatprep.subr.bf16.mxu0 0
    %4626 = vmatpush1.bf16.msra.mxu0 0
    %4627 = vmatprep.subr.bf16.mxu0 0
    %4628 = vmatpush1.bf16.msra.mxu0 0
    %4629 = vmatprep.subr.bf16.mxu0 0
    %4630 = vmatpush1.bf16.msra.mxu0 0
    %4631 = vmatprep.subr.bf16.mxu0 0
    %4632 = vmatpush1.bf16.msra.mxu0 0
    %4633 = vmatprep.subr.bf16.mxu0 0
    %4634 = vmatpush1.bf16.msra.mxu0 0
    %4635 = vmatprep.subr.bf16.mxu0 0
    %4636 = vmatpush1.bf16.msra.mxu0 0
    %4637 = vmatprep.subr.bf16.mxu0 0
    %4638 = vmatpush1.bf16.msra.mxu0 0
    %4639 = vmatprep.subr.bf16.mxu0 0
    %4640 = vmatpush1.bf16.msra.mxu0 0
    %4641 = vmatprep.mubr.bf16.mxu0 0
    %4642 = vmatmul.mubr.bf16.gmra.mrb[0].mxu0 %v4544
    %v4643 = vpop.f32.mrb[0].mxu0
    %v4644 = vadd.f32 0.0, %v4643
    %v4645 = vpop.f32.mrb[0].mxu0
    %v4646 = vpop.f32.mrb[0].mxu0
    %v4647 = vpop.f32.mrb[0].mxu0
    %4648 = vdwg.mxu0
    %v4649 = vadd.f32 %v4258, %v4644
    %v4650 = vadd.f32 %v4649, %v1869
    %s4651 = scalar_lea.vmem [#allocation14], 32
    %4652 = vst [vmem:[%s4651] sm:$0xff] %v4650
    %s4653 = sld [smem:[#allocation3 + $0x4]]
    %p4654 = scmp.ne.s32.totalorder %s4653, 0
    // Predicated region
    $region102: #{seq2seq_forward.1} parent=1 // pred_check
      %p4655 = pneg %p4654
    $region103: #{seq2seq_forward.1} parent=1 // pred_check_branch
      %4657 = sbr.rel (%p4655) target = $region105
    $region104: #{seq2seq_forward.1} parent=1 // pred_region
      %s4658 = scalar_lea.vmem %s2, 32
      %v4659 = vld [vmem:[%s4658] sm:$0xff]
    $region105: #{seq2seq_forward.1} parent=1 // pred_fallthru
      %v4660 = vphi 0, %v4659
    %p4661 = pneg %p4654
    // Predicated region
    $region106: #{seq2seq_forward.1} parent=1 // pred_check
      _
    $region107: #{seq2seq_forward.1} parent=1 // pred_check_branch
      %4663 = sbr.rel (%p4654) target = $region109
    $region108: #{seq2seq_forward.1} parent=1 // pred_region
      %4664 = vmax.xlane.f32.xlu0 %v4650
      %v4665 = vpop.xlane.xlu0 %4664
      %vm4666 = vcmp.eq.f32.partialorder %v4650, %v4665
      %v4667 = vsel %vm4666, %v128, 128
      %v4668 = vand.u32 %v4667, 65535
      %v4669 = vshra.s32 %v4667, 16
      %v4670 = vcvt.s32.f32 %v4668
      %v4671 = vcvt.s32.f32 %v4669
      %4672 = vmin.xlane.f32.xlu0 %v4671
      %v4673 = vpop.xlane.xlu0 %4672
      %vm4674 = vcmp.eq.f32.partialorder %v4671, %v4673
      %v4675 = vsel %vm4674, %v4670, inf
      %4676 = vmin.xlane.f32.xlu0 %v4675
      %v4677 = vpop.xlane.xlu0 %4676
      %v4678 = vcvt.f32.s32 %v4677
      %v4679 = vcvt.f32.s32 %v4673
      %v4680 = vshll.u32 %v4679, 16
      %v4681 = vadd.s32 %v4680, %v4678
    $region109: #{seq2seq_forward.1} parent=1 // pred_fallthru
      %v4682 = vphi %v4660, %v4681
    %4683 = vset.pattern.permute.xlu0 0
    %4684 = vperm.xlu0 %4683, %v4682
    %v4685 = vpop.permute.xlu0 %4684
    %vm4686 = vcmp.eq.s32.totalorder %v4685, %v128
    %v4687 = vsel %vm4686, 1, 0
    %v4688 = vcvt.s32.f32 %v4687
    %v4689 = vpack.c.bf16 %v4688, %v4688
    %v4690 = vld [vmem:[#allocation10] sm:$0xff]
    %v4691 = vld [vmem:[#allocation10 + $0x8] sm:$0xff]
    %v4692 = vld [vmem:[#allocation10 + $0x10] sm:$0xff]
    %v4693 = vld [vmem:[#allocation10 + $0x18] sm:$0xff]
    %v4694 = vld [vmem:[#allocation10 + $0x20] sm:$0xff]
    %v4695 = vld [vmem:[#allocation10 + $0x28] sm:$0xff]
    %v4696 = vld [vmem:[#allocation10 + $0x30] sm:$0xff]
    %v4697 = vld [vmem:[#allocation10 + $0x38] sm:$0xff]
    %v4698 = vld [vmem:[#allocation10 + $0x40] sm:$0xff]
    %v4699 = vld [vmem:[#allocation10 + $0x48] sm:$0xff]
    %v4700 = vld [vmem:[#allocation10 + $0x50] sm:$0xff]
    %v4701 = vld [vmem:[#allocation10 + $0x58] sm:$0xff]
    %v4702 = vld [vmem:[#allocation10 + $0x60] sm:$0xff]
    %v4703 = vld [vmem:[#allocation10 + $0x68] sm:$0xff]
    %v4704 = vld [vmem:[#allocation10 + $0x70] sm:$0xff]
    %v4705 = vld [vmem:[#allocation10 + $0x78] sm:$0xff]
    %v4706 = vld [vmem:[#allocation10 + $0x80] sm:$0xff]
    %v4707 = vld [vmem:[#allocation10 + $0x88] sm:$0xff]
    %v4708 = vld [vmem:[#allocation10 + $0x90] sm:$0xff]
    %v4709 = vld [vmem:[#allocation10 + $0x98] sm:$0xff]
    %v4710 = vld [vmem:[#allocation10 + $0xa0] sm:$0xff]
    %v4711 = vld [vmem:[#allocation10 + $0xa8] sm:$0xff]
    %v4712 = vld [vmem:[#allocation10 + $0xb0] sm:$0xff]
    %v4713 = vld [vmem:[#allocation10 + $0xb8] sm:$0xff]
    %v4714 = vld [vmem:[#allocation10 + $0xc0] sm:$0xff]
    %v4715 = vld [vmem:[#allocation10 + $0xc8] sm:$0xff]
    %v4716 = vld [vmem:[#allocation10 + $0xd0] sm:$0xff]
    %v4717 = vld [vmem:[#allocation10 + $0xd8] sm:$0xff]
    %v4718 = vld [vmem:[#allocation10 + $0xe0] sm:$0xff]
    %v4719 = vld [vmem:[#allocation10 + $0xe8] sm:$0xff]
    %v4720 = vld [vmem:[#allocation10 + $0xf0] sm:$0xff]
    %v4721 = vld [vmem:[#allocation10 + $0xf8] sm:$0xff]
    %v4754 = vunpack.c.l.b16 %v4690
    %v4755 = vunpack.c.h.b16 %v4690
    %v4756 = vunpack.c.l.b16 %v4691
    %v4757 = vunpack.c.h.b16 %v4691
    %v4758 = vunpack.c.l.b16 %v4692
    %v4759 = vunpack.c.h.b16 %v4692
    %v4760 = vunpack.c.l.b16 %v4693
    %v4761 = vunpack.c.h.b16 %v4693
    %v4762 = vunpack.c.l.b16 %v4694
    %v4763 = vunpack.c.h.b16 %v4694
    %v4764 = vunpack.c.l.b16 %v4695
    %v4765 = vunpack.c.h.b16 %v4695
    %v4766 = vunpack.c.l.b16 %v4696
    %v4767 = vunpack.c.h.b16 %v4696
    %v4768 = vunpack.c.l.b16 %v4697
    %v4769 = vunpack.c.h.b16 %v4697
    %v4770 = vunpack.c.l.b16 %v4698
    %v4771 = vunpack.c.h.b16 %v4698
    %v4772 = vunpack.c.l.b16 %v4699
    %v4773 = vunpack.c.h.b16 %v4699
    %v4774 = vunpack.c.l.b16 %v4700
    %v4775 = vunpack.c.h.b16 %v4700
    %v4776 = vunpack.c.l.b16 %v4701
    %v4777 = vunpack.c.h.b16 %v4701
    %v4778 = vunpack.c.l.b16 %v4702
    %v4779 = vunpack.c.h.b16 %v4702
    %v4780 = vunpack.c.l.b16 %v4703
    %v4781 = vunpack.c.h.b16 %v4703
    %v4782 = vunpack.c.l.b16 %v4704
    %v4783 = vunpack.c.h.b16 %v4704
    %v4784 = vunpack.c.l.b16 %v4705
    %v4785 = vunpack.c.h.b16 %v4705
    %v4786 = vunpack.c.l.b16 %v4706
    %v4787 = vunpack.c.h.b16 %v4706
    %v4788 = vunpack.c.l.b16 %v4707
    %v4789 = vunpack.c.h.b16 %v4707
    %v4790 = vunpack.c.l.b16 %v4708
    %v4791 = vunpack.c.h.b16 %v4708
    %v4792 = vunpack.c.l.b16 %v4709
    %v4793 = vunpack.c.h.b16 %v4709
    %v4794 = vunpack.c.l.b16 %v4710
    %v4795 = vunpack.c.h.b16 %v4710
    %v4796 = vunpack.c.l.b16 %v4711
    %v4797 = vunpack.c.h.b16 %v4711
    %v4798 = vunpack.c.l.b16 %v4712
    %v4799 = vunpack.c.h.b16 %v4712
    %v4800 = vunpack.c.l.b16 %v4713
    %v4801 = vunpack.c.h.b16 %v4713
    %v4802 = vunpack.c.l.b16 %v4714
    %v4803 = vunpack.c.h.b16 %v4714
    %v4804 = vunpack.c.l.b16 %v4715
    %v4805 = vunpack.c.h.b16 %v4715
    %v4806 = vunpack.c.l.b16 %v4716
    %v4807 = vunpack.c.h.b16 %v4716
    %v4808 = vunpack.c.l.b16 %v4717
    %v4809 = vunpack.c.h.b16 %v4717
    %v4810 = vunpack.c.l.b16 %v4718
    %v4811 = vunpack.c.h.b16 %v4718
    %v4812 = vunpack.c.l.b16 %v4719
    %v4813 = vunpack.c.h.b16 %v4719
    %v4814 = vunpack.c.l.b16 %v4720
    %v4815 = vunpack.c.h.b16 %v4720
    %v4816 = vunpack.c.l.b16 %v4721
    %v4817 = vunpack.c.h.b16 %v4721
    %v4818 = vpack.c.b16 %v4758, %v4754
    %v4819 = vpack.c.b16 %v4759, %v4755
    %v4820 = vpack.c.b16 %v4760, %v4756
    %v4821 = vpack.c.b16 %v4761, %v4757
    %v4822 = vpack.c.b16 %v4766, %v4762
    %v4823 = vpack.c.b16 %v4767, %v4763
    %v4824 = vpack.c.b16 %v4768, %v4764
    %v4825 = vpack.c.b16 %v4769, %v4765
    %v4826 = vpack.c.b16 %v4774, %v4770
    %v4827 = vpack.c.b16 %v4775, %v4771
    %v4828 = vpack.c.b16 %v4776, %v4772
    %v4829 = vpack.c.b16 %v4777, %v4773
    %v4830 = vpack.c.b16 %v4782, %v4778
    %v4831 = vpack.c.b16 %v4783, %v4779
    %v4832 = vpack.c.b16 %v4784, %v4780
    %v4833 = vpack.c.b16 %v4785, %v4781
    %v4834 = vpack.c.b16 %v4790, %v4786
    %v4835 = vpack.c.b16 %v4791, %v4787
    %v4836 = vpack.c.b16 %v4792, %v4788
    %v4837 = vpack.c.b16 %v4793, %v4789
    %v4838 = vpack.c.b16 %v4798, %v4794
    %v4839 = vpack.c.b16 %v4799, %v4795
    %v4840 = vpack.c.b16 %v4800, %v4796
    %v4841 = vpack.c.b16 %v4801, %v4797
    %v4842 = vpack.c.b16 %v4806, %v4802
    %v4843 = vpack.c.b16 %v4807, %v4803
    %v4844 = vpack.c.b16 %v4808, %v4804
    %v4845 = vpack.c.b16 %v4809, %v4805
    %v4846 = vpack.c.b16 %v4814, %v4810
    %v4847 = vpack.c.b16 %v4815, %v4811
    %v4848 = vpack.c.b16 %v4816, %v4812
    %v4849 = vpack.c.b16 %v4817, %v4813
    %4882 = vmatprep.subr.bf16.mxu0 %v4819
    %4883 = vmatpush1.bf16.msra.mxu0 %v4818
    %4884 = vmatprep.subr.bf16.mxu0 %v4823
    %4885 = vmatpush1.bf16.msra.mxu0 %v4822
    %4886 = vmatprep.subr.bf16.mxu0 %v4827
    %4887 = vmatpush1.bf16.msra.mxu0 %v4826
    %4888 = vmatprep.subr.bf16.mxu0 %v4831
    %4889 = vmatpush1.bf16.msra.mxu0 %v4830
    %4890 = vmatprep.subr.bf16.mxu0 %v4835
    %4891 = vmatpush1.bf16.msra.mxu0 %v4834
    %4892 = vmatprep.subr.bf16.mxu0 %v4839
    %4893 = vmatpush1.bf16.msra.mxu0 %v4838
    %4894 = vmatprep.subr.bf16.mxu0 %v4843
    %4895 = vmatpush1.bf16.msra.mxu0 %v4842
    %4896 = vmatprep.subr.bf16.mxu0 %v4847
    %4897 = vmatpush1.bf16.msra.mxu0 %v4846
    %4898 = vmatprep.subr.bf16.mxu0 0
    %4899 = vmatpush1.bf16.msra.mxu0 0
    %4900 = vmatprep.subr.bf16.mxu0 0
    %4901 = vmatpush1.bf16.msra.mxu0 0
    %4902 = vmatprep.subr.bf16.mxu0 0
    %4903 = vmatpush1.bf16.msra.mxu0 0
    %4904 = vmatprep.subr.bf16.mxu0 0
    %4905 = vmatpush1.bf16.msra.mxu0 0
    %4906 = vmatprep.subr.bf16.mxu0 0
    %4907 = vmatpush1.bf16.msra.mxu0 0
    %4908 = vmatprep.subr.bf16.mxu0 0
    %4909 = vmatpush1.bf16.msra.mxu0 0
    %4910 = vmatprep.subr.bf16.mxu0 0
    %4911 = vmatpush1.bf16.msra.mxu0 0
    %4912 = vmatprep.subr.bf16.mxu0 0
    %4913 = vmatpush1.bf16.msra.mxu0 0
    %4914 = vmatprep.mubr.bf16.mxu0 0
    %4915 = vmatmul.mubr.bf16.gmra.mrb[0].mxu0 %v4689
    %v4916 = vpop.f32.mrb[0].mxu0
    %v4917 = vadd.f32 0.0, %v4916
    %v4918 = vpop.f32.mrb[0].mxu0
    %v4919 = vadd.f32 0.0, %v4918
    %v4920 = vpop.f32.mrb[0].mxu0
    %v4921 = vpop.f32.mrb[0].mxu0
    %4922 = vdwg.mxu0
    %4923 = vmatprep.subr.bf16.mxu0 %v4821
    %4924 = vmatpush1.bf16.msra.mxu0 %v4820
    %4925 = vmatprep.subr.bf16.mxu0 %v4825
    %4926 = vmatpush1.bf16.msra.mxu0 %v4824
    %4927 = vmatprep.subr.bf16.mxu0 %v4829
    %4928 = vmatpush1.bf16.msra.mxu0 %v4828
    %4929 = vmatprep.subr.bf16.mxu0 %v4833
    %4930 = vmatpush1.bf16.msra.mxu0 %v4832
    %4931 = vmatprep.subr.bf16.mxu0 %v4837
    %4932 = vmatpush1.bf16.msra.mxu0 %v4836
    %4933 = vmatprep.subr.bf16.mxu0 %v4841
    %4934 = vmatpush1.bf16.msra.mxu0 %v4840
    %4935 = vmatprep.subr.bf16.mxu0 %v4845
    %4936 = vmatpush1.bf16.msra.mxu0 %v4844
    %4937 = vmatprep.subr.bf16.mxu0 %v4849
    %4938 = vmatpush1.bf16.msra.mxu0 %v4848
    %4939 = vmatprep.subr.bf16.mxu0 0
    %4940 = vmatpush1.bf16.msra.mxu0 0
    %4941 = vmatprep.subr.bf16.mxu0 0
    %4942 = vmatpush1.bf16.msra.mxu0 0
    %4943 = vmatprep.subr.bf16.mxu0 0
    %4944 = vmatpush1.bf16.msra.mxu0 0
    %4945 = vmatprep.subr.bf16.mxu0 0
    %4946 = vmatpush1.bf16.msra.mxu0 0
    %4947 = vmatprep.subr.bf16.mxu0 0
    %4948 = vmatpush1.bf16.msra.mxu0 0
    %4949 = vmatprep.subr.bf16.mxu0 0
    %4950 = vmatpush1.bf16.msra.mxu0 0
    %4951 = vmatprep.subr.bf16.mxu0 0
    %4952 = vmatpush1.bf16.msra.mxu0 0
    %4953 = vmatprep.subr.bf16.mxu0 0
    %4954 = vmatpush1.bf16.msra.mxu0 0
    %4955 = vmatprep.mubr.bf16.mxu0 0
    %4956 = vmatmul.mubr.bf16.gmra.mrb[0].mxu0 %v4689
    %v4957 = vpop.f32.mrb[0].mxu0
    %v4958 = vadd.f32 0.0, %v4957
    %v4959 = vpop.f32.mrb[0].mxu0
    %v4960 = vadd.f32 0.0, %v4959
    %v4961 = vpop.f32.mrb[0].mxu0
    %v4962 = vpop.f32.mrb[0].mxu0
    %4963 = vdwg.mxu0
    %v4964 = vadd.f32 %v4917, %v1826
    %v4965 = vadd.f32 %v4919, %v1828
    %v4966 = vadd.f32 %v4958, %v1867
    %v4967 = vld [vmem:[#allocation11] sm:$0xff]
    %v4968 = vld [vmem:[#allocation11 + $0x8] sm:$0xf]
    %v4969 = vld [vmem:[#allocation11 + $0xc] sm:$0xff]
    %v4970 = vld [vmem:[#allocation11 + $0x14] sm:$0xf]
    %v4971 = vld [vmem:[#allocation11 + $0x18] sm:$0xff]
    %v4972 = vld [vmem:[#allocation11 + $0x20] sm:$0xf]
    %v4973 = vld [vmem:[#allocation11 + $0x24] sm:$0xff]
    %v4974 = vld [vmem:[#allocation11 + $0x2c] sm:$0xf]
    %v4975 = vld [vmem:[#allocation11 + $0x30] sm:$0xff]
    %v4976 = vld [vmem:[#allocation11 + $0x38] sm:$0xf]
    %v4977 = vld [vmem:[#allocation11 + $0x3c] sm:$0xff]
    %v4978 = vld [vmem:[#allocation11 + $0x44] sm:$0xf]
    %v4979 = vld [vmem:[#allocation11 + $0x48] sm:$0xff]
    %v4980 = vld [vmem:[#allocation11 + $0x50] sm:$0xf]
    %v4981 = vld [vmem:[#allocation11 + $0x54] sm:$0xff]
    %v4982 = vld [vmem:[#allocation11 + $0x5c] sm:$0xf]
    %v4983 = vld [vmem:[#allocation11 + $0x60] sm:$0xff]
    %v4984 = vld [vmem:[#allocation11 + $0x68] sm:$0xf]
    %v4985 = vld [vmem:[#allocation11 + $0x6c] sm:$0xff]
    %v4986 = vld [vmem:[#allocation11 + $0x74] sm:$0xf]
    %v4987 = vld [vmem:[#allocation11 + $0x78] sm:$0xff]
    %v4988 = vld [vmem:[#allocation11 + $0x80] sm:$0xf]
    %v4989 = vld [vmem:[#allocation11 + $0x84] sm:$0xff]
    %v4990 = vld [vmem:[#allocation11 + $0x8c] sm:$0xf]
    %v4991 = vld [vmem:[#allocation11 + $0x90] sm:$0xff]
    %v4992 = vld [vmem:[#allocation11 + $0x98] sm:$0xf]
    %v4993 = vld [vmem:[#allocation11 + $0x9c] sm:$0xff]
    %v4994 = vld [vmem:[#allocation11 + $0xa4] sm:$0xf]
    %v4995 = vld [vmem:[#allocation11 + $0xa8] sm:$0xff]
    %v4996 = vld [vmem:[#allocation11 + $0xb0] sm:$0xf]
    %v4997 = vld [vmem:[#allocation11 + $0xb4] sm:$0xff]
    %v4998 = vld [vmem:[#allocation11 + $0xbc] sm:$0xf]
    %v4999 = vld [vmem:[%s9] sm:$0x7]
    %v5001 = vlaneseq
    %v5002 = vshrl.u32 %v5001, 7
    %v5003 = vsub.s32 0, %v5002
    %v5004 = vrot.slane %v4999, %v5003
    %v5005 = vlaneseq
    %v5006 = vshrl.u32 %v5005, 7
    %v5007 = vsub.s32 1, %v5006
    %v5008 = vrot.slane %v4999, %v5007
    %v5009 = vlaneseq
    %v5010 = vshrl.u32 %v5009, 7
    %v5011 = vsub.s32 2, %v5010
    %v5012 = vrot.slane %v4999, %v5011
    %v5048 = vunpack.c.l.b16 %v4967
    %v5049 = vunpack.c.h.b16 %v4967
    %v5050 = vunpack.c.l.b16 %v4968
    %v5051 = vunpack.c.l.b16 %v4969
    %v5052 = vunpack.c.h.b16 %v4969
    %v5053 = vunpack.c.l.b16 %v4970
    %v5054 = vunpack.c.l.b16 %v4971
    %v5055 = vunpack.c.h.b16 %v4971
    %v5056 = vunpack.c.l.b16 %v4972
    %v5057 = vunpack.c.l.b16 %v4973
    %v5058 = vunpack.c.h.b16 %v4973
    %v5059 = vunpack.c.l.b16 %v4974
    %v5060 = vunpack.c.l.b16 %v4975
    %v5061 = vunpack.c.h.b16 %v4975
    %v5062 = vunpack.c.l.b16 %v4976
    %v5063 = vunpack.c.l.b16 %v4977
    %v5064 = vunpack.c.h.b16 %v4977
    %v5065 = vunpack.c.l.b16 %v4978
    %v5066 = vunpack.c.l.b16 %v4979
    %v5067 = vunpack.c.h.b16 %v4979
    %v5068 = vunpack.c.l.b16 %v4980
    %v5069 = vunpack.c.l.b16 %v4981
    %v5070 = vunpack.c.h.b16 %v4981
    %v5071 = vunpack.c.l.b16 %v4982
    %v5072 = vunpack.c.l.b16 %v4983
    %v5073 = vunpack.c.h.b16 %v4983
    %v5074 = vunpack.c.l.b16 %v4984
    %v5075 = vunpack.c.l.b16 %v4985
    %v5076 = vunpack.c.h.b16 %v4985
    %v5077 = vunpack.c.l.b16 %v4986
    %v5078 = vunpack.c.l.b16 %v4987
    %v5079 = vunpack.c.h.b16 %v4987
    %v5080 = vunpack.c.l.b16 %v4988
    %v5081 = vunpack.c.l.b16 %v4989
    %v5082 = vunpack.c.h.b16 %v4989
    %v5083 = vunpack.c.l.b16 %v4990
    %v5084 = vunpack.c.l.b16 %v4991
    %v5085 = vunpack.c.h.b16 %v4991
    %v5086 = vunpack.c.l.b16 %v4992
    %v5087 = vunpack.c.l.b16 %v4993
    %v5088 = vunpack.c.h.b16 %v4993
    %v5089 = vunpack.c.l.b16 %v4994
    %v5090 = vunpack.c.l.b16 %v4995
    %v5091 = vunpack.c.h.b16 %v4995
    %v5092 = vunpack.c.l.b16 %v4996
    %v5093 = vunpack.c.l.b16 %v4997
    %v5094 = vunpack.c.h.b16 %v4997
    %v5095 = vunpack.c.l.b16 %v4998
    %v5096 = vpack.c.b16 %v5051, %v5048
    %v5097 = vpack.c.b16 %v5052, %v5049
    %v5098 = vpack.c.b16 %v5053, %v5050
    %v5099 = vpack.c.b16 %v5057, %v5054
    %v5100 = vpack.c.b16 %v5058, %v5055
    %v5101 = vpack.c.b16 %v5059, %v5056
    %v5102 = vpack.c.b16 %v5063, %v5060
    %v5103 = vpack.c.b16 %v5064, %v5061
    %v5104 = vpack.c.b16 %v5065, %v5062
    %v5105 = vpack.c.b16 %v5069, %v5066
    %v5106 = vpack.c.b16 %v5070, %v5067
    %v5107 = vpack.c.b16 %v5071, %v5068
    %v5108 = vpack.c.b16 %v5075, %v5072
    %v5109 = vpack.c.b16 %v5076, %v5073
    %v5110 = vpack.c.b16 %v5077, %v5074
    %v5111 = vpack.c.b16 %v5081, %v5078
    %v5112 = vpack.c.b16 %v5082, %v5079
    %v5113 = vpack.c.b16 %v5083, %v5080
    %v5114 = vpack.c.b16 %v5087, %v5084
    %v5115 = vpack.c.b16 %v5088, %v5085
    %v5116 = vpack.c.b16 %v5089, %v5086
    %v5117 = vpack.c.b16 %v5093, %v5090
    %v5118 = vpack.c.b16 %v5094, %v5091
    %v5119 = vpack.c.b16 %v5095, %v5092
    %5144 = vmatprep.subr.bf16.mxu0 %v5097
    %5145 = vmatpush1.bf16.msra.mxu0 %v5096
    %5146 = vmatprep.subr.bf16.mxu0 %v5100
    %5147 = vmatpush1.bf16.msra.mxu0 %v5099
    %5148 = vmatprep.subr.bf16.mxu0 %v5103
    %5149 = vmatpush1.bf16.msra.mxu0 %v5102
    %5150 = vmatprep.subr.bf16.mxu0 %v5106
    %5151 = vmatpush1.bf16.msra.mxu0 %v5105
    %5152 = vmatprep.subr.bf16.mxu0 %v5109
    %5153 = vmatpush1.bf16.msra.mxu0 %v5108
    %5154 = vmatprep.subr.bf16.mxu0 %v5112
    %5155 = vmatpush1.bf16.msra.mxu0 %v5111
    %5156 = vmatprep.subr.bf16.mxu0 %v5115
    %5157 = vmatpush1.bf16.msra.mxu0 %v5114
    %5158 = vmatprep.subr.bf16.mxu0 %v5118
    %5159 = vmatpush1.bf16.msra.mxu0 %v5117
    %5160 = vmatprep.subr.bf16.mxu0 0
    %5161 = vmatpush1.bf16.msra.mxu0 0
    %5162 = vmatprep.subr.bf16.mxu0 0
    %5163 = vmatpush1.bf16.msra.mxu0 0
    %5164 = vmatprep.subr.bf16.mxu0 0
    %5165 = vmatpush1.bf16.msra.mxu0 0
    %5166 = vmatprep.subr.bf16.mxu0 0
    %5167 = vmatpush1.bf16.msra.mxu0 0
    %5168 = vmatprep.subr.bf16.mxu0 0
    %5169 = vmatpush1.bf16.msra.mxu0 0
    %5170 = vmatprep.subr.bf16.mxu0 0
    %5171 = vmatpush1.bf16.msra.mxu0 0
    %5172 = vmatprep.subr.bf16.mxu0 0
    %5173 = vmatpush1.bf16.msra.mxu0 0
    %5174 = vmatprep.subr.bf16.mxu0 0
    %5175 = vmatpush1.bf16.msra.mxu0 0
    %5176 = vmatprep.mubr.bf16.mxu0 0
    %5177 = vmatmul.mubr.bf16.gmra.mrb[0].mxu0 %v4544
    %v5178 = vpop.f32.mrb[0].mxu0
    %v5179 = vadd.f32 %v5004, %v5178
    %v5180 = vpop.f32.mrb[0].mxu0
    %v5181 = vadd.f32 %v5008, %v5180
    %v5182 = vpop.f32.mrb[0].mxu0
    %v5183 = vpop.f32.mrb[0].mxu0
    %5184 = vdwg.mxu0
    %5185 = vmatprep.subr.bf16.mxu0 0
    %5186 = vmatpush1.bf16.msra.mxu0 %v5098
    %5187 = vmatprep.subr.bf16.mxu0 0
    %5188 = vmatpush1.bf16.msra.mxu0 %v5101
    %5189 = vmatprep.subr.bf16.mxu0 0
    %5190 = vmatpush1.bf16.msra.mxu0 %v5104
    %5191 = vmatprep.subr.bf16.mxu0 0
    %5192 = vmatpush1.bf16.msra.mxu0 %v5107
    %5193 = vmatprep.subr.bf16.mxu0 0
    %5194 = vmatpush1.bf16.msra.mxu0 %v5110
    %5195 = vmatprep.subr.bf16.mxu0 0
    %5196 = vmatpush1.bf16.msra.mxu0 %v5113
    %5197 = vmatprep.subr.bf16.mxu0 0
    %5198 = vmatpush1.bf16.msra.mxu0 %v5116
    %5199 = vmatprep.subr.bf16.mxu0 0
    %5200 = vmatpush1.bf16.msra.mxu0 %v5119
    %5201 = vmatprep.subr.bf16.mxu0 0
    %5202 = vmatpush1.bf16.msra.mxu0 0
    %5203 = vmatprep.subr.bf16.mxu0 0
    %5204 = vmatpush1.bf16.msra.mxu0 0
    %5205 = vmatprep.subr.bf16.mxu0 0
    %5206 = vmatpush1.bf16.msra.mxu0 0
    %5207 = vmatprep.subr.bf16.mxu0 0
    %5208 = vmatpush1.bf16.msra.mxu0 0
    %5209 = vmatprep.subr.bf16.mxu0 0
    %5210 = vmatpush1.bf16.msra.mxu0 0
    %5211 = vmatprep.subr.bf16.mxu0 0
    %5212 = vmatpush1.bf16.msra.mxu0 0
    %5213 = vmatprep.subr.bf16.mxu0 0
    %5214 = vmatpush1.bf16.msra.mxu0 0
    %5215 = vmatprep.subr.bf16.mxu0 0
    %5216 = vmatpush1.bf16.msra.mxu0 0
    %5217 = vmatprep.mubr.bf16.mxu0 0
    %5218 = vmatmul.mubr.bf16.gmra.mrb[0].mxu0 %v4544
    %v5219 = vpop.f32.mrb[0].mxu0
    %v5220 = vadd.f32 %v5012, %v5219
    %v5221 = vpop.f32.mrb[0].mxu0
    %v5222 = vpop.f32.mrb[0].mxu0
    %v5223 = vpop.f32.mrb[0].mxu0
    %5224 = vdwg.mxu0
    %v5225 = vadd.f32 %v4964, %v5179
    %v5226 = vadd.f32 %v4965, %v5181
    %v5227 = vxor.u32 %v5225, 2147483648
    %v5228 = vxor.u32 %v5226, 2147483648
    %v5229 = vmul.f32 %v5227, 1.442695
    %v5230 = vpow.pop %v5229
    %v5231 = vmul.f32 %v5228, 1.442695
    %v5232 = vpow.pop %v5231
    %v5233 = vadd.f32 %v5230, 1.0
    %v5234 = vadd.f32 %v5232, 1.0
    %v5235 = vrcp.pop %v5233
    %v5236 = vmul.f32 1.0, %v5235
    %v5237 = vrcp.pop %v5234
    %v5238 = vmul.f32 1.0, %v5237
    %v5239 = vmul.f32 %v5236, %v5220
    %v5240 = vadd.f32 %v4966, %v5239
    %v5241 = vtanh.pop %v5240
    %v5242 = vsub.f32 1.0, %v5238
    %v5243 = vmul.f32 %v5242, %v5241
    %v5244 = vmul.f32 %v5238, %v4543
    %v5245 = vadd.f32 %v5243, %v5244
    %v5246 = vpack.c.bf16 %v5245, %v5245
    %v5247 = vld [vmem:[%s12] sm:$0xf]
    %v5248 = vld [vmem:[%s12 + $0x4] sm:$0xf]
    %v5249 = vld [vmem:[%s12 + $0x8] sm:$0xf]
    %v5250 = vld [vmem:[%s12 + $0xc] sm:$0xf]
    %v5251 = vld [vmem:[%s12 + $0x10] sm:$0xf]
    %v5252 = vld [vmem:[%s12 + $0x14] sm:$0xf]
    %v5253 = vld [vmem:[%s12 + $0x18] sm:$0xf]
    %v5254 = vld [vmem:[%s12 + $0x1c] sm:$0xf]
    %v5255 = vld [vmem:[%s12 + $0x20] sm:$0xf]
    %v5256 = vld [vmem:[%s12 + $0x24] sm:$0xf]
    %v5257 = vld [vmem:[%s12 + $0x28] sm:$0xf]
    %v5258 = vld [vmem:[%s12 + $0x2c] sm:$0xf]
    %v5259 = vld [vmem:[%s12 + $0x30] sm:$0xf]
    %v5260 = vld [vmem:[%s12 + $0x34] sm:$0xf]
    %v5261 = vld [vmem:[%s12 + $0x38] sm:$0xf]
    %v5262 = vld [vmem:[%s12 + $0x3c] sm:$0xf]
    %v5279 = vunpack.c.l.b16 %v5247
    %v5280 = vunpack.c.l.b16 %v5248
    %v5281 = vunpack.c.l.b16 %v5249
    %v5282 = vunpack.c.l.b16 %v5250
    %v5283 = vunpack.c.l.b16 %v5251
    %v5284 = vunpack.c.l.b16 %v5252
    %v5285 = vunpack.c.l.b16 %v5253
    %v5286 = vunpack.c.l.b16 %v5254
    %v5287 = vunpack.c.l.b16 %v5255
    %v5288 = vunpack.c.l.b16 %v5256
    %v5289 = vunpack.c.l.b16 %v5257
    %v5290 = vunpack.c.l.b16 %v5258
    %v5291 = vunpack.c.l.b16 %v5259
    %v5292 = vunpack.c.l.b16 %v5260
    %v5293 = vunpack.c.l.b16 %v5261
    %v5294 = vunpack.c.l.b16 %v5262
    %v5295 = vpack.c.b16 %v5280, %v5279
    %v5296 = vpack.c.b16 %v5282, %v5281
    %v5297 = vpack.c.b16 %v5284, %v5283
    %v5298 = vpack.c.b16 %v5286, %v5285
    %v5299 = vpack.c.b16 %v5288, %v5287
    %v5300 = vpack.c.b16 %v5290, %v5289
    %v5301 = vpack.c.b16 %v5292, %v5291
    %v5302 = vpack.c.b16 %v5294, %v5293
    %5311 = vmatprep.subr.bf16.mxu0 0
    %5312 = vmatpush1.bf16.msra.mxu0 %v5295
    %5313 = vmatprep.subr.bf16.mxu0 0
    %5314 = vmatpush1.bf16.msra.mxu0 %v5296
    %5315 = vmatprep.subr.bf16.mxu0 0
    %5316 = vmatpush1.bf16.msra.mxu0 %v5297
    %5317 = vmatprep.subr.bf16.mxu0 0
    %5318 = vmatpush1.bf16.msra.mxu0 %v5298
    %5319 = vmatprep.subr.bf16.mxu0 0
    %5320 = vmatpush1.bf16.msra.mxu0 %v5299
    %5321 = vmatprep.subr.bf16.mxu0 0
    %5322 = vmatpush1.bf16.msra.mxu0 %v5300
    %5323 = vmatprep.subr.bf16.mxu0 0
    %5324 = vmatpush1.bf16.msra.mxu0 %v5301
    %5325 = vmatprep.subr.bf16.mxu0 0
    %5326 = vmatpush1.bf16.msra.mxu0 %v5302
    %5327 = vmatprep.subr.bf16.mxu0 0
    %5328 = vmatpush1.bf16.msra.mxu0 0
    %5329 = vmatprep.subr.bf16.mxu0 0
    %5330 = vmatpush1.bf16.msra.mxu0 0
    %5331 = vmatprep.subr.bf16.mxu0 0
    %5332 = vmatpush1.bf16.msra.mxu0 0
    %5333 = vmatprep.subr.bf16.mxu0 0
    %5334 = vmatpush1.bf16.msra.mxu0 0
    %5335 = vmatprep.subr.bf16.mxu0 0
    %5336 = vmatpush1.bf16.msra.mxu0 0
    %5337 = vmatprep.subr.bf16.mxu0 0
    %5338 = vmatpush1.bf16.msra.mxu0 0
    %5339 = vmatprep.subr.bf16.mxu0 0
    %5340 = vmatpush1.bf16.msra.mxu0 0
    %5341 = vmatprep.subr.bf16.mxu0 0
    %5342 = vmatpush1.bf16.msra.mxu0 0
    %5343 = vmatprep.mubr.bf16.mxu0 0
    %5344 = vmatmul.mubr.bf16.gmra.mrb[0].mxu0 %v5246
    %v5345 = vpop.f32.mrb[0].mxu0
    %v5346 = vadd.f32 0.0, %v5345
    %v5347 = vpop.f32.mrb[0].mxu0
    %v5348 = vpop.f32.mrb[0].mxu0
    %v5349 = vpop.f32.mrb[0].mxu0
    %5350 = vdwg.mxu0
    %v5351 = vadd.f32 %v4960, %v5346
    %v5352 = vadd.f32 %v5351, %v1869
    %s5353 = scalar_lea.vmem [#allocation14], 40
    %5354 = vst [vmem:[%s5353] sm:$0xff] %v5352
    %s5355 = sld [smem:[#allocation3 + $0x5]]
    %p5356 = scmp.ne.s32.totalorder %s5355, 0
    // Predicated region
    $region110: #{seq2seq_forward.1} parent=1 // pred_check
      %p5357 = pneg %p5356
    $region111: #{seq2seq_forward.1} parent=1 // pred_check_branch
      %5359 = sbr.rel (%p5357) target = $region113
    $region112: #{seq2seq_forward.1} parent=1 // pred_region
      %s5360 = scalar_lea.vmem %s2, 40
      %v5361 = vld [vmem:[%s5360] sm:$0xff]
    $region113: #{seq2seq_forward.1} parent=1 // pred_fallthru
      %v5362 = vphi 0, %v5361
    %p5363 = pneg %p5356
    // Predicated region
    $region114: #{seq2seq_forward.1} parent=1 // pred_check
      _
    $region115: #{seq2seq_forward.1} parent=1 // pred_check_branch
      %5365 = sbr.rel (%p5356) target = $region117
    $region116: #{seq2seq_forward.1} parent=1 // pred_region
      %5366 = vmax.xlane.f32.xlu0 %v5352
      %v5367 = vpop.xlane.xlu0 %5366
      %vm5368 = vcmp.eq.f32.partialorder %v5352, %v5367
      %v5369 = vsel %vm5368, %v128, 128
      %v5370 = vand.u32 %v5369, 65535
      %v5371 = vshra.s32 %v5369, 16
      %v5372 = vcvt.s32.f32 %v5370
      %v5373 = vcvt.s32.f32 %v5371
      %5374 = vmin.xlane.f32.xlu0 %v5373
      %v5375 = vpop.xlane.xlu0 %5374
      %vm5376 = vcmp.eq.f32.partialorder %v5373, %v5375
      %v5377 = vsel %vm5376, %v5372, inf
      %5378 = vmin.xlane.f32.xlu0 %v5377
      %v5379 = vpop.xlane.xlu0 %5378
      %v5380 = vcvt.f32.s32 %v5379
      %v5381 = vcvt.f32.s32 %v5375
      %v5382 = vshll.u32 %v5381, 16
      %v5383 = vadd.s32 %v5382, %v5380
    $region117: #{seq2seq_forward.1} parent=1 // pred_fallthru
      %v5384 = vphi %v5362, %v5383
    %5385 = vset.pattern.permute.xlu0 0
    %5386 = vperm.xlu0 %5385, %v5384
    %v5387 = vpop.permute.xlu0 %5386
    %vm5388 = vcmp.eq.s32.totalorder %v5387, %v128
    %v5389 = vsel %vm5388, 1, 0
    %v5390 = vcvt.s32.f32 %v5389
    %v5391 = vpack.c.bf16 %v5390, %v5390
    %v5392 = vld [vmem:[#allocation10] sm:$0xff]
    %v5393 = vld [vmem:[#allocation10 + $0x8] sm:$0xff]
    %v5394 = vld [vmem:[#allocation10 + $0x10] sm:$0xff]
    %v5395 = vld [vmem:[#allocation10 + $0x18] sm:$0xff]
    %v5396 = vld [vmem:[#allocation10 + $0x20] sm:$0xff]
    %v5397 = vld [vmem:[#allocation10 + $0x28] sm:$0xff]
    %v5398 = vld [vmem:[#allocation10 + $0x30] sm:$0xff]
    %v5399 = vld [vmem:[#allocation10 + $0x38] sm:$0xff]
    %v5400 = vld [vmem:[#allocation10 + $0x40] sm:$0xff]
    %v5401 = vld [vmem:[#allocation10 + $0x48] sm:$0xff]
    %v5402 = vld [vmem:[#allocation10 + $0x50] sm:$0xff]
    %v5403 = vld [vmem:[#allocation10 + $0x58] sm:$0xff]
    %v5404 = vld [vmem:[#allocation10 + $0x60] sm:$0xff]
    %v5405 = vld [vmem:[#allocation10 + $0x68] sm:$0xff]
    %v5406 = vld [vmem:[#allocation10 + $0x70] sm:$0xff]
    %v5407 = vld [vmem:[#allocation10 + $0x78] sm:$0xff]
    %v5408 = vld [vmem:[#allocation10 + $0x80] sm:$0xff]
    %v5409 = vld [vmem:[#allocation10 + $0x88] sm:$0xff]
    %v5410 = vld [vmem:[#allocation10 + $0x90] sm:$0xff]
    %v5411 = vld [vmem:[#allocation10 + $0x98] sm:$0xff]
    %v5412 = vld [vmem:[#allocation10 + $0xa0] sm:$0xff]
    %v5413 = vld [vmem:[#allocation10 + $0xa8] sm:$0xff]
    %v5414 = vld [vmem:[#allocation10 + $0xb0] sm:$0xff]
    %v5415 = vld [vmem:[#allocation10 + $0xb8] sm:$0xff]
    %v5416 = vld [vmem:[#allocation10 + $0xc0] sm:$0xff]
    %v5417 = vld [vmem:[#allocation10 + $0xc8] sm:$0xff]
    %v5418 = vld [vmem:[#allocation10 + $0xd0] sm:$0xff]
    %v5419 = vld [vmem:[#allocation10 + $0xd8] sm:$0xff]
    %v5420 = vld [vmem:[#allocation10 + $0xe0] sm:$0xff]
    %v5421 = vld [vmem:[#allocation10 + $0xe8] sm:$0xff]
    %v5422 = vld [vmem:[#allocation10 + $0xf0] sm:$0xff]
    %v5423 = vld [vmem:[#allocation10 + $0xf8] sm:$0xff]
    %v5456 = vunpack.c.l.b16 %v5392
    %v5457 = vunpack.c.h.b16 %v5392
    %v5458 = vunpack.c.l.b16 %v5393
    %v5459 = vunpack.c.h.b16 %v5393
    %v5460 = vunpack.c.l.b16 %v5394
    %v5461 = vunpack.c.h.b16 %v5394
    %v5462 = vunpack.c.l.b16 %v5395
    %v5463 = vunpack.c.h.b16 %v5395
    %v5464 = vunpack.c.l.b16 %v5396
    %v5465 = vunpack.c.h.b16 %v5396
    %v5466 = vunpack.c.l.b16 %v5397
    %v5467 = vunpack.c.h.b16 %v5397
    %v5468 = vunpack.c.l.b16 %v5398
    %v5469 = vunpack.c.h.b16 %v5398
    %v5470 = vunpack.c.l.b16 %v5399
    %v5471 = vunpack.c.h.b16 %v5399
    %v5472 = vunpack.c.l.b16 %v5400
    %v5473 = vunpack.c.h.b16 %v5400
    %v5474 = vunpack.c.l.b16 %v5401
    %v5475 = vunpack.c.h.b16 %v5401
    %v5476 = vunpack.c.l.b16 %v5402
    %v5477 = vunpack.c.h.b16 %v5402
    %v5478 = vunpack.c.l.b16 %v5403
    %v5479 = vunpack.c.h.b16 %v5403
    %v5480 = vunpack.c.l.b16 %v5404
    %v5481 = vunpack.c.h.b16 %v5404
    %v5482 = vunpack.c.l.b16 %v5405
    %v5483 = vunpack.c.h.b16 %v5405
    %v5484 = vunpack.c.l.b16 %v5406
    %v5485 = vunpack.c.h.b16 %v5406
    %v5486 = vunpack.c.l.b16 %v5407
    %v5487 = vunpack.c.h.b16 %v5407
    %v5488 = vunpack.c.l.b16 %v5408
    %v5489 = vunpack.c.h.b16 %v5408
    %v5490 = vunpack.c.l.b16 %v5409
    %v5491 = vunpack.c.h.b16 %v5409
    %v5492 = vunpack.c.l.b16 %v5410
    %v5493 = vunpack.c.h.b16 %v5410
    %v5494 = vunpack.c.l.b16 %v5411
    %v5495 = vunpack.c.h.b16 %v5411
    %v5496 = vunpack.c.l.b16 %v5412
    %v5497 = vunpack.c.h.b16 %v5412
    %v5498 = vunpack.c.l.b16 %v5413
    %v5499 = vunpack.c.h.b16 %v5413
    %v5500 = vunpack.c.l.b16 %v5414
    %v5501 = vunpack.c.h.b16 %v5414
    %v5502 = vunpack.c.l.b16 %v5415
    %v5503 = vunpack.c.h.b16 %v5415
    %v5504 = vunpack.c.l.b16 %v5416
    %v5505 = vunpack.c.h.b16 %v5416
    %v5506 = vunpack.c.l.b16 %v5417
    %v5507 = vunpack.c.h.b16 %v5417
    %v5508 = vunpack.c.l.b16 %v5418
    %v5509 = vunpack.c.h.b16 %v5418
    %v5510 = vunpack.c.l.b16 %v5419
    %v5511 = vunpack.c.h.b16 %v5419
    %v5512 = vunpack.c.l.b16 %v5420
    %v5513 = vunpack.c.h.b16 %v5420
    %v5514 = vunpack.c.l.b16 %v5421
    %v5515 = vunpack.c.h.b16 %v5421
    %v5516 = vunpack.c.l.b16 %v5422
    %v5517 = vunpack.c.h.b16 %v5422
    %v5518 = vunpack.c.l.b16 %v5423
    %v5519 = vunpack.c.h.b16 %v5423
    %v5520 = vpack.c.b16 %v5460, %v5456
    %v5521 = vpack.c.b16 %v5461, %v5457
    %v5522 = vpack.c.b16 %v5462, %v5458
    %v5523 = vpack.c.b16 %v5463, %v5459
    %v5524 = vpack.c.b16 %v5468, %v5464
    %v5525 = vpack.c.b16 %v5469, %v5465
    %v5526 = vpack.c.b16 %v5470, %v5466
    %v5527 = vpack.c.b16 %v5471, %v5467
    %v5528 = vpack.c.b16 %v5476, %v5472
    %v5529 = vpack.c.b16 %v5477, %v5473
    %v5530 = vpack.c.b16 %v5478, %v5474
    %v5531 = vpack.c.b16 %v5479, %v5475
    %v5532 = vpack.c.b16 %v5484, %v5480
    %v5533 = vpack.c.b16 %v5485, %v5481
    %v5534 = vpack.c.b16 %v5486, %v5482
    %v5535 = vpack.c.b16 %v5487, %v5483
    %v5536 = vpack.c.b16 %v5492, %v5488
    %v5537 = vpack.c.b16 %v5493, %v5489
    %v5538 = vpack.c.b16 %v5494, %v5490
    %v5539 = vpack.c.b16 %v5495, %v5491
    %v5540 = vpack.c.b16 %v5500, %v5496
    %v5541 = vpack.c.b16 %v5501, %v5497
    %v5542 = vpack.c.b16 %v5502, %v5498
    %v5543 = vpack.c.b16 %v5503, %v5499
    %v5544 = vpack.c.b16 %v5508, %v5504
    %v5545 = vpack.c.b16 %v5509, %v5505
    %v5546 = vpack.c.b16 %v5510, %v5506
    %v5547 = vpack.c.b16 %v5511, %v5507
    %v5548 = vpack.c.b16 %v5516, %v5512
    %v5549 = vpack.c.b16 %v5517, %v5513
    %v5550 = vpack.c.b16 %v5518, %v5514
    %v5551 = vpack.c.b16 %v5519, %v5515
    %5584 = vmatprep.subr.bf16.mxu0 %v5521
    %5585 = vmatpush1.bf16.msra.mxu0 %v5520
    %5586 = vmatprep.subr.bf16.mxu0 %v5525
    %5587 = vmatpush1.bf16.msra.mxu0 %v5524
    %5588 = vmatprep.subr.bf16.mxu0 %v5529
    %5589 = vmatpush1.bf16.msra.mxu0 %v5528
    %5590 = vmatprep.subr.bf16.mxu0 %v5533
    %5591 = vmatpush1.bf16.msra.mxu0 %v5532
    %5592 = vmatprep.subr.bf16.mxu0 %v5537
    %5593 = vmatpush1.bf16.msra.mxu0 %v5536
    %5594 = vmatprep.subr.bf16.mxu0 %v5541
    %5595 = vmatpush1.bf16.msra.mxu0 %v5540
    %5596 = vmatprep.subr.bf16.mxu0 %v5545
    %5597 = vmatpush1.bf16.msra.mxu0 %v5544
    %5598 = vmatprep.subr.bf16.mxu0 %v5549
    %5599 = vmatpush1.bf16.msra.mxu0 %v5548
    %5600 = vmatprep.subr.bf16.mxu0 0
    %5601 = vmatpush1.bf16.msra.mxu0 0
    %5602 = vmatprep.subr.bf16.mxu0 0
    %5603 = vmatpush1.bf16.msra.mxu0 0
    %5604 = vmatprep.subr.bf16.mxu0 0
    %5605 = vmatpush1.bf16.msra.mxu0 0
    %5606 = vmatprep.subr.bf16.mxu0 0
    %5607 = vmatpush1.bf16.msra.mxu0 0
    %5608 = vmatprep.subr.bf16.mxu0 0
    %5609 = vmatpush1.bf16.msra.mxu0 0
    %5610 = vmatprep.subr.bf16.mxu0 0
    %5611 = vmatpush1.bf16.msra.mxu0 0
    %5612 = vmatprep.subr.bf16.mxu0 0
    %5613 = vmatpush1.bf16.msra.mxu0 0
    %5614 = vmatprep.subr.bf16.mxu0 0
    %5615 = vmatpush1.bf16.msra.mxu0 0
    %5616 = vmatprep.mubr.bf16.mxu0 0
    %5617 = vmatmul.mubr.bf16.gmra.mrb[0].mxu0 %v5391
    %v5618 = vpop.f32.mrb[0].mxu0
    %v5619 = vadd.f32 0.0, %v5618
    %v5620 = vpop.f32.mrb[0].mxu0
    %v5621 = vadd.f32 0.0, %v5620
    %v5622 = vpop.f32.mrb[0].mxu0
    %v5623 = vpop.f32.mrb[0].mxu0
    %5624 = vdwg.mxu0
    %5625 = vmatprep.subr.bf16.mxu0 %v5523
    %5626 = vmatpush1.bf16.msra.mxu0 %v5522
    %5627 = vmatprep.subr.bf16.mxu0 %v5527
    %5628 = vmatpush1.bf16.msra.mxu0 %v5526
    %5629 = vmatprep.subr.bf16.mxu0 %v5531
    %5630 = vmatpush1.bf16.msra.mxu0 %v5530
    %5631 = vmatprep.subr.bf16.mxu0 %v5535
    %5632 = vmatpush1.bf16.msra.mxu0 %v5534
    %5633 = vmatprep.subr.bf16.mxu0 %v5539
    %5634 = vmatpush1.bf16.msra.mxu0 %v5538
    %5635 = vmatprep.subr.bf16.mxu0 %v5543
    %5636 = vmatpush1.bf16.msra.mxu0 %v5542
    %5637 = vmatprep.subr.bf16.mxu0 %v5547
    %5638 = vmatpush1.bf16.msra.mxu0 %v5546
    %5639 = vmatprep.subr.bf16.mxu0 %v5551
    %5640 = vmatpush1.bf16.msra.mxu0 %v5550
    %5641 = vmatprep.subr.bf16.mxu0 0
    %5642 = vmatpush1.bf16.msra.mxu0 0
    %5643 = vmatprep.subr.bf16.mxu0 0
    %5644 = vmatpush1.bf16.msra.mxu0 0
    %5645 = vmatprep.subr.bf16.mxu0 0
    %5646 = vmatpush1.bf16.msra.mxu0 0
    %5647 = vmatprep.subr.bf16.mxu0 0
    %5648 = vmatpush1.bf16.msra.mxu0 0
    %5649 = vmatprep.subr.bf16.mxu0 0
    %5650 = vmatpush1.bf16.msra.mxu0 0
    %5651 = vmatprep.subr.bf16.mxu0 0
    %5652 = vmatpush1.bf16.msra.mxu0 0
    %5653 = vmatprep.subr.bf16.mxu0 0
    %5654 = vmatpush1.bf16.msra.mxu0 0
    %5655 = vmatprep.subr.bf16.mxu0 0
    %5656 = vmatpush1.bf16.msra.mxu0 0
    %5657 = vmatprep.mubr.bf16.mxu0 0
    %5658 = vmatmul.mubr.bf16.gmra.mrb[0].mxu0 %v5391
    %v5659 = vpop.f32.mrb[0].mxu0
    %v5660 = vadd.f32 0.0, %v5659
    %v5661 = vpop.f32.mrb[0].mxu0
    %v5662 = vadd.f32 0.0, %v5661
    %v5663 = vpop.f32.mrb[0].mxu0
    %v5664 = vpop.f32.mrb[0].mxu0
    %5665 = vdwg.mxu0
    %v5666 = vadd.f32 %v5619, %v1826
    %v5667 = vadd.f32 %v5621, %v1828
    %v5668 = vadd.f32 %v5660, %v1867
    %v5669 = vld [vmem:[#allocation11] sm:$0xff]
    %v5670 = vld [vmem:[#allocation11 + $0x8] sm:$0xf]
    %v5671 = vld [vmem:[#allocation11 + $0xc] sm:$0xff]
    %v5672 = vld [vmem:[#allocation11 + $0x14] sm:$0xf]
    %v5673 = vld [vmem:[#allocation11 + $0x18] sm:$0xff]
    %v5674 = vld [vmem:[#allocation11 + $0x20] sm:$0xf]
    %v5675 = vld [vmem:[#allocation11 + $0x24] sm:$0xff]
    %v5676 = vld [vmem:[#allocation11 + $0x2c] sm:$0xf]
    %v5677 = vld [vmem:[#allocation11 + $0x30] sm:$0xff]
    %v5678 = vld [vmem:[#allocation11 + $0x38] sm:$0xf]
    %v5679 = vld [vmem:[#allocation11 + $0x3c] sm:$0xff]
    %v5680 = vld [vmem:[#allocation11 + $0x44] sm:$0xf]
    %v5681 = vld [vmem:[#allocation11 + $0x48] sm:$0xff]
    %v5682 = vld [vmem:[#allocation11 + $0x50] sm:$0xf]
    %v5683 = vld [vmem:[#allocation11 + $0x54] sm:$0xff]
    %v5684 = vld [vmem:[#allocation11 + $0x5c] sm:$0xf]
    %v5685 = vld [vmem:[#allocation11 + $0x60] sm:$0xff]
    %v5686 = vld [vmem:[#allocation11 + $0x68] sm:$0xf]
    %v5687 = vld [vmem:[#allocation11 + $0x6c] sm:$0xff]
    %v5688 = vld [vmem:[#allocation11 + $0x74] sm:$0xf]
    %v5689 = vld [vmem:[#allocation11 + $0x78] sm:$0xff]
    %v5690 = vld [vmem:[#allocation11 + $0x80] sm:$0xf]
    %v5691 = vld [vmem:[#allocation11 + $0x84] sm:$0xff]
    %v5692 = vld [vmem:[#allocation11 + $0x8c] sm:$0xf]
    %v5693 = vld [vmem:[#allocation11 + $0x90] sm:$0xff]
    %v5694 = vld [vmem:[#allocation11 + $0x98] sm:$0xf]
    %v5695 = vld [vmem:[#allocation11 + $0x9c] sm:$0xff]
    %v5696 = vld [vmem:[#allocation11 + $0xa4] sm:$0xf]
    %v5697 = vld [vmem:[#allocation11 + $0xa8] sm:$0xff]
    %v5698 = vld [vmem:[#allocation11 + $0xb0] sm:$0xf]
    %v5699 = vld [vmem:[#allocation11 + $0xb4] sm:$0xff]
    %v5700 = vld [vmem:[#allocation11 + $0xbc] sm:$0xf]
    %v5701 = vld [vmem:[%s9] sm:$0x7]
    %v5703 = vlaneseq
    %v5704 = vshrl.u32 %v5703, 7
    %v5705 = vsub.s32 0, %v5704
    %v5706 = vrot.slane %v5701, %v5705
    %v5707 = vlaneseq
    %v5708 = vshrl.u32 %v5707, 7
    %v5709 = vsub.s32 1, %v5708
    %v5710 = vrot.slane %v5701, %v5709
    %v5711 = vlaneseq
    %v5712 = vshrl.u32 %v5711, 7
    %v5713 = vsub.s32 2, %v5712
    %v5714 = vrot.slane %v5701, %v5713
    %v5750 = vunpack.c.l.b16 %v5669
    %v5751 = vunpack.c.h.b16 %v5669
    %v5752 = vunpack.c.l.b16 %v5670
    %v5753 = vunpack.c.l.b16 %v5671
    %v5754 = vunpack.c.h.b16 %v5671
    %v5755 = vunpack.c.l.b16 %v5672
    %v5756 = vunpack.c.l.b16 %v5673
    %v5757 = vunpack.c.h.b16 %v5673
    %v5758 = vunpack.c.l.b16 %v5674
    %v5759 = vunpack.c.l.b16 %v5675
    %v5760 = vunpack.c.h.b16 %v5675
    %v5761 = vunpack.c.l.b16 %v5676
    %v5762 = vunpack.c.l.b16 %v5677
    %v5763 = vunpack.c.h.b16 %v5677
    %v5764 = vunpack.c.l.b16 %v5678
    %v5765 = vunpack.c.l.b16 %v5679
    %v5766 = vunpack.c.h.b16 %v5679
    %v5767 = vunpack.c.l.b16 %v5680
    %v5768 = vunpack.c.l.b16 %v5681
    %v5769 = vunpack.c.h.b16 %v5681
    %v5770 = vunpack.c.l.b16 %v5682
    %v5771 = vunpack.c.l.b16 %v5683
    %v5772 = vunpack.c.h.b16 %v5683
    %v5773 = vunpack.c.l.b16 %v5684
    %v5774 = vunpack.c.l.b16 %v5685
    %v5775 = vunpack.c.h.b16 %v5685
    %v5776 = vunpack.c.l.b16 %v5686
    %v5777 = vunpack.c.l.b16 %v5687
    %v5778 = vunpack.c.h.b16 %v5687
    %v5779 = vunpack.c.l.b16 %v5688
    %v5780 = vunpack.c.l.b16 %v5689
    %v5781 = vunpack.c.h.b16 %v5689
    %v5782 = vunpack.c.l.b16 %v5690
    %v5783 = vunpack.c.l.b16 %v5691
    %v5784 = vunpack.c.h.b16 %v5691
    %v5785 = vunpack.c.l.b16 %v5692
    %v5786 = vunpack.c.l.b16 %v5693
    %v5787 = vunpack.c.h.b16 %v5693
    %v5788 = vunpack.c.l.b16 %v5694
    %v5789 = vunpack.c.l.b16 %v5695
    %v5790 = vunpack.c.h.b16 %v5695
    %v5791 = vunpack.c.l.b16 %v5696
    %v5792 = vunpack.c.l.b16 %v5697
    %v5793 = vunpack.c.h.b16 %v5697
    %v5794 = vunpack.c.l.b16 %v5698
    %v5795 = vunpack.c.l.b16 %v5699
    %v5796 = vunpack.c.h.b16 %v5699
    %v5797 = vunpack.c.l.b16 %v5700
    %v5798 = vpack.c.b16 %v5753, %v5750
    %v5799 = vpack.c.b16 %v5754, %v5751
    %v5800 = vpack.c.b16 %v5755, %v5752
    %v5801 = vpack.c.b16 %v5759, %v5756
    %v5802 = vpack.c.b16 %v5760, %v5757
    %v5803 = vpack.c.b16 %v5761, %v5758
    %v5804 = vpack.c.b16 %v5765, %v5762
    %v5805 = vpack.c.b16 %v5766, %v5763
    %v5806 = vpack.c.b16 %v5767, %v5764
    %v5807 = vpack.c.b16 %v5771, %v5768
    %v5808 = vpack.c.b16 %v5772, %v5769
    %v5809 = vpack.c.b16 %v5773, %v5770
    %v5810 = vpack.c.b16 %v5777, %v5774
    %v5811 = vpack.c.b16 %v5778, %v5775
    %v5812 = vpack.c.b16 %v5779, %v5776
    %v5813 = vpack.c.b16 %v5783, %v5780
    %v5814 = vpack.c.b16 %v5784, %v5781
    %v5815 = vpack.c.b16 %v5785, %v5782
    %v5816 = vpack.c.b16 %v5789, %v5786
    %v5817 = vpack.c.b16 %v5790, %v5787
    %v5818 = vpack.c.b16 %v5791, %v5788
    %v5819 = vpack.c.b16 %v5795, %v5792
    %v5820 = vpack.c.b16 %v5796, %v5793
    %v5821 = vpack.c.b16 %v5797, %v5794
    %5846 = vmatprep.subr.bf16.mxu0 %v5799
    %5847 = vmatpush1.bf16.msra.mxu0 %v5798
    %5848 = vmatprep.subr.bf16.mxu0 %v5802
    %5849 = vmatpush1.bf16.msra.mxu0 %v5801
    %5850 = vmatprep.subr.bf16.mxu0 %v5805
    %5851 = vmatpush1.bf16.msra.mxu0 %v5804
    %5852 = vmatprep.subr.bf16.mxu0 %v5808
    %5853 = vmatpush1.bf16.msra.mxu0 %v5807
    %5854 = vmatprep.subr.bf16.mxu0 %v5811
    %5855 = vmatpush1.bf16.msra.mxu0 %v5810
    %5856 = vmatprep.subr.bf16.mxu0 %v5814
    %5857 = vmatpush1.bf16.msra.mxu0 %v5813
    %5858 = vmatprep.subr.bf16.mxu0 %v5817
    %5859 = vmatpush1.bf16.msra.mxu0 %v5816
    %5860 = vmatprep.subr.bf16.mxu0 %v5820
    %5861 = vmatpush1.bf16.msra.mxu0 %v5819
    %5862 = vmatprep.subr.bf16.mxu0 0
    %5863 = vmatpush1.bf16.msra.mxu0 0
    %5864 = vmatprep.subr.bf16.mxu0 0
    %5865 = vmatpush1.bf16.msra.mxu0 0
    %5866 = vmatprep.subr.bf16.mxu0 0
    %5867 = vmatpush1.bf16.msra.mxu0 0
    %5868 = vmatprep.subr.bf16.mxu0 0
    %5869 = vmatpush1.bf16.msra.mxu0 0
    %5870 = vmatprep.subr.bf16.mxu0 0
    %5871 = vmatpush1.bf16.msra.mxu0 0
    %5872 = vmatprep.subr.bf16.mxu0 0
    %5873 = vmatpush1.bf16.msra.mxu0 0
    %5874 = vmatprep.subr.bf16.mxu0 0
    %5875 = vmatpush1.bf16.msra.mxu0 0
    %5876 = vmatprep.subr.bf16.mxu0 0
    %5877 = vmatpush1.bf16.msra.mxu0 0
    %5878 = vmatprep.mubr.bf16.mxu0 0
    %5879 = vmatmul.mubr.bf16.gmra.mrb[0].mxu0 %v5246
    %v5880 = vpop.f32.mrb[0].mxu0
    %v5881 = vadd.f32 %v5706, %v5880
    %v5882 = vpop.f32.mrb[0].mxu0
    %v5883 = vadd.f32 %v5710, %v5882
    %v5884 = vpop.f32.mrb[0].mxu0
    %v5885 = vpop.f32.mrb[0].mxu0
    %5886 = vdwg.mxu0
    %5887 = vmatprep.subr.bf16.mxu0 0
    %5888 = vmatpush1.bf16.msra.mxu0 %v5800
    %5889 = vmatprep.subr.bf16.mxu0 0
    %5890 = vmatpush1.bf16.msra.mxu0 %v5803
    %5891 = vmatprep.subr.bf16.mxu0 0
    %5892 = vmatpush1.bf16.msra.mxu0 %v5806
    %5893 = vmatprep.subr.bf16.mxu0 0
    %5894 = vmatpush1.bf16.msra.mxu0 %v5809
    %5895 = vmatprep.subr.bf16.mxu0 0
    %5896 = vmatpush1.bf16.msra.mxu0 %v5812
    %5897 = vmatprep.subr.bf16.mxu0 0
    %5898 = vmatpush1.bf16.msra.mxu0 %v5815
    %5899 = vmatprep.subr.bf16.mxu0 0
    %5900 = vmatpush1.bf16.msra.mxu0 %v5818
    %5901 = vmatprep.subr.bf16.mxu0 0
    %5902 = vmatpush1.bf16.msra.mxu0 %v5821
    %5903 = vmatprep.subr.bf16.mxu0 0
    %5904 = vmatpush1.bf16.msra.mxu0 0
    %5905 = vmatprep.subr.bf16.mxu0 0
    %5906 = vmatpush1.bf16.msra.mxu0 0
    %5907 = vmatprep.subr.bf16.mxu0 0
    %5908 = vmatpush1.bf16.msra.mxu0 0
    %5909 = vmatprep.subr.bf16.mxu0 0
    %5910 = vmatpush1.bf16.msra.mxu0 0
    %5911 = vmatprep.subr.bf16.mxu0 0
    %5912 = vmatpush1.bf16.msra.mxu0 0
    %5913 = vmatprep.subr.bf16.mxu0 0
    %5914 = vmatpush1.bf16.msra.mxu0 0
    %5915 = vmatprep.subr.bf16.mxu0 0
    %5916 = vmatpush1.bf16.msra.mxu0 0
    %5917 = vmatprep.subr.bf16.mxu0 0
    %5918 = vmatpush1.bf16.msra.mxu0 0
    %5919 = vmatprep.mubr.bf16.mxu0 0
    %5920 = vmatmul.mubr.bf16.gmra.mrb[0].mxu0 %v5246
    %v5921 = vpop.f32.mrb[0].mxu0
    %v5922 = vadd.f32 %v5714, %v5921
    %v5923 = vpop.f32.mrb[0].mxu0
    %v5924 = vpop.f32.mrb[0].mxu0
    %v5925 = vpop.f32.mrb[0].mxu0
    %5926 = vdwg.mxu0
    %v5927 = vadd.f32 %v5666, %v5881
    %v5928 = vadd.f32 %v5667, %v5883
    %v5929 = vxor.u32 %v5927, 2147483648
    %v5930 = vxor.u32 %v5928, 2147483648
    %v5931 = vmul.f32 %v5929, 1.442695
    %v5932 = vpow.pop %v5931
    %v5933 = vmul.f32 %v5930, 1.442695
    %v5934 = vpow.pop %v5933
    %v5935 = vadd.f32 %v5932, 1.0
    %v5936 = vadd.f32 %v5934, 1.0
    %v5937 = vrcp.pop %v5935
    %v5938 = vmul.f32 1.0, %v5937
    %v5939 = vrcp.pop %v5936
    %v5940 = vmul.f32 1.0, %v5939
    %v5941 = vmul.f32 %v5938, %v5922
    %v5942 = vadd.f32 %v5668, %v5941
    %v5943 = vtanh.pop %v5942
    %v5944 = vsub.f32 1.0, %v5940
    %v5945 = vmul.f32 %v5944, %v5943
    %v5946 = vmul.f32 %v5940, %v5245
    %v5947 = vadd.f32 %v5945, %v5946
    %v5948 = vpack.c.bf16 %v5947, %v5947
    %v5949 = vld [vmem:[%s12] sm:$0xf]
    %v5950 = vld [vmem:[%s12 + $0x4] sm:$0xf]
    %v5951 = vld [vmem:[%s12 + $0x8] sm:$0xf]
    %v5952 = vld [vmem:[%s12 + $0xc] sm:$0xf]
    %v5953 = vld [vmem:[%s12 + $0x10] sm:$0xf]
    %v5954 = vld [vmem:[%s12 + $0x14] sm:$0xf]
    %v5955 = vld [vmem:[%s12 + $0x18] sm:$0xf]
    %v5956 = vld [vmem:[%s12 + $0x1c] sm:$0xf]
    %v5957 = vld [vmem:[%s12 + $0x20] sm:$0xf]
    %v5958 = vld [vmem:[%s12 + $0x24] sm:$0xf]
    %v5959 = vld [vmem:[%s12 + $0x28] sm:$0xf]
    %v5960 = vld [vmem:[%s12 + $0x2c] sm:$0xf]
    %v5961 = vld [vmem:[%s12 + $0x30] sm:$0xf]
    %v5962 = vld [vmem:[%s12 + $0x34] sm:$0xf]
    %v5963 = vld [vmem:[%s12 + $0x38] sm:$0xf]
    %v5964 = vld [vmem:[%s12 + $0x3c] sm:$0xf]
    %v5981 = vunpack.c.l.b16 %v5949
    %v5982 = vunpack.c.l.b16 %v5950
    %v5983 = vunpack.c.l.b16 %v5951
    %v5984 = vunpack.c.l.b16 %v5952
    %v5985 = vunpack.c.l.b16 %v5953
    %v5986 = vunpack.c.l.b16 %v5954
    %v5987 = vunpack.c.l.b16 %v5955
    %v5988 = vunpack.c.l.b16 %v5956
    %v5989 = vunpack.c.l.b16 %v5957
    %v5990 = vunpack.c.l.b16 %v5958
    %v5991 = vunpack.c.l.b16 %v5959
    %v5992 = vunpack.c.l.b16 %v5960
    %v5993 = vunpack.c.l.b16 %v5961
    %v5994 = vunpack.c.l.b16 %v5962
    %v5995 = vunpack.c.l.b16 %v5963
    %v5996 = vunpack.c.l.b16 %v5964
    %v5997 = vpack.c.b16 %v5982, %v5981
    %v5998 = vpack.c.b16 %v5984, %v5983
    %v5999 = vpack.c.b16 %v5986, %v5985
    %v6000 = vpack.c.b16 %v5988, %v5987
    %v6001 = vpack.c.b16 %v5990, %v5989
    %v6002 = vpack.c.b16 %v5992, %v5991
    %v6003 = vpack.c.b16 %v5994, %v5993
    %v6004 = vpack.c.b16 %v5996, %v5995
    %6013 = vmatprep.subr.bf16.mxu0 0
    %6014 = vmatpush1.bf16.msra.mxu0 %v5997
    %6015 = vmatprep.subr.bf16.mxu0 0
    %6016 = vmatpush1.bf16.msra.mxu0 %v5998
    %6017 = vmatprep.subr.bf16.mxu0 0
    %6018 = vmatpush1.bf16.msra.mxu0 %v5999
    %6019 = vmatprep.subr.bf16.mxu0 0
    %6020 = vmatpush1.bf16.msra.mxu0 %v6000
    %6021 = vmatprep.subr.bf16.mxu0 0
    %6022 = vmatpush1.bf16.msra.mxu0 %v6001
    %6023 = vmatprep.subr.bf16.mxu0 0
    %6024 = vmatpush1.bf16.msra.mxu0 %v6002
    %6025 = vmatprep.subr.bf16.mxu0 0
    %6026 = vmatpush1.bf16.msra.mxu0 %v6003
    %6027 = vmatprep.subr.bf16.mxu0 0
    %6028 = vmatpush1.bf16.msra.mxu0 %v6004
    %6029 = vmatprep.subr.bf16.mxu0 0
    %6030 = vmatpush1.bf16.msra.mxu0 0
    %6031 = vmatprep.subr.bf16.mxu0 0
    %6032 = vmatpush1.bf16.msra.mxu0 0
    %6033 = vmatprep.subr.bf16.mxu0 0
    %6034 = vmatpush1.bf16.msra.mxu0 0
    %6035 = vmatprep.subr.bf16.mxu0 0
    %6036 = vmatpush1.bf16.msra.mxu0 0
    %6037 = vmatprep.subr.bf16.mxu0 0
    %6038 = vmatpush1.bf16.msra.mxu0 0
    %6039 = vmatprep.subr.bf16.mxu0 0
    %6040 = vmatpush1.bf16.msra.mxu0 0
    %6041 = vmatprep.subr.bf16.mxu0 0
    %6042 = vmatpush1.bf16.msra.mxu0 0
    %6043 = vmatprep.subr.bf16.mxu0 0
    %6044 = vmatpush1.bf16.msra.mxu0 0
    %6045 = vmatprep.mubr.bf16.mxu0 0
    %6046 = vmatmul.mubr.bf16.gmra.mrb[0].mxu0 %v5948
    %v6047 = vpop.f32.mrb[0].mxu0
    %v6048 = vadd.f32 0.0, %v6047
    %v6049 = vpop.f32.mrb[0].mxu0
    %v6050 = vpop.f32.mrb[0].mxu0
    %v6051 = vpop.f32.mrb[0].mxu0
    %6052 = vdwg.mxu0
    %v6053 = vadd.f32 %v5662, %v6048
    %v6054 = vadd.f32 %v6053, %v1869
    %s6055 = scalar_lea.vmem [#allocation14], 48
    %6056 = vst [vmem:[%s6055] sm:$0xff] %v6054
    %s6057 = sld [smem:[#allocation3 + $0x6]]
    %p6058 = scmp.ne.s32.totalorder %s6057, 0
    // Predicated region
    $region118: #{seq2seq_forward.1} parent=1 // pred_check
      %p6059 = pneg %p6058
    $region119: #{seq2seq_forward.1} parent=1 // pred_check_branch
      %6061 = sbr.rel (%p6059) target = $region121
    $region120: #{seq2seq_forward.1} parent=1 // pred_region
      %s6062 = scalar_lea.vmem %s2, 48
      %v6063 = vld [vmem:[%s6062] sm:$0xff]
    $region121: #{seq2seq_forward.1} parent=1 // pred_fallthru
      %v6064 = vphi 0, %v6063
    %p6065 = pneg %p6058
    // Predicated region
    $region122: #{seq2seq_forward.1} parent=1 // pred_check
      _
    $region123: #{seq2seq_forward.1} parent=1 // pred_check_branch
      %6067 = sbr.rel (%p6058) target = $region125
    $region124: #{seq2seq_forward.1} parent=1 // pred_region
      %6068 = vmax.xlane.f32.xlu0 %v6054
      %v6069 = vpop.xlane.xlu0 %6068
      %vm6070 = vcmp.eq.f32.partialorder %v6054, %v6069
      %v6071 = vsel %vm6070, %v128, 128
      %v6072 = vand.u32 %v6071, 65535
      %v6073 = vshra.s32 %v6071, 16
      %v6074 = vcvt.s32.f32 %v6072
      %v6075 = vcvt.s32.f32 %v6073
      %6076 = vmin.xlane.f32.xlu0 %v6075
      %v6077 = vpop.xlane.xlu0 %6076
      %vm6078 = vcmp.eq.f32.partialorder %v6075, %v6077
      %v6079 = vsel %vm6078, %v6074, inf
      %6080 = vmin.xlane.f32.xlu0 %v6079
      %v6081 = vpop.xlane.xlu0 %6080
      %v6082 = vcvt.f32.s32 %v6081
      %v6083 = vcvt.f32.s32 %v6077
      %v6084 = vshll.u32 %v6083, 16
      %v6085 = vadd.s32 %v6084, %v6082
    $region125: #{seq2seq_forward.1} parent=1 // pred_fallthru
      %v6086 = vphi %v6064, %v6085
    %6087 = vset.pattern.permute.xlu0 0
    %6088 = vperm.xlu0 %6087, %v6086
    %v6089 = vpop.permute.xlu0 %6088
    %vm6090 = vcmp.eq.s32.totalorder %v6089, %v128
    %v6091 = vsel %vm6090, 1, 0
    %v6092 = vcvt.s32.f32 %v6091
    %v6093 = vpack.c.bf16 %v6092, %v6092
    %v6094 = vld [vmem:[#allocation10] sm:$0xff]
    %v6095 = vld [vmem:[#allocation10 + $0x8] sm:$0xff]
    %v6096 = vld [vmem:[#allocation10 + $0x10] sm:$0xff]
    %v6097 = vld [vmem:[#allocation10 + $0x18] sm:$0xff]
    %v6098 = vld [vmem:[#allocation10 + $0x20] sm:$0xff]
    %v6099 = vld [vmem:[#allocation10 + $0x28] sm:$0xff]
    %v6100 = vld [vmem:[#allocation10 + $0x30] sm:$0xff]
    %v6101 = vld [vmem:[#allocation10 + $0x38] sm:$0xff]
    %v6102 = vld [vmem:[#allocation10 + $0x40] sm:$0xff]
    %v6103 = vld [vmem:[#allocation10 + $0x48] sm:$0xff]
    %v6104 = vld [vmem:[#allocation10 + $0x50] sm:$0xff]
    %v6105 = vld [vmem:[#allocation10 + $0x58] sm:$0xff]
    %v6106 = vld [vmem:[#allocation10 + $0x60] sm:$0xff]
    %v6107 = vld [vmem:[#allocation10 + $0x68] sm:$0xff]
    %v6108 = vld [vmem:[#allocation10 + $0x70] sm:$0xff]
    %v6109 = vld [vmem:[#allocation10 + $0x78] sm:$0xff]
    %v6110 = vld [vmem:[#allocation10 + $0x80] sm:$0xff]
    %v6111 = vld [vmem:[#allocation10 + $0x88] sm:$0xff]
    %v6112 = vld [vmem:[#allocation10 + $0x90] sm:$0xff]
    %v6113 = vld [vmem:[#allocation10 + $0x98] sm:$0xff]
    %v6114 = vld [vmem:[#allocation10 + $0xa0] sm:$0xff]
    %v6115 = vld [vmem:[#allocation10 + $0xa8] sm:$0xff]
    %v6116 = vld [vmem:[#allocation10 + $0xb0] sm:$0xff]
    %v6117 = vld [vmem:[#allocation10 + $0xb8] sm:$0xff]
    %v6118 = vld [vmem:[#allocation10 + $0xc0] sm:$0xff]
    %v6119 = vld [vmem:[#allocation10 + $0xc8] sm:$0xff]
    %v6120 = vld [vmem:[#allocation10 + $0xd0] sm:$0xff]
    %v6121 = vld [vmem:[#allocation10 + $0xd8] sm:$0xff]
    %v6122 = vld [vmem:[#allocation10 + $0xe0] sm:$0xff]
    %v6123 = vld [vmem:[#allocation10 + $0xe8] sm:$0xff]
    %v6124 = vld [vmem:[#allocation10 + $0xf0] sm:$0xff]
    %v6125 = vld [vmem:[#allocation10 + $0xf8] sm:$0xff]
    %v6158 = vunpack.c.l.b16 %v6094
    %v6159 = vunpack.c.h.b16 %v6094
    %v6160 = vunpack.c.l.b16 %v6095
    %v6161 = vunpack.c.h.b16 %v6095
    %v6162 = vunpack.c.l.b16 %v6096
    %v6163 = vunpack.c.h.b16 %v6096
    %v6164 = vunpack.c.l.b16 %v6097
    %v6165 = vunpack.c.h.b16 %v6097
    %v6166 = vunpack.c.l.b16 %v6098
    %v6167 = vunpack.c.h.b16 %v6098
    %v6168 = vunpack.c.l.b16 %v6099
    %v6169 = vunpack.c.h.b16 %v6099
    %v6170 = vunpack.c.l.b16 %v6100
    %v6171 = vunpack.c.h.b16 %v6100
    %v6172 = vunpack.c.l.b16 %v6101
    %v6173 = vunpack.c.h.b16 %v6101
    %v6174 = vunpack.c.l.b16 %v6102
    %v6175 = vunpack.c.h.b16 %v6102
    %v6176 = vunpack.c.l.b16 %v6103
    %v6177 = vunpack.c.h.b16 %v6103
    %v6178 = vunpack.c.l.b16 %v6104
    %v6179 = vunpack.c.h.b16 %v6104
    %v6180 = vunpack.c.l.b16 %v6105
    %v6181 = vunpack.c.h.b16 %v6105
    %v6182 = vunpack.c.l.b16 %v6106
    %v6183 = vunpack.c.h.b16 %v6106
    %v6184 = vunpack.c.l.b16 %v6107
    %v6185 = vunpack.c.h.b16 %v6107
    %v6186 = vunpack.c.l.b16 %v6108
    %v6187 = vunpack.c.h.b16 %v6108
    %v6188 = vunpack.c.l.b16 %v6109
    %v6189 = vunpack.c.h.b16 %v6109
    %v6190 = vunpack.c.l.b16 %v6110
    %v6191 = vunpack.c.h.b16 %v6110
    %v6192 = vunpack.c.l.b16 %v6111
    %v6193 = vunpack.c.h.b16 %v6111
    %v6194 = vunpack.c.l.b16 %v6112
    %v6195 = vunpack.c.h.b16 %v6112
    %v6196 = vunpack.c.l.b16 %v6113
    %v6197 = vunpack.c.h.b16 %v6113
    %v6198 = vunpack.c.l.b16 %v6114
    %v6199 = vunpack.c.h.b16 %v6114
    %v6200 = vunpack.c.l.b16 %v6115
    %v6201 = vunpack.c.h.b16 %v6115
    %v6202 = vunpack.c.l.b16 %v6116
    %v6203 = vunpack.c.h.b16 %v6116
    %v6204 = vunpack.c.l.b16 %v6117
    %v6205 = vunpack.c.h.b16 %v6117
    %v6206 = vunpack.c.l.b16 %v6118
    %v6207 = vunpack.c.h.b16 %v6118
    %v6208 = vunpack.c.l.b16 %v6119
    %v6209 = vunpack.c.h.b16 %v6119
    %v6210 = vunpack.c.l.b16 %v6120
    %v6211 = vunpack.c.h.b16 %v6120
    %v6212 = vunpack.c.l.b16 %v6121
    %v6213 = vunpack.c.h.b16 %v6121
    %v6214 = vunpack.c.l.b16 %v6122
    %v6215 = vunpack.c.h.b16 %v6122
    %v6216 = vunpack.c.l.b16 %v6123
    %v6217 = vunpack.c.h.b16 %v6123
    %v6218 = vunpack.c.l.b16 %v6124
    %v6219 = vunpack.c.h.b16 %v6124
    %v6220 = vunpack.c.l.b16 %v6125
    %v6221 = vunpack.c.h.b16 %v6125
    %v6222 = vpack.c.b16 %v6162, %v6158
    %v6223 = vpack.c.b16 %v6163, %v6159
    %v6224 = vpack.c.b16 %v6164, %v6160
    %v6225 = vpack.c.b16 %v6165, %v6161
    %v6226 = vpack.c.b16 %v6170, %v6166
    %v6227 = vpack.c.b16 %v6171, %v6167
    %v6228 = vpack.c.b16 %v6172, %v6168
    %v6229 = vpack.c.b16 %v6173, %v6169
    %v6230 = vpack.c.b16 %v6178, %v6174
    %v6231 = vpack.c.b16 %v6179, %v6175
    %v6232 = vpack.c.b16 %v6180, %v6176
    %v6233 = vpack.c.b16 %v6181, %v6177
    %v6234 = vpack.c.b16 %v6186, %v6182
    %v6235 = vpack.c.b16 %v6187, %v6183
    %v6236 = vpack.c.b16 %v6188, %v6184
    %v6237 = vpack.c.b16 %v6189, %v6185
    %v6238 = vpack.c.b16 %v6194, %v6190
    %v6239 = vpack.c.b16 %v6195, %v6191
    %v6240 = vpack.c.b16 %v6196, %v6192
    %v6241 = vpack.c.b16 %v6197, %v6193
    %v6242 = vpack.c.b16 %v6202, %v6198
    %v6243 = vpack.c.b16 %v6203, %v6199
    %v6244 = vpack.c.b16 %v6204, %v6200
    %v6245 = vpack.c.b16 %v6205, %v6201
    %v6246 = vpack.c.b16 %v6210, %v6206
    %v6247 = vpack.c.b16 %v6211, %v6207
    %v6248 = vpack.c.b16 %v6212, %v6208
    %v6249 = vpack.c.b16 %v6213, %v6209
    %v6250 = vpack.c.b16 %v6218, %v6214
    %v6251 = vpack.c.b16 %v6219, %v6215
    %v6252 = vpack.c.b16 %v6220, %v6216
    %v6253 = vpack.c.b16 %v6221, %v6217
    %6286 = vmatprep.subr.bf16.mxu0 %v6223
    %6287 = vmatpush1.bf16.msra.mxu0 %v6222
    %6288 = vmatprep.subr.bf16.mxu0 %v6227
    %6289 = vmatpush1.bf16.msra.mxu0 %v6226
    %6290 = vmatprep.subr.bf16.mxu0 %v6231
    %6291 = vmatpush1.bf16.msra.mxu0 %v6230
    %6292 = vmatprep.subr.bf16.mxu0 %v6235
    %6293 = vmatpush1.bf16.msra.mxu0 %v6234
    %6294 = vmatprep.subr.bf16.mxu0 %v6239
    %6295 = vmatpush1.bf16.msra.mxu0 %v6238
    %6296 = vmatprep.subr.bf16.mxu0 %v6243
    %6297 = vmatpush1.bf16.msra.mxu0 %v6242
    %6298 = vmatprep.subr.bf16.mxu0 %v6247
    %6299 = vmatpush1.bf16.msra.mxu0 %v6246
    %6300 = vmatprep.subr.bf16.mxu0 %v6251
    %6301 = vmatpush1.bf16.msra.mxu0 %v6250
    %6302 = vmatprep.subr.bf16.mxu0 0
    %6303 = vmatpush1.bf16.msra.mxu0 0
    %6304 = vmatprep.subr.bf16.mxu0 0
    %6305 = vmatpush1.bf16.msra.mxu0 0
    %6306 = vmatprep.subr.bf16.mxu0 0
    %6307 = vmatpush1.bf16.msra.mxu0 0
    %6308 = vmatprep.subr.bf16.mxu0 0
    %6309 = vmatpush1.bf16.msra.mxu0 0
    %6310 = vmatprep.subr.bf16.mxu0 0
    %6311 = vmatpush1.bf16.msra.mxu0 0
    %6312 = vmatprep.subr.bf16.mxu0 0
    %6313 = vmatpush1.bf16.msra.mxu0 0
    %6314 = vmatprep.subr.bf16.mxu0 0
    %6315 = vmatpush1.bf16.msra.mxu0 0
    %6316 = vmatprep.subr.bf16.mxu0 0
    %6317 = vmatpush1.bf16.msra.mxu0 0
    %6318 = vmatprep.mubr.bf16.mxu0 0
    %6319 = vmatmul.mubr.bf16.gmra.mrb[0].mxu0 %v6093
    %v6320 = vpop.f32.mrb[0].mxu0
    %v6321 = vadd.f32 0.0, %v6320
    %v6322 = vpop.f32.mrb[0].mxu0
    %v6323 = vadd.f32 0.0, %v6322
    %v6324 = vpop.f32.mrb[0].mxu0
    %v6325 = vpop.f32.mrb[0].mxu0
    %6326 = vdwg.mxu0
    %6327 = vmatprep.subr.bf16.mxu0 %v6225
    %6328 = vmatpush1.bf16.msra.mxu0 %v6224
    %6329 = vmatprep.subr.bf16.mxu0 %v6229
    %6330 = vmatpush1.bf16.msra.mxu0 %v6228
    %6331 = vmatprep.subr.bf16.mxu0 %v6233
    %6332 = vmatpush1.bf16.msra.mxu0 %v6232
    %6333 = vmatprep.subr.bf16.mxu0 %v6237
    %6334 = vmatpush1.bf16.msra.mxu0 %v6236
    %6335 = vmatprep.subr.bf16.mxu0 %v6241
    %6336 = vmatpush1.bf16.msra.mxu0 %v6240
    %6337 = vmatprep.subr.bf16.mxu0 %v6245
    %6338 = vmatpush1.bf16.msra.mxu0 %v6244
    %6339 = vmatprep.subr.bf16.mxu0 %v6249
    %6340 = vmatpush1.bf16.msra.mxu0 %v6248
    %6341 = vmatprep.subr.bf16.mxu0 %v6253
    %6342 = vmatpush1.bf16.msra.mxu0 %v6252
    %6343 = vmatprep.subr.bf16.mxu0 0
    %6344 = vmatpush1.bf16.msra.mxu0 0
    %6345 = vmatprep.subr.bf16.mxu0 0
    %6346 = vmatpush1.bf16.msra.mxu0 0
    %6347 = vmatprep.subr.bf16.mxu0 0
    %6348 = vmatpush1.bf16.msra.mxu0 0
    %6349 = vmatprep.subr.bf16.mxu0 0
    %6350 = vmatpush1.bf16.msra.mxu0 0
    %6351 = vmatprep.subr.bf16.mxu0 0
    %6352 = vmatpush1.bf16.msra.mxu0 0
    %6353 = vmatprep.subr.bf16.mxu0 0
    %6354 = vmatpush1.bf16.msra.mxu0 0
    %6355 = vmatprep.subr.bf16.mxu0 0
    %6356 = vmatpush1.bf16.msra.mxu0 0
    %6357 = vmatprep.subr.bf16.mxu0 0
    %6358 = vmatpush1.bf16.msra.mxu0 0
    %6359 = vmatprep.mubr.bf16.mxu0 0
    %6360 = vmatmul.mubr.bf16.gmra.mrb[0].mxu0 %v6093
    %v6361 = vpop.f32.mrb[0].mxu0
    %v6362 = vadd.f32 0.0, %v6361
    %v6363 = vpop.f32.mrb[0].mxu0
    %v6364 = vadd.f32 0.0, %v6363
    %v6365 = vpop.f32.mrb[0].mxu0
    %v6366 = vpop.f32.mrb[0].mxu0
    %6367 = vdwg.mxu0
    %v6368 = vadd.f32 %v6321, %v1826
    %v6369 = vadd.f32 %v6323, %v1828
    %v6370 = vadd.f32 %v6362, %v1867
    %v6371 = vld [vmem:[#allocation11] sm:$0xff]
    %v6372 = vld [vmem:[#allocation11 + $0x8] sm:$0xf]
    %v6373 = vld [vmem:[#allocation11 + $0xc] sm:$0xff]
    %v6374 = vld [vmem:[#allocation11 + $0x14] sm:$0xf]
    %v6375 = vld [vmem:[#allocation11 + $0x18] sm:$0xff]
    %v6376 = vld [vmem:[#allocation11 + $0x20] sm:$0xf]
    %v6377 = vld [vmem:[#allocation11 + $0x24] sm:$0xff]
    %v6378 = vld [vmem:[#allocation11 + $0x2c] sm:$0xf]
    %v6379 = vld [vmem:[#allocation11 + $0x30] sm:$0xff]
    %v6380 = vld [vmem:[#allocation11 + $0x38] sm:$0xf]
    %v6381 = vld [vmem:[#allocation11 + $0x3c] sm:$0xff]
    %v6382 = vld [vmem:[#allocation11 + $0x44] sm:$0xf]
    %v6383 = vld [vmem:[#allocation11 + $0x48] sm:$0xff]
    %v6384 = vld [vmem:[#allocation11 + $0x50] sm:$0xf]
    %v6385 = vld [vmem:[#allocation11 + $0x54] sm:$0xff]
    %v6386 = vld [vmem:[#allocation11 + $0x5c] sm:$0xf]
    %v6387 = vld [vmem:[#allocation11 + $0x60] sm:$0xff]
    %v6388 = vld [vmem:[#allocation11 + $0x68] sm:$0xf]
    %v6389 = vld [vmem:[#allocation11 + $0x6c] sm:$0xff]
    %v6390 = vld [vmem:[#allocation11 + $0x74] sm:$0xf]
    %v6391 = vld [vmem:[#allocation11 + $0x78] sm:$0xff]
    %v6392 = vld [vmem:[#allocation11 + $0x80] sm:$0xf]
    %v6393 = vld [vmem:[#allocation11 + $0x84] sm:$0xff]
    %v6394 = vld [vmem:[#allocation11 + $0x8c] sm:$0xf]
    %v6395 = vld [vmem:[#allocation11 + $0x90] sm:$0xff]
    %v6396 = vld [vmem:[#allocation11 + $0x98] sm:$0xf]
    %v6397 = vld [vmem:[#allocation11 + $0x9c] sm:$0xff]
    %v6398 = vld [vmem:[#allocation11 + $0xa4] sm:$0xf]
    %v6399 = vld [vmem:[#allocation11 + $0xa8] sm:$0xff]
    %v6400 = vld [vmem:[#allocation11 + $0xb0] sm:$0xf]
    %v6401 = vld [vmem:[#allocation11 + $0xb4] sm:$0xff]
    %v6402 = vld [vmem:[#allocation11 + $0xbc] sm:$0xf]
    %v6403 = vld [vmem:[%s9] sm:$0x7]
    %v6405 = vlaneseq
    %v6406 = vshrl.u32 %v6405, 7
    %v6407 = vsub.s32 0, %v6406
    %v6408 = vrot.slane %v6403, %v6407
    %v6409 = vlaneseq
    %v6410 = vshrl.u32 %v6409, 7
    %v6411 = vsub.s32 1, %v6410
    %v6412 = vrot.slane %v6403, %v6411
    %v6413 = vlaneseq
    %v6414 = vshrl.u32 %v6413, 7
    %v6415 = vsub.s32 2, %v6414
    %v6416 = vrot.slane %v6403, %v6415
    %v6452 = vunpack.c.l.b16 %v6371
    %v6453 = vunpack.c.h.b16 %v6371
    %v6454 = vunpack.c.l.b16 %v6372
    %v6455 = vunpack.c.l.b16 %v6373
    %v6456 = vunpack.c.h.b16 %v6373
    %v6457 = vunpack.c.l.b16 %v6374
    %v6458 = vunpack.c.l.b16 %v6375
    %v6459 = vunpack.c.h.b16 %v6375
    %v6460 = vunpack.c.l.b16 %v6376
    %v6461 = vunpack.c.l.b16 %v6377
    %v6462 = vunpack.c.h.b16 %v6377
    %v6463 = vunpack.c.l.b16 %v6378
    %v6464 = vunpack.c.l.b16 %v6379
    %v6465 = vunpack.c.h.b16 %v6379
    %v6466 = vunpack.c.l.b16 %v6380
    %v6467 = vunpack.c.l.b16 %v6381
    %v6468 = vunpack.c.h.b16 %v6381
    %v6469 = vunpack.c.l.b16 %v6382
    %v6470 = vunpack.c.l.b16 %v6383
    %v6471 = vunpack.c.h.b16 %v6383
    %v6472 = vunpack.c.l.b16 %v6384
    %v6473 = vunpack.c.l.b16 %v6385
    %v6474 = vunpack.c.h.b16 %v6385
    %v6475 = vunpack.c.l.b16 %v6386
    %v6476 = vunpack.c.l.b16 %v6387
    %v6477 = vunpack.c.h.b16 %v6387
    %v6478 = vunpack.c.l.b16 %v6388
    %v6479 = vunpack.c.l.b16 %v6389
    %v6480 = vunpack.c.h.b16 %v6389
    %v6481 = vunpack.c.l.b16 %v6390
    %v6482 = vunpack.c.l.b16 %v6391
    %v6483 = vunpack.c.h.b16 %v6391
    %v6484 = vunpack.c.l.b16 %v6392
    %v6485 = vunpack.c.l.b16 %v6393
    %v6486 = vunpack.c.h.b16 %v6393
    %v6487 = vunpack.c.l.b16 %v6394
    %v6488 = vunpack.c.l.b16 %v6395
    %v6489 = vunpack.c.h.b16 %v6395
    %v6490 = vunpack.c.l.b16 %v6396
    %v6491 = vunpack.c.l.b16 %v6397
    %v6492 = vunpack.c.h.b16 %v6397
    %v6493 = vunpack.c.l.b16 %v6398
    %v6494 = vunpack.c.l.b16 %v6399
    %v6495 = vunpack.c.h.b16 %v6399
    %v6496 = vunpack.c.l.b16 %v6400
    %v6497 = vunpack.c.l.b16 %v6401
    %v6498 = vunpack.c.h.b16 %v6401
    %v6499 = vunpack.c.l.b16 %v6402
    %v6500 = vpack.c.b16 %v6455, %v6452
    %v6501 = vpack.c.b16 %v6456, %v6453
    %v6502 = vpack.c.b16 %v6457, %v6454
    %v6503 = vpack.c.b16 %v6461, %v6458
    %v6504 = vpack.c.b16 %v6462, %v6459
    %v6505 = vpack.c.b16 %v6463, %v6460
    %v6506 = vpack.c.b16 %v6467, %v6464
    %v6507 = vpack.c.b16 %v6468, %v6465
    %v6508 = vpack.c.b16 %v6469, %v6466
    %v6509 = vpack.c.b16 %v6473, %v6470
    %v6510 = vpack.c.b16 %v6474, %v6471
    %v6511 = vpack.c.b16 %v6475, %v6472
    %v6512 = vpack.c.b16 %v6479, %v6476
    %v6513 = vpack.c.b16 %v6480, %v6477
    %v6514 = vpack.c.b16 %v6481, %v6478
    %v6515 = vpack.c.b16 %v6485, %v6482
    %v6516 = vpack.c.b16 %v6486, %v6483
    %v6517 = vpack.c.b16 %v6487, %v6484
    %v6518 = vpack.c.b16 %v6491, %v6488
    %v6519 = vpack.c.b16 %v6492, %v6489
    %v6520 = vpack.c.b16 %v6493, %v6490
    %v6521 = vpack.c.b16 %v6497, %v6494
    %v6522 = vpack.c.b16 %v6498, %v6495
    %v6523 = vpack.c.b16 %v6499, %v6496
    %6548 = vmatprep.subr.bf16.mxu0 %v6501
    %6549 = vmatpush1.bf16.msra.mxu0 %v6500
    %6550 = vmatprep.subr.bf16.mxu0 %v6504
    %6551 = vmatpush1.bf16.msra.mxu0 %v6503
    %6552 = vmatprep.subr.bf16.mxu0 %v6507
    %6553 = vmatpush1.bf16.msra.mxu0 %v6506
    %6554 = vmatprep.subr.bf16.mxu0 %v6510
    %6555 = vmatpush1.bf16.msra.mxu0 %v6509
    %6556 = vmatprep.subr.bf16.mxu0 %v6513
    %6557 = vmatpush1.bf16.msra.mxu0 %v6512
    %6558 = vmatprep.subr.bf16.mxu0 %v6516
    %6559 = vmatpush1.bf16.msra.mxu0 %v6515
    %6560 = vmatprep.subr.bf16.mxu0 %v6519
    %6561 = vmatpush1.bf16.msra.mxu0 %v6518
    %6562 = vmatprep.subr.bf16.mxu0 %v6522
    %6563 = vmatpush1.bf16.msra.mxu0 %v6521
    %6564 = vmatprep.subr.bf16.mxu0 0
    %6565 = vmatpush1.bf16.msra.mxu0 0
    %6566 = vmatprep.subr.bf16.mxu0 0
    %6567 = vmatpush1.bf16.msra.mxu0 0
    %6568 = vmatprep.subr.bf16.mxu0 0
    %6569 = vmatpush1.bf16.msra.mxu0 0
    %6570 = vmatprep.subr.bf16.mxu0 0
    %6571 = vmatpush1.bf16.msra.mxu0 0
    %6572 = vmatprep.subr.bf16.mxu0 0
    %6573 = vmatpush1.bf16.msra.mxu0 0
    %6574 = vmatprep.subr.bf16.mxu0 0
    %6575 = vmatpush1.bf16.msra.mxu0 0
    %6576 = vmatprep.subr.bf16.mxu0 0
    %6577 = vmatpush1.bf16.msra.mxu0 0
    %6578 = vmatprep.subr.bf16.mxu0 0
    %6579 = vmatpush1.bf16.msra.mxu0 0
    %6580 = vmatprep.mubr.bf16.mxu0 0
    %6581 = vmatmul.mubr.bf16.gmra.mrb[0].mxu0 %v5948
    %v6582 = vpop.f32.mrb[0].mxu0
    %v6583 = vadd.f32 %v6408, %v6582
    %v6584 = vpop.f32.mrb[0].mxu0
    %v6585 = vadd.f32 %v6412, %v6584
    %v6586 = vpop.f32.mrb[0].mxu0
    %v6587 = vpop.f32.mrb[0].mxu0
    %6588 = vdwg.mxu0
    %6589 = vmatprep.subr.bf16.mxu0 0
    %6590 = vmatpush1.bf16.msra.mxu0 %v6502
    %6591 = vmatprep.subr.bf16.mxu0 0
    %6592 = vmatpush1.bf16.msra.mxu0 %v6505
    %6593 = vmatprep.subr.bf16.mxu0 0
    %6594 = vmatpush1.bf16.msra.mxu0 %v6508
    %6595 = vmatprep.subr.bf16.mxu0 0
    %6596 = vmatpush1.bf16.msra.mxu0 %v6511
    %6597 = vmatprep.subr.bf16.mxu0 0
    %6598 = vmatpush1.bf16.msra.mxu0 %v6514
    %6599 = vmatprep.subr.bf16.mxu0 0
    %6600 = vmatpush1.bf16.msra.mxu0 %v6517
    %6601 = vmatprep.subr.bf16.mxu0 0
    %6602 = vmatpush1.bf16.msra.mxu0 %v6520
    %6603 = vmatprep.subr.bf16.mxu0 0
    %6604 = vmatpush1.bf16.msra.mxu0 %v6523
    %6605 = vmatprep.subr.bf16.mxu0 0
    %6606 = vmatpush1.bf16.msra.mxu0 0
    %6607 = vmatprep.subr.bf16.mxu0 0
    %6608 = vmatpush1.bf16.msra.mxu0 0
    %6609 = vmatprep.subr.bf16.mxu0 0
    %6610 = vmatpush1.bf16.msra.mxu0 0
    %6611 = vmatprep.subr.bf16.mxu0 0
    %6612 = vmatpush1.bf16.msra.mxu0 0
    %6613 = vmatprep.subr.bf16.mxu0 0
    %6614 = vmatpush1.bf16.msra.mxu0 0
    %6615 = vmatprep.subr.bf16.mxu0 0
    %6616 = vmatpush1.bf16.msra.mxu0 0
    %6617 = vmatprep.subr.bf16.mxu0 0
    %6618 = vmatpush1.bf16.msra.mxu0 0
    %6619 = vmatprep.subr.bf16.mxu0 0
    %6620 = vmatpush1.bf16.msra.mxu0 0
    %6621 = vmatprep.mubr.bf16.mxu0 0
    %6622 = vmatmul.mubr.bf16.gmra.mrb[0].mxu0 %v5948
    %v6623 = vpop.f32.mrb[0].mxu0
    %v6624 = vadd.f32 %v6416, %v6623
    %v6625 = vpop.f32.mrb[0].mxu0
    %v6626 = vpop.f32.mrb[0].mxu0
    %v6627 = vpop.f32.mrb[0].mxu0
    %6628 = vdwg.mxu0
    %v6629 = vadd.f32 %v6368, %v6583
    %v6630 = vadd.f32 %v6369, %v6585
    %v6631 = vxor.u32 %v6629, 2147483648
    %v6632 = vxor.u32 %v6630, 2147483648
    %v6633 = vmul.f32 %v6631, 1.442695
    %v6634 = vpow.pop %v6633
    %v6635 = vmul.f32 %v6632, 1.442695
    %v6636 = vpow.pop %v6635
    %v6637 = vadd.f32 %v6634, 1.0
    %v6638 = vadd.f32 %v6636, 1.0
    %v6639 = vrcp.pop %v6637
    %v6640 = vmul.f32 1.0, %v6639
    %v6641 = vrcp.pop %v6638
    %v6642 = vmul.f32 1.0, %v6641
    %v6643 = vmul.f32 %v6640, %v6624
    %v6644 = vadd.f32 %v6370, %v6643
    %v6645 = vtanh.pop %v6644
    %v6646 = vsub.f32 1.0, %v6642
    %v6647 = vmul.f32 %v6646, %v6645
    %v6648 = vmul.f32 %v6642, %v5947
    %v6649 = vadd.f32 %v6647, %v6648
    %v6650 = vpack.c.bf16 %v6649, %v6649
    %v6651 = vld [vmem:[%s12] sm:$0xf]
    %v6652 = vld [vmem:[%s12 + $0x4] sm:$0xf]
    %v6653 = vld [vmem:[%s12 + $0x8] sm:$0xf]
    %v6654 = vld [vmem:[%s12 + $0xc] sm:$0xf]
    %v6655 = vld [vmem:[%s12 + $0x10] sm:$0xf]
    %v6656 = vld [vmem:[%s12 + $0x14] sm:$0xf]
    %v6657 = vld [vmem:[%s12 + $0x18] sm:$0xf]
    %v6658 = vld [vmem:[%s12 + $0x1c] sm:$0xf]
    %v6659 = vld [vmem:[%s12 + $0x20] sm:$0xf]
    %v6660 = vld [vmem:[%s12 + $0x24] sm:$0xf]
    %v6661 = vld [vmem:[%s12 + $0x28] sm:$0xf]
    %v6662 = vld [vmem:[%s12 + $0x2c] sm:$0xf]
    %v6663 = vld [vmem:[%s12 + $0x30] sm:$0xf]
    %v6664 = vld [vmem:[%s12 + $0x34] sm:$0xf]
    %v6665 = vld [vmem:[%s12 + $0x38] sm:$0xf]
    %v6666 = vld [vmem:[%s12 + $0x3c] sm:$0xf]
    %v6683 = vunpack.c.l.b16 %v6651
    %v6684 = vunpack.c.l.b16 %v6652
    %v6685 = vunpack.c.l.b16 %v6653
    %v6686 = vunpack.c.l.b16 %v6654
    %v6687 = vunpack.c.l.b16 %v6655
    %v6688 = vunpack.c.l.b16 %v6656
    %v6689 = vunpack.c.l.b16 %v6657
    %v6690 = vunpack.c.l.b16 %v6658
    %v6691 = vunpack.c.l.b16 %v6659
    %v6692 = vunpack.c.l.b16 %v6660
    %v6693 = vunpack.c.l.b16 %v6661
    %v6694 = vunpack.c.l.b16 %v6662
    %v6695 = vunpack.c.l.b16 %v6663
    %v6696 = vunpack.c.l.b16 %v6664
    %v6697 = vunpack.c.l.b16 %v6665
    %v6698 = vunpack.c.l.b16 %v6666
    %v6699 = vpack.c.b16 %v6684, %v6683
    %v6700 = vpack.c.b16 %v6686, %v6685
    %v6701 = vpack.c.b16 %v6688, %v6687
    %v6702 = vpack.c.b16 %v6690, %v6689
    %v6703 = vpack.c.b16 %v6692, %v6691
    %v6704 = vpack.c.b16 %v6694, %v6693
    %v6705 = vpack.c.b16 %v6696, %v6695
    %v6706 = vpack.c.b16 %v6698, %v6697
    %6715 = vmatprep.subr.bf16.mxu0 0
    %6716 = vmatpush1.bf16.msra.mxu0 %v6699
    %6717 = vmatprep.subr.bf16.mxu0 0
    %6718 = vmatpush1.bf16.msra.mxu0 %v6700
    %6719 = vmatprep.subr.bf16.mxu0 0
    %6720 = vmatpush1.bf16.msra.mxu0 %v6701
    %6721 = vmatprep.subr.bf16.mxu0 0
    %6722 = vmatpush1.bf16.msra.mxu0 %v6702
    %6723 = vmatprep.subr.bf16.mxu0 0
    %6724 = vmatpush1.bf16.msra.mxu0 %v6703
    %6725 = vmatprep.subr.bf16.mxu0 0
    %6726 = vmatpush1.bf16.msra.mxu0 %v6704
    %6727 = vmatprep.subr.bf16.mxu0 0
    %6728 = vmatpush1.bf16.msra.mxu0 %v6705
    %6729 = vmatprep.subr.bf16.mxu0 0
    %6730 = vmatpush1.bf16.msra.mxu0 %v6706
    %6731 = vmatprep.subr.bf16.mxu0 0
    %6732 = vmatpush1.bf16.msra.mxu0 0
    %6733 = vmatprep.subr.bf16.mxu0 0
    %6734 = vmatpush1.bf16.msra.mxu0 0
    %6735 = vmatprep.subr.bf16.mxu0 0
    %6736 = vmatpush1.bf16.msra.mxu0 0
    %6737 = vmatprep.subr.bf16.mxu0 0
    %6738 = vmatpush1.bf16.msra.mxu0 0
    %6739 = vmatprep.subr.bf16.mxu0 0
    %6740 = vmatpush1.bf16.msra.mxu0 0
    %6741 = vmatprep.subr.bf16.mxu0 0
    %6742 = vmatpush1.bf16.msra.mxu0 0
    %6743 = vmatprep.subr.bf16.mxu0 0
    %6744 = vmatpush1.bf16.msra.mxu0 0
    %6745 = vmatprep.subr.bf16.mxu0 0
    %6746 = vmatpush1.bf16.msra.mxu0 0
    %6747 = vmatprep.mubr.bf16.mxu0 0
    %6748 = vmatmul.mubr.bf16.gmra.mrb[0].mxu0 %v6650
    %v6749 = vpop.f32.mrb[0].mxu0
    %v6750 = vadd.f32 0.0, %v6749
    %v6751 = vpop.f32.mrb[0].mxu0
    %v6752 = vpop.f32.mrb[0].mxu0
    %v6753 = vpop.f32.mrb[0].mxu0
    %6754 = vdwg.mxu0
    %v6755 = vadd.f32 %v6364, %v6750
    %v6756 = vadd.f32 %v6755, %v1869
    %s6757 = scalar_lea.vmem [#allocation14], 56
    %6758 = vst [vmem:[%s6757] sm:$0xff] %v6756
    // Predicated region
    $region126: #{seq2seq_forward.1} parent=1 // pred_check
      _
    $region127: #{seq2seq_forward.1} parent=1 // pred_check_branch
      %6760 = sbr.rel (0) target = $region129
    $region128: #{seq2seq_forward.1} parent=1 // pred_region
      %s6762 = ssub.s32 1024, 1024
      %6763 = vsyncadd [#allocation5], %s6762
      %s6764 = sshll.u32 [#allocation14], 4
      %s6765 = int_to_ptr.vmem [resolvable:$true] %s6764
      %6770 = dma.vmem_to_hbm [thread:$0]  %s6765, 1024, %s13, [#allocation5], 128, 128, 8
    $region129: #{seq2seq_forward.1} parent=1 // pred_fallthru
      _
    // Predicated region
    $region130: #{seq2seq_forward.1} parent=1 // pred_check
      _
    $region131: #{seq2seq_forward.1} parent=1 // pred_check_branch
      %6772 = sbr.rel (0) target = $region133
    $region132: #{seq2seq_forward.1} parent=1 // pred_region
      %6773 = dma.done [#allocation5], 1024
    $region133: #{seq2seq_forward.1} parent=1 // pred_fallthru
      _
    %6774 = vsyncpa [#allocation4], 1
    %6775 = vsyncpa [#allocation9], 1
    %6776 = vsyncpa [#allocation12], 1
    %6777 = vsyncpa [#allocation5], 1
    %6778 = vsyncpa [#allocation6], 1

</llo_original>
